<compile_context>
chip_gen: v7x
topology: tpu7x:2x2x1
jax: 0.10.0
libtpu: 0.0.40
codegen_flags: <defaults>
</compile_context>

<pallas_src>
import functools
import math

import jax
import jax.numpy as jnp
from jax import lax
from jax.experimental import pallas as pl
from jax.experimental.pallas import tpu as pltpu


# ----------------------------------------------------------------------------- kernel
def _sde_kernel(zz_ref, tb_ref, wsv_ref, wh_ref, bh_ref, wout_ref, bout_ref, k_ref,
                out_ref, *, n_hidden, obs_steps, n_strikes,
                S0, V0, rate, theta, kappa, lamdb, h):
    MC = zz_ref.shape[-1]                      # Monte-Carlo lane tile
    sqrt_h = math.sqrt(h)

    # Hoist small loop-invariant weights once (don't re-slice refs every step).
    w_s = wsv_ref[:, 0:1]                      # (4W, 1)  weight column for S
    w_v = wsv_ref[:, 1:2]                      # (4W, 1)  weight column for V
    w_out = wout_ref[...]                      # (4, 4W)  fused output head
    b_out = bout_ref[...]                      # (4, 1)
    strikes = k_ref[...]                       # (n_strikes, 1)  call + put fused

    def euler_step(i, carry):
        s, v = carry                                              # (1, MC) each
        dw = sqrt_h * zz_ref[i - 1]                               # (2, MC): [dW; dW1]
        dW = dw[0:1]
        dW1 = dw[1:2]
        # Fused first layer for all 4 nets: [t, S, V] -> (4W, MC).
        # The t-dependent part (w_t * t_{i-1} + b_in) is precomputed in tb_ref.
        hdd = jnp.maximum(w_s * s + w_v * v + tb_ref[i - 1], 0.0)
        for l in range(n_hidden):                                 # block-diag hidden layers
            hdd = jnp.maximum(
                jnp.dot(wh_ref[l], hdd, preferred_element_type=jnp.float32)
                + bh_ref[l], 0.0)
        nn = jnp.dot(w_out, hdd, preferred_element_type=jnp.float32) + b_out  # (4, MC)
        drift = nn[0:1]
        diffusion = nn[1:2]
        driftV = nn[2:3]
        diffusionV = nn[3:4]
        s_new = s + (s * rate + drift) * h + (s * jnp.sqrt(v) + diffusion) * dW
        v_new = v + (kappa * (theta - v) + driftV) * h + (lamdb + diffusionV) * dW1
        return s_new, jnp.maximum(v_new, 0.01)                    # cat-with-0.01 + max

    s = jnp.full((1, MC), S0, dtype=jnp.float32)
    v = jnp.full((1, MC), V0, dtype=jnp.float32)

    prev = 1
    for j, idx in enumerate(obs_steps):        # host-static observation schedule
        trip = idx + 1 - prev
        if trip > 0:
            unroll = trip if trip <= 16 else 4
            s, v = lax.fori_loop(prev, idx + 1, euler_step, (s, v), unroll=unroll)
        prev = idx + 1
        # NaN-aware payoff partials for this MC tile; the mask depends only on S,
        # so it is computed once and shared by all (call + put) strikes.
        is_nan = jnp.isnan(s)                                              # (1, MC)
        payoff = jnp.where(is_nan, 0.0, jnp.maximum(s - strikes, 0.0))     # (K, MC)
        valid = jnp.where(is_nan, 0.0, 1.0)                                # (1, MC)
        out_ref[pl.ds(j, 1), 0:n_strikes] = \
            jnp.sum(payoff, axis=1, keepdims=True)[None]                   # (1, K, 1)
        out_ref[pl.ds(j, 1), n_strikes:n_strikes + 1] = \
            jnp.sum(valid, axis=1, keepdims=True)[None]                    # (1, 1, 1)
    # Steps after the last observation cannot affect the output and are skipped.


# ----------------------------------------------------------------- host-side packing
def _pack_params(params, timegrid_f32):
    """Fuse the 4 Net_Timestep MLPs into one block-diagonal weight stack."""
    w_in, b_in, w_h, b_h, w_out, b_out = params
    n_nets, W, n_dim = w_in.shape                               # (4, W, 3)
    n_hidden = w_h.shape[1]
    W4 = n_nets * W
    w_in_p = w_in.reshape(W4, n_dim).astype(jnp.float32)        # (4W, 3)
    b_in_p = b_in.reshape(W4, 1).astype(jnp.float32)            # (4W, 1)
    wsv = w_in_p[:, 1:3]                                        # (4W, 2): [w_S, w_V]
    # Per-step constant first-layer term  w_t * t_{i-1} + b_in  ->  (n_steps, 4W, 1)
    tb = w_in_p[:, 0:1][None] * timegrid_f32[:-1, None, None] + b_in_p[None]
    wh_bd = jnp.zeros((n_hidden, W4, W4), jnp.float32)
    wout_p = jnp.zeros((n_nets, W4), jnp.float32)
    for n in range(n_nets):
        wh_bd = wh_bd.at[:, n * W:(n + 1) * W, n * W:(n + 1) * W].set(w_h[n])
        wout_p = wout_p.at[n, n * W:(n + 1) * W].set(w_out[n, 0])
    bh_p = jnp.transpose(b_h, (1, 0, 2, 3)).reshape(n_hidden, W4, 1).astype(jnp.float32)
    bout_p = b_out.reshape(n_nets, 1).astype(jnp.float32)
    return wsv, tb, wh_bd, bh_p, wout_p, bout_p


def _pick_mc_tile(mc, n_steps):
    """Monte-Carlo lane tile: multiple of 128 lanes, double-buffered z/z1 block kept
    under ~20 MiB (safe for v7x's 64 MiB VMEM), and >=2 grid tiles when MC allows so
    the v7x megacore / pipeline has parallel work."""
    budget = 20 * 2 ** 20
    per_lane = n_steps * 2 * 4 * 2            # f32, z+z1 stacked, double-buffered
    cap = max(128, (budget // per_lane) // 128 * 128)
    tile = int(min(cap, 2048))
    mc128 = ((mc + 127) // 128) * 128
    if mc128 >= 256:
        tile = min(tile, max(128, (mc128 // 2) // 128 * 128))
    tile = min(tile, mc128)
    mc_pad = ((mc + tile - 1) // tile) * tile
    return tile, mc_pad


# ----------------------------------------------------------------------------- wrapper
def net_sde_pro_forward(heston_info, asset_info, timegrid, params,
                        strikes_call, strikes_put, indices, z, z1, MC_samples):
    rho, theta, kappa, lamdb = [float(x) for x in heston_info]   # rho unused in forward
    S0, V0, rate = [float(x) for x in asset_info]
    n_steps = len(timegrid) - 1
    h = float(timegrid[1] - timegrid[0])
    obs_steps = tuple(sorted(int(i) for i in indices))   # torch emits rows in time order
    num_obs = len(obs_steps)
    n_call = len(strikes_call)
    n_put = len(strikes_put)
    n_strikes = n_call + n_put

    tg = jnp.asarray(timegrid, jnp.float32)
    wsv, tb, wh_bd, bh_p, wout_p, bout_p = _pack_params(params, tg)
    W4 = wsv.shape[0]
    n_hidden = wh_bd.shape[0]

    # Fused call/put strike slab (same payoff max(S-K, 0) in the torch code).
    strikes_all = jnp.concatenate(
        [jnp.asarray(strikes_call, jnp.float32),
         jnp.asarray(strikes_put, jnp.float32)]).reshape(n_strikes, 1)

    # Brownian increments stacked as (n_steps, 2, MC), NaN-padded on the MC axis.
    zz = jnp.stack([jnp.asarray(z, jnp.float32).T,
                    jnp.asarray(z1, jnp.float32).T], axis=1)
    mc_tile, mc_pad = _pick_mc_tile(MC_samples, n_steps)
    if mc_pad > MC_samples:
        zz = jnp.concatenate(
            [zz, jnp.full((n_steps, 2, mc_pad - MC_samples), jnp.nan, jnp.float32)],
            axis=2)
    num_tiles = mc_pad // mc_tile

    kernel = functools.partial(
        _sde_kernel, n_hidden=n_hidden, obs_steps=obs_steps, n_strikes=n_strikes,
        S0=S0, V0=V0, rate=rate, theta=theta, kappa=kappa, lamdb=lamdb, h=h)

    # Explicit VMEM budget: double-buffered blocks + generous intermediate headroom.
    blk_bytes = 4 * (n_steps * 2 * mc_tile + tb.size + wsv.size + wh_bd.size
                     + bh_p.size + wout_p.size + bout_p.size + strikes_all.size
                     + num_obs * (n_strikes + 1))
    headroom = 16 * mc_tile * W4 * 4
    vmem_limit = int(min(100 * 2 ** 20, max(32 * 2 ** 20, 2 * blk_bytes + headroom)))

    out = pl.pallas_call(
        kernel,
        out_shape=jax.ShapeDtypeStruct((num_tiles * num_obs, n_strikes + 1, 1),
                                       jnp.float32),
        grid=(num_tiles,),
        in_specs=[
            pl.BlockSpec((n_steps, 2, mc_tile), lambda i: (0, 0, i)),   # z/z1 tile
            pl.BlockSpec((n_steps, W4, 1), lambda i: (0, 0, 0)),        # w_t*t + b_in
            pl.BlockSpec((W4, 2), lambda i: (0, 0)),                    # [w_S, w_V]
            pl.BlockSpec((n_hidden, W4, W4), lambda i: (0, 0, 0)),      # block-diag hidden
            pl.BlockSpec((n_hidden, W4, 1), lambda i: (0, 0, 0)),       # hidden bias
            pl.BlockSpec((4, W4), lambda i: (0, 0)),                    # fused output head
            pl.BlockSpec((4, 1), lambda i: (0, 0)),                     # output bias
            pl.BlockSpec((n_strikes, 1), lambda i: (0, 0)),             # strikes
        ],
        out_specs=pl.BlockSpec((num_obs, n_strikes + 1, 1), lambda i: (i, 0, 0)),
        compiler_params=pltpu.CompilerParams(
            dimension_semantics=("parallel",),
            vmem_limit_bytes=vmem_limit),
    )(zz, tb, wsv, wh_bd, bh_p, wout_p, bout_p, strikes_all)

    # Finish the nanmean + discounting from per-tile (sum, count) partials.
    out = out.reshape(num_tiles, num_obs, n_strikes + 1)
    totals = jnp.sum(out, axis=0)                            # (num_obs, K+1)
    sums = totals[:, :n_strikes]
    counts = totals[:, n_strikes:]
    disc = jnp.exp(-rate * jnp.asarray(obs_steps, jnp.float32) / n_steps)
    prices = sums * disc[:, None] / counts
    average_SS = prices[:, :n_call]      # "call" rows
    average_SS1 = prices[:, n_call:]     # "put" rows (same payoff as the torch code)
    return jnp.concatenate([average_SS, average_SS1], axis=0)


# ------------------------------------------------------------------- parameter helpers
def init_params(key, n_dim, n_layers, vNetWidth):
    """Deterministic synthetic weights for the 4 Net_Timestep MLPs (drift, diffusion,
    driftV, diffusionV), packed along a leading axis of size 4."""
    n_hidden = n_layers - 1
    ks = jax.random.split(key, 6)
    sc = 0.2
    w_in = sc * jax.random.normal(ks[0], (4, vNetWidth, n_dim), jnp.float32)
    b_in = sc * jax.random.normal(ks[1], (4, vNetWidth, 1), jnp.float32)
    w_h = (sc / math.sqrt(vNetWidth)) * jax.random.normal(
        ks[2], (4, n_hidden, vNetWidth, vNetWidth), jnp.float32)
    b_h = sc * jax.random.normal(ks[3], (4, n_hidden, vNetWidth, 1), jnp.float32)
    w_out = (sc / math.sqrt(vNetWidth)) * jax.random.normal(
        ks[4], (4, 1, vNetWidth), jnp.float32)
    b_out = sc * jax.random.normal(ks[5], (4, 1, 1), jnp.float32)
    return w_in, b_in, w_h, b_h, w_out, b_out


# -------------------------------------------------------------------- pure-JAX reference
def _mlp_ref(params, net, t, s, v):
    w_in, b_in, w_h, b_h, w_out, b_out = params
    hdd = jnp.maximum(w_in[net, :, 0:1] * t + w_in[net, :, 1:2] * s
                      + w_in[net, :, 2:3] * v + b_in[net], 0.0)
    for l in range(w_h.shape[1]):
        hdd = jnp.maximum(w_h[net, l] @ hdd + b_h[net, l], 0.0)
    return w_out[net] @ hdd + b_out[net]


def reference_forward(heston_info, asset_info, timegrid, params,
                      strikes_call, strikes_put, indices, z, z1, MC):
    rho, theta, kappa, lamdb = [float(x) for x in heston_info]
    S0, V0, rate = [float(x) for x in asset_info]
    n_steps = len(timegrid) - 1
    h = float(timegrid[1] - timegrid[0])
    sqrt_h = math.sqrt(h)
    kc = jnp.asarray(strikes_call, jnp.float32).reshape(-1, 1)
    kp = jnp.asarray(strikes_put, jnp.float32).reshape(-1, 1)
    zT = jnp.asarray(z, jnp.float32).T
    z1T = jnp.asarray(z1, jnp.float32).T
    s = jnp.full((1, MC), S0, jnp.float32)
    v = jnp.full((1, MC), V0, jnp.float32)
    calls, puts = [], []
    for i in range(1, n_steps + 1):
        t = float(timegrid[i - 1])
        dW = sqrt_h * zT[i - 1:i]
        dW1 = sqrt_h * z1T[i - 1:i]
        drift = _mlp_ref(params, 0, t, s, v)
        diffusion = _mlp_ref(params, 1, t, s, v)
        driftV = _mlp_ref(params, 2, t, s, v)
        diffusionV = _mlp_ref(params, 3, t, s, v)
        s = s + (s * rate + drift) * h + (s * jnp.sqrt(v) + diffusion) * dW
        v_new = v + (kappa * (theta - v) + driftV) * h + (lamdb + diffusionV) * dW1
        v = jnp.maximum(v_new, 0.01)
        if i in indices:
            disc = math.exp(-rate * i / n_steps)
            calls.append(jnp.nanmean(jnp.maximum(s - kc, 0.0) * disc, axis=1))
            puts.append(jnp.nanmean(jnp.maximum(s - kp, 0.0) * disc, axis=1))
    return jnp.concatenate([jnp.stack(calls), jnp.stack(puts)], axis=0)


# ----------------------------------------------------------------------------- main
if __name__ == "__main__":
    MC_samples = 256
    n_steps = 16
    n_dim = 3            # [time, S, V]
    n_layers = 2
    vNetWidth = 32

    timegrid = [i / n_steps for i in range(n_steps + 1)]
    heston_info = [-0.7, 0.04, 1.5, 0.3]        # rho, theta, kappa, lambd
    asset_info = [1.0, 0.04, 0.025]             # S0, V0, rate
    strikes_call = [0.9, 1.0, 1.1, 1.2]
    strikes_put = [0.7, 0.8, 0.9, 1.0]
    indices = [8, 16]                           # observation time steps

    key = jax.random.PRNGKey(0)
    kparams, kz, kz1 = jax.random.split(key, 3)
    params = init_params(kparams, n_dim, n_layers, vNetWidth)
    z = jax.random.normal(kz, (MC_samples, n_steps), jnp.float32)
    z1 = jax.random.normal(kz1, (MC_samples, n_steps), jnp.float32)

    out = net_sde_pro_forward(heston_info, asset_info, timegrid, params,
                              strikes_call, strikes_put, indices, z, z1, MC_samples)
    out = jax.block_until_ready(out)

    ref = reference_forward(heston_info, asset_info, timegrid, params,
                            strikes_call, strikes_put, indices, z, z1, MC_samples)
    ref = jax.block_until_ready(ref)

    assert out.shape == (2 * len(indices), len(strikes_call)), out.shape
    assert bool(jnp.all(jnp.isfinite(out)))
    assert bool(jnp.allclose(out, ref, rtol=2e-3, atol=2e-3)), (out, ref)
    print("KERNEL_OK")
</pallas_src>

<mosaic_0001>
module attributes {stable_mosaic.version = 11 : i64} {
  func.func @_sde_kernel(%arg0: i32, %arg1: memref<16x2x128xf32, #tpu.memory_space<vmem>>, %arg2: memref<16x128x1xf32, #tpu.memory_space<vmem>>, %arg3: memref<128x2xf32, #tpu.memory_space<vmem>>, %arg4: memref<1x128x128xf32, #tpu.memory_space<vmem>>, %arg5: memref<1x128x1xf32, #tpu.memory_space<vmem>>, %arg6: memref<4x128xf32, #tpu.memory_space<vmem>>, %arg7: memref<4x1xf32, #tpu.memory_space<vmem>>, %arg8: memref<8x1xf32, #tpu.memory_space<vmem>>, %arg9: memref<2x9x1xf32, #tpu.memory_space<vmem>>) attributes {dimension_semantics = [#tpu.dimension_semantics<parallel>], iteration_bounds = array<i64: 2>, scalar_prefetch = 0 : i64, scratch_operands = 0 : i64, tpu.core_type = #tpu.core_type<tc>, window_params = [{transform_indices = @transform_0, window_bounds = array<i64: 16, 2, 128>}, {pipeline_mode = #tpu.pipeline_mode<synchronous>, transform_indices = @transform_1, window_bounds = array<i64: 16, 128, 1>}, {pipeline_mode = #tpu.pipeline_mode<synchronous>, transform_indices = @transform_2, window_bounds = array<i64: 128, 2>}, {pipeline_mode = #tpu.pipeline_mode<synchronous>, transform_indices = @transform_3, window_bounds = array<i64: 1, 128, 128>}, {pipeline_mode = #tpu.pipeline_mode<synchronous>, transform_indices = @transform_4, window_bounds = array<i64: 1, 128, 1>}, {pipeline_mode = #tpu.pipeline_mode<synchronous>, transform_indices = @transform_5, window_bounds = array<i64: 4, 128>}, {pipeline_mode = #tpu.pipeline_mode<synchronous>, transform_indices = @transform_6, window_bounds = array<i64: 4, 1>}, {pipeline_mode = #tpu.pipeline_mode<synchronous>, transform_indices = @transform_7, window_bounds = array<i64: 8, 1>}, {transform_indices = @transform_8, window_bounds = array<i64: 2, 9, 1>}]} {
    %c0 = arith.constant 0 : index
    %c0_0 = arith.constant 0 : index
    %0 = vector.load %arg3[%c0, %c0_0] : memref<128x2xf32, #tpu.memory_space<vmem>>, vector<128x1xf32>
    %c0_1 = arith.constant 0 : index
    %c1 = arith.constant 1 : index
    %1 = vector.load %arg3[%c0_1, %c1] : memref<128x2xf32, #tpu.memory_space<vmem>>, vector<128x1xf32>
    %c0_2 = arith.constant 0 : index
    %c0_3 = arith.constant 0 : index
    %2 = vector.load %arg6[%c0_2, %c0_3] : memref<4x128xf32, #tpu.memory_space<vmem>>, vector<4x128xf32>
    %c0_4 = arith.constant 0 : index
    %c0_5 = arith.constant 0 : index
    %3 = vector.load %arg7[%c0_4, %c0_5] : memref<4x1xf32, #tpu.memory_space<vmem>>, vector<4x1xf32>
    %c0_6 = arith.constant 0 : index
    %c0_7 = arith.constant 0 : index
    %4 = vector.load %arg8[%c0_6, %c0_7] : memref<8x1xf32, #tpu.memory_space<vmem>>, vector<8x1xf32>
    %cst = arith.constant 1.000000e+00 : f32
    %5 = vector.broadcast %cst : f32 to vector<1x128xf32>
    %cst_8 = arith.constant 4.000000e-02 : f32
    %6 = vector.broadcast %cst_8 : f32 to vector<1x128xf32>
    %c1_i32 = arith.constant 1 : i32
    %c1_i32_9 = arith.constant 1 : i32
    %7 = arith.subi %c1_i32, %c1_i32_9 : i32
    %8 = arith.index_cast %7 : i32 to index
    %c0_10 = arith.constant 0 : index
    %c0_11 = arith.constant 0 : index
    %9 = vector.load %arg1[%8, %c0_10, %c0_11] : memref<16x2x128xf32, #tpu.memory_space<vmem>>, vector<1x2x128xf32>
    %10 = vector.shape_cast %9 : vector<1x2x128xf32> to vector<2x128xf32>
    %cst_12 = arith.constant 2.500000e-01 : f32
    %11 = vector.broadcast %cst_12 : f32 to vector<2x128xf32>
    %12 = arith.mulf %11, %10 : vector<2x128xf32>
    %13 = vector.extract_strided_slice %12 {offsets = [0, 0], sizes = [1, 128], strides = [1, 1]} : vector<2x128xf32> to vector<1x128xf32>
    %14 = vector.extract_strided_slice %12 {offsets = [1, 0], sizes = [1, 128], strides = [1, 1]} : vector<2x128xf32> to vector<1x128xf32>
    %15 = vector.broadcast %0 : vector<128x1xf32> to vector<128x128xf32>
    %16 = vector.broadcast %5 : vector<1x128xf32> to vector<128x128xf32>
    %17 = arith.mulf %15, %16 : vector<128x128xf32>
    %18 = vector.broadcast %1 : vector<128x1xf32> to vector<128x128xf32>
    %19 = vector.broadcast %6 : vector<1x128xf32> to vector<128x128xf32>
    %20 = arith.mulf %18, %19 : vector<128x128xf32>
    %21 = arith.addf %17, %20 : vector<128x128xf32>
    %c1_i32_13 = arith.constant 1 : i32
    %22 = arith.subi %c1_i32, %c1_i32_13 : i32
    %23 = arith.index_cast %22 : i32 to index
    %c0_14 = arith.constant 0 : index
    %c0_15 = arith.constant 0 : index
    %24 = vector.load %arg2[%23, %c0_14, %c0_15] : memref<16x128x1xf32, #tpu.memory_space<vmem>>, vector<1x128x1xf32>
    %25 = vector.shape_cast %24 : vector<1x128x1xf32> to vector<128x1xf32>
    %26 = vector.broadcast %25 : vector<128x1xf32> to vector<128x128xf32>
    %27 = arith.addf %21, %26 : vector<128x128xf32>
    %cst_16 = arith.constant 0.000000e+00 : f32
    %28 = vector.broadcast %cst_16 : f32 to vector<128x128xf32>
    %29 = arith.maximumf %27, %28 : vector<128x128xf32>
    %c0_17 = arith.constant 0 : index
    %c0_18 = arith.constant 0 : index
    %c0_19 = arith.constant 0 : index
    %30 = vector.load %arg4[%c0_17, %c0_18, %c0_19] : memref<1x128x128xf32, #tpu.memory_space<vmem>>, vector<1x128x128xf32>
    %31 = vector.shape_cast %30 : vector<1x128x128xf32> to vector<128x128xf32>
    %cst_20 = arith.constant dense<0.000000e+00> : vector<128x128xf32>
    %32 = tpu.matmul %31, %29, %cst_20 {dimension_numbers = #tpu.dot_dimension_numbers<[1], [0], [0], [1], [0, 0, 1, 1], [], []>} : vector<128x128xf32>, vector<128x128xf32>, vector<128x128xf32> -> vector<128x128xf32>
    %c0_21 = arith.constant 0 : index
    %c0_22 = arith.constant 0 : index
    %c0_23 = arith.constant 0 : index
    %33 = vector.load %arg5[%c0_21, %c0_22, %c0_23] : memref<1x128x1xf32, #tpu.memory_space<vmem>>, vector<1x128x1xf32>
    %34 = vector.shape_cast %33 : vector<1x128x1xf32> to vector<128x1xf32>
    %35 = vector.broadcast %34 : vector<128x1xf32> to vector<128x128xf32>
    %36 = arith.addf %32, %35 : vector<128x128xf32>
    %cst_24 = arith.constant 0.000000e+00 : f32
    %37 = vector.broadcast %cst_24 : f32 to vector<128x128xf32>
    %38 = arith.maximumf %36, %37 : vector<128x128xf32>
    %cst_25 = arith.constant dense<0.000000e+00> : vector<4x128xf32>
    %39 = tpu.matmul %2, %38, %cst_25 {dimension_numbers = #tpu.dot_dimension_numbers<[1], [0], [0], [1], [0, 0, 1, 1], [], []>} : vector<4x128xf32>, vector<128x128xf32>, vector<4x128xf32> -> vector<4x128xf32>
    %40 = vector.broadcast %3 : vector<4x1xf32> to vector<4x128xf32>
    %41 = arith.addf %39, %40 : vector<4x128xf32>
    %42 = vector.extract_strided_slice %41 {offsets = [0, 0], sizes = [1, 128], strides = [1, 1]} : vector<4x128xf32> to vector<1x128xf32>
    %43 = vector.extract_strided_slice %41 {offsets = [1, 0], sizes = [1, 128], strides = [1, 1]} : vector<4x128xf32> to vector<1x128xf32>
    %44 = vector.extract_strided_slice %41 {offsets = [2, 0], sizes = [1, 128], strides = [1, 1]} : vector<4x128xf32> to vector<1x128xf32>
    %45 = vector.extract_strided_slice %41 {offsets = [3, 0], sizes = [1, 128], strides = [1, 1]} : vector<4x128xf32> to vector<1x128xf32>
    %cst_26 = arith.constant 2.500000e-02 : f32
    %46 = vector.broadcast %cst_26 : f32 to vector<1x128xf32>
    %47 = arith.mulf %5, %46 : vector<1x128xf32>
    %48 = arith.addf %47, %42 : vector<1x128xf32>
    %cst_27 = arith.constant 6.250000e-02 : f32
    %49 = vector.broadcast %cst_27 : f32 to vector<1x128xf32>
    %50 = arith.mulf %48, %49 : vector<1x128xf32>
    %51 = arith.addf %5, %50 : vector<1x128xf32>
    %52 = math.sqrt %6 : vector<1x128xf32>
    %53 = arith.mulf %5, %52 : vector<1x128xf32>
    %54 = arith.addf %53, %43 : vector<1x128xf32>
    %55 = arith.mulf %54, %13 : vector<1x128xf32>
    %56 = arith.addf %51, %55 : vector<1x128xf32>
    %cst_28 = arith.constant 4.000000e-02 : f32
    %57 = vector.broadcast %cst_28 : f32 to vector<1x128xf32>
    %58 = arith.subf %57, %6 : vector<1x128xf32>
    %cst_29 = arith.constant 1.500000e+00 : f32
    %59 = vector.broadcast %cst_29 : f32 to vector<1x128xf32>
    %60 = arith.mulf %59, %58 : vector<1x128xf32>
    %61 = arith.addf %60, %44 : vector<1x128xf32>
    %cst_30 = arith.constant 6.250000e-02 : f32
    %62 = vector.broadcast %cst_30 : f32 to vector<1x128xf32>
    %63 = arith.mulf %61, %62 : vector<1x128xf32>
    %64 = arith.addf %6, %63 : vector<1x128xf32>
    %cst_31 = arith.constant 3.000000e-01 : f32
    %65 = vector.broadcast %cst_31 : f32 to vector<1x128xf32>
    %66 = arith.addf %65, %45 : vector<1x128xf32>
    %67 = arith.mulf %66, %14 : vector<1x128xf32>
    %68 = arith.addf %64, %67 : vector<1x128xf32>
    %cst_32 = arith.constant 0.00999999977 : f32
    %69 = vector.broadcast %cst_32 : f32 to vector<1x128xf32>
    %70 = arith.maximumf %68, %69 : vector<1x128xf32>
    %c2_i32 = arith.constant 2 : i32
    %c1_i32_33 = arith.constant 1 : i32
    %71 = arith.subi %c2_i32, %c1_i32_33 : i32
    %72 = arith.index_cast %71 : i32 to index
    %c0_34 = arith.constant 0 : index
    %c0_35 = arith.constant 0 : index
    %73 = vector.load %arg1[%72, %c0_34, %c0_35] : memref<16x2x128xf32, #tpu.memory_space<vmem>>, vector<1x2x128xf32>
    %74 = vector.shape_cast %73 : vector<1x2x128xf32> to vector<2x128xf32>
    %cst_36 = arith.constant 2.500000e-01 : f32
    %75 = vector.broadcast %cst_36 : f32 to vector<2x128xf32>
    %76 = arith.mulf %75, %74 : vector<2x128xf32>
    %77 = vector.extract_strided_slice %76 {offsets = [0, 0], sizes = [1, 128], strides = [1, 1]} : vector<2x128xf32> to vector<1x128xf32>
    %78 = vector.extract_strided_slice %76 {offsets = [1, 0], sizes = [1, 128], strides = [1, 1]} : vector<2x128xf32> to vector<1x128xf32>
    %79 = vector.broadcast %0 : vector<128x1xf32> to vector<128x128xf32>
    %80 = vector.broadcast %56 : vector<1x128xf32> to vector<128x128xf32>
    %81 = arith.mulf %79, %80 : vector<128x128xf32>
    %82 = vector.broadcast %1 : vector<128x1xf32> to vector<128x128xf32>
    %83 = vector.broadcast %70 : vector<1x128xf32> to vector<128x128xf32>
    %84 = arith.mulf %82, %83 : vector<128x128xf32>
    %85 = arith.addf %81, %84 : vector<128x128xf32>
    %c1_i32_37 = arith.constant 1 : i32
    %86 = arith.subi %c2_i32, %c1_i32_37 : i32
    %87 = arith.index_cast %86 : i32 to index
    %c0_38 = arith.constant 0 : index
    %c0_39 = arith.constant 0 : index
    %88 = vector.load %arg2[%87, %c0_38, %c0_39] : memref<16x128x1xf32, #tpu.memory_space<vmem>>, vector<1x128x1xf32>
    %89 = vector.shape_cast %88 : vector<1x128x1xf32> to vector<128x1xf32>
    %90 = vector.broadcast %89 : vector<128x1xf32> to vector<128x128xf32>
    %91 = arith.addf %85, %90 : vector<128x128xf32>
    %cst_40 = arith.constant 0.000000e+00 : f32
    %92 = vector.broadcast %cst_40 : f32 to vector<128x128xf32>
    %93 = arith.maximumf %91, %92 : vector<128x128xf32>
    %c0_41 = arith.constant 0 : index
    %c0_42 = arith.constant 0 : index
    %c0_43 = arith.constant 0 : index
    %94 = vector.load %arg4[%c0_41, %c0_42, %c0_43] : memref<1x128x128xf32, #tpu.memory_space<vmem>>, vector<1x128x128xf32>
    %95 = vector.shape_cast %94 : vector<1x128x128xf32> to vector<128x128xf32>
    %cst_44 = arith.constant dense<0.000000e+00> : vector<128x128xf32>
    %96 = tpu.matmul %95, %93, %cst_44 {dimension_numbers = #tpu.dot_dimension_numbers<[1], [0], [0], [1], [0, 0, 1, 1], [], []>} : vector<128x128xf32>, vector<128x128xf32>, vector<128x128xf32> -> vector<128x128xf32>
    %c0_45 = arith.constant 0 : index
    %c0_46 = arith.constant 0 : index
    %c0_47 = arith.constant 0 : index
    %97 = vector.load %arg5[%c0_45, %c0_46, %c0_47] : memref<1x128x1xf32, #tpu.memory_space<vmem>>, vector<1x128x1xf32>
    %98 = vector.shape_cast %97 : vector<1x128x1xf32> to vector<128x1xf32>
    %99 = vector.broadcast %98 : vector<128x1xf32> to vector<128x128xf32>
    %100 = arith.addf %96, %99 : vector<128x128xf32>
    %cst_48 = arith.constant 0.000000e+00 : f32
    %101 = vector.broadcast %cst_48 : f32 to vector<128x128xf32>
    %102 = arith.maximumf %100, %101 : vector<128x128xf32>
    %cst_49 = arith.constant dense<0.000000e+00> : vector<4x128xf32>
    %103 = tpu.matmul %2, %102, %cst_49 {dimension_numbers = #tpu.dot_dimension_numbers<[1], [0], [0], [1], [0, 0, 1, 1], [], []>} : vector<4x128xf32>, vector<128x128xf32>, vector<4x128xf32> -> vector<4x128xf32>
    %104 = vector.broadcast %3 : vector<4x1xf32> to vector<4x128xf32>
    %105 = arith.addf %103, %104 : vector<4x128xf32>
    %106 = vector.extract_strided_slice %105 {offsets = [0, 0], sizes = [1, 128], strides = [1, 1]} : vector<4x128xf32> to vector<1x128xf32>
    %107 = vector.extract_strided_slice %105 {offsets = [1, 0], sizes = [1, 128], strides = [1, 1]} : vector<4x128xf32> to vector<1x128xf32>
    %108 = vector.extract_strided_slice %105 {offsets = [2, 0], sizes = [1, 128], strides = [1, 1]} : vector<4x128xf32> to vector<1x128xf32>
    %109 = vector.extract_strided_slice %105 {offsets = [3, 0], sizes = [1, 128], strides = [1, 1]} : vector<4x128xf32> to vector<1x128xf32>
    %cst_50 = arith.constant 2.500000e-02 : f32
    %110 = vector.broadcast %cst_50 : f32 to vector<1x128xf32>
    %111 = arith.mulf %56, %110 : vector<1x128xf32>
    %112 = arith.addf %111, %106 : vector<1x128xf32>
    %cst_51 = arith.constant 6.250000e-02 : f32
    %113 = vector.broadcast %cst_51 : f32 to vector<1x128xf32>
    %114 = arith.mulf %112, %113 : vector<1x128xf32>
    %115 = arith.addf %56, %114 : vector<1x128xf32>
    %116 = math.sqrt %70 : vector<1x128xf32>
    %117 = arith.mulf %56, %116 : vector<1x128xf32>
    %118 = arith.addf %117, %107 : vector<1x128xf32>
    %119 = arith.mulf %118, %77 : vector<1x128xf32>
    %120 = arith.addf %115, %119 : vector<1x128xf32>
    %cst_52 = arith.constant 4.000000e-02 : f32
    %121 = vector.broadcast %cst_52 : f32 to vector<1x128xf32>
    %122 = arith.subf %121, %70 : vector<1x128xf32>
    %cst_53 = arith.constant 1.500000e+00 : f32
    %123 = vector.broadcast %cst_53 : f32 to vector<1x128xf32>
    %124 = arith.mulf %123, %122 : vector<1x128xf32>
    %125 = arith.addf %124, %108 : vector<1x128xf32>
    %cst_54 = arith.constant 6.250000e-02 : f32
    %126 = vector.broadcast %cst_54 : f32 to vector<1x128xf32>
    %127 = arith.mulf %125, %126 : vector<1x128xf32>
    %128 = arith.addf %70, %127 : vector<1x128xf32>
    %cst_55 = arith.constant 3.000000e-01 : f32
    %129 = vector.broadcast %cst_55 : f32 to vector<1x128xf32>
    %130 = arith.addf %129, %109 : vector<1x128xf32>
    %131 = arith.mulf %130, %78 : vector<1x128xf32>
    %132 = arith.addf %128, %131 : vector<1x128xf32>
    %cst_56 = arith.constant 0.00999999977 : f32
    %133 = vector.broadcast %cst_56 : f32 to vector<1x128xf32>
    %134 = arith.maximumf %132, %133 : vector<1x128xf32>
    %c3_i32 = arith.constant 3 : i32
    %c1_i32_57 = arith.constant 1 : i32
    %135 = arith.subi %c3_i32, %c1_i32_57 : i32
    %136 = arith.index_cast %135 : i32 to index
    %c0_58 = arith.constant 0 : index
    %c0_59 = arith.constant 0 : index
    %137 = vector.load %arg1[%136, %c0_58, %c0_59] : memref<16x2x128xf32, #tpu.memory_space<vmem>>, vector<1x2x128xf32>
    %138 = vector.shape_cast %137 : vector<1x2x128xf32> to vector<2x128xf32>
    %cst_60 = arith.constant 2.500000e-01 : f32
    %139 = vector.broadcast %cst_60 : f32 to vector<2x128xf32>
    %140 = arith.mulf %139, %138 : vector<2x128xf32>
    %141 = vector.extract_strided_slice %140 {offsets = [0, 0], sizes = [1, 128], strides = [1, 1]} : vector<2x128xf32> to vector<1x128xf32>
    %142 = vector.extract_strided_slice %140 {offsets = [1, 0], sizes = [1, 128], strides = [1, 1]} : vector<2x128xf32> to vector<1x128xf32>
    %143 = vector.broadcast %0 : vector<128x1xf32> to vector<128x128xf32>
    %144 = vector.broadcast %120 : vector<1x128xf32> to vector<128x128xf32>
    %145 = arith.mulf %143, %144 : vector<128x128xf32>
    %146 = vector.broadcast %1 : vector<128x1xf32> to vector<128x128xf32>
    %147 = vector.broadcast %134 : vector<1x128xf32> to vector<128x128xf32>
    %148 = arith.mulf %146, %147 : vector<128x128xf32>
    %149 = arith.addf %145, %148 : vector<128x128xf32>
    %c1_i32_61 = arith.constant 1 : i32
    %150 = arith.subi %c3_i32, %c1_i32_61 : i32
    %151 = arith.index_cast %150 : i32 to index
    %c0_62 = arith.constant 0 : index
    %c0_63 = arith.constant 0 : index
    %152 = vector.load %arg2[%151, %c0_62, %c0_63] : memref<16x128x1xf32, #tpu.memory_space<vmem>>, vector<1x128x1xf32>
    %153 = vector.shape_cast %152 : vector<1x128x1xf32> to vector<128x1xf32>
    %154 = vector.broadcast %153 : vector<128x1xf32> to vector<128x128xf32>
    %155 = arith.addf %149, %154 : vector<128x128xf32>
    %cst_64 = arith.constant 0.000000e+00 : f32
    %156 = vector.broadcast %cst_64 : f32 to vector<128x128xf32>
    %157 = arith.maximumf %155, %156 : vector<128x128xf32>
    %c0_65 = arith.constant 0 : index
    %c0_66 = arith.constant 0 : index
    %c0_67 = arith.constant 0 : index
    %158 = vector.load %arg4[%c0_65, %c0_66, %c0_67] : memref<1x128x128xf32, #tpu.memory_space<vmem>>, vector<1x128x128xf32>
    %159 = vector.shape_cast %158 : vector<1x128x128xf32> to vector<128x128xf32>
    %cst_68 = arith.constant dense<0.000000e+00> : vector<128x128xf32>
    %160 = tpu.matmul %159, %157, %cst_68 {dimension_numbers = #tpu.dot_dimension_numbers<[1], [0], [0], [1], [0, 0, 1, 1], [], []>} : vector<128x128xf32>, vector<128x128xf32>, vector<128x128xf32> -> vector<128x128xf32>
    %c0_69 = arith.constant 0 : index
    %c0_70 = arith.constant 0 : index
    %c0_71 = arith.constant 0 : index
    %161 = vector.load %arg5[%c0_69, %c0_70, %c0_71] : memref<1x128x1xf32, #tpu.memory_space<vmem>>, vector<1x128x1xf32>
    %162 = vector.shape_cast %161 : vector<1x128x1xf32> to vector<128x1xf32>
    %163 = vector.broadcast %162 : vector<128x1xf32> to vector<128x128xf32>
    %164 = arith.addf %160, %163 : vector<128x128xf32>
    %cst_72 = arith.constant 0.000000e+00 : f32
    %165 = vector.broadcast %cst_72 : f32 to vector<128x128xf32>
    %166 = arith.maximumf %164, %165 : vector<128x128xf32>
    %cst_73 = arith.constant dense<0.000000e+00> : vector<4x128xf32>
    %167 = tpu.matmul %2, %166, %cst_73 {dimension_numbers = #tpu.dot_dimension_numbers<[1], [0], [0], [1], [0, 0, 1, 1], [], []>} : vector<4x128xf32>, vector<128x128xf32>, vector<4x128xf32> -> vector<4x128xf32>
    %168 = vector.broadcast %3 : vector<4x1xf32> to vector<4x128xf32>
    %169 = arith.addf %167, %168 : vector<4x128xf32>
    %170 = vector.extract_strided_slice %169 {offsets = [0, 0], sizes = [1, 128], strides = [1, 1]} : vector<4x128xf32> to vector<1x128xf32>
    %171 = vector.extract_strided_slice %169 {offsets = [1, 0], sizes = [1, 128], strides = [1, 1]} : vector<4x128xf32> to vector<1x128xf32>
    %172 = vector.extract_strided_slice %169 {offsets = [2, 0], sizes = [1, 128], strides = [1, 1]} : vector<4x128xf32> to vector<1x128xf32>
    %173 = vector.extract_strided_slice %169 {offsets = [3, 0], sizes = [1, 128], strides = [1, 1]} : vector<4x128xf32> to vector<1x128xf32>
    %cst_74 = arith.constant 2.500000e-02 : f32
    %174 = vector.broadcast %cst_74 : f32 to vector<1x128xf32>
    %175 = arith.mulf %120, %174 : vector<1x128xf32>
    %176 = arith.addf %175, %170 : vector<1x128xf32>
    %cst_75 = arith.constant 6.250000e-02 : f32
    %177 = vector.broadcast %cst_75 : f32 to vector<1x128xf32>
    %178 = arith.mulf %176, %177 : vector<1x128xf32>
    %179 = arith.addf %120, %178 : vector<1x128xf32>
    %180 = math.sqrt %134 : vector<1x128xf32>
    %181 = arith.mulf %120, %180 : vector<1x128xf32>
    %182 = arith.addf %181, %171 : vector<1x128xf32>
    %183 = arith.mulf %182, %141 : vector<1x128xf32>
    %184 = arith.addf %179, %183 : vector<1x128xf32>
    %cst_76 = arith.constant 4.000000e-02 : f32
    %185 = vector.broadcast %cst_76 : f32 to vector<1x128xf32>
    %186 = arith.subf %185, %134 : vector<1x128xf32>
    %cst_77 = arith.constant 1.500000e+00 : f32
    %187 = vector.broadcast %cst_77 : f32 to vector<1x128xf32>
    %188 = arith.mulf %187, %186 : vector<1x128xf32>
    %189 = arith.addf %188, %172 : vector<1x128xf32>
    %cst_78 = arith.constant 6.250000e-02 : f32
    %190 = vector.broadcast %cst_78 : f32 to vector<1x128xf32>
    %191 = arith.mulf %189, %190 : vector<1x128xf32>
    %192 = arith.addf %134, %191 : vector<1x128xf32>
    %cst_79 = arith.constant 3.000000e-01 : f32
    %193 = vector.broadcast %cst_79 : f32 to vector<1x128xf32>
    %194 = arith.addf %193, %173 : vector<1x128xf32>
    %195 = arith.mulf %194, %142 : vector<1x128xf32>
    %196 = arith.addf %192, %195 : vector<1x128xf32>
    %cst_80 = arith.constant 0.00999999977 : f32
    %197 = vector.broadcast %cst_80 : f32 to vector<1x128xf32>
    %198 = arith.maximumf %196, %197 : vector<1x128xf32>
    %c4_i32 = arith.constant 4 : i32
    %c1_i32_81 = arith.constant 1 : i32
    %199 = arith.subi %c4_i32, %c1_i32_81 : i32
    %200 = arith.index_cast %199 : i32 to index
    %c0_82 = arith.constant 0 : index
    %c0_83 = arith.constant 0 : index
    %201 = vector.load %arg1[%200, %c0_82, %c0_83] : memref<16x2x128xf32, #tpu.memory_space<vmem>>, vector<1x2x128xf32>
    %202 = vector.shape_cast %201 : vector<1x2x128xf32> to vector<2x128xf32>
    %cst_84 = arith.constant 2.500000e-01 : f32
    %203 = vector.broadcast %cst_84 : f32 to vector<2x128xf32>
    %204 = arith.mulf %203, %202 : vector<2x128xf32>
    %205 = vector.extract_strided_slice %204 {offsets = [0, 0], sizes = [1, 128], strides = [1, 1]} : vector<2x128xf32> to vector<1x128xf32>
    %206 = vector.extract_strided_slice %204 {offsets = [1, 0], sizes = [1, 128], strides = [1, 1]} : vector<2x128xf32> to vector<1x128xf32>
    %207 = vector.broadcast %0 : vector<128x1xf32> to vector<128x128xf32>
    %208 = vector.broadcast %184 : vector<1x128xf32> to vector<128x128xf32>
    %209 = arith.mulf %207, %208 : vector<128x128xf32>
    %210 = vector.broadcast %1 : vector<128x1xf32> to vector<128x128xf32>
    %211 = vector.broadcast %198 : vector<1x128xf32> to vector<128x128xf32>
    %212 = arith.mulf %210, %211 : vector<128x128xf32>
    %213 = arith.addf %209, %212 : vector<128x128xf32>
    %c1_i32_85 = arith.constant 1 : i32
    %214 = arith.subi %c4_i32, %c1_i32_85 : i32
    %215 = arith.index_cast %214 : i32 to index
    %c0_86 = arith.constant 0 : index
    %c0_87 = arith.constant 0 : index
    %216 = vector.load %arg2[%215, %c0_86, %c0_87] : memref<16x128x1xf32, #tpu.memory_space<vmem>>, vector<1x128x1xf32>
    %217 = vector.shape_cast %216 : vector<1x128x1xf32> to vector<128x1xf32>
    %218 = vector.broadcast %217 : vector<128x1xf32> to vector<128x128xf32>
    %219 = arith.addf %213, %218 : vector<128x128xf32>
    %cst_88 = arith.constant 0.000000e+00 : f32
    %220 = vector.broadcast %cst_88 : f32 to vector<128x128xf32>
    %221 = arith.maximumf %219, %220 : vector<128x128xf32>
    %c0_89 = arith.constant 0 : index
    %c0_90 = arith.constant 0 : index
    %c0_91 = arith.constant 0 : index
    %222 = vector.load %arg4[%c0_89, %c0_90, %c0_91] : memref<1x128x128xf32, #tpu.memory_space<vmem>>, vector<1x128x128xf32>
    %223 = vector.shape_cast %222 : vector<1x128x128xf32> to vector<128x128xf32>
    %cst_92 = arith.constant dense<0.000000e+00> : vector<128x128xf32>
    %224 = tpu.matmul %223, %221, %cst_92 {dimension_numbers = #tpu.dot_dimension_numbers<[1], [0], [0], [1], [0, 0, 1, 1], [], []>} : vector<128x128xf32>, vector<128x128xf32>, vector<128x128xf32> -> vector<128x128xf32>
    %c0_93 = arith.constant 0 : index
    %c0_94 = arith.constant 0 : index
    %c0_95 = arith.constant 0 : index
    %225 = vector.load %arg5[%c0_93, %c0_94, %c0_95] : memref<1x128x1xf32, #tpu.memory_space<vmem>>, vector<1x128x1xf32>
    %226 = vector.shape_cast %225 : vector<1x128x1xf32> to vector<128x1xf32>
    %227 = vector.broadcast %226 : vector<128x1xf32> to vector<128x128xf32>
    %228 = arith.addf %224, %227 : vector<128x128xf32>
    %cst_96 = arith.constant 0.000000e+00 : f32
    %229 = vector.broadcast %cst_96 : f32 to vector<128x128xf32>
    %230 = arith.maximumf %228, %229 : vector<128x128xf32>
    %cst_97 = arith.constant dense<0.000000e+00> : vector<4x128xf32>
    %231 = tpu.matmul %2, %230, %cst_97 {dimension_numbers = #tpu.dot_dimension_numbers<[1], [0], [0], [1], [0, 0, 1, 1], [], []>} : vector<4x128xf32>, vector<128x128xf32>, vector<4x128xf32> -> vector<4x128xf32>
    %232 = vector.broadcast %3 : vector<4x1xf32> to vector<4x128xf32>
    %233 = arith.addf %231, %232 : vector<4x128xf32>
    %234 = vector.extract_strided_slice %233 {offsets = [0, 0], sizes = [1, 128], strides = [1, 1]} : vector<4x128xf32> to vector<1x128xf32>
    %235 = vector.extract_strided_slice %233 {offsets = [1, 0], sizes = [1, 128], strides = [1, 1]} : vector<4x128xf32> to vector<1x128xf32>
    %236 = vector.extract_strided_slice %233 {offsets = [2, 0], sizes = [1, 128], strides = [1, 1]} : vector<4x128xf32> to vector<1x128xf32>
    %237 = vector.extract_strided_slice %233 {offsets = [3, 0], sizes = [1, 128], strides = [1, 1]} : vector<4x128xf32> to vector<1x128xf32>
    %cst_98 = arith.constant 2.500000e-02 : f32
    %238 = vector.broadcast %cst_98 : f32 to vector<1x128xf32>
    %239 = arith.mulf %184, %238 : vector<1x128xf32>
    %240 = arith.addf %239, %234 : vector<1x128xf32>
    %cst_99 = arith.constant 6.250000e-02 : f32
    %241 = vector.broadcast %cst_99 : f32 to vector<1x128xf32>
    %242 = arith.mulf %240, %241 : vector<1x128xf32>
    %243 = arith.addf %184, %242 : vector<1x128xf32>
    %244 = math.sqrt %198 : vector<1x128xf32>
    %245 = arith.mulf %184, %244 : vector<1x128xf32>
    %246 = arith.addf %245, %235 : vector<1x128xf32>
    %247 = arith.mulf %246, %205 : vector<1x128xf32>
    %248 = arith.addf %243, %247 : vector<1x128xf32>
    %cst_100 = arith.constant 4.000000e-02 : f32
    %249 = vector.broadcast %cst_100 : f32 to vector<1x128xf32>
    %250 = arith.subf %249, %198 : vector<1x128xf32>
    %cst_101 = arith.constant 1.500000e+00 : f32
    %251 = vector.broadcast %cst_101 : f32 to vector<1x128xf32>
    %252 = arith.mulf %251, %250 : vector<1x128xf32>
    %253 = arith.addf %252, %236 : vector<1x128xf32>
    %cst_102 = arith.constant 6.250000e-02 : f32
    %254 = vector.broadcast %cst_102 : f32 to vector<1x128xf32>
    %255 = arith.mulf %253, %254 : vector<1x128xf32>
    %256 = arith.addf %198, %255 : vector<1x128xf32>
    %cst_103 = arith.constant 3.000000e-01 : f32
    %257 = vector.broadcast %cst_103 : f32 to vector<1x128xf32>
    %258 = arith.addf %257, %237 : vector<1x128xf32>
    %259 = arith.mulf %258, %206 : vector<1x128xf32>
    %260 = arith.addf %256, %259 : vector<1x128xf32>
    %cst_104 = arith.constant 0.00999999977 : f32
    %261 = vector.broadcast %cst_104 : f32 to vector<1x128xf32>
    %262 = arith.maximumf %260, %261 : vector<1x128xf32>
    %c5_i32 = arith.constant 5 : i32
    %c1_i32_105 = arith.constant 1 : i32
    %263 = arith.subi %c5_i32, %c1_i32_105 : i32
    %264 = arith.index_cast %263 : i32 to index
    %c0_106 = arith.constant 0 : index
    %c0_107 = arith.constant 0 : index
    %265 = vector.load %arg1[%264, %c0_106, %c0_107] : memref<16x2x128xf32, #tpu.memory_space<vmem>>, vector<1x2x128xf32>
    %266 = vector.shape_cast %265 : vector<1x2x128xf32> to vector<2x128xf32>
    %cst_108 = arith.constant 2.500000e-01 : f32
    %267 = vector.broadcast %cst_108 : f32 to vector<2x128xf32>
    %268 = arith.mulf %267, %266 : vector<2x128xf32>
    %269 = vector.extract_strided_slice %268 {offsets = [0, 0], sizes = [1, 128], strides = [1, 1]} : vector<2x128xf32> to vector<1x128xf32>
    %270 = vector.extract_strided_slice %268 {offsets = [1, 0], sizes = [1, 128], strides = [1, 1]} : vector<2x128xf32> to vector<1x128xf32>
    %271 = vector.broadcast %0 : vector<128x1xf32> to vector<128x128xf32>
    %272 = vector.broadcast %248 : vector<1x128xf32> to vector<128x128xf32>
    %273 = arith.mulf %271, %272 : vector<128x128xf32>
    %274 = vector.broadcast %1 : vector<128x1xf32> to vector<128x128xf32>
    %275 = vector.broadcast %262 : vector<1x128xf32> to vector<128x128xf32>
    %276 = arith.mulf %274, %275 : vector<128x128xf32>
    %277 = arith.addf %273, %276 : vector<128x128xf32>
    %c1_i32_109 = arith.constant 1 : i32
    %278 = arith.subi %c5_i32, %c1_i32_109 : i32
    %279 = arith.index_cast %278 : i32 to index
    %c0_110 = arith.constant 0 : index
    %c0_111 = arith.constant 0 : index
    %280 = vector.load %arg2[%279, %c0_110, %c0_111] : memref<16x128x1xf32, #tpu.memory_space<vmem>>, vector<1x128x1xf32>
    %281 = vector.shape_cast %280 : vector<1x128x1xf32> to vector<128x1xf32>
    %282 = vector.broadcast %281 : vector<128x1xf32> to vector<128x128xf32>
    %283 = arith.addf %277, %282 : vector<128x128xf32>
    %cst_112 = arith.constant 0.000000e+00 : f32
    %284 = vector.broadcast %cst_112 : f32 to vector<128x128xf32>
    %285 = arith.maximumf %283, %284 : vector<128x128xf32>
    %c0_113 = arith.constant 0 : index
    %c0_114 = arith.constant 0 : index
    %c0_115 = arith.constant 0 : index
    %286 = vector.load %arg4[%c0_113, %c0_114, %c0_115] : memref<1x128x128xf32, #tpu.memory_space<vmem>>, vector<1x128x128xf32>
    %287 = vector.shape_cast %286 : vector<1x128x128xf32> to vector<128x128xf32>
    %cst_116 = arith.constant dense<0.000000e+00> : vector<128x128xf32>
    %288 = tpu.matmul %287, %285, %cst_116 {dimension_numbers = #tpu.dot_dimension_numbers<[1], [0], [0], [1], [0, 0, 1, 1], [], []>} : vector<128x128xf32>, vector<128x128xf32>, vector<128x128xf32> -> vector<128x128xf32>
    %c0_117 = arith.constant 0 : index
    %c0_118 = arith.constant 0 : index
    %c0_119 = arith.constant 0 : index
    %289 = vector.load %arg5[%c0_117, %c0_118, %c0_119] : memref<1x128x1xf32, #tpu.memory_space<vmem>>, vector<1x128x1xf32>
    %290 = vector.shape_cast %289 : vector<1x128x1xf32> to vector<128x1xf32>
    %291 = vector.broadcast %290 : vector<128x1xf32> to vector<128x128xf32>
    %292 = arith.addf %288, %291 : vector<128x128xf32>
    %cst_120 = arith.constant 0.000000e+00 : f32
    %293 = vector.broadcast %cst_120 : f32 to vector<128x128xf32>
    %294 = arith.maximumf %292, %293 : vector<128x128xf32>
    %cst_121 = arith.constant dense<0.000000e+00> : vector<4x128xf32>
    %295 = tpu.matmul %2, %294, %cst_121 {dimension_numbers = #tpu.dot_dimension_numbers<[1], [0], [0], [1], [0, 0, 1, 1], [], []>} : vector<4x128xf32>, vector<128x128xf32>, vector<4x128xf32> -> vector<4x128xf32>
    %296 = vector.broadcast %3 : vector<4x1xf32> to vector<4x128xf32>
    %297 = arith.addf %295, %296 : vector<4x128xf32>
    %298 = vector.extract_strided_slice %297 {offsets = [0, 0], sizes = [1, 128], strides = [1, 1]} : vector<4x128xf32> to vector<1x128xf32>
    %299 = vector.extract_strided_slice %297 {offsets = [1, 0], sizes = [1, 128], strides = [1, 1]} : vector<4x128xf32> to vector<1x128xf32>
    %300 = vector.extract_strided_slice %297 {offsets = [2, 0], sizes = [1, 128], strides = [1, 1]} : vector<4x128xf32> to vector<1x128xf32>
    %301 = vector.extract_strided_slice %297 {offsets = [3, 0], sizes = [1, 128], strides = [1, 1]} : vector<4x128xf32> to vector<1x128xf32>
    %cst_122 = arith.constant 2.500000e-02 : f32
    %302 = vector.broadcast %cst_122 : f32 to vector<1x128xf32>
    %303 = arith.mulf %248, %302 : vector<1x128xf32>
    %304 = arith.addf %303, %298 : vector<1x128xf32>
    %cst_123 = arith.constant 6.250000e-02 : f32
    %305 = vector.broadcast %cst_123 : f32 to vector<1x128xf32>
    %306 = arith.mulf %304, %305 : vector<1x128xf32>
    %307 = arith.addf %248, %306 : vector<1x128xf32>
    %308 = math.sqrt %262 : vector<1x128xf32>
    %309 = arith.mulf %248, %308 : vector<1x128xf32>
    %310 = arith.addf %309, %299 : vector<1x128xf32>
    %311 = arith.mulf %310, %269 : vector<1x128xf32>
    %312 = arith.addf %307, %311 : vector<1x128xf32>
    %cst_124 = arith.constant 4.000000e-02 : f32
    %313 = vector.broadcast %cst_124 : f32 to vector<1x128xf32>
    %314 = arith.subf %313, %262 : vector<1x128xf32>
    %cst_125 = arith.constant 1.500000e+00 : f32
    %315 = vector.broadcast %cst_125 : f32 to vector<1x128xf32>
    %316 = arith.mulf %315, %314 : vector<1x128xf32>
    %317 = arith.addf %316, %300 : vector<1x128xf32>
    %cst_126 = arith.constant 6.250000e-02 : f32
    %318 = vector.broadcast %cst_126 : f32 to vector<1x128xf32>
    %319 = arith.mulf %317, %318 : vector<1x128xf32>
    %320 = arith.addf %262, %319 : vector<1x128xf32>
    %cst_127 = arith.constant 3.000000e-01 : f32
    %321 = vector.broadcast %cst_127 : f32 to vector<1x128xf32>
    %322 = arith.addf %321, %301 : vector<1x128xf32>
    %323 = arith.mulf %322, %270 : vector<1x128xf32>
    %324 = arith.addf %320, %323 : vector<1x128xf32>
    %cst_128 = arith.constant 0.00999999977 : f32
    %325 = vector.broadcast %cst_128 : f32 to vector<1x128xf32>
    %326 = arith.maximumf %324, %325 : vector<1x128xf32>
    %c6_i32 = arith.constant 6 : i32
    %c1_i32_129 = arith.constant 1 : i32
    %327 = arith.subi %c6_i32, %c1_i32_129 : i32
    %328 = arith.index_cast %327 : i32 to index
    %c0_130 = arith.constant 0 : index
    %c0_131 = arith.constant 0 : index
    %329 = vector.load %arg1[%328, %c0_130, %c0_131] : memref<16x2x128xf32, #tpu.memory_space<vmem>>, vector<1x2x128xf32>
    %330 = vector.shape_cast %329 : vector<1x2x128xf32> to vector<2x128xf32>
    %cst_132 = arith.constant 2.500000e-01 : f32
    %331 = vector.broadcast %cst_132 : f32 to vector<2x128xf32>
    %332 = arith.mulf %331, %330 : vector<2x128xf32>
    %333 = vector.extract_strided_slice %332 {offsets = [0, 0], sizes = [1, 128], strides = [1, 1]} : vector<2x128xf32> to vector<1x128xf32>
    %334 = vector.extract_strided_slice %332 {offsets = [1, 0], sizes = [1, 128], strides = [1, 1]} : vector<2x128xf32> to vector<1x128xf32>
    %335 = vector.broadcast %0 : vector<128x1xf32> to vector<128x128xf32>
    %336 = vector.broadcast %312 : vector<1x128xf32> to vector<128x128xf32>
    %337 = arith.mulf %335, %336 : vector<128x128xf32>
    %338 = vector.broadcast %1 : vector<128x1xf32> to vector<128x128xf32>
    %339 = vector.broadcast %326 : vector<1x128xf32> to vector<128x128xf32>
    %340 = arith.mulf %338, %339 : vector<128x128xf32>
    %341 = arith.addf %337, %340 : vector<128x128xf32>
    %c1_i32_133 = arith.constant 1 : i32
    %342 = arith.subi %c6_i32, %c1_i32_133 : i32
    %343 = arith.index_cast %342 : i32 to index
    %c0_134 = arith.constant 0 : index
    %c0_135 = arith.constant 0 : index
    %344 = vector.load %arg2[%343, %c0_134, %c0_135] : memref<16x128x1xf32, #tpu.memory_space<vmem>>, vector<1x128x1xf32>
    %345 = vector.shape_cast %344 : vector<1x128x1xf32> to vector<128x1xf32>
    %346 = vector.broadcast %345 : vector<128x1xf32> to vector<128x128xf32>
    %347 = arith.addf %341, %346 : vector<128x128xf32>
    %cst_136 = arith.constant 0.000000e+00 : f32
    %348 = vector.broadcast %cst_136 : f32 to vector<128x128xf32>
    %349 = arith.maximumf %347, %348 : vector<128x128xf32>
    %c0_137 = arith.constant 0 : index
    %c0_138 = arith.constant 0 : index
    %c0_139 = arith.constant 0 : index
    %350 = vector.load %arg4[%c0_137, %c0_138, %c0_139] : memref<1x128x128xf32, #tpu.memory_space<vmem>>, vector<1x128x128xf32>
    %351 = vector.shape_cast %350 : vector<1x128x128xf32> to vector<128x128xf32>
    %cst_140 = arith.constant dense<0.000000e+00> : vector<128x128xf32>
    %352 = tpu.matmul %351, %349, %cst_140 {dimension_numbers = #tpu.dot_dimension_numbers<[1], [0], [0], [1], [0, 0, 1, 1], [], []>} : vector<128x128xf32>, vector<128x128xf32>, vector<128x128xf32> -> vector<128x128xf32>
    %c0_141 = arith.constant 0 : index
    %c0_142 = arith.constant 0 : index
    %c0_143 = arith.constant 0 : index
    %353 = vector.load %arg5[%c0_141, %c0_142, %c0_143] : memref<1x128x1xf32, #tpu.memory_space<vmem>>, vector<1x128x1xf32>
    %354 = vector.shape_cast %353 : vector<1x128x1xf32> to vector<128x1xf32>
    %355 = vector.broadcast %354 : vector<128x1xf32> to vector<128x128xf32>
    %356 = arith.addf %352, %355 : vector<128x128xf32>
    %cst_144 = arith.constant 0.000000e+00 : f32
    %357 = vector.broadcast %cst_144 : f32 to vector<128x128xf32>
    %358 = arith.maximumf %356, %357 : vector<128x128xf32>
    %cst_145 = arith.constant dense<0.000000e+00> : vector<4x128xf32>
    %359 = tpu.matmul %2, %358, %cst_145 {dimension_numbers = #tpu.dot_dimension_numbers<[1], [0], [0], [1], [0, 0, 1, 1], [], []>} : vector<4x128xf32>, vector<128x128xf32>, vector<4x128xf32> -> vector<4x128xf32>
    %360 = vector.broadcast %3 : vector<4x1xf32> to vector<4x128xf32>
    %361 = arith.addf %359, %360 : vector<4x128xf32>
    %362 = vector.extract_strided_slice %361 {offsets = [0, 0], sizes = [1, 128], strides = [1, 1]} : vector<4x128xf32> to vector<1x128xf32>
    %363 = vector.extract_strided_slice %361 {offsets = [1, 0], sizes = [1, 128], strides = [1, 1]} : vector<4x128xf32> to vector<1x128xf32>
    %364 = vector.extract_strided_slice %361 {offsets = [2, 0], sizes = [1, 128], strides = [1, 1]} : vector<4x128xf32> to vector<1x128xf32>
    %365 = vector.extract_strided_slice %361 {offsets = [3, 0], sizes = [1, 128], strides = [1, 1]} : vector<4x128xf32> to vector<1x128xf32>
    %cst_146 = arith.constant 2.500000e-02 : f32
    %366 = vector.broadcast %cst_146 : f32 to vector<1x128xf32>
    %367 = arith.mulf %312, %366 : vector<1x128xf32>
    %368 = arith.addf %367, %362 : vector<1x128xf32>
    %cst_147 = arith.constant 6.250000e-02 : f32
    %369 = vector.broadcast %cst_147 : f32 to vector<1x128xf32>
    %370 = arith.mulf %368, %369 : vector<1x128xf32>
    %371 = arith.addf %312, %370 : vector<1x128xf32>
    %372 = math.sqrt %326 : vector<1x128xf32>
    %373 = arith.mulf %312, %372 : vector<1x128xf32>
    %374 = arith.addf %373, %363 : vector<1x128xf32>
    %375 = arith.mulf %374, %333 : vector<1x128xf32>
    %376 = arith.addf %371, %375 : vector<1x128xf32>
    %cst_148 = arith.constant 4.000000e-02 : f32
    %377 = vector.broadcast %cst_148 : f32 to vector<1x128xf32>
    %378 = arith.subf %377, %326 : vector<1x128xf32>
    %cst_149 = arith.constant 1.500000e+00 : f32
    %379 = vector.broadcast %cst_149 : f32 to vector<1x128xf32>
    %380 = arith.mulf %379, %378 : vector<1x128xf32>
    %381 = arith.addf %380, %364 : vector<1x128xf32>
    %cst_150 = arith.constant 6.250000e-02 : f32
    %382 = vector.broadcast %cst_150 : f32 to vector<1x128xf32>
    %383 = arith.mulf %381, %382 : vector<1x128xf32>
    %384 = arith.addf %326, %383 : vector<1x128xf32>
    %cst_151 = arith.constant 3.000000e-01 : f32
    %385 = vector.broadcast %cst_151 : f32 to vector<1x128xf32>
    %386 = arith.addf %385, %365 : vector<1x128xf32>
    %387 = arith.mulf %386, %334 : vector<1x128xf32>
    %388 = arith.addf %384, %387 : vector<1x128xf32>
    %cst_152 = arith.constant 0.00999999977 : f32
    %389 = vector.broadcast %cst_152 : f32 to vector<1x128xf32>
    %390 = arith.maximumf %388, %389 : vector<1x128xf32>
    %c7_i32 = arith.constant 7 : i32
    %c1_i32_153 = arith.constant 1 : i32
    %391 = arith.subi %c7_i32, %c1_i32_153 : i32
    %392 = arith.index_cast %391 : i32 to index
    %c0_154 = arith.constant 0 : index
    %c0_155 = arith.constant 0 : index
    %393 = vector.load %arg1[%392, %c0_154, %c0_155] : memref<16x2x128xf32, #tpu.memory_space<vmem>>, vector<1x2x128xf32>
    %394 = vector.shape_cast %393 : vector<1x2x128xf32> to vector<2x128xf32>
    %cst_156 = arith.constant 2.500000e-01 : f32
    %395 = vector.broadcast %cst_156 : f32 to vector<2x128xf32>
    %396 = arith.mulf %395, %394 : vector<2x128xf32>
    %397 = vector.extract_strided_slice %396 {offsets = [0, 0], sizes = [1, 128], strides = [1, 1]} : vector<2x128xf32> to vector<1x128xf32>
    %398 = vector.extract_strided_slice %396 {offsets = [1, 0], sizes = [1, 128], strides = [1, 1]} : vector<2x128xf32> to vector<1x128xf32>
    %399 = vector.broadcast %0 : vector<128x1xf32> to vector<128x128xf32>
    %400 = vector.broadcast %376 : vector<1x128xf32> to vector<128x128xf32>
    %401 = arith.mulf %399, %400 : vector<128x128xf32>
    %402 = vector.broadcast %1 : vector<128x1xf32> to vector<128x128xf32>
    %403 = vector.broadcast %390 : vector<1x128xf32> to vector<128x128xf32>
    %404 = arith.mulf %402, %403 : vector<128x128xf32>
    %405 = arith.addf %401, %404 : vector<128x128xf32>
    %c1_i32_157 = arith.constant 1 : i32
    %406 = arith.subi %c7_i32, %c1_i32_157 : i32
    %407 = arith.index_cast %406 : i32 to index
    %c0_158 = arith.constant 0 : index
    %c0_159 = arith.constant 0 : index
    %408 = vector.load %arg2[%407, %c0_158, %c0_159] : memref<16x128x1xf32, #tpu.memory_space<vmem>>, vector<1x128x1xf32>
    %409 = vector.shape_cast %408 : vector<1x128x1xf32> to vector<128x1xf32>
    %410 = vector.broadcast %409 : vector<128x1xf32> to vector<128x128xf32>
    %411 = arith.addf %405, %410 : vector<128x128xf32>
    %cst_160 = arith.constant 0.000000e+00 : f32
    %412 = vector.broadcast %cst_160 : f32 to vector<128x128xf32>
    %413 = arith.maximumf %411, %412 : vector<128x128xf32>
    %c0_161 = arith.constant 0 : index
    %c0_162 = arith.constant 0 : index
    %c0_163 = arith.constant 0 : index
    %414 = vector.load %arg4[%c0_161, %c0_162, %c0_163] : memref<1x128x128xf32, #tpu.memory_space<vmem>>, vector<1x128x128xf32>
    %415 = vector.shape_cast %414 : vector<1x128x128xf32> to vector<128x128xf32>
    %cst_164 = arith.constant dense<0.000000e+00> : vector<128x128xf32>
    %416 = tpu.matmul %415, %413, %cst_164 {dimension_numbers = #tpu.dot_dimension_numbers<[1], [0], [0], [1], [0, 0, 1, 1], [], []>} : vector<128x128xf32>, vector<128x128xf32>, vector<128x128xf32> -> vector<128x128xf32>
    %c0_165 = arith.constant 0 : index
    %c0_166 = arith.constant 0 : index
    %c0_167 = arith.constant 0 : index
    %417 = vector.load %arg5[%c0_165, %c0_166, %c0_167] : memref<1x128x1xf32, #tpu.memory_space<vmem>>, vector<1x128x1xf32>
    %418 = vector.shape_cast %417 : vector<1x128x1xf32> to vector<128x1xf32>
    %419 = vector.broadcast %418 : vector<128x1xf32> to vector<128x128xf32>
    %420 = arith.addf %416, %419 : vector<128x128xf32>
    %cst_168 = arith.constant 0.000000e+00 : f32
    %421 = vector.broadcast %cst_168 : f32 to vector<128x128xf32>
    %422 = arith.maximumf %420, %421 : vector<128x128xf32>
    %cst_169 = arith.constant dense<0.000000e+00> : vector<4x128xf32>
    %423 = tpu.matmul %2, %422, %cst_169 {dimension_numbers = #tpu.dot_dimension_numbers<[1], [0], [0], [1], [0, 0, 1, 1], [], []>} : vector<4x128xf32>, vector<128x128xf32>, vector<4x128xf32> -> vector<4x128xf32>
    %424 = vector.broadcast %3 : vector<4x1xf32> to vector<4x128xf32>
    %425 = arith.addf %423, %424 : vector<4x128xf32>
    %426 = vector.extract_strided_slice %425 {offsets = [0, 0], sizes = [1, 128], strides = [1, 1]} : vector<4x128xf32> to vector<1x128xf32>
    %427 = vector.extract_strided_slice %425 {offsets = [1, 0], sizes = [1, 128], strides = [1, 1]} : vector<4x128xf32> to vector<1x128xf32>
    %428 = vector.extract_strided_slice %425 {offsets = [2, 0], sizes = [1, 128], strides = [1, 1]} : vector<4x128xf32> to vector<1x128xf32>
    %429 = vector.extract_strided_slice %425 {offsets = [3, 0], sizes = [1, 128], strides = [1, 1]} : vector<4x128xf32> to vector<1x128xf32>
    %cst_170 = arith.constant 2.500000e-02 : f32
    %430 = vector.broadcast %cst_170 : f32 to vector<1x128xf32>
    %431 = arith.mulf %376, %430 : vector<1x128xf32>
    %432 = arith.addf %431, %426 : vector<1x128xf32>
    %cst_171 = arith.constant 6.250000e-02 : f32
    %433 = vector.broadcast %cst_171 : f32 to vector<1x128xf32>
    %434 = arith.mulf %432, %433 : vector<1x128xf32>
    %435 = arith.addf %376, %434 : vector<1x128xf32>
    %436 = math.sqrt %390 : vector<1x128xf32>
    %437 = arith.mulf %376, %436 : vector<1x128xf32>
    %438 = arith.addf %437, %427 : vector<1x128xf32>
    %439 = arith.mulf %438, %397 : vector<1x128xf32>
    %440 = arith.addf %435, %439 : vector<1x128xf32>
    %cst_172 = arith.constant 4.000000e-02 : f32
    %441 = vector.broadcast %cst_172 : f32 to vector<1x128xf32>
    %442 = arith.subf %441, %390 : vector<1x128xf32>
    %cst_173 = arith.constant 1.500000e+00 : f32
    %443 = vector.broadcast %cst_173 : f32 to vector<1x128xf32>
    %444 = arith.mulf %443, %442 : vector<1x128xf32>
    %445 = arith.addf %444, %428 : vector<1x128xf32>
    %cst_174 = arith.constant 6.250000e-02 : f32
    %446 = vector.broadcast %cst_174 : f32 to vector<1x128xf32>
    %447 = arith.mulf %445, %446 : vector<1x128xf32>
    %448 = arith.addf %390, %447 : vector<1x128xf32>
    %cst_175 = arith.constant 3.000000e-01 : f32
    %449 = vector.broadcast %cst_175 : f32 to vector<1x128xf32>
    %450 = arith.addf %449, %429 : vector<1x128xf32>
    %451 = arith.mulf %450, %398 : vector<1x128xf32>
    %452 = arith.addf %448, %451 : vector<1x128xf32>
    %cst_176 = arith.constant 0.00999999977 : f32
    %453 = vector.broadcast %cst_176 : f32 to vector<1x128xf32>
    %454 = arith.maximumf %452, %453 : vector<1x128xf32>
    %c8_i32 = arith.constant 8 : i32
    %c1_i32_177 = arith.constant 1 : i32
    %455 = arith.subi %c8_i32, %c1_i32_177 : i32
    %456 = arith.index_cast %455 : i32 to index
    %c0_178 = arith.constant 0 : index
    %c0_179 = arith.constant 0 : index
    %457 = vector.load %arg1[%456, %c0_178, %c0_179] : memref<16x2x128xf32, #tpu.memory_space<vmem>>, vector<1x2x128xf32>
    %458 = vector.shape_cast %457 : vector<1x2x128xf32> to vector<2x128xf32>
    %cst_180 = arith.constant 2.500000e-01 : f32
    %459 = vector.broadcast %cst_180 : f32 to vector<2x128xf32>
    %460 = arith.mulf %459, %458 : vector<2x128xf32>
    %461 = vector.extract_strided_slice %460 {offsets = [0, 0], sizes = [1, 128], strides = [1, 1]} : vector<2x128xf32> to vector<1x128xf32>
    %462 = vector.extract_strided_slice %460 {offsets = [1, 0], sizes = [1, 128], strides = [1, 1]} : vector<2x128xf32> to vector<1x128xf32>
    %463 = vector.broadcast %0 : vector<128x1xf32> to vector<128x128xf32>
    %464 = vector.broadcast %440 : vector<1x128xf32> to vector<128x128xf32>
    %465 = arith.mulf %463, %464 : vector<128x128xf32>
    %466 = vector.broadcast %1 : vector<128x1xf32> to vector<128x128xf32>
    %467 = vector.broadcast %454 : vector<1x128xf32> to vector<128x128xf32>
    %468 = arith.mulf %466, %467 : vector<128x128xf32>
    %469 = arith.addf %465, %468 : vector<128x128xf32>
    %c1_i32_181 = arith.constant 1 : i32
    %470 = arith.subi %c8_i32, %c1_i32_181 : i32
    %471 = arith.index_cast %470 : i32 to index
    %c0_182 = arith.constant 0 : index
    %c0_183 = arith.constant 0 : index
    %472 = vector.load %arg2[%471, %c0_182, %c0_183] : memref<16x128x1xf32, #tpu.memory_space<vmem>>, vector<1x128x1xf32>
    %473 = vector.shape_cast %472 : vector<1x128x1xf32> to vector<128x1xf32>
    %474 = vector.broadcast %473 : vector<128x1xf32> to vector<128x128xf32>
    %475 = arith.addf %469, %474 : vector<128x128xf32>
    %cst_184 = arith.constant 0.000000e+00 : f32
    %476 = vector.broadcast %cst_184 : f32 to vector<128x128xf32>
    %477 = arith.maximumf %475, %476 : vector<128x128xf32>
    %c0_185 = arith.constant 0 : index
    %c0_186 = arith.constant 0 : index
    %c0_187 = arith.constant 0 : index
    %478 = vector.load %arg4[%c0_185, %c0_186, %c0_187] : memref<1x128x128xf32, #tpu.memory_space<vmem>>, vector<1x128x128xf32>
    %479 = vector.shape_cast %478 : vector<1x128x128xf32> to vector<128x128xf32>
    %cst_188 = arith.constant dense<0.000000e+00> : vector<128x128xf32>
    %480 = tpu.matmul %479, %477, %cst_188 {dimension_numbers = #tpu.dot_dimension_numbers<[1], [0], [0], [1], [0, 0, 1, 1], [], []>} : vector<128x128xf32>, vector<128x128xf32>, vector<128x128xf32> -> vector<128x128xf32>
    %c0_189 = arith.constant 0 : index
    %c0_190 = arith.constant 0 : index
    %c0_191 = arith.constant 0 : index
    %481 = vector.load %arg5[%c0_189, %c0_190, %c0_191] : memref<1x128x1xf32, #tpu.memory_space<vmem>>, vector<1x128x1xf32>
    %482 = vector.shape_cast %481 : vector<1x128x1xf32> to vector<128x1xf32>
    %483 = vector.broadcast %482 : vector<128x1xf32> to vector<128x128xf32>
    %484 = arith.addf %480, %483 : vector<128x128xf32>
    %cst_192 = arith.constant 0.000000e+00 : f32
    %485 = vector.broadcast %cst_192 : f32 to vector<128x128xf32>
    %486 = arith.maximumf %484, %485 : vector<128x128xf32>
    %cst_193 = arith.constant dense<0.000000e+00> : vector<4x128xf32>
    %487 = tpu.matmul %2, %486, %cst_193 {dimension_numbers = #tpu.dot_dimension_numbers<[1], [0], [0], [1], [0, 0, 1, 1], [], []>} : vector<4x128xf32>, vector<128x128xf32>, vector<4x128xf32> -> vector<4x128xf32>
    %488 = vector.broadcast %3 : vector<4x1xf32> to vector<4x128xf32>
    %489 = arith.addf %487, %488 : vector<4x128xf32>
    %490 = vector.extract_strided_slice %489 {offsets = [0, 0], sizes = [1, 128], strides = [1, 1]} : vector<4x128xf32> to vector<1x128xf32>
    %491 = vector.extract_strided_slice %489 {offsets = [1, 0], sizes = [1, 128], strides = [1, 1]} : vector<4x128xf32> to vector<1x128xf32>
    %492 = vector.extract_strided_slice %489 {offsets = [2, 0], sizes = [1, 128], strides = [1, 1]} : vector<4x128xf32> to vector<1x128xf32>
    %493 = vector.extract_strided_slice %489 {offsets = [3, 0], sizes = [1, 128], strides = [1, 1]} : vector<4x128xf32> to vector<1x128xf32>
    %cst_194 = arith.constant 2.500000e-02 : f32
    %494 = vector.broadcast %cst_194 : f32 to vector<1x128xf32>
    %495 = arith.mulf %440, %494 : vector<1x128xf32>
    %496 = arith.addf %495, %490 : vector<1x128xf32>
    %cst_195 = arith.constant 6.250000e-02 : f32
    %497 = vector.broadcast %cst_195 : f32 to vector<1x128xf32>
    %498 = arith.mulf %496, %497 : vector<1x128xf32>
    %499 = arith.addf %440, %498 : vector<1x128xf32>
    %500 = math.sqrt %454 : vector<1x128xf32>
    %501 = arith.mulf %440, %500 : vector<1x128xf32>
    %502 = arith.addf %501, %491 : vector<1x128xf32>
    %503 = arith.mulf %502, %461 : vector<1x128xf32>
    %504 = arith.addf %499, %503 : vector<1x128xf32>
    %cst_196 = arith.constant 4.000000e-02 : f32
    %505 = vector.broadcast %cst_196 : f32 to vector<1x128xf32>
    %506 = arith.subf %505, %454 : vector<1x128xf32>
    %cst_197 = arith.constant 1.500000e+00 : f32
    %507 = vector.broadcast %cst_197 : f32 to vector<1x128xf32>
    %508 = arith.mulf %507, %506 : vector<1x128xf32>
    %509 = arith.addf %508, %492 : vector<1x128xf32>
    %cst_198 = arith.constant 6.250000e-02 : f32
    %510 = vector.broadcast %cst_198 : f32 to vector<1x128xf32>
    %511 = arith.mulf %509, %510 : vector<1x128xf32>
    %512 = arith.addf %454, %511 : vector<1x128xf32>
    %cst_199 = arith.constant 3.000000e-01 : f32
    %513 = vector.broadcast %cst_199 : f32 to vector<1x128xf32>
    %514 = arith.addf %513, %493 : vector<1x128xf32>
    %515 = arith.mulf %514, %462 : vector<1x128xf32>
    %516 = arith.addf %512, %515 : vector<1x128xf32>
    %cst_200 = arith.constant 0.00999999977 : f32
    %517 = vector.broadcast %cst_200 : f32 to vector<1x128xf32>
    %518 = arith.maximumf %516, %517 : vector<1x128xf32>
    %c8_i32_201 = arith.constant 8 : i32
    %519 = arith.cmpf one, %504, %504 : vector<1x128xf32>
    %520 = vector.broadcast %504 : vector<1x128xf32> to vector<8x128xf32>
    %521 = vector.broadcast %4 : vector<8x1xf32> to vector<8x128xf32>
    %522 = arith.subf %520, %521 : vector<8x128xf32>
    %cst_202 = arith.constant 0.000000e+00 : f32
    %523 = vector.broadcast %cst_202 : f32 to vector<8x128xf32>
    %524 = arith.maximumf %522, %523 : vector<8x128xf32>
    %cst_203 = arith.constant 0.000000e+00 : f32
    %525 = vector.shape_cast %519 : vector<1x128xi1> to vector<1x128xi1>
    %526 = vector.broadcast %525 : vector<1x128xi1> to vector<8x128xi1>
    %527 = vector.broadcast %cst_203 : f32 to vector<8x128xf32>
    %528 = arith.select %526, %527, %524 : vector<8x128xi1>, vector<8x128xf32>
    %cst_204 = arith.constant 0.000000e+00 : f32
    %cst_205 = arith.constant 1.000000e+00 : f32
    %529 = vector.broadcast %cst_204 : f32 to vector<1x128xf32>
    %530 = vector.broadcast %cst_205 : f32 to vector<1x128xf32>
    %531 = arith.select %519, %529, %530 : vector<1x128xi1>, vector<1x128xf32>
    %cst_206 = arith.constant dense<0.000000e+00> : vector<8xf32>
    %532 = vector.multi_reduction <add>, %528, %cst_206 [1] : vector<8x128xf32> to vector<8xf32>
    %533 = vector.shape_cast %532 : vector<8xf32> to vector<8x1xf32>
    %534 = vector.shape_cast %533 : vector<8x1xf32> to vector<1x8x1xf32>
    %c0_207 = arith.constant 0 : index
    %c0_208 = arith.constant 0 : index
    %c0_209 = arith.constant 0 : index
    %535 = vector.load %arg9[%c0_207, %c0_208, %c0_209] : memref<2x9x1xf32, #tpu.memory_space<vmem>>, vector<1x8x1xf32>
    tpu.vector_store %arg9[%c0_207, %c0_208, %c0_209], %534 {strides = array<i32>} : memref<2x9x1xf32, #tpu.memory_space<vmem>>, vector<1x8x1xf32>,
    %cst_210 = arith.constant dense<0.000000e+00> : vector<1xf32>
    %536 = vector.multi_reduction <add>, %531, %cst_210 [1] : vector<1x128xf32> to vector<1xf32>
    %537 = vector.shape_cast %536 : vector<1xf32> to vector<1x1xf32>
    %538 = vector.shape_cast %537 : vector<1x1xf32> to vector<1x1x1xf32>
    %c0_211 = arith.constant 0 : index
    %c8 = arith.constant 8 : index
    %c0_212 = arith.constant 0 : index
    %539 = vector.load %arg9[%c0_211, %c8, %c0_212] : memref<2x9x1xf32, #tpu.memory_space<vmem>>, vector<1x1x1xf32>
    tpu.vector_store %arg9[%c0_211, %c8, %c0_212], %538 {strides = array<i32>} : memref<2x9x1xf32, #tpu.memory_space<vmem>>, vector<1x1x1xf32>,
    %c9_i32 = arith.constant 9 : i32
    %c1_i32_213 = arith.constant 1 : i32
    %540 = arith.subi %c9_i32, %c1_i32_213 : i32
    %541 = arith.index_cast %540 : i32 to index
    %c0_214 = arith.constant 0 : index
    %c0_215 = arith.constant 0 : index
    %542 = vector.load %arg1[%541, %c0_214, %c0_215] : memref<16x2x128xf32, #tpu.memory_space<vmem>>, vector<1x2x128xf32>
    %543 = vector.shape_cast %542 : vector<1x2x128xf32> to vector<2x128xf32>
    %cst_216 = arith.constant 2.500000e-01 : f32
    %544 = vector.broadcast %cst_216 : f32 to vector<2x128xf32>
    %545 = arith.mulf %544, %543 : vector<2x128xf32>
    %546 = vector.extract_strided_slice %545 {offsets = [0, 0], sizes = [1, 128], strides = [1, 1]} : vector<2x128xf32> to vector<1x128xf32>
    %547 = vector.extract_strided_slice %545 {offsets = [1, 0], sizes = [1, 128], strides = [1, 1]} : vector<2x128xf32> to vector<1x128xf32>
    %548 = vector.broadcast %0 : vector<128x1xf32> to vector<128x128xf32>
    %549 = vector.broadcast %504 : vector<1x128xf32> to vector<128x128xf32>
    %550 = arith.mulf %548, %549 : vector<128x128xf32>
    %551 = vector.broadcast %1 : vector<128x1xf32> to vector<128x128xf32>
    %552 = vector.broadcast %518 : vector<1x128xf32> to vector<128x128xf32>
    %553 = arith.mulf %551, %552 : vector<128x128xf32>
    %554 = arith.addf %550, %553 : vector<128x128xf32>
    %c1_i32_217 = arith.constant 1 : i32
    %555 = arith.subi %c9_i32, %c1_i32_217 : i32
    %556 = arith.index_cast %555 : i32 to index
    %c0_218 = arith.constant 0 : index
    %c0_219 = arith.constant 0 : index
    %557 = vector.load %arg2[%556, %c0_218, %c0_219] : memref<16x128x1xf32, #tpu.memory_space<vmem>>, vector<1x128x1xf32>
    %558 = vector.shape_cast %557 : vector<1x128x1xf32> to vector<128x1xf32>
    %559 = vector.broadcast %558 : vector<128x1xf32> to vector<128x128xf32>
    %560 = arith.addf %554, %559 : vector<128x128xf32>
    %cst_220 = arith.constant 0.000000e+00 : f32
    %561 = vector.broadcast %cst_220 : f32 to vector<128x128xf32>
    %562 = arith.maximumf %560, %561 : vector<128x128xf32>
    %c0_221 = arith.constant 0 : index
    %c0_222 = arith.constant 0 : index
    %c0_223 = arith.constant 0 : index
    %563 = vector.load %arg4[%c0_221, %c0_222, %c0_223] : memref<1x128x128xf32, #tpu.memory_space<vmem>>, vector<1x128x128xf32>
    %564 = vector.shape_cast %563 : vector<1x128x128xf32> to vector<128x128xf32>
    %cst_224 = arith.constant dense<0.000000e+00> : vector<128x128xf32>
    %565 = tpu.matmul %564, %562, %cst_224 {dimension_numbers = #tpu.dot_dimension_numbers<[1], [0], [0], [1], [0, 0, 1, 1], [], []>} : vector<128x128xf32>, vector<128x128xf32>, vector<128x128xf32> -> vector<128x128xf32>
    %c0_225 = arith.constant 0 : index
    %c0_226 = arith.constant 0 : index
    %c0_227 = arith.constant 0 : index
    %566 = vector.load %arg5[%c0_225, %c0_226, %c0_227] : memref<1x128x1xf32, #tpu.memory_space<vmem>>, vector<1x128x1xf32>
    %567 = vector.shape_cast %566 : vector<1x128x1xf32> to vector<128x1xf32>
    %568 = vector.broadcast %567 : vector<128x1xf32> to vector<128x128xf32>
    %569 = arith.addf %565, %568 : vector<128x128xf32>
    %cst_228 = arith.constant 0.000000e+00 : f32
    %570 = vector.broadcast %cst_228 : f32 to vector<128x128xf32>
    %571 = arith.maximumf %569, %570 : vector<128x128xf32>
    %cst_229 = arith.constant dense<0.000000e+00> : vector<4x128xf32>
    %572 = tpu.matmul %2, %571, %cst_229 {dimension_numbers = #tpu.dot_dimension_numbers<[1], [0], [0], [1], [0, 0, 1, 1], [], []>} : vector<4x128xf32>, vector<128x128xf32>, vector<4x128xf32> -> vector<4x128xf32>
    %573 = vector.broadcast %3 : vector<4x1xf32> to vector<4x128xf32>
    %574 = arith.addf %572, %573 : vector<4x128xf32>
    %575 = vector.extract_strided_slice %574 {offsets = [0, 0], sizes = [1, 128], strides = [1, 1]} : vector<4x128xf32> to vector<1x128xf32>
    %576 = vector.extract_strided_slice %574 {offsets = [1, 0], sizes = [1, 128], strides = [1, 1]} : vector<4x128xf32> to vector<1x128xf32>
    %577 = vector.extract_strided_slice %574 {offsets = [2, 0], sizes = [1, 128], strides = [1, 1]} : vector<4x128xf32> to vector<1x128xf32>
    %578 = vector.extract_strided_slice %574 {offsets = [3, 0], sizes = [1, 128], strides = [1, 1]} : vector<4x128xf32> to vector<1x128xf32>
    %cst_230 = arith.constant 2.500000e-02 : f32
    %579 = vector.broadcast %cst_230 : f32 to vector<1x128xf32>
    %580 = arith.mulf %504, %579 : vector<1x128xf32>
    %581 = arith.addf %580, %575 : vector<1x128xf32>
    %cst_231 = arith.constant 6.250000e-02 : f32
    %582 = vector.broadcast %cst_231 : f32 to vector<1x128xf32>
    %583 = arith.mulf %581, %582 : vector<1x128xf32>
    %584 = arith.addf %504, %583 : vector<1x128xf32>
    %585 = math.sqrt %518 : vector<1x128xf32>
    %586 = arith.mulf %504, %585 : vector<1x128xf32>
    %587 = arith.addf %586, %576 : vector<1x128xf32>
    %588 = arith.mulf %587, %546 : vector<1x128xf32>
    %589 = arith.addf %584, %588 : vector<1x128xf32>
    %cst_232 = arith.constant 4.000000e-02 : f32
    %590 = vector.broadcast %cst_232 : f32 to vector<1x128xf32>
    %591 = arith.subf %590, %518 : vector<1x128xf32>
    %cst_233 = arith.constant 1.500000e+00 : f32
    %592 = vector.broadcast %cst_233 : f32 to vector<1x128xf32>
    %593 = arith.mulf %592, %591 : vector<1x128xf32>
    %594 = arith.addf %593, %577 : vector<1x128xf32>
    %cst_234 = arith.constant 6.250000e-02 : f32
    %595 = vector.broadcast %cst_234 : f32 to vector<1x128xf32>
    %596 = arith.mulf %594, %595 : vector<1x128xf32>
    %597 = arith.addf %518, %596 : vector<1x128xf32>
    %cst_235 = arith.constant 3.000000e-01 : f32
    %598 = vector.broadcast %cst_235 : f32 to vector<1x128xf32>
    %599 = arith.addf %598, %578 : vector<1x128xf32>
    %600 = arith.mulf %599, %547 : vector<1x128xf32>
    %601 = arith.addf %597, %600 : vector<1x128xf32>
    %cst_236 = arith.constant 0.00999999977 : f32
    %602 = vector.broadcast %cst_236 : f32 to vector<1x128xf32>
    %603 = arith.maximumf %601, %602 : vector<1x128xf32>
    %c10_i32 = arith.constant 10 : i32
    %c1_i32_237 = arith.constant 1 : i32
    %604 = arith.subi %c10_i32, %c1_i32_237 : i32
    %605 = arith.index_cast %604 : i32 to index
    %c0_238 = arith.constant 0 : index
    %c0_239 = arith.constant 0 : index
    %606 = vector.load %arg1[%605, %c0_238, %c0_239] : memref<16x2x128xf32, #tpu.memory_space<vmem>>, vector<1x2x128xf32>
    %607 = vector.shape_cast %606 : vector<1x2x128xf32> to vector<2x128xf32>
    %cst_240 = arith.constant 2.500000e-01 : f32
    %608 = vector.broadcast %cst_240 : f32 to vector<2x128xf32>
    %609 = arith.mulf %608, %607 : vector<2x128xf32>
    %610 = vector.extract_strided_slice %609 {offsets = [0, 0], sizes = [1, 128], strides = [1, 1]} : vector<2x128xf32> to vector<1x128xf32>
    %611 = vector.extract_strided_slice %609 {offsets = [1, 0], sizes = [1, 128], strides = [1, 1]} : vector<2x128xf32> to vector<1x128xf32>
    %612 = vector.broadcast %0 : vector<128x1xf32> to vector<128x128xf32>
    %613 = vector.broadcast %589 : vector<1x128xf32> to vector<128x128xf32>
    %614 = arith.mulf %612, %613 : vector<128x128xf32>
    %615 = vector.broadcast %1 : vector<128x1xf32> to vector<128x128xf32>
    %616 = vector.broadcast %603 : vector<1x128xf32> to vector<128x128xf32>
    %617 = arith.mulf %615, %616 : vector<128x128xf32>
    %618 = arith.addf %614, %617 : vector<128x128xf32>
    %c1_i32_241 = arith.constant 1 : i32
    %619 = arith.subi %c10_i32, %c1_i32_241 : i32
    %620 = arith.index_cast %619 : i32 to index
    %c0_242 = arith.constant 0 : index
    %c0_243 = arith.constant 0 : index
    %621 = vector.load %arg2[%620, %c0_242, %c0_243] : memref<16x128x1xf32, #tpu.memory_space<vmem>>, vector<1x128x1xf32>
    %622 = vector.shape_cast %621 : vector<1x128x1xf32> to vector<128x1xf32>
    %623 = vector.broadcast %622 : vector<128x1xf32> to vector<128x128xf32>
    %624 = arith.addf %618, %623 : vector<128x128xf32>
    %cst_244 = arith.constant 0.000000e+00 : f32
    %625 = vector.broadcast %cst_244 : f32 to vector<128x128xf32>
    %626 = arith.maximumf %624, %625 : vector<128x128xf32>
    %c0_245 = arith.constant 0 : index
    %c0_246 = arith.constant 0 : index
    %c0_247 = arith.constant 0 : index
    %627 = vector.load %arg4[%c0_245, %c0_246, %c0_247] : memref<1x128x128xf32, #tpu.memory_space<vmem>>, vector<1x128x128xf32>
    %628 = vector.shape_cast %627 : vector<1x128x128xf32> to vector<128x128xf32>
    %cst_248 = arith.constant dense<0.000000e+00> : vector<128x128xf32>
    %629 = tpu.matmul %628, %626, %cst_248 {dimension_numbers = #tpu.dot_dimension_numbers<[1], [0], [0], [1], [0, 0, 1, 1], [], []>} : vector<128x128xf32>, vector<128x128xf32>, vector<128x128xf32> -> vector<128x128xf32>
    %c0_249 = arith.constant 0 : index
    %c0_250 = arith.constant 0 : index
    %c0_251 = arith.constant 0 : index
    %630 = vector.load %arg5[%c0_249, %c0_250, %c0_251] : memref<1x128x1xf32, #tpu.memory_space<vmem>>, vector<1x128x1xf32>
    %631 = vector.shape_cast %630 : vector<1x128x1xf32> to vector<128x1xf32>
    %632 = vector.broadcast %631 : vector<128x1xf32> to vector<128x128xf32>
    %633 = arith.addf %629, %632 : vector<128x128xf32>
    %cst_252 = arith.constant 0.000000e+00 : f32
    %634 = vector.broadcast %cst_252 : f32 to vector<128x128xf32>
    %635 = arith.maximumf %633, %634 : vector<128x128xf32>
    %cst_253 = arith.constant dense<0.000000e+00> : vector<4x128xf32>
    %636 = tpu.matmul %2, %635, %cst_253 {dimension_numbers = #tpu.dot_dimension_numbers<[1], [0], [0], [1], [0, 0, 1, 1], [], []>} : vector<4x128xf32>, vector<128x128xf32>, vector<4x128xf32> -> vector<4x128xf32>
    %637 = vector.broadcast %3 : vector<4x1xf32> to vector<4x128xf32>
    %638 = arith.addf %636, %637 : vector<4x128xf32>
    %639 = vector.extract_strided_slice %638 {offsets = [0, 0], sizes = [1, 128], strides = [1, 1]} : vector<4x128xf32> to vector<1x128xf32>
    %640 = vector.extract_strided_slice %638 {offsets = [1, 0], sizes = [1, 128], strides = [1, 1]} : vector<4x128xf32> to vector<1x128xf32>
    %641 = vector.extract_strided_slice %638 {offsets = [2, 0], sizes = [1, 128], strides = [1, 1]} : vector<4x128xf32> to vector<1x128xf32>
    %642 = vector.extract_strided_slice %638 {offsets = [3, 0], sizes = [1, 128], strides = [1, 1]} : vector<4x128xf32> to vector<1x128xf32>
    %cst_254 = arith.constant 2.500000e-02 : f32
    %643 = vector.broadcast %cst_254 : f32 to vector<1x128xf32>
    %644 = arith.mulf %589, %643 : vector<1x128xf32>
    %645 = arith.addf %644, %639 : vector<1x128xf32>
    %cst_255 = arith.constant 6.250000e-02 : f32
    %646 = vector.broadcast %cst_255 : f32 to vector<1x128xf32>
    %647 = arith.mulf %645, %646 : vector<1x128xf32>
    %648 = arith.addf %589, %647 : vector<1x128xf32>
    %649 = math.sqrt %603 : vector<1x128xf32>
    %650 = arith.mulf %589, %649 : vector<1x128xf32>
    %651 = arith.addf %650, %640 : vector<1x128xf32>
    %652 = arith.mulf %651, %610 : vector<1x128xf32>
    %653 = arith.addf %648, %652 : vector<1x128xf32>
    %cst_256 = arith.constant 4.000000e-02 : f32
    %654 = vector.broadcast %cst_256 : f32 to vector<1x128xf32>
    %655 = arith.subf %654, %603 : vector<1x128xf32>
    %cst_257 = arith.constant 1.500000e+00 : f32
    %656 = vector.broadcast %cst_257 : f32 to vector<1x128xf32>
    %657 = arith.mulf %656, %655 : vector<1x128xf32>
    %658 = arith.addf %657, %641 : vector<1x128xf32>
    %cst_258 = arith.constant 6.250000e-02 : f32
    %659 = vector.broadcast %cst_258 : f32 to vector<1x128xf32>
    %660 = arith.mulf %658, %659 : vector<1x128xf32>
    %661 = arith.addf %603, %660 : vector<1x128xf32>
    %cst_259 = arith.constant 3.000000e-01 : f32
    %662 = vector.broadcast %cst_259 : f32 to vector<1x128xf32>
    %663 = arith.addf %662, %642 : vector<1x128xf32>
    %664 = arith.mulf %663, %611 : vector<1x128xf32>
    %665 = arith.addf %661, %664 : vector<1x128xf32>
    %cst_260 = arith.constant 0.00999999977 : f32
    %666 = vector.broadcast %cst_260 : f32 to vector<1x128xf32>
    %667 = arith.maximumf %665, %666 : vector<1x128xf32>
    %c11_i32 = arith.constant 11 : i32
    %c1_i32_261 = arith.constant 1 : i32
    %668 = arith.subi %c11_i32, %c1_i32_261 : i32
    %669 = arith.index_cast %668 : i32 to index
    %c0_262 = arith.constant 0 : index
    %c0_263 = arith.constant 0 : index
    %670 = vector.load %arg1[%669, %c0_262, %c0_263] : memref<16x2x128xf32, #tpu.memory_space<vmem>>, vector<1x2x128xf32>
    %671 = vector.shape_cast %670 : vector<1x2x128xf32> to vector<2x128xf32>
    %cst_264 = arith.constant 2.500000e-01 : f32
    %672 = vector.broadcast %cst_264 : f32 to vector<2x128xf32>
    %673 = arith.mulf %672, %671 : vector<2x128xf32>
    %674 = vector.extract_strided_slice %673 {offsets = [0, 0], sizes = [1, 128], strides = [1, 1]} : vector<2x128xf32> to vector<1x128xf32>
    %675 = vector.extract_strided_slice %673 {offsets = [1, 0], sizes = [1, 128], strides = [1, 1]} : vector<2x128xf32> to vector<1x128xf32>
    %676 = vector.broadcast %0 : vector<128x1xf32> to vector<128x128xf32>
    %677 = vector.broadcast %653 : vector<1x128xf32> to vector<128x128xf32>
    %678 = arith.mulf %676, %677 : vector<128x128xf32>
    %679 = vector.broadcast %1 : vector<128x1xf32> to vector<128x128xf32>
    %680 = vector.broadcast %667 : vector<1x128xf32> to vector<128x128xf32>
    %681 = arith.mulf %679, %680 : vector<128x128xf32>
    %682 = arith.addf %678, %681 : vector<128x128xf32>
    %c1_i32_265 = arith.constant 1 : i32
    %683 = arith.subi %c11_i32, %c1_i32_265 : i32
    %684 = arith.index_cast %683 : i32 to index
    %c0_266 = arith.constant 0 : index
    %c0_267 = arith.constant 0 : index
    %685 = vector.load %arg2[%684, %c0_266, %c0_267] : memref<16x128x1xf32, #tpu.memory_space<vmem>>, vector<1x128x1xf32>
    %686 = vector.shape_cast %685 : vector<1x128x1xf32> to vector<128x1xf32>
    %687 = vector.broadcast %686 : vector<128x1xf32> to vector<128x128xf32>
    %688 = arith.addf %682, %687 : vector<128x128xf32>
    %cst_268 = arith.constant 0.000000e+00 : f32
    %689 = vector.broadcast %cst_268 : f32 to vector<128x128xf32>
    %690 = arith.maximumf %688, %689 : vector<128x128xf32>
    %c0_269 = arith.constant 0 : index
    %c0_270 = arith.constant 0 : index
    %c0_271 = arith.constant 0 : index
    %691 = vector.load %arg4[%c0_269, %c0_270, %c0_271] : memref<1x128x128xf32, #tpu.memory_space<vmem>>, vector<1x128x128xf32>
    %692 = vector.shape_cast %691 : vector<1x128x128xf32> to vector<128x128xf32>
    %cst_272 = arith.constant dense<0.000000e+00> : vector<128x128xf32>
    %693 = tpu.matmul %692, %690, %cst_272 {dimension_numbers = #tpu.dot_dimension_numbers<[1], [0], [0], [1], [0, 0, 1, 1], [], []>} : vector<128x128xf32>, vector<128x128xf32>, vector<128x128xf32> -> vector<128x128xf32>
    %c0_273 = arith.constant 0 : index
    %c0_274 = arith.constant 0 : index
    %c0_275 = arith.constant 0 : index
    %694 = vector.load %arg5[%c0_273, %c0_274, %c0_275] : memref<1x128x1xf32, #tpu.memory_space<vmem>>, vector<1x128x1xf32>
    %695 = vector.shape_cast %694 : vector<1x128x1xf32> to vector<128x1xf32>
    %696 = vector.broadcast %695 : vector<128x1xf32> to vector<128x128xf32>
    %697 = arith.addf %693, %696 : vector<128x128xf32>
    %cst_276 = arith.constant 0.000000e+00 : f32
    %698 = vector.broadcast %cst_276 : f32 to vector<128x128xf32>
    %699 = arith.maximumf %697, %698 : vector<128x128xf32>
    %cst_277 = arith.constant dense<0.000000e+00> : vector<4x128xf32>
    %700 = tpu.matmul %2, %699, %cst_277 {dimension_numbers = #tpu.dot_dimension_numbers<[1], [0], [0], [1], [0, 0, 1, 1], [], []>} : vector<4x128xf32>, vector<128x128xf32>, vector<4x128xf32> -> vector<4x128xf32>
    %701 = vector.broadcast %3 : vector<4x1xf32> to vector<4x128xf32>
    %702 = arith.addf %700, %701 : vector<4x128xf32>
    %703 = vector.extract_strided_slice %702 {offsets = [0, 0], sizes = [1, 128], strides = [1, 1]} : vector<4x128xf32> to vector<1x128xf32>
    %704 = vector.extract_strided_slice %702 {offsets = [1, 0], sizes = [1, 128], strides = [1, 1]} : vector<4x128xf32> to vector<1x128xf32>
    %705 = vector.extract_strided_slice %702 {offsets = [2, 0], sizes = [1, 128], strides = [1, 1]} : vector<4x128xf32> to vector<1x128xf32>
    %706 = vector.extract_strided_slice %702 {offsets = [3, 0], sizes = [1, 128], strides = [1, 1]} : vector<4x128xf32> to vector<1x128xf32>
    %cst_278 = arith.constant 2.500000e-02 : f32
    %707 = vector.broadcast %cst_278 : f32 to vector<1x128xf32>
    %708 = arith.mulf %653, %707 : vector<1x128xf32>
    %709 = arith.addf %708, %703 : vector<1x128xf32>
    %cst_279 = arith.constant 6.250000e-02 : f32
    %710 = vector.broadcast %cst_279 : f32 to vector<1x128xf32>
    %711 = arith.mulf %709, %710 : vector<1x128xf32>
    %712 = arith.addf %653, %711 : vector<1x128xf32>
    %713 = math.sqrt %667 : vector<1x128xf32>
    %714 = arith.mulf %653, %713 : vector<1x128xf32>
    %715 = arith.addf %714, %704 : vector<1x128xf32>
    %716 = arith.mulf %715, %674 : vector<1x128xf32>
    %717 = arith.addf %712, %716 : vector<1x128xf32>
    %cst_280 = arith.constant 4.000000e-02 : f32
    %718 = vector.broadcast %cst_280 : f32 to vector<1x128xf32>
    %719 = arith.subf %718, %667 : vector<1x128xf32>
    %cst_281 = arith.constant 1.500000e+00 : f32
    %720 = vector.broadcast %cst_281 : f32 to vector<1x128xf32>
    %721 = arith.mulf %720, %719 : vector<1x128xf32>
    %722 = arith.addf %721, %705 : vector<1x128xf32>
    %cst_282 = arith.constant 6.250000e-02 : f32
    %723 = vector.broadcast %cst_282 : f32 to vector<1x128xf32>
    %724 = arith.mulf %722, %723 : vector<1x128xf32>
    %725 = arith.addf %667, %724 : vector<1x128xf32>
    %cst_283 = arith.constant 3.000000e-01 : f32
    %726 = vector.broadcast %cst_283 : f32 to vector<1x128xf32>
    %727 = arith.addf %726, %706 : vector<1x128xf32>
    %728 = arith.mulf %727, %675 : vector<1x128xf32>
    %729 = arith.addf %725, %728 : vector<1x128xf32>
    %cst_284 = arith.constant 0.00999999977 : f32
    %730 = vector.broadcast %cst_284 : f32 to vector<1x128xf32>
    %731 = arith.maximumf %729, %730 : vector<1x128xf32>
    %c12_i32 = arith.constant 12 : i32
    %c1_i32_285 = arith.constant 1 : i32
    %732 = arith.subi %c12_i32, %c1_i32_285 : i32
    %733 = arith.index_cast %732 : i32 to index
    %c0_286 = arith.constant 0 : index
    %c0_287 = arith.constant 0 : index
    %734 = vector.load %arg1[%733, %c0_286, %c0_287] : memref<16x2x128xf32, #tpu.memory_space<vmem>>, vector<1x2x128xf32>
    %735 = vector.shape_cast %734 : vector<1x2x128xf32> to vector<2x128xf32>
    %cst_288 = arith.constant 2.500000e-01 : f32
    %736 = vector.broadcast %cst_288 : f32 to vector<2x128xf32>
    %737 = arith.mulf %736, %735 : vector<2x128xf32>
    %738 = vector.extract_strided_slice %737 {offsets = [0, 0], sizes = [1, 128], strides = [1, 1]} : vector<2x128xf32> to vector<1x128xf32>
    %739 = vector.extract_strided_slice %737 {offsets = [1, 0], sizes = [1, 128], strides = [1, 1]} : vector<2x128xf32> to vector<1x128xf32>
    %740 = vector.broadcast %0 : vector<128x1xf32> to vector<128x128xf32>
    %741 = vector.broadcast %717 : vector<1x128xf32> to vector<128x128xf32>
    %742 = arith.mulf %740, %741 : vector<128x128xf32>
    %743 = vector.broadcast %1 : vector<128x1xf32> to vector<128x128xf32>
    %744 = vector.broadcast %731 : vector<1x128xf32> to vector<128x128xf32>
    %745 = arith.mulf %743, %744 : vector<128x128xf32>
    %746 = arith.addf %742, %745 : vector<128x128xf32>
    %c1_i32_289 = arith.constant 1 : i32
    %747 = arith.subi %c12_i32, %c1_i32_289 : i32
    %748 = arith.index_cast %747 : i32 to index
    %c0_290 = arith.constant 0 : index
    %c0_291 = arith.constant 0 : index
    %749 = vector.load %arg2[%748, %c0_290, %c0_291] : memref<16x128x1xf32, #tpu.memory_space<vmem>>, vector<1x128x1xf32>
    %750 = vector.shape_cast %749 : vector<1x128x1xf32> to vector<128x1xf32>
    %751 = vector.broadcast %750 : vector<128x1xf32> to vector<128x128xf32>
    %752 = arith.addf %746, %751 : vector<128x128xf32>
    %cst_292 = arith.constant 0.000000e+00 : f32
    %753 = vector.broadcast %cst_292 : f32 to vector<128x128xf32>
    %754 = arith.maximumf %752, %753 : vector<128x128xf32>
    %c0_293 = arith.constant 0 : index
    %c0_294 = arith.constant 0 : index
    %c0_295 = arith.constant 0 : index
    %755 = vector.load %arg4[%c0_293, %c0_294, %c0_295] : memref<1x128x128xf32, #tpu.memory_space<vmem>>, vector<1x128x128xf32>
    %756 = vector.shape_cast %755 : vector<1x128x128xf32> to vector<128x128xf32>
    %cst_296 = arith.constant dense<0.000000e+00> : vector<128x128xf32>
    %757 = tpu.matmul %756, %754, %cst_296 {dimension_numbers = #tpu.dot_dimension_numbers<[1], [0], [0], [1], [0, 0, 1, 1], [], []>} : vector<128x128xf32>, vector<128x128xf32>, vector<128x128xf32> -> vector<128x128xf32>
    %c0_297 = arith.constant 0 : index
    %c0_298 = arith.constant 0 : index
    %c0_299 = arith.constant 0 : index
    %758 = vector.load %arg5[%c0_297, %c0_298, %c0_299] : memref<1x128x1xf32, #tpu.memory_space<vmem>>, vector<1x128x1xf32>
    %759 = vector.shape_cast %758 : vector<1x128x1xf32> to vector<128x1xf32>
    %760 = vector.broadcast %759 : vector<128x1xf32> to vector<128x128xf32>
    %761 = arith.addf %757, %760 : vector<128x128xf32>
    %cst_300 = arith.constant 0.000000e+00 : f32
    %762 = vector.broadcast %cst_300 : f32 to vector<128x128xf32>
    %763 = arith.maximumf %761, %762 : vector<128x128xf32>
    %cst_301 = arith.constant dense<0.000000e+00> : vector<4x128xf32>
    %764 = tpu.matmul %2, %763, %cst_301 {dimension_numbers = #tpu.dot_dimension_numbers<[1], [0], [0], [1], [0, 0, 1, 1], [], []>} : vector<4x128xf32>, vector<128x128xf32>, vector<4x128xf32> -> vector<4x128xf32>
    %765 = vector.broadcast %3 : vector<4x1xf32> to vector<4x128xf32>
    %766 = arith.addf %764, %765 : vector<4x128xf32>
    %767 = vector.extract_strided_slice %766 {offsets = [0, 0], sizes = [1, 128], strides = [1, 1]} : vector<4x128xf32> to vector<1x128xf32>
    %768 = vector.extract_strided_slice %766 {offsets = [1, 0], sizes = [1, 128], strides = [1, 1]} : vector<4x128xf32> to vector<1x128xf32>
    %769 = vector.extract_strided_slice %766 {offsets = [2, 0], sizes = [1, 128], strides = [1, 1]} : vector<4x128xf32> to vector<1x128xf32>
    %770 = vector.extract_strided_slice %766 {offsets = [3, 0], sizes = [1, 128], strides = [1, 1]} : vector<4x128xf32> to vector<1x128xf32>
    %cst_302 = arith.constant 2.500000e-02 : f32
    %771 = vector.broadcast %cst_302 : f32 to vector<1x128xf32>
    %772 = arith.mulf %717, %771 : vector<1x128xf32>
    %773 = arith.addf %772, %767 : vector<1x128xf32>
    %cst_303 = arith.constant 6.250000e-02 : f32
    %774 = vector.broadcast %cst_303 : f32 to vector<1x128xf32>
    %775 = arith.mulf %773, %774 : vector<1x128xf32>
    %776 = arith.addf %717, %775 : vector<1x128xf32>
    %777 = math.sqrt %731 : vector<1x128xf32>
    %778 = arith.mulf %717, %777 : vector<1x128xf32>
    %779 = arith.addf %778, %768 : vector<1x128xf32>
    %780 = arith.mulf %779, %738 : vector<1x128xf32>
    %781 = arith.addf %776, %780 : vector<1x128xf32>
    %cst_304 = arith.constant 4.000000e-02 : f32
    %782 = vector.broadcast %cst_304 : f32 to vector<1x128xf32>
    %783 = arith.subf %782, %731 : vector<1x128xf32>
    %cst_305 = arith.constant 1.500000e+00 : f32
    %784 = vector.broadcast %cst_305 : f32 to vector<1x128xf32>
    %785 = arith.mulf %784, %783 : vector<1x128xf32>
    %786 = arith.addf %785, %769 : vector<1x128xf32>
    %cst_306 = arith.constant 6.250000e-02 : f32
    %787 = vector.broadcast %cst_306 : f32 to vector<1x128xf32>
    %788 = arith.mulf %786, %787 : vector<1x128xf32>
    %789 = arith.addf %731, %788 : vector<1x128xf32>
    %cst_307 = arith.constant 3.000000e-01 : f32
    %790 = vector.broadcast %cst_307 : f32 to vector<1x128xf32>
    %791 = arith.addf %790, %770 : vector<1x128xf32>
    %792 = arith.mulf %791, %739 : vector<1x128xf32>
    %793 = arith.addf %789, %792 : vector<1x128xf32>
    %cst_308 = arith.constant 0.00999999977 : f32
    %794 = vector.broadcast %cst_308 : f32 to vector<1x128xf32>
    %795 = arith.maximumf %793, %794 : vector<1x128xf32>
    %c13_i32 = arith.constant 13 : i32
    %c1_i32_309 = arith.constant 1 : i32
    %796 = arith.subi %c13_i32, %c1_i32_309 : i32
    %797 = arith.index_cast %796 : i32 to index
    %c0_310 = arith.constant 0 : index
    %c0_311 = arith.constant 0 : index
    %798 = vector.load %arg1[%797, %c0_310, %c0_311] : memref<16x2x128xf32, #tpu.memory_space<vmem>>, vector<1x2x128xf32>
    %799 = vector.shape_cast %798 : vector<1x2x128xf32> to vector<2x128xf32>
    %cst_312 = arith.constant 2.500000e-01 : f32
    %800 = vector.broadcast %cst_312 : f32 to vector<2x128xf32>
    %801 = arith.mulf %800, %799 : vector<2x128xf32>
    %802 = vector.extract_strided_slice %801 {offsets = [0, 0], sizes = [1, 128], strides = [1, 1]} : vector<2x128xf32> to vector<1x128xf32>
    %803 = vector.extract_strided_slice %801 {offsets = [1, 0], sizes = [1, 128], strides = [1, 1]} : vector<2x128xf32> to vector<1x128xf32>
    %804 = vector.broadcast %0 : vector<128x1xf32> to vector<128x128xf32>
    %805 = vector.broadcast %781 : vector<1x128xf32> to vector<128x128xf32>
    %806 = arith.mulf %804, %805 : vector<128x128xf32>
    %807 = vector.broadcast %1 : vector<128x1xf32> to vector<128x128xf32>
    %808 = vector.broadcast %795 : vector<1x128xf32> to vector<128x128xf32>
    %809 = arith.mulf %807, %808 : vector<128x128xf32>
    %810 = arith.addf %806, %809 : vector<128x128xf32>
    %c1_i32_313 = arith.constant 1 : i32
    %811 = arith.subi %c13_i32, %c1_i32_313 : i32
    %812 = arith.index_cast %811 : i32 to index
    %c0_314 = arith.constant 0 : index
    %c0_315 = arith.constant 0 : index
    %813 = vector.load %arg2[%812, %c0_314, %c0_315] : memref<16x128x1xf32, #tpu.memory_space<vmem>>, vector<1x128x1xf32>
    %814 = vector.shape_cast %813 : vector<1x128x1xf32> to vector<128x1xf32>
    %815 = vector.broadcast %814 : vector<128x1xf32> to vector<128x128xf32>
    %816 = arith.addf %810, %815 : vector<128x128xf32>
    %cst_316 = arith.constant 0.000000e+00 : f32
    %817 = vector.broadcast %cst_316 : f32 to vector<128x128xf32>
    %818 = arith.maximumf %816, %817 : vector<128x128xf32>
    %c0_317 = arith.constant 0 : index
    %c0_318 = arith.constant 0 : index
    %c0_319 = arith.constant 0 : index
    %819 = vector.load %arg4[%c0_317, %c0_318, %c0_319] : memref<1x128x128xf32, #tpu.memory_space<vmem>>, vector<1x128x128xf32>
    %820 = vector.shape_cast %819 : vector<1x128x128xf32> to vector<128x128xf32>
    %cst_320 = arith.constant dense<0.000000e+00> : vector<128x128xf32>
    %821 = tpu.matmul %820, %818, %cst_320 {dimension_numbers = #tpu.dot_dimension_numbers<[1], [0], [0], [1], [0, 0, 1, 1], [], []>} : vector<128x128xf32>, vector<128x128xf32>, vector<128x128xf32> -> vector<128x128xf32>
    %c0_321 = arith.constant 0 : index
    %c0_322 = arith.constant 0 : index
    %c0_323 = arith.constant 0 : index
    %822 = vector.load %arg5[%c0_321, %c0_322, %c0_323] : memref<1x128x1xf32, #tpu.memory_space<vmem>>, vector<1x128x1xf32>
    %823 = vector.shape_cast %822 : vector<1x128x1xf32> to vector<128x1xf32>
    %824 = vector.broadcast %823 : vector<128x1xf32> to vector<128x128xf32>
    %825 = arith.addf %821, %824 : vector<128x128xf32>
    %cst_324 = arith.constant 0.000000e+00 : f32
    %826 = vector.broadcast %cst_324 : f32 to vector<128x128xf32>
    %827 = arith.maximumf %825, %826 : vector<128x128xf32>
    %cst_325 = arith.constant dense<0.000000e+00> : vector<4x128xf32>
    %828 = tpu.matmul %2, %827, %cst_325 {dimension_numbers = #tpu.dot_dimension_numbers<[1], [0], [0], [1], [0, 0, 1, 1], [], []>} : vector<4x128xf32>, vector<128x128xf32>, vector<4x128xf32> -> vector<4x128xf32>
    %829 = vector.broadcast %3 : vector<4x1xf32> to vector<4x128xf32>
    %830 = arith.addf %828, %829 : vector<4x128xf32>
    %831 = vector.extract_strided_slice %830 {offsets = [0, 0], sizes = [1, 128], strides = [1, 1]} : vector<4x128xf32> to vector<1x128xf32>
    %832 = vector.extract_strided_slice %830 {offsets = [1, 0], sizes = [1, 128], strides = [1, 1]} : vector<4x128xf32> to vector<1x128xf32>
    %833 = vector.extract_strided_slice %830 {offsets = [2, 0], sizes = [1, 128], strides = [1, 1]} : vector<4x128xf32> to vector<1x128xf32>
    %834 = vector.extract_strided_slice %830 {offsets = [3, 0], sizes = [1, 128], strides = [1, 1]} : vector<4x128xf32> to vector<1x128xf32>
    %cst_326 = arith.constant 2.500000e-02 : f32
    %835 = vector.broadcast %cst_326 : f32 to vector<1x128xf32>
    %836 = arith.mulf %781, %835 : vector<1x128xf32>
    %837 = arith.addf %836, %831 : vector<1x128xf32>
    %cst_327 = arith.constant 6.250000e-02 : f32
    %838 = vector.broadcast %cst_327 : f32 to vector<1x128xf32>
    %839 = arith.mulf %837, %838 : vector<1x128xf32>
    %840 = arith.addf %781, %839 : vector<1x128xf32>
    %841 = math.sqrt %795 : vector<1x128xf32>
    %842 = arith.mulf %781, %841 : vector<1x128xf32>
    %843 = arith.addf %842, %832 : vector<1x128xf32>
    %844 = arith.mulf %843, %802 : vector<1x128xf32>
    %845 = arith.addf %840, %844 : vector<1x128xf32>
    %cst_328 = arith.constant 4.000000e-02 : f32
    %846 = vector.broadcast %cst_328 : f32 to vector<1x128xf32>
    %847 = arith.subf %846, %795 : vector<1x128xf32>
    %cst_329 = arith.constant 1.500000e+00 : f32
    %848 = vector.broadcast %cst_329 : f32 to vector<1x128xf32>
    %849 = arith.mulf %848, %847 : vector<1x128xf32>
    %850 = arith.addf %849, %833 : vector<1x128xf32>
    %cst_330 = arith.constant 6.250000e-02 : f32
    %851 = vector.broadcast %cst_330 : f32 to vector<1x128xf32>
    %852 = arith.mulf %850, %851 : vector<1x128xf32>
    %853 = arith.addf %795, %852 : vector<1x128xf32>
    %cst_331 = arith.constant 3.000000e-01 : f32
    %854 = vector.broadcast %cst_331 : f32 to vector<1x128xf32>
    %855 = arith.addf %854, %834 : vector<1x128xf32>
    %856 = arith.mulf %855, %803 : vector<1x128xf32>
    %857 = arith.addf %853, %856 : vector<1x128xf32>
    %cst_332 = arith.constant 0.00999999977 : f32
    %858 = vector.broadcast %cst_332 : f32 to vector<1x128xf32>
    %859 = arith.maximumf %857, %858 : vector<1x128xf32>
    %c14_i32 = arith.constant 14 : i32
    %c1_i32_333 = arith.constant 1 : i32
    %860 = arith.subi %c14_i32, %c1_i32_333 : i32
    %861 = arith.index_cast %860 : i32 to index
    %c0_334 = arith.constant 0 : index
    %c0_335 = arith.constant 0 : index
    %862 = vector.load %arg1[%861, %c0_334, %c0_335] : memref<16x2x128xf32, #tpu.memory_space<vmem>>, vector<1x2x128xf32>
    %863 = vector.shape_cast %862 : vector<1x2x128xf32> to vector<2x128xf32>
    %cst_336 = arith.constant 2.500000e-01 : f32
    %864 = vector.broadcast %cst_336 : f32 to vector<2x128xf32>
    %865 = arith.mulf %864, %863 : vector<2x128xf32>
    %866 = vector.extract_strided_slice %865 {offsets = [0, 0], sizes = [1, 128], strides = [1, 1]} : vector<2x128xf32> to vector<1x128xf32>
    %867 = vector.extract_strided_slice %865 {offsets = [1, 0], sizes = [1, 128], strides = [1, 1]} : vector<2x128xf32> to vector<1x128xf32>
    %868 = vector.broadcast %0 : vector<128x1xf32> to vector<128x128xf32>
    %869 = vector.broadcast %845 : vector<1x128xf32> to vector<128x128xf32>
    %870 = arith.mulf %868, %869 : vector<128x128xf32>
    %871 = vector.broadcast %1 : vector<128x1xf32> to vector<128x128xf32>
    %872 = vector.broadcast %859 : vector<1x128xf32> to vector<128x128xf32>
    %873 = arith.mulf %871, %872 : vector<128x128xf32>
    %874 = arith.addf %870, %873 : vector<128x128xf32>
    %c1_i32_337 = arith.constant 1 : i32
    %875 = arith.subi %c14_i32, %c1_i32_337 : i32
    %876 = arith.index_cast %875 : i32 to index
    %c0_338 = arith.constant 0 : index
    %c0_339 = arith.constant 0 : index
    %877 = vector.load %arg2[%876, %c0_338, %c0_339] : memref<16x128x1xf32, #tpu.memory_space<vmem>>, vector<1x128x1xf32>
    %878 = vector.shape_cast %877 : vector<1x128x1xf32> to vector<128x1xf32>
    %879 = vector.broadcast %878 : vector<128x1xf32> to vector<128x128xf32>
    %880 = arith.addf %874, %879 : vector<128x128xf32>
    %cst_340 = arith.constant 0.000000e+00 : f32
    %881 = vector.broadcast %cst_340 : f32 to vector<128x128xf32>
    %882 = arith.maximumf %880, %881 : vector<128x128xf32>
    %c0_341 = arith.constant 0 : index
    %c0_342 = arith.constant 0 : index
    %c0_343 = arith.constant 0 : index
    %883 = vector.load %arg4[%c0_341, %c0_342, %c0_343] : memref<1x128x128xf32, #tpu.memory_space<vmem>>, vector<1x128x128xf32>
    %884 = vector.shape_cast %883 : vector<1x128x128xf32> to vector<128x128xf32>
    %cst_344 = arith.constant dense<0.000000e+00> : vector<128x128xf32>
    %885 = tpu.matmul %884, %882, %cst_344 {dimension_numbers = #tpu.dot_dimension_numbers<[1], [0], [0], [1], [0, 0, 1, 1], [], []>} : vector<128x128xf32>, vector<128x128xf32>, vector<128x128xf32> -> vector<128x128xf32>
    %c0_345 = arith.constant 0 : index
    %c0_346 = arith.constant 0 : index
    %c0_347 = arith.constant 0 : index
    %886 = vector.load %arg5[%c0_345, %c0_346, %c0_347] : memref<1x128x1xf32, #tpu.memory_space<vmem>>, vector<1x128x1xf32>
    %887 = vector.shape_cast %886 : vector<1x128x1xf32> to vector<128x1xf32>
    %888 = vector.broadcast %887 : vector<128x1xf32> to vector<128x128xf32>
    %889 = arith.addf %885, %888 : vector<128x128xf32>
    %cst_348 = arith.constant 0.000000e+00 : f32
    %890 = vector.broadcast %cst_348 : f32 to vector<128x128xf32>
    %891 = arith.maximumf %889, %890 : vector<128x128xf32>
    %cst_349 = arith.constant dense<0.000000e+00> : vector<4x128xf32>
    %892 = tpu.matmul %2, %891, %cst_349 {dimension_numbers = #tpu.dot_dimension_numbers<[1], [0], [0], [1], [0, 0, 1, 1], [], []>} : vector<4x128xf32>, vector<128x128xf32>, vector<4x128xf32> -> vector<4x128xf32>
    %893 = vector.broadcast %3 : vector<4x1xf32> to vector<4x128xf32>
    %894 = arith.addf %892, %893 : vector<4x128xf32>
    %895 = vector.extract_strided_slice %894 {offsets = [0, 0], sizes = [1, 128], strides = [1, 1]} : vector<4x128xf32> to vector<1x128xf32>
    %896 = vector.extract_strided_slice %894 {offsets = [1, 0], sizes = [1, 128], strides = [1, 1]} : vector<4x128xf32> to vector<1x128xf32>
    %897 = vector.extract_strided_slice %894 {offsets = [2, 0], sizes = [1, 128], strides = [1, 1]} : vector<4x128xf32> to vector<1x128xf32>
    %898 = vector.extract_strided_slice %894 {offsets = [3, 0], sizes = [1, 128], strides = [1, 1]} : vector<4x128xf32> to vector<1x128xf32>
    %cst_350 = arith.constant 2.500000e-02 : f32
    %899 = vector.broadcast %cst_350 : f32 to vector<1x128xf32>
    %900 = arith.mulf %845, %899 : vector<1x128xf32>
    %901 = arith.addf %900, %895 : vector<1x128xf32>
    %cst_351 = arith.constant 6.250000e-02 : f32
    %902 = vector.broadcast %cst_351 : f32 to vector<1x128xf32>
    %903 = arith.mulf %901, %902 : vector<1x128xf32>
    %904 = arith.addf %845, %903 : vector<1x128xf32>
    %905 = math.sqrt %859 : vector<1x128xf32>
    %906 = arith.mulf %845, %905 : vector<1x128xf32>
    %907 = arith.addf %906, %896 : vector<1x128xf32>
    %908 = arith.mulf %907, %866 : vector<1x128xf32>
    %909 = arith.addf %904, %908 : vector<1x128xf32>
    %cst_352 = arith.constant 4.000000e-02 : f32
    %910 = vector.broadcast %cst_352 : f32 to vector<1x128xf32>
    %911 = arith.subf %910, %859 : vector<1x128xf32>
    %cst_353 = arith.constant 1.500000e+00 : f32
    %912 = vector.broadcast %cst_353 : f32 to vector<1x128xf32>
    %913 = arith.mulf %912, %911 : vector<1x128xf32>
    %914 = arith.addf %913, %897 : vector<1x128xf32>
    %cst_354 = arith.constant 6.250000e-02 : f32
    %915 = vector.broadcast %cst_354 : f32 to vector<1x128xf32>
    %916 = arith.mulf %914, %915 : vector<1x128xf32>
    %917 = arith.addf %859, %916 : vector<1x128xf32>
    %cst_355 = arith.constant 3.000000e-01 : f32
    %918 = vector.broadcast %cst_355 : f32 to vector<1x128xf32>
    %919 = arith.addf %918, %898 : vector<1x128xf32>
    %920 = arith.mulf %919, %867 : vector<1x128xf32>
    %921 = arith.addf %917, %920 : vector<1x128xf32>
    %cst_356 = arith.constant 0.00999999977 : f32
    %922 = vector.broadcast %cst_356 : f32 to vector<1x128xf32>
    %923 = arith.maximumf %921, %922 : vector<1x128xf32>
    %c15_i32 = arith.constant 15 : i32
    %c1_i32_357 = arith.constant 1 : i32
    %924 = arith.subi %c15_i32, %c1_i32_357 : i32
    %925 = arith.index_cast %924 : i32 to index
    %c0_358 = arith.constant 0 : index
    %c0_359 = arith.constant 0 : index
    %926 = vector.load %arg1[%925, %c0_358, %c0_359] : memref<16x2x128xf32, #tpu.memory_space<vmem>>, vector<1x2x128xf32>
    %927 = vector.shape_cast %926 : vector<1x2x128xf32> to vector<2x128xf32>
    %cst_360 = arith.constant 2.500000e-01 : f32
    %928 = vector.broadcast %cst_360 : f32 to vector<2x128xf32>
    %929 = arith.mulf %928, %927 : vector<2x128xf32>
    %930 = vector.extract_strided_slice %929 {offsets = [0, 0], sizes = [1, 128], strides = [1, 1]} : vector<2x128xf32> to vector<1x128xf32>
    %931 = vector.extract_strided_slice %929 {offsets = [1, 0], sizes = [1, 128], strides = [1, 1]} : vector<2x128xf32> to vector<1x128xf32>
    %932 = vector.broadcast %0 : vector<128x1xf32> to vector<128x128xf32>
    %933 = vector.broadcast %909 : vector<1x128xf32> to vector<128x128xf32>
    %934 = arith.mulf %932, %933 : vector<128x128xf32>
    %935 = vector.broadcast %1 : vector<128x1xf32> to vector<128x128xf32>
    %936 = vector.broadcast %923 : vector<1x128xf32> to vector<128x128xf32>
    %937 = arith.mulf %935, %936 : vector<128x128xf32>
    %938 = arith.addf %934, %937 : vector<128x128xf32>
    %c1_i32_361 = arith.constant 1 : i32
    %939 = arith.subi %c15_i32, %c1_i32_361 : i32
    %940 = arith.index_cast %939 : i32 to index
    %c0_362 = arith.constant 0 : index
    %c0_363 = arith.constant 0 : index
    %941 = vector.load %arg2[%940, %c0_362, %c0_363] : memref<16x128x1xf32, #tpu.memory_space<vmem>>, vector<1x128x1xf32>
    %942 = vector.shape_cast %941 : vector<1x128x1xf32> to vector<128x1xf32>
    %943 = vector.broadcast %942 : vector<128x1xf32> to vector<128x128xf32>
    %944 = arith.addf %938, %943 : vector<128x128xf32>
    %cst_364 = arith.constant 0.000000e+00 : f32
    %945 = vector.broadcast %cst_364 : f32 to vector<128x128xf32>
    %946 = arith.maximumf %944, %945 : vector<128x128xf32>
    %c0_365 = arith.constant 0 : index
    %c0_366 = arith.constant 0 : index
    %c0_367 = arith.constant 0 : index
    %947 = vector.load %arg4[%c0_365, %c0_366, %c0_367] : memref<1x128x128xf32, #tpu.memory_space<vmem>>, vector<1x128x128xf32>
    %948 = vector.shape_cast %947 : vector<1x128x128xf32> to vector<128x128xf32>
    %cst_368 = arith.constant dense<0.000000e+00> : vector<128x128xf32>
    %949 = tpu.matmul %948, %946, %cst_368 {dimension_numbers = #tpu.dot_dimension_numbers<[1], [0], [0], [1], [0, 0, 1, 1], [], []>} : vector<128x128xf32>, vector<128x128xf32>, vector<128x128xf32> -> vector<128x128xf32>
    %c0_369 = arith.constant 0 : index
    %c0_370 = arith.constant 0 : index
    %c0_371 = arith.constant 0 : index
    %950 = vector.load %arg5[%c0_369, %c0_370, %c0_371] : memref<1x128x1xf32, #tpu.memory_space<vmem>>, vector<1x128x1xf32>
    %951 = vector.shape_cast %950 : vector<1x128x1xf32> to vector<128x1xf32>
    %952 = vector.broadcast %951 : vector<128x1xf32> to vector<128x128xf32>
    %953 = arith.addf %949, %952 : vector<128x128xf32>
    %cst_372 = arith.constant 0.000000e+00 : f32
    %954 = vector.broadcast %cst_372 : f32 to vector<128x128xf32>
    %955 = arith.maximumf %953, %954 : vector<128x128xf32>
    %cst_373 = arith.constant dense<0.000000e+00> : vector<4x128xf32>
    %956 = tpu.matmul %2, %955, %cst_373 {dimension_numbers = #tpu.dot_dimension_numbers<[1], [0], [0], [1], [0, 0, 1, 1], [], []>} : vector<4x128xf32>, vector<128x128xf32>, vector<4x128xf32> -> vector<4x128xf32>
    %957 = vector.broadcast %3 : vector<4x1xf32> to vector<4x128xf32>
    %958 = arith.addf %956, %957 : vector<4x128xf32>
    %959 = vector.extract_strided_slice %958 {offsets = [0, 0], sizes = [1, 128], strides = [1, 1]} : vector<4x128xf32> to vector<1x128xf32>
    %960 = vector.extract_strided_slice %958 {offsets = [1, 0], sizes = [1, 128], strides = [1, 1]} : vector<4x128xf32> to vector<1x128xf32>
    %961 = vector.extract_strided_slice %958 {offsets = [2, 0], sizes = [1, 128], strides = [1, 1]} : vector<4x128xf32> to vector<1x128xf32>
    %962 = vector.extract_strided_slice %958 {offsets = [3, 0], sizes = [1, 128], strides = [1, 1]} : vector<4x128xf32> to vector<1x128xf32>
    %cst_374 = arith.constant 2.500000e-02 : f32
    %963 = vector.broadcast %cst_374 : f32 to vector<1x128xf32>
    %964 = arith.mulf %909, %963 : vector<1x128xf32>
    %965 = arith.addf %964, %959 : vector<1x128xf32>
    %cst_375 = arith.constant 6.250000e-02 : f32
    %966 = vector.broadcast %cst_375 : f32 to vector<1x128xf32>
    %967 = arith.mulf %965, %966 : vector<1x128xf32>
    %968 = arith.addf %909, %967 : vector<1x128xf32>
    %969 = math.sqrt %923 : vector<1x128xf32>
    %970 = arith.mulf %909, %969 : vector<1x128xf32>
    %971 = arith.addf %970, %960 : vector<1x128xf32>
    %972 = arith.mulf %971, %930 : vector<1x128xf32>
    %973 = arith.addf %968, %972 : vector<1x128xf32>
    %cst_376 = arith.constant 4.000000e-02 : f32
    %974 = vector.broadcast %cst_376 : f32 to vector<1x128xf32>
    %975 = arith.subf %974, %923 : vector<1x128xf32>
    %cst_377 = arith.constant 1.500000e+00 : f32
    %976 = vector.broadcast %cst_377 : f32 to vector<1x128xf32>
    %977 = arith.mulf %976, %975 : vector<1x128xf32>
    %978 = arith.addf %977, %961 : vector<1x128xf32>
    %cst_378 = arith.constant 6.250000e-02 : f32
    %979 = vector.broadcast %cst_378 : f32 to vector<1x128xf32>
    %980 = arith.mulf %978, %979 : vector<1x128xf32>
    %981 = arith.addf %923, %980 : vector<1x128xf32>
    %cst_379 = arith.constant 3.000000e-01 : f32
    %982 = vector.broadcast %cst_379 : f32 to vector<1x128xf32>
    %983 = arith.addf %982, %962 : vector<1x128xf32>
    %984 = arith.mulf %983, %931 : vector<1x128xf32>
    %985 = arith.addf %981, %984 : vector<1x128xf32>
    %cst_380 = arith.constant 0.00999999977 : f32
    %986 = vector.broadcast %cst_380 : f32 to vector<1x128xf32>
    %987 = arith.maximumf %985, %986 : vector<1x128xf32>
    %c16_i32 = arith.constant 16 : i32
    %c1_i32_381 = arith.constant 1 : i32
    %988 = arith.subi %c16_i32, %c1_i32_381 : i32
    %989 = arith.index_cast %988 : i32 to index
    %c0_382 = arith.constant 0 : index
    %c0_383 = arith.constant 0 : index
    %990 = vector.load %arg1[%989, %c0_382, %c0_383] : memref<16x2x128xf32, #tpu.memory_space<vmem>>, vector<1x2x128xf32>
    %991 = vector.shape_cast %990 : vector<1x2x128xf32> to vector<2x128xf32>
    %cst_384 = arith.constant 2.500000e-01 : f32
    %992 = vector.broadcast %cst_384 : f32 to vector<2x128xf32>
    %993 = arith.mulf %992, %991 : vector<2x128xf32>
    %994 = vector.extract_strided_slice %993 {offsets = [0, 0], sizes = [1, 128], strides = [1, 1]} : vector<2x128xf32> to vector<1x128xf32>
    %995 = vector.extract_strided_slice %993 {offsets = [1, 0], sizes = [1, 128], strides = [1, 1]} : vector<2x128xf32> to vector<1x128xf32>
    %996 = vector.broadcast %0 : vector<128x1xf32> to vector<128x128xf32>
    %997 = vector.broadcast %973 : vector<1x128xf32> to vector<128x128xf32>
    %998 = arith.mulf %996, %997 : vector<128x128xf32>
    %999 = vector.broadcast %1 : vector<128x1xf32> to vector<128x128xf32>
    %1000 = vector.broadcast %987 : vector<1x128xf32> to vector<128x128xf32>
    %1001 = arith.mulf %999, %1000 : vector<128x128xf32>
    %1002 = arith.addf %998, %1001 : vector<128x128xf32>
    %c1_i32_385 = arith.constant 1 : i32
    %1003 = arith.subi %c16_i32, %c1_i32_385 : i32
    %1004 = arith.index_cast %1003 : i32 to index
    %c0_386 = arith.constant 0 : index
    %c0_387 = arith.constant 0 : index
    %1005 = vector.load %arg2[%1004, %c0_386, %c0_387] : memref<16x128x1xf32, #tpu.memory_space<vmem>>, vector<1x128x1xf32>
    %1006 = vector.shape_cast %1005 : vector<1x128x1xf32> to vector<128x1xf32>
    %1007 = vector.broadcast %1006 : vector<128x1xf32> to vector<128x128xf32>
    %1008 = arith.addf %1002, %1007 : vector<128x128xf32>
    %cst_388 = arith.constant 0.000000e+00 : f32
    %1009 = vector.broadcast %cst_388 : f32 to vector<128x128xf32>
    %1010 = arith.maximumf %1008, %1009 : vector<128x128xf32>
    %c0_389 = arith.constant 0 : index
    %c0_390 = arith.constant 0 : index
    %c0_391 = arith.constant 0 : index
    %1011 = vector.load %arg4[%c0_389, %c0_390, %c0_391] : memref<1x128x128xf32, #tpu.memory_space<vmem>>, vector<1x128x128xf32>
    %1012 = vector.shape_cast %1011 : vector<1x128x128xf32> to vector<128x128xf32>
    %cst_392 = arith.constant dense<0.000000e+00> : vector<128x128xf32>
    %1013 = tpu.matmul %1012, %1010, %cst_392 {dimension_numbers = #tpu.dot_dimension_numbers<[1], [0], [0], [1], [0, 0, 1, 1], [], []>} : vector<128x128xf32>, vector<128x128xf32>, vector<128x128xf32> -> vector<128x128xf32>
    %c0_393 = arith.constant 0 : index
    %c0_394 = arith.constant 0 : index
    %c0_395 = arith.constant 0 : index
    %1014 = vector.load %arg5[%c0_393, %c0_394, %c0_395] : memref<1x128x1xf32, #tpu.memory_space<vmem>>, vector<1x128x1xf32>
    %1015 = vector.shape_cast %1014 : vector<1x128x1xf32> to vector<128x1xf32>
    %1016 = vector.broadcast %1015 : vector<128x1xf32> to vector<128x128xf32>
    %1017 = arith.addf %1013, %1016 : vector<128x128xf32>
    %cst_396 = arith.constant 0.000000e+00 : f32
    %1018 = vector.broadcast %cst_396 : f32 to vector<128x128xf32>
    %1019 = arith.maximumf %1017, %1018 : vector<128x128xf32>
    %cst_397 = arith.constant dense<0.000000e+00> : vector<4x128xf32>
    %1020 = tpu.matmul %2, %1019, %cst_397 {dimension_numbers = #tpu.dot_dimension_numbers<[1], [0], [0], [1], [0, 0, 1, 1], [], []>} : vector<4x128xf32>, vector<128x128xf32>, vector<4x128xf32> -> vector<4x128xf32>
    %1021 = vector.broadcast %3 : vector<4x1xf32> to vector<4x128xf32>
    %1022 = arith.addf %1020, %1021 : vector<4x128xf32>
    %1023 = vector.extract_strided_slice %1022 {offsets = [0, 0], sizes = [1, 128], strides = [1, 1]} : vector<4x128xf32> to vector<1x128xf32>
    %1024 = vector.extract_strided_slice %1022 {offsets = [1, 0], sizes = [1, 128], strides = [1, 1]} : vector<4x128xf32> to vector<1x128xf32>
    %1025 = vector.extract_strided_slice %1022 {offsets = [2, 0], sizes = [1, 128], strides = [1, 1]} : vector<4x128xf32> to vector<1x128xf32>
    %1026 = vector.extract_strided_slice %1022 {offsets = [3, 0], sizes = [1, 128], strides = [1, 1]} : vector<4x128xf32> to vector<1x128xf32>
    %cst_398 = arith.constant 2.500000e-02 : f32
    %1027 = vector.broadcast %cst_398 : f32 to vector<1x128xf32>
    %1028 = arith.mulf %973, %1027 : vector<1x128xf32>
    %1029 = arith.addf %1028, %1023 : vector<1x128xf32>
    %cst_399 = arith.constant 6.250000e-02 : f32
    %1030 = vector.broadcast %cst_399 : f32 to vector<1x128xf32>
    %1031 = arith.mulf %1029, %1030 : vector<1x128xf32>
    %1032 = arith.addf %973, %1031 : vector<1x128xf32>
    %1033 = math.sqrt %987 : vector<1x128xf32>
    %1034 = arith.mulf %973, %1033 : vector<1x128xf32>
    %1035 = arith.addf %1034, %1024 : vector<1x128xf32>
    %1036 = arith.mulf %1035, %994 : vector<1x128xf32>
    %1037 = arith.addf %1032, %1036 : vector<1x128xf32>
    %cst_400 = arith.constant 4.000000e-02 : f32
    %1038 = vector.broadcast %cst_400 : f32 to vector<1x128xf32>
    %1039 = arith.subf %1038, %987 : vector<1x128xf32>
    %cst_401 = arith.constant 1.500000e+00 : f32
    %1040 = vector.broadcast %cst_401 : f32 to vector<1x128xf32>
    %1041 = arith.mulf %1040, %1039 : vector<1x128xf32>
    %1042 = arith.addf %1041, %1025 : vector<1x128xf32>
    %cst_402 = arith.constant 6.250000e-02 : f32
    %1043 = vector.broadcast %cst_402 : f32 to vector<1x128xf32>
    %1044 = arith.mulf %1042, %1043 : vector<1x128xf32>
    %1045 = arith.addf %987, %1044 : vector<1x128xf32>
    %cst_403 = arith.constant 3.000000e-01 : f32
    %1046 = vector.broadcast %cst_403 : f32 to vector<1x128xf32>
    %1047 = arith.addf %1046, %1026 : vector<1x128xf32>
    %1048 = arith.mulf %1047, %995 : vector<1x128xf32>
    %1049 = arith.addf %1045, %1048 : vector<1x128xf32>
    %cst_404 = arith.constant 0.00999999977 : f32
    %1050 = vector.broadcast %cst_404 : f32 to vector<1x128xf32>
    %1051 = arith.maximumf %1049, %1050 : vector<1x128xf32>
    %c8_i32_405 = arith.constant 8 : i32
    %1052 = arith.cmpf one, %1037, %1037 : vector<1x128xf32>
    %1053 = vector.broadcast %1037 : vector<1x128xf32> to vector<8x128xf32>
    %1054 = vector.broadcast %4 : vector<8x1xf32> to vector<8x128xf32>
    %1055 = arith.subf %1053, %1054 : vector<8x128xf32>
    %cst_406 = arith.constant 0.000000e+00 : f32
    %1056 = vector.broadcast %cst_406 : f32 to vector<8x128xf32>
    %1057 = arith.maximumf %1055, %1056 : vector<8x128xf32>
    %cst_407 = arith.constant 0.000000e+00 : f32
    %1058 = vector.shape_cast %1052 : vector<1x128xi1> to vector<1x128xi1>
    %1059 = vector.broadcast %1058 : vector<1x128xi1> to vector<8x128xi1>
    %1060 = vector.broadcast %cst_407 : f32 to vector<8x128xf32>
    %1061 = arith.select %1059, %1060, %1057 : vector<8x128xi1>, vector<8x128xf32>
    %cst_408 = arith.constant 0.000000e+00 : f32
    %cst_409 = arith.constant 1.000000e+00 : f32
    %1062 = vector.broadcast %cst_408 : f32 to vector<1x128xf32>
    %1063 = vector.broadcast %cst_409 : f32 to vector<1x128xf32>
    %1064 = arith.select %1052, %1062, %1063 : vector<1x128xi1>, vector<1x128xf32>
    %cst_410 = arith.constant dense<0.000000e+00> : vector<8xf32>
    %1065 = vector.multi_reduction <add>, %1061, %cst_410 [1] : vector<8x128xf32> to vector<8xf32>
    %1066 = vector.shape_cast %1065 : vector<8xf32> to vector<8x1xf32>
    %1067 = vector.shape_cast %1066 : vector<8x1xf32> to vector<1x8x1xf32>
    %c1_411 = arith.constant 1 : index
    %c0_412 = arith.constant 0 : index
    %c0_413 = arith.constant 0 : index
    %1068 = vector.load %arg9[%c1_411, %c0_412, %c0_413] : memref<2x9x1xf32, #tpu.memory_space<vmem>>, vector<1x8x1xf32>
    tpu.vector_store %arg9[%c1_411, %c0_412, %c0_413], %1067 {strides = array<i32>} : memref<2x9x1xf32, #tpu.memory_space<vmem>>, vector<1x8x1xf32>,
    %cst_414 = arith.constant dense<0.000000e+00> : vector<1xf32>
    %1069 = vector.multi_reduction <add>, %1064, %cst_414 [1] : vector<1x128xf32> to vector<1xf32>
    %1070 = vector.shape_cast %1069 : vector<1xf32> to vector<1x1xf32>
    %1071 = vector.shape_cast %1070 : vector<1x1xf32> to vector<1x1x1xf32>
    %c1_415 = arith.constant 1 : index
    %c8_416 = arith.constant 8 : index
    %c0_417 = arith.constant 0 : index
    %1072 = vector.load %arg9[%c1_415, %c8_416, %c0_417] : memref<2x9x1xf32, #tpu.memory_space<vmem>>, vector<1x1x1xf32>
    tpu.vector_store %arg9[%c1_415, %c8_416, %c0_417], %1071 {strides = array<i32>} : memref<2x9x1xf32, #tpu.memory_space<vmem>>, vector<1x1x1xf32>,
    return
  }
  func.func @transform_0(%arg0: i32) -> (i32, i32, i32) {
    %c0_i32 = arith.constant 0 : i32
    %c0_i32_0 = arith.constant 0 : i32
    %c0_i32_1 = arith.constant 0 : i32
    return %c0_i32, %c0_i32_0, %arg0 : i32, i32, i32
  }
  func.func @transform_1(%arg0: i32) -> (i32, i32, i32) {
    %c0_i32 = arith.constant 0 : i32
    %c0_i32_0 = arith.constant 0 : i32
    %c0_i32_1 = arith.constant 0 : i32
    %c0_i32_2 = arith.constant 0 : i32
    return %c0_i32, %c0_i32_0, %c0_i32_1 : i32, i32, i32
  }
  func.func @transform_2(%arg0: i32) -> (i32, i32) {
    %c0_i32 = arith.constant 0 : i32
    %c0_i32_0 = arith.constant 0 : i32
    %c0_i32_1 = arith.constant 0 : i32
    return %c0_i32, %c0_i32_0 : i32, i32
  }
  func.func @transform_3(%arg0: i32) -> (i32, i32, i32) {
    %c0_i32 = arith.constant 0 : i32
    %c0_i32_0 = arith.constant 0 : i32
    %c0_i32_1 = arith.constant 0 : i32
    %c0_i32_2 = arith.constant 0 : i32
    return %c0_i32, %c0_i32_0, %c0_i32_1 : i32, i32, i32
  }
  func.func @transform_4(%arg0: i32) -> (i32, i32, i32) {
    %c0_i32 = arith.constant 0 : i32
    %c0_i32_0 = arith.constant 0 : i32
    %c0_i32_1 = arith.constant 0 : i32
    %c0_i32_2 = arith.constant 0 : i32
    return %c0_i32, %c0_i32_0, %c0_i32_1 : i32, i32, i32
  }
  func.func @transform_5(%arg0: i32) -> (i32, i32) {
    %c0_i32 = arith.constant 0 : i32
    %c0_i32_0 = arith.constant 0 : i32
    %c0_i32_1 = arith.constant 0 : i32
    return %c0_i32, %c0_i32_0 : i32, i32
  }
  func.func @transform_6(%arg0: i32) -> (i32, i32) {
    %c0_i32 = arith.constant 0 : i32
    %c0_i32_0 = arith.constant 0 : i32
    %c0_i32_1 = arith.constant 0 : i32
    return %c0_i32, %c0_i32_0 : i32, i32
  }
  func.func @transform_7(%arg0: i32) -> (i32, i32) {
    %c0_i32 = arith.constant 0 : i32
    %c0_i32_0 = arith.constant 0 : i32
    %c0_i32_1 = arith.constant 0 : i32
    return %c0_i32, %c0_i32_0 : i32, i32
  }
  func.func @transform_8(%arg0: i32) -> (i32, i32, i32) {
    %c0_i32 = arith.constant 0 : i32
    %c0_i32_0 = arith.constant 0 : i32
    %c0_i32_1 = arith.constant 0 : i32
    return %arg0, %c0_i32, %c0_i32_0 : i32, i32, i32
  }
}

</mosaic_0001>

<llo_original>
// kernel: tpu_custom_call.1
$region0: #{tpu_custom_call.1}
  #allocation0 [shape = 'u32[]', space=smem, size = 0x4, offset = 0x4, fixed_abs, tag = 'smem constant byte address 0x4 - core index']
  #allocation1 [shape = 'u32[144,128]{1,0:T(1,128)}', space=vmem, size = 0x12000, scoped, tag = 'internal scratch']
  %s0 = inlined_call_operand.vmem [shape: f32[16,2,256], index: 0, kind: input, shape index: {}]
  %s1 = inlined_call_operand.vmem [shape: f32[16,128,1], index: 1, kind: input, shape index: {}]
  %s2 = inlined_call_operand.vmem [shape: f32[128,2], index: 2, kind: input, shape index: {}]
  %s3 = inlined_call_operand.vmem [shape: f32[1,128,128], index: 3, kind: input, shape index: {}]
  %s4 = inlined_call_operand.vmem [shape: f32[1,128,1], index: 4, kind: input, shape index: {}]
  %s5 = inlined_call_operand.vmem [shape: f32[4,128], index: 5, kind: input, shape index: {}]
  %s6 = inlined_call_operand.vmem [shape: f32[4,1], index: 6, kind: input, shape index: {}]
  %s7 = inlined_call_operand.vmem [shape: f32[8,1], index: 7, kind: input, shape index: {}]
  %s8 = inlined_call_operand.vmem [shape: f32[4,9,1], index: 8, kind: output, shape index: {}]
  %s9 = sld [smem:[#allocation0]]
  $region106: #{tpu_custom_call.1} parent=0
    _
  %s11 = ssub.s32 1, %s9
  %s12 = scalar_select 0, %s11, %s9
  $region1: #{tpu_custom_call.1} parent=0
    #allocation2 [shape = 'u8[32768]{0}', space=vmem, size = 0x8000, scoped, tag = 'input window, operand 0']
    loop: start=0, step=1, limit=4
    $region2: #{tpu_custom_call.1} parent=1 // loop_pre_header
      _
    $region3: #{tpu_custom_call.1} parent=1 // loop_header
      %s14 = sphi 0, %s18
      %p15 = scmp.ge.s32.totalorder %s14, 4
      %s24 = sphi 0, %s26
      %s27 = sphi 0, %s24
      %s28 = sphi 0, %s27
      %s44 = sphi 0, %s28
      %s48 = sphi 0, %s48
      %s50 = sphi 0, %s48
      %s51 = sphi 0, %s50
      %s65 = sphi 0, %s51
      %s69 = sphi 0, %s69
      %s71 = sphi 0, %s69
      %s72 = sphi 0, %s71
      %s86 = sphi 0, %s72
      %s90 = sphi 0, %s90
      %s92 = sphi 0, %s90
      %s93 = sphi 0, %s92
      %s107 = sphi 0, %s93
      %s111 = sphi 0, %s111
      %s113 = sphi 0, %s111
      %s114 = sphi 0, %s113
      %s128 = sphi 0, %s114
      %s132 = sphi 0, %s132
      %s134 = sphi 0, %s132
      %s135 = sphi 0, %s134
      %s149 = sphi 0, %s135
      %s153 = sphi 0, %s153
      %s155 = sphi 0, %s153
      %s156 = sphi 0, %s155
      %s170 = sphi 0, %s156
      %s174 = sphi 0, %s174
      %s176 = sphi 0, %s174
      %s177 = sphi 0, %s176
      %s191 = sphi 0, %s177
      %s197 = sphi 0, %s199
      %s200 = sphi 0, %s197
      %s201 = sphi 0, %s200
      %s217 = sphi 0, %s201
    $region4: #{tpu_custom_call.1} parent=1 // loop_header_branch
      %17 = sbr.rel (%p15) target = $region8
    $region5: #{tpu_custom_call.1} parent=1 // loop_body
      %s19 = ssub.s32 %s14, 1
      %s20 = ssub.s32 %s14, 2
      %s21 = sadd.s32 %s14, 1
      %s22 = ssub.s32 %s14, %s21
      %p23 = scmp.eq.s32.totalorder %s22, 0
      %s25 = sadd.s32 %s24, 1
      %s26 = scalar_select %p23, %s24, %s25
      %p29 = pneg %p23
      %p30 = scmp.eq.s32.totalorder %s14, 1
      %p31 = por %p29, %p30
      %p32 = scmp.ne.s32.totalorder %s24, %s27
      %p33 = scmp.eq.s32.totalorder %s14, 0
      %p34 = por %p32, %p33
      %p35 = scmp.ne.s32.totalorder %s24, %s27
      %p36 = scmp.eq.s32.totalorder %s19, 1
      %p37 = por %p35, %p36
      %p38 = scmp.ne.s32.totalorder %s27, %s28
      %p39 = scmp.eq.s32.totalorder %s19, 0
      %p40 = por %p38, %p39
      %p41 = scmp.ne.s32.totalorder %s27, %s28
      %p42 = scmp.eq.s32.totalorder %s20, 1
      %p43 = por %p41, %p42
      %p45 = scmp.ne.s32.totalorder %s28, %s44
      %p46 = scmp.eq.s32.totalorder %s20, 0
      %p47 = por %p45, %p46
      %s49 = sadd.s32 %s48, 1
      %p52 = scmp.eq.s32.totalorder %s14, 1
      %p53 = scmp.ne.s32.totalorder %s48, %s50
      %p54 = scmp.eq.s32.totalorder %s14, 0
      %p55 = por %p53, %p54
      %p56 = scmp.ne.s32.totalorder %s48, %s50
      %p57 = scmp.eq.s32.totalorder %s19, 1
      %p58 = por %p56, %p57
      %p59 = scmp.ne.s32.totalorder %s50, %s51
      %p60 = scmp.eq.s32.totalorder %s19, 0
      %p61 = por %p59, %p60
      %p62 = scmp.ne.s32.totalorder %s50, %s51
      %p63 = scmp.eq.s32.totalorder %s20, 1
      %p64 = por %p62, %p63
      %p66 = scmp.ne.s32.totalorder %s51, %s65
      %p67 = scmp.eq.s32.totalorder %s20, 0
      %p68 = por %p66, %p67
      %s70 = sadd.s32 %s69, 1
      %p73 = scmp.eq.s32.totalorder %s14, 1
      %p74 = scmp.ne.s32.totalorder %s69, %s71
      %p75 = scmp.eq.s32.totalorder %s14, 0
      %p76 = por %p74, %p75
      %p77 = scmp.ne.s32.totalorder %s69, %s71
      %p78 = scmp.eq.s32.totalorder %s19, 1
      %p79 = por %p77, %p78
      %p80 = scmp.ne.s32.totalorder %s71, %s72
      %p81 = scmp.eq.s32.totalorder %s19, 0
      %p82 = por %p80, %p81
      %p83 = scmp.ne.s32.totalorder %s71, %s72
      %p84 = scmp.eq.s32.totalorder %s20, 1
      %p85 = por %p83, %p84
      %p87 = scmp.ne.s32.totalorder %s72, %s86
      %p88 = scmp.eq.s32.totalorder %s20, 0
      %p89 = por %p87, %p88
      %s91 = sadd.s32 %s90, 1
      %p94 = scmp.eq.s32.totalorder %s14, 1
      %p95 = scmp.ne.s32.totalorder %s90, %s92
      %p96 = scmp.eq.s32.totalorder %s14, 0
      %p97 = por %p95, %p96
      %p98 = scmp.ne.s32.totalorder %s90, %s92
      %p99 = scmp.eq.s32.totalorder %s19, 1
      %p100 = por %p98, %p99
      %p101 = scmp.ne.s32.totalorder %s92, %s93
      %p102 = scmp.eq.s32.totalorder %s19, 0
      %p103 = por %p101, %p102
      %p104 = scmp.ne.s32.totalorder %s92, %s93
      %p105 = scmp.eq.s32.totalorder %s20, 1
      %p106 = por %p104, %p105
      %p108 = scmp.ne.s32.totalorder %s93, %s107
      %p109 = scmp.eq.s32.totalorder %s20, 0
      %p110 = por %p108, %p109
      %s112 = sadd.s32 %s111, 1
      %p115 = scmp.eq.s32.totalorder %s14, 1
      %p116 = scmp.ne.s32.totalorder %s111, %s113
      %p117 = scmp.eq.s32.totalorder %s14, 0
      %p118 = por %p116, %p117
      %p119 = scmp.ne.s32.totalorder %s111, %s113
      %p120 = scmp.eq.s32.totalorder %s19, 1
      %p121 = por %p119, %p120
      %p122 = scmp.ne.s32.totalorder %s113, %s114
      %p123 = scmp.eq.s32.totalorder %s19, 0
      %p124 = por %p122, %p123
      %p125 = scmp.ne.s32.totalorder %s113, %s114
      %p126 = scmp.eq.s32.totalorder %s20, 1
      %p127 = por %p125, %p126
      %p129 = scmp.ne.s32.totalorder %s114, %s128
      %p130 = scmp.eq.s32.totalorder %s20, 0
      %p131 = por %p129, %p130
      %s133 = sadd.s32 %s132, 1
      %p136 = scmp.eq.s32.totalorder %s14, 1
      %p137 = scmp.ne.s32.totalorder %s132, %s134
      %p138 = scmp.eq.s32.totalorder %s14, 0
      %p139 = por %p137, %p138
      %p140 = scmp.ne.s32.totalorder %s132, %s134
      %p141 = scmp.eq.s32.totalorder %s19, 1
      %p142 = por %p140, %p141
      %p143 = scmp.ne.s32.totalorder %s134, %s135
      %p144 = scmp.eq.s32.totalorder %s19, 0
      %p145 = por %p143, %p144
      %p146 = scmp.ne.s32.totalorder %s134, %s135
      %p147 = scmp.eq.s32.totalorder %s20, 1
      %p148 = por %p146, %p147
      %p150 = scmp.ne.s32.totalorder %s135, %s149
      %p151 = scmp.eq.s32.totalorder %s20, 0
      %p152 = por %p150, %p151
      %s154 = sadd.s32 %s153, 1
      %p157 = scmp.eq.s32.totalorder %s14, 1
      %p158 = scmp.ne.s32.totalorder %s153, %s155
      %p159 = scmp.eq.s32.totalorder %s14, 0
      %p160 = por %p158, %p159
      %p161 = scmp.ne.s32.totalorder %s153, %s155
      %p162 = scmp.eq.s32.totalorder %s19, 1
      %p163 = por %p161, %p162
      %p164 = scmp.ne.s32.totalorder %s155, %s156
      %p165 = scmp.eq.s32.totalorder %s19, 0
      %p166 = por %p164, %p165
      %p167 = scmp.ne.s32.totalorder %s155, %s156
      %p168 = scmp.eq.s32.totalorder %s20, 1
      %p169 = por %p167, %p168
      %p171 = scmp.ne.s32.totalorder %s156, %s170
      %p172 = scmp.eq.s32.totalorder %s20, 0
      %p173 = por %p171, %p172
      %s175 = sadd.s32 %s174, 1
      %p178 = scmp.eq.s32.totalorder %s14, 1
      %p179 = scmp.ne.s32.totalorder %s174, %s176
      %p180 = scmp.eq.s32.totalorder %s14, 0
      %p181 = por %p179, %p180
      %p182 = scmp.ne.s32.totalorder %s174, %s176
      %p183 = scmp.eq.s32.totalorder %s19, 1
      %p184 = por %p182, %p183
      %p185 = scmp.ne.s32.totalorder %s176, %s177
      %p186 = scmp.eq.s32.totalorder %s19, 0
      %p187 = por %p185, %p186
      %p188 = scmp.ne.s32.totalorder %s176, %s177
      %p189 = scmp.eq.s32.totalorder %s20, 1
      %p190 = por %p188, %p189
      %p192 = scmp.ne.s32.totalorder %s177, %s191
      %p193 = scmp.eq.s32.totalorder %s20, 0
      %p194 = por %p192, %p193
      %s195 = ssub.s32 %s14, %s21
      %p196 = scmp.eq.s32.totalorder %s195, 0
      %s198 = sadd.s32 %s197, 1
      %s199 = scalar_select %p196, %s197, %s198
      %p202 = pneg %p196
      %p203 = scmp.eq.s32.totalorder %s14, 1
      %p204 = por %p202, %p203
      %p205 = scmp.ne.s32.totalorder %s197, %s200
      %p206 = scmp.eq.s32.totalorder %s14, 0
      %p207 = por %p205, %p206
      %p208 = scmp.ne.s32.totalorder %s197, %s200
      %p209 = scmp.eq.s32.totalorder %s19, 1
      %p210 = por %p208, %p209
      %p211 = scmp.ne.s32.totalorder %s200, %s201
      %p212 = scmp.eq.s32.totalorder %s19, 0
      %p213 = por %p211, %p212
      %p214 = scmp.ne.s32.totalorder %s200, %s201
      %p215 = scmp.eq.s32.totalorder %s20, 1
      %p216 = por %p214, %p215
      %p218 = scmp.ne.s32.totalorder %s201, %s217
      %p219 = scmp.eq.s32.totalorder %s20, 0
      %p220 = por %p218, %p219
      %p221 = scmp.le.s32.totalorder 1, %s14
      %p222 = scmp.lt.s32.totalorder %s14, 3
      %p223 = pnand %p221, %p222
      %p224 = pneg %p223
      // Predicated region
      $region9: #{tpu_custom_call.1} parent=5 // pred_check
        _
      $region10: #{tpu_custom_call.1} parent=5 // pred_check_branch
        %226 = sbr.rel (%p223) target = $region12
      $region11: #{tpu_custom_call.1} parent=5 // pred_region
        %s227 = ssub.s32 %s14, 1
        // Predicated region
        $region13: #{tpu_custom_call.1} parent=11 // pred_check
          %p228 = pneg %p61
        $region14: #{tpu_custom_call.1} parent=11 // pred_check_branch
          %230 = sbr.rel (%p228) target = $region16
        $region15: #{tpu_custom_call.1} parent=11 // pred_region
          _
        $region16: #{tpu_custom_call.1} parent=11 // pred_fallthru
          _
        // Predicated region
        $region17: #{tpu_custom_call.1} parent=11 // pred_check
          %p231 = pneg %p82
        $region18: #{tpu_custom_call.1} parent=11 // pred_check_branch
          %233 = sbr.rel (%p231) target = $region20
        $region19: #{tpu_custom_call.1} parent=11 // pred_region
          _
        $region20: #{tpu_custom_call.1} parent=11 // pred_fallthru
          _
        // Predicated region
        $region21: #{tpu_custom_call.1} parent=11 // pred_check
          %p234 = pneg %p103
        $region22: #{tpu_custom_call.1} parent=11 // pred_check_branch
          %236 = sbr.rel (%p234) target = $region24
        $region23: #{tpu_custom_call.1} parent=11 // pred_region
          _
        $region24: #{tpu_custom_call.1} parent=11 // pred_fallthru
          _
        // Predicated region
        $region25: #{tpu_custom_call.1} parent=11 // pred_check
          %p237 = pneg %p124
        $region26: #{tpu_custom_call.1} parent=11 // pred_check_branch
          %239 = sbr.rel (%p237) target = $region28
        $region27: #{tpu_custom_call.1} parent=11 // pred_region
          _
        $region28: #{tpu_custom_call.1} parent=11 // pred_fallthru
          _
        // Predicated region
        $region29: #{tpu_custom_call.1} parent=11 // pred_check
          %p240 = pneg %p145
        $region30: #{tpu_custom_call.1} parent=11 // pred_check_branch
          %242 = sbr.rel (%p240) target = $region32
        $region31: #{tpu_custom_call.1} parent=11 // pred_region
          _
        $region32: #{tpu_custom_call.1} parent=11 // pred_fallthru
          _
        // Predicated region
        $region33: #{tpu_custom_call.1} parent=11 // pred_check
          %p243 = pneg %p166
        $region34: #{tpu_custom_call.1} parent=11 // pred_check_branch
          %245 = sbr.rel (%p243) target = $region36
        $region35: #{tpu_custom_call.1} parent=11 // pred_region
          _
        $region36: #{tpu_custom_call.1} parent=11 // pred_fallthru
          _
        // Predicated region
        $region37: #{tpu_custom_call.1} parent=11 // pred_check
          %p246 = pneg %p187
        $region38: #{tpu_custom_call.1} parent=11 // pred_check_branch
          %248 = sbr.rel (%p246) target = $region40
        $region39: #{tpu_custom_call.1} parent=11 // pred_region
          _
        $region40: #{tpu_custom_call.1} parent=11 // pred_fallthru
          _
      $region12: #{tpu_custom_call.1} parent=5 // pred_fallthru
        _
      %p249 = scmp.lt.s32.totalorder %s14, 2
      // Predicated region
      $region41: #{tpu_custom_call.1} parent=5 // pred_check
        %p250 = pneg %p249
      $region42: #{tpu_custom_call.1} parent=5 // pred_check_branch
        %252 = sbr.rel (%p250) target = $region44
      $region43: #{tpu_custom_call.1} parent=5 // pred_region
        // Predicated region
        $region45: #{tpu_custom_call.1} parent=43 // pred_check
          %p253 = pneg %p34
        $region46: #{tpu_custom_call.1} parent=43 // pred_check_branch
          %255 = sbr.rel (%p253) target = $region48
        $region47: #{tpu_custom_call.1} parent=43 // pred_region
          %s256 = sand.u32 %s24, 1
          %s257 = sand.u32 %s24, 1
          %s258 = smul.addr %s257, 32
          %s259 = scalar_lea.vmem [#allocation2], %s258
          %s260 = smul.addr %s14, 2
          %s261 = scalar_lea.vmem %s0, %s260
          // Predicated region
          $region49: #{tpu_custom_call.1} parent=47 // pred_check
            _
          $region50: #{tpu_custom_call.1} parent=47 // pred_check_branch
            %263 = sbr.rel (0) target = $region52
          $region51: #{tpu_custom_call.1} parent=47 // pred_region
            // Predicated region
            $region53: #{tpu_custom_call.1} parent=51 // pred_check
              _
            $region54: #{tpu_custom_call.1} parent=51 // pred_check_branch
              %265 = sbr.rel target = $region56
            $region55: #{tpu_custom_call.1} parent=51 // pred_region
              // Predicated region
              $region68: #{tpu_custom_call.1} parent=55 // pred_check
                _
              $region69: #{tpu_custom_call.1} parent=55 // pred_check_branch
                %310 = sbr.rel (0) target = $region71
              $region70: #{tpu_custom_call.1} parent=55 // pred_region
                loop: start=0, step=1, limit=1
                $region72: #{tpu_custom_call.1} parent=70 // loop_pre_header
                  _
                $region73: #{tpu_custom_call.1} parent=70 // loop_header
                  %s312 = sphi 0, %s316
                  %p313 = scmp.ge.s32.totalorder %s312, 1
                  %s317 = sphi %s261, %s261
                  %s318 = sphi %s259, %s259
                $region74: #{tpu_custom_call.1} parent=70 // loop_header_branch
                  %315 = sbr.rel (%p313) target = $region78
                $region75: #{tpu_custom_call.1} parent=70 // loop_body
                  _
                $region76: #{tpu_custom_call.1} parent=70 // loop_footer
                  %s316 = sadd.s32 1, %s312
                $region77: #{tpu_custom_call.1} parent=70 // loop_footer_branch
                  %311 = sbr.rel target = $region73
                $region78: #{tpu_custom_call.1} parent=70 // loop_exit
                  _
                loop: start=0, step=1, limit=1
                $region79: #{tpu_custom_call.1} parent=70 // loop_pre_header
                  _
                $region80: #{tpu_custom_call.1} parent=70 // loop_header
                  %s321 = sphi 0, %s325
                  %p322 = scmp.ge.s32.totalorder %s321, 1
                  %s326 = sphi %s261, %s261
                  %s327 = sphi %s259, %s259
                $region81: #{tpu_custom_call.1} parent=70 // loop_header_branch
                  %324 = sbr.rel (%p322) target = $region85
                $region82: #{tpu_custom_call.1} parent=70 // loop_body
                  %v328 = vld [vmem:[%s326] sm:$0x3]
                  %329 = vst [vmem:[%s327] sm:$0x3] %v328
                  %v330 = vld [vmem:[%s326 + $0x4] sm:$0x3]
                  %331 = vst [vmem:[%s327 + $0x2] sm:$0x3] %v330
                  %v332 = vld [vmem:[%s326 + $0x8] sm:$0x3]
                  %333 = vst [vmem:[%s327 + $0x4] sm:$0x3] %v332
                  %v334 = vld [vmem:[%s326 + $0xc] sm:$0x3]
                  %335 = vst [vmem:[%s327 + $0x6] sm:$0x3] %v334
                  %v336 = vld [vmem:[%s326 + $0x10] sm:$0x3]
                  %337 = vst [vmem:[%s327 + $0x8] sm:$0x3] %v336
                  %v338 = vld [vmem:[%s326 + $0x14] sm:$0x3]
                  %339 = vst [vmem:[%s327 + $0xa] sm:$0x3] %v338
                  %v340 = vld [vmem:[%s326 + $0x18] sm:$0x3]
                  %341 = vst [vmem:[%s327 + $0xc] sm:$0x3] %v340
                  %v342 = vld [vmem:[%s326 + $0x1c] sm:$0x3]
                  %343 = vst [vmem:[%s327 + $0xe] sm:$0x3] %v342
                  %v344 = vld [vmem:[%s326 + $0x20] sm:$0x3]
                  %345 = vst [vmem:[%s327 + $0x10] sm:$0x3] %v344
                  %v346 = vld [vmem:[%s326 + $0x24] sm:$0x3]
                  %347 = vst [vmem:[%s327 + $0x12] sm:$0x3] %v346
                  %v348 = vld [vmem:[%s326 + $0x28] sm:$0x3]
                  %349 = vst [vmem:[%s327 + $0x14] sm:$0x3] %v348
                  %v350 = vld [vmem:[%s326 + $0x2c] sm:$0x3]
                  %351 = vst [vmem:[%s327 + $0x16] sm:$0x3] %v350
                  %v352 = vld [vmem:[%s326 + $0x30] sm:$0x3]
                  %353 = vst [vmem:[%s327 + $0x18] sm:$0x3] %v352
                  %v354 = vld [vmem:[%s326 + $0x34] sm:$0x3]
                  %355 = vst [vmem:[%s327 + $0x1a] sm:$0x3] %v354
                  %v356 = vld [vmem:[%s326 + $0x38] sm:$0x3]
                  %357 = vst [vmem:[%s327 + $0x1c] sm:$0x3] %v356
                  %v358 = vld [vmem:[%s326 + $0x3c] sm:$0x3]
                  %359 = vst [vmem:[%s327 + $0x1e] sm:$0x3] %v358
                $region83: #{tpu_custom_call.1} parent=70 // loop_footer
                  %s325 = sadd.s32 1, %s321
                $region84: #{tpu_custom_call.1} parent=70 // loop_footer_branch
                  %320 = sbr.rel target = $region80
                $region85: #{tpu_custom_call.1} parent=70 // loop_exit
                  _
              $region71: #{tpu_custom_call.1} parent=55 // pred_fallthru
                _
            $region56: #{tpu_custom_call.1} parent=51 // pred_fallthru
              _
            // Predicated region
            $region57: #{tpu_custom_call.1} parent=51 // pred_check
              _
            $region58: #{tpu_custom_call.1} parent=51 // pred_check_branch
              %267 = sbr.rel (0) target = $region60
            $region59: #{tpu_custom_call.1} parent=51 // pred_region
              loop: start=0, step=1, limit=1
              $region61: #{tpu_custom_call.1} parent=59 // loop_pre_header
                _
              $region62: #{tpu_custom_call.1} parent=59 // loop_header
                %s270 = sphi 0, %s274
                %p271 = scmp.ge.s32.totalorder %s270, 1
                %s275 = sphi %s261, %s261
                %s276 = sphi %s259, %s259
              $region63: #{tpu_custom_call.1} parent=59 // loop_header_branch
                %273 = sbr.rel (%p271) target = $region67
              $region64: #{tpu_custom_call.1} parent=59 // loop_body
                %v277 = vld [vmem:[%s275] sm:$0x3]
                %278 = vst [vmem:[%s276] sm:$0x3] %v277
                %v279 = vld [vmem:[%s275 + $0x4] sm:$0x3]
                %280 = vst [vmem:[%s276 + $0x2] sm:$0x3] %v279
                %v281 = vld [vmem:[%s275 + $0x8] sm:$0x3]
                %282 = vst [vmem:[%s276 + $0x4] sm:$0x3] %v281
                %v283 = vld [vmem:[%s275 + $0xc] sm:$0x3]
                %284 = vst [vmem:[%s276 + $0x6] sm:$0x3] %v283
                %v285 = vld [vmem:[%s275 + $0x10] sm:$0x3]
                %286 = vst [vmem:[%s276 + $0x8] sm:$0x3] %v285
                %v287 = vld [vmem:[%s275 + $0x14] sm:$0x3]
                %288 = vst [vmem:[%s276 + $0xa] sm:$0x3] %v287
                %v289 = vld [vmem:[%s275 + $0x18] sm:$0x3]
                %290 = vst [vmem:[%s276 + $0xc] sm:$0x3] %v289
                %v291 = vld [vmem:[%s275 + $0x1c] sm:$0x3]
                %292 = vst [vmem:[%s276 + $0xe] sm:$0x3] %v291
                %v293 = vld [vmem:[%s275 + $0x20] sm:$0x3]
                %294 = vst [vmem:[%s276 + $0x10] sm:$0x3] %v293
                %v295 = vld [vmem:[%s275 + $0x24] sm:$0x3]
                %296 = vst [vmem:[%s276 + $0x12] sm:$0x3] %v295
                %v297 = vld [vmem:[%s275 + $0x28] sm:$0x3]
                %298 = vst [vmem:[%s276 + $0x14] sm:$0x3] %v297
                %v299 = vld [vmem:[%s275 + $0x2c] sm:$0x3]
                %300 = vst [vmem:[%s276 + $0x16] sm:$0x3] %v299
                %v301 = vld [vmem:[%s275 + $0x30] sm:$0x3]
                %302 = vst [vmem:[%s276 + $0x18] sm:$0x3] %v301
                %v303 = vld [vmem:[%s275 + $0x34] sm:$0x3]
                %304 = vst [vmem:[%s276 + $0x1a] sm:$0x3] %v303
                %v305 = vld [vmem:[%s275 + $0x38] sm:$0x3]
                %306 = vst [vmem:[%s276 + $0x1c] sm:$0x3] %v305
                %v307 = vld [vmem:[%s275 + $0x3c] sm:$0x3]
                %308 = vst [vmem:[%s276 + $0x1e] sm:$0x3] %v307
              $region65: #{tpu_custom_call.1} parent=59 // loop_footer
                %s274 = sadd.s32 1, %s270
              $region66: #{tpu_custom_call.1} parent=59 // loop_footer_branch
                %269 = sbr.rel target = $region62
              $region67: #{tpu_custom_call.1} parent=59 // loop_exit
                _
            $region60: #{tpu_custom_call.1} parent=51 // pred_fallthru
              _
          $region52: #{tpu_custom_call.1} parent=47 // pred_fallthru
            _
          %360 = vnop
        $region48: #{tpu_custom_call.1} parent=43 // pred_fallthru
          _
      $region44: #{tpu_custom_call.1} parent=5 // pred_fallthru
        _
      %p361 = scmp.le.s32.totalorder 1, %s14
      %p362 = scmp.lt.s32.totalorder %s14, 3
      %p363 = pnand %p361, %p362
      %p364 = pneg %p363
      // Predicated region
      $region86: #{tpu_custom_call.1} parent=5 // pred_check
        _
      $region87: #{tpu_custom_call.1} parent=5 // pred_check_branch
        %366 = sbr.rel (%p363) target = $region89
      $region88: #{tpu_custom_call.1} parent=5 // pred_region
        %s367 = ssub.s32 %s14, 1
        %s368 = sand.u32 %s27, 1
        %s369 = sand.u32 %s27, 1
        %s370 = smul.addr %s369, 32
        %s371 = scalar_lea.vmem [#allocation2], %s370
        // Predicated region
        $region90: #{tpu_custom_call.1} parent=88 // pred_check
          %p372 = pneg %p40
        $region91: #{tpu_custom_call.1} parent=88 // pred_check_branch
          %374 = sbr.rel (%p372) target = $region93
        $region92: #{tpu_custom_call.1} parent=88 // pred_region
          _
        $region93: #{tpu_custom_call.1} parent=88 // pred_fallthru
          _
        %s375 = sand.u32 %s27, 1
        %s376 = sand.u32 %s27, 1
        %s377 = smul.addr %s376, 32
        %s378 = scalar_lea.vmem [#allocation2], %s377
        %p379 = pneg %p40
        %p380 = pneg %p37
        %p381 = pneg %p61
        %p382 = pneg %p58
        %p383 = pneg %p82
        %p384 = pneg %p79
        %p385 = pneg %p103
        %p386 = pneg %p100
        %p387 = pneg %p124
        %p388 = pneg %p121
        %p389 = pneg %p145
        %p390 = pneg %p142
        %p391 = pneg %p166
        %p392 = pneg %p163
        %p393 = pneg %p187
        %p394 = pneg %p184
        %p395 = pneg %p213
        %p396 = pneg %p210
        %s397 = smul.u32 2, %s19
        %p398 = scmp.lt.s32.totalorder %s397, 3
        %s399 = scalar_select %p398, %s397, 3
        %s400 = smul.addr %s399, 2
        %s401 = smul.addr %s400, 8
        %s402 = scalar_lea.vmem %s8, %s401
        %s403 = smul.u32 2, %s19
        %p404 = scmp.lt.s32.totalorder %s403, 3
        %s405 = scalar_select %p404, %s403, 3
        %s406 = smul.addr %s405, 2
        %s407 = smul.addr %s406, 8
        %s408 = scalar_lea.vmem %s8, %s407
        %s409 = smul.u32 2, %s19
        %v410 = vld [vmem:[%s2] sm:$0xff]
        %v411 = vld [vmem:[%s2 + $0x8] sm:$0xff]
        %v412 = vld [vmem:[%s2 + $0x10] sm:$0xff]
        %v413 = vld [vmem:[%s2 + $0x18] sm:$0xff]
        %v414 = vld [vmem:[%s2 + $0x20] sm:$0xff]
        %v415 = vld [vmem:[%s2 + $0x28] sm:$0xff]
        %v416 = vld [vmem:[%s2 + $0x30] sm:$0xff]
        %v417 = vld [vmem:[%s2 + $0x38] sm:$0xff]
        %v418 = vld [vmem:[%s2 + $0x40] sm:$0xff]
        %v419 = vld [vmem:[%s2 + $0x48] sm:$0xff]
        %v420 = vld [vmem:[%s2 + $0x50] sm:$0xff]
        %v421 = vld [vmem:[%s2 + $0x58] sm:$0xff]
        %v422 = vld [vmem:[%s2 + $0x60] sm:$0xff]
        %v423 = vld [vmem:[%s2 + $0x68] sm:$0xff]
        %v424 = vld [vmem:[%s2 + $0x70] sm:$0xff]
        %v425 = vld [vmem:[%s2 + $0x78] sm:$0xff]
        %v426 = vld [vmem:[%s5] sm:$0xf]
        %v427 = vld [vmem:[%s6] sm:$0xf]
        %v428 = vld [vmem:[%s7] sm:$0xff]
        %v429 = vld [vmem:[%s371] sm:$0x3]
        %v430 = vmul.f32 %v429, 0.25
        %432 = vset.pattern.permute.xlu0 0
        %433 = vperm.xlu0 %432, %v410
        %v434 = vpop.permute.xlu0 %433
        %437 = vset.pattern.permute.xlu0 0
        %438 = vperm.xlu0 %437, %v411
        %v439 = vpop.permute.xlu0 %438
        %442 = vset.pattern.permute.xlu0 0
        %443 = vperm.xlu0 %442, %v412
        %v444 = vpop.permute.xlu0 %443
        %447 = vset.pattern.permute.xlu0 0
        %448 = vperm.xlu0 %447, %v413
        %v449 = vpop.permute.xlu0 %448
        %452 = vset.pattern.permute.xlu0 0
        %453 = vperm.xlu0 %452, %v414
        %v454 = vpop.permute.xlu0 %453
        %457 = vset.pattern.permute.xlu0 0
        %458 = vperm.xlu0 %457, %v415
        %v459 = vpop.permute.xlu0 %458
        %462 = vset.pattern.permute.xlu0 0
        %463 = vperm.xlu0 %462, %v416
        %v464 = vpop.permute.xlu0 %463
        %467 = vset.pattern.permute.xlu0 0
        %468 = vperm.xlu0 %467, %v417
        %v469 = vpop.permute.xlu0 %468
        %472 = vset.pattern.permute.xlu0 0
        %473 = vperm.xlu0 %472, %v418
        %v474 = vpop.permute.xlu0 %473
        %477 = vset.pattern.permute.xlu0 0
        %478 = vperm.xlu0 %477, %v419
        %v479 = vpop.permute.xlu0 %478
        %482 = vset.pattern.permute.xlu0 0
        %483 = vperm.xlu0 %482, %v420
        %v484 = vpop.permute.xlu0 %483
        %487 = vset.pattern.permute.xlu0 0
        %488 = vperm.xlu0 %487, %v421
        %v489 = vpop.permute.xlu0 %488
        %492 = vset.pattern.permute.xlu0 0
        %493 = vperm.xlu0 %492, %v422
        %v494 = vpop.permute.xlu0 %493
        %497 = vset.pattern.permute.xlu0 0
        %498 = vperm.xlu0 %497, %v423
        %v499 = vpop.permute.xlu0 %498
        %502 = vset.pattern.permute.xlu0 0
        %503 = vperm.xlu0 %502, %v424
        %v504 = vpop.permute.xlu0 %503
        %507 = vset.pattern.permute.xlu0 0
        %508 = vperm.xlu0 %507, %v425
        %v509 = vpop.permute.xlu0 %508
        %511 = vset.pattern.permute.xlu0 1
        %512 = vperm.xlu0 %511, %v410
        %v513 = vpop.permute.xlu0 %512
        %515 = vset.pattern.permute.xlu0 1
        %516 = vperm.xlu0 %515, %v411
        %v517 = vpop.permute.xlu0 %516
        %519 = vset.pattern.permute.xlu0 1
        %520 = vperm.xlu0 %519, %v412
        %v521 = vpop.permute.xlu0 %520
        %523 = vset.pattern.permute.xlu0 1
        %524 = vperm.xlu0 %523, %v413
        %v525 = vpop.permute.xlu0 %524
        %527 = vset.pattern.permute.xlu0 1
        %528 = vperm.xlu0 %527, %v414
        %v529 = vpop.permute.xlu0 %528
        %531 = vset.pattern.permute.xlu0 1
        %532 = vperm.xlu0 %531, %v415
        %v533 = vpop.permute.xlu0 %532
        %535 = vset.pattern.permute.xlu0 1
        %536 = vperm.xlu0 %535, %v416
        %v537 = vpop.permute.xlu0 %536
        %539 = vset.pattern.permute.xlu0 1
        %540 = vperm.xlu0 %539, %v417
        %v541 = vpop.permute.xlu0 %540
        %543 = vset.pattern.permute.xlu0 1
        %544 = vperm.xlu0 %543, %v418
        %v545 = vpop.permute.xlu0 %544
        %547 = vset.pattern.permute.xlu0 1
        %548 = vperm.xlu0 %547, %v419
        %v549 = vpop.permute.xlu0 %548
        %551 = vset.pattern.permute.xlu0 1
        %552 = vperm.xlu0 %551, %v420
        %v553 = vpop.permute.xlu0 %552
        %555 = vset.pattern.permute.xlu0 1
        %556 = vperm.xlu0 %555, %v421
        %v557 = vpop.permute.xlu0 %556
        %559 = vset.pattern.permute.xlu0 1
        %560 = vperm.xlu0 %559, %v422
        %v561 = vpop.permute.xlu0 %560
        %563 = vset.pattern.permute.xlu0 1
        %564 = vperm.xlu0 %563, %v423
        %v565 = vpop.permute.xlu0 %564
        %567 = vset.pattern.permute.xlu0 1
        %568 = vperm.xlu0 %567, %v424
        %v569 = vpop.permute.xlu0 %568
        %571 = vset.pattern.permute.xlu0 1
        %572 = vperm.xlu0 %571, %v425
        %v573 = vpop.permute.xlu0 %572
        %v575 = vmul.f32 %v513, 0.04
        %v576 = vmul.f32 %v517, 0.04
        %v577 = vmul.f32 %v521, 0.04
        %v578 = vmul.f32 %v525, 0.04
        %v579 = vmul.f32 %v529, 0.04
        %v580 = vmul.f32 %v533, 0.04
        %v581 = vmul.f32 %v537, 0.04
        %v582 = vmul.f32 %v541, 0.04
        %v583 = vmul.f32 %v545, 0.04
        %v584 = vmul.f32 %v549, 0.04
        %v585 = vmul.f32 %v553, 0.04
        %v586 = vmul.f32 %v557, 0.04
        %v587 = vmul.f32 %v561, 0.04
        %v588 = vmul.f32 %v565, 0.04
        %v589 = vmul.f32 %v569, 0.04
        %v590 = vmul.f32 %v573, 0.04
        %v591 = vadd.f32 %v434, %v575
        %v592 = vadd.f32 %v439, %v576
        %v593 = vadd.f32 %v444, %v577
        %v594 = vadd.f32 %v449, %v578
        %v595 = vadd.f32 %v454, %v579
        %v596 = vadd.f32 %v459, %v580
        %v597 = vadd.f32 %v464, %v581
        %v598 = vadd.f32 %v469, %v582
        %v599 = vadd.f32 %v474, %v583
        %v600 = vadd.f32 %v479, %v584
        %v601 = vadd.f32 %v484, %v585
        %v602 = vadd.f32 %v489, %v586
        %v603 = vadd.f32 %v494, %v587
        %v604 = vadd.f32 %v499, %v588
        %v605 = vadd.f32 %v504, %v589
        %v606 = vadd.f32 %v509, %v590
        %v607 = vld [vmem:[%s1] sm:$0xff]
        %v608 = vld [vmem:[%s1 + $0x8] sm:$0xff]
        %v609 = vld [vmem:[%s1 + $0x10] sm:$0xff]
        %v610 = vld [vmem:[%s1 + $0x18] sm:$0xff]
        %v611 = vld [vmem:[%s1 + $0x20] sm:$0xff]
        %v612 = vld [vmem:[%s1 + $0x28] sm:$0xff]
        %v613 = vld [vmem:[%s1 + $0x30] sm:$0xff]
        %v614 = vld [vmem:[%s1 + $0x38] sm:$0xff]
        %v615 = vld [vmem:[%s1 + $0x40] sm:$0xff]
        %v616 = vld [vmem:[%s1 + $0x48] sm:$0xff]
        %v617 = vld [vmem:[%s1 + $0x50] sm:$0xff]
        %v618 = vld [vmem:[%s1 + $0x58] sm:$0xff]
        %v619 = vld [vmem:[%s1 + $0x60] sm:$0xff]
        %v620 = vld [vmem:[%s1 + $0x68] sm:$0xff]
        %v621 = vld [vmem:[%s1 + $0x70] sm:$0xff]
        %v622 = vld [vmem:[%s1 + $0x78] sm:$0xff]
        %624 = vset.pattern.permute.xlu0 0
        %625 = vperm.xlu0 %624, %v607
        %v626 = vpop.permute.xlu0 %625
        %629 = vset.pattern.permute.xlu0 0
        %630 = vperm.xlu0 %629, %v608
        %v631 = vpop.permute.xlu0 %630
        %634 = vset.pattern.permute.xlu0 0
        %635 = vperm.xlu0 %634, %v609
        %v636 = vpop.permute.xlu0 %635
        %639 = vset.pattern.permute.xlu0 0
        %640 = vperm.xlu0 %639, %v610
        %v641 = vpop.permute.xlu0 %640
        %644 = vset.pattern.permute.xlu0 0
        %645 = vperm.xlu0 %644, %v611
        %v646 = vpop.permute.xlu0 %645
        %649 = vset.pattern.permute.xlu0 0
        %650 = vperm.xlu0 %649, %v612
        %v651 = vpop.permute.xlu0 %650
        %654 = vset.pattern.permute.xlu0 0
        %655 = vperm.xlu0 %654, %v613
        %v656 = vpop.permute.xlu0 %655
        %659 = vset.pattern.permute.xlu0 0
        %660 = vperm.xlu0 %659, %v614
        %v661 = vpop.permute.xlu0 %660
        %664 = vset.pattern.permute.xlu0 0
        %665 = vperm.xlu0 %664, %v615
        %v666 = vpop.permute.xlu0 %665
        %669 = vset.pattern.permute.xlu0 0
        %670 = vperm.xlu0 %669, %v616
        %v671 = vpop.permute.xlu0 %670
        %674 = vset.pattern.permute.xlu0 0
        %675 = vperm.xlu0 %674, %v617
        %v676 = vpop.permute.xlu0 %675
        %679 = vset.pattern.permute.xlu0 0
        %680 = vperm.xlu0 %679, %v618
        %v681 = vpop.permute.xlu0 %680
        %684 = vset.pattern.permute.xlu0 0
        %685 = vperm.xlu0 %684, %v619
        %v686 = vpop.permute.xlu0 %685
        %689 = vset.pattern.permute.xlu0 0
        %690 = vperm.xlu0 %689, %v620
        %v691 = vpop.permute.xlu0 %690
        %694 = vset.pattern.permute.xlu0 0
        %695 = vperm.xlu0 %694, %v621
        %v696 = vpop.permute.xlu0 %695
        %699 = vset.pattern.permute.xlu0 0
        %700 = vperm.xlu0 %699, %v622
        %v701 = vpop.permute.xlu0 %700
        %v703 = vadd.f32 %v591, %v626
        %v704 = vadd.f32 %v592, %v631
        %v705 = vadd.f32 %v593, %v636
        %v706 = vadd.f32 %v594, %v641
        %v707 = vadd.f32 %v595, %v646
        %v708 = vadd.f32 %v596, %v651
        %v709 = vadd.f32 %v597, %v656
        %v710 = vadd.f32 %v598, %v661
        %v711 = vadd.f32 %v599, %v666
        %v712 = vadd.f32 %v600, %v671
        %v713 = vadd.f32 %v601, %v676
        %v714 = vadd.f32 %v602, %v681
        %v715 = vadd.f32 %v603, %v686
        %v716 = vadd.f32 %v604, %v691
        %v717 = vadd.f32 %v605, %v696
        %v718 = vadd.f32 %v606, %v701
        %v719 = vmax.f32 %v703, 0.0
        %v720 = vmax.f32 %v704, 0.0
        %v721 = vmax.f32 %v705, 0.0
        %v722 = vmax.f32 %v706, 0.0
        %v723 = vmax.f32 %v707, 0.0
        %v724 = vmax.f32 %v708, 0.0
        %v725 = vmax.f32 %v709, 0.0
        %v726 = vmax.f32 %v710, 0.0
        %v727 = vmax.f32 %v711, 0.0
        %v728 = vmax.f32 %v712, 0.0
        %v729 = vmax.f32 %v713, 0.0
        %v730 = vmax.f32 %v714, 0.0
        %v731 = vmax.f32 %v715, 0.0
        %v732 = vmax.f32 %v716, 0.0
        %v733 = vmax.f32 %v717, 0.0
        %v734 = vmax.f32 %v718, 0.0
        %v735 = vld [vmem:[%s3] sm:$0xff]
        %v736 = vld [vmem:[%s3 + $0x8] sm:$0xff]
        %v737 = vld [vmem:[%s3 + $0x10] sm:$0xff]
        %v738 = vld [vmem:[%s3 + $0x18] sm:$0xff]
        %v739 = vld [vmem:[%s3 + $0x20] sm:$0xff]
        %v740 = vld [vmem:[%s3 + $0x28] sm:$0xff]
        %v741 = vld [vmem:[%s3 + $0x30] sm:$0xff]
        %v742 = vld [vmem:[%s3 + $0x38] sm:$0xff]
        %v743 = vld [vmem:[%s3 + $0x40] sm:$0xff]
        %v744 = vld [vmem:[%s3 + $0x48] sm:$0xff]
        %v745 = vld [vmem:[%s3 + $0x50] sm:$0xff]
        %v746 = vld [vmem:[%s3 + $0x58] sm:$0xff]
        %v747 = vld [vmem:[%s3 + $0x60] sm:$0xff]
        %v748 = vld [vmem:[%s3 + $0x68] sm:$0xff]
        %v749 = vld [vmem:[%s3 + $0x70] sm:$0xff]
        %v750 = vld [vmem:[%s3 + $0x78] sm:$0xff]
        %v751 = vld [vmem:[%s4] sm:$0xff]
        %v752 = vld [vmem:[%s4 + $0x8] sm:$0xff]
        %v753 = vld [vmem:[%s4 + $0x10] sm:$0xff]
        %v754 = vld [vmem:[%s4 + $0x18] sm:$0xff]
        %v755 = vld [vmem:[%s4 + $0x20] sm:$0xff]
        %v756 = vld [vmem:[%s4 + $0x28] sm:$0xff]
        %v757 = vld [vmem:[%s4 + $0x30] sm:$0xff]
        %v758 = vld [vmem:[%s4 + $0x38] sm:$0xff]
        %v759 = vld [vmem:[%s4 + $0x40] sm:$0xff]
        %v760 = vld [vmem:[%s4 + $0x48] sm:$0xff]
        %v761 = vld [vmem:[%s4 + $0x50] sm:$0xff]
        %v762 = vld [vmem:[%s4 + $0x58] sm:$0xff]
        %v763 = vld [vmem:[%s4 + $0x60] sm:$0xff]
        %v764 = vld [vmem:[%s4 + $0x68] sm:$0xff]
        %v765 = vld [vmem:[%s4 + $0x70] sm:$0xff]
        %v766 = vld [vmem:[%s4 + $0x78] sm:$0xff]
        %768 = vset.pattern.permute.xlu0 0
        %769 = vperm.xlu0 %768, %v751
        %v770 = vpop.permute.xlu0 %769
        %773 = vset.pattern.permute.xlu0 0
        %774 = vperm.xlu0 %773, %v752
        %v775 = vpop.permute.xlu0 %774
        %778 = vset.pattern.permute.xlu0 0
        %779 = vperm.xlu0 %778, %v753
        %v780 = vpop.permute.xlu0 %779
        %783 = vset.pattern.permute.xlu0 0
        %784 = vperm.xlu0 %783, %v754
        %v785 = vpop.permute.xlu0 %784
        %788 = vset.pattern.permute.xlu0 0
        %789 = vperm.xlu0 %788, %v755
        %v790 = vpop.permute.xlu0 %789
        %793 = vset.pattern.permute.xlu0 0
        %794 = vperm.xlu0 %793, %v756
        %v795 = vpop.permute.xlu0 %794
        %798 = vset.pattern.permute.xlu0 0
        %799 = vperm.xlu0 %798, %v757
        %v800 = vpop.permute.xlu0 %799
        %803 = vset.pattern.permute.xlu0 0
        %804 = vperm.xlu0 %803, %v758
        %v805 = vpop.permute.xlu0 %804
        %808 = vset.pattern.permute.xlu0 0
        %809 = vperm.xlu0 %808, %v759
        %v810 = vpop.permute.xlu0 %809
        %813 = vset.pattern.permute.xlu0 0
        %814 = vperm.xlu0 %813, %v760
        %v815 = vpop.permute.xlu0 %814
        %818 = vset.pattern.permute.xlu0 0
        %819 = vperm.xlu0 %818, %v761
        %v820 = vpop.permute.xlu0 %819
        %823 = vset.pattern.permute.xlu0 0
        %824 = vperm.xlu0 %823, %v762
        %v825 = vpop.permute.xlu0 %824
        %828 = vset.pattern.permute.xlu0 0
        %829 = vperm.xlu0 %828, %v763
        %v830 = vpop.permute.xlu0 %829
        %833 = vset.pattern.permute.xlu0 0
        %834 = vperm.xlu0 %833, %v764
        %v835 = vpop.permute.xlu0 %834
        %838 = vset.pattern.permute.xlu0 0
        %839 = vperm.xlu0 %838, %v765
        %v840 = vpop.permute.xlu0 %839
        %843 = vset.pattern.permute.xlu0 0
        %844 = vperm.xlu0 %843, %v766
        %v845 = vpop.permute.xlu0 %844
        %847 = vmatprep.subr.mxu0 0.0
        %848 = vmatpush1.msra.mxu0 %v719
        %849 = vmatprep.subr.mxu0 0.0
        %850 = vmatpush1.msra.mxu0 %v720
        %851 = vmatprep.subr.mxu0 0.0
        %852 = vmatpush1.msra.mxu0 %v721
        %853 = vmatprep.subr.mxu0 0.0
        %854 = vmatpush1.msra.mxu0 %v722
        %855 = vmatprep.subr.mxu0 0.0
        %856 = vmatpush1.msra.mxu0 %v723
        %857 = vmatprep.subr.mxu0 0.0
        %858 = vmatpush1.msra.mxu0 %v724
        %859 = vmatprep.subr.mxu0 0.0
        %860 = vmatpush1.msra.mxu0 %v725
        %861 = vmatprep.subr.mxu0 0.0
        %862 = vmatpush1.msra.mxu0 %v726
        %863 = vmatprep.subr.mxu0 0.0
        %864 = vmatpush1.msra.mxu0 %v727
        %865 = vmatprep.subr.mxu0 0.0
        %866 = vmatpush1.msra.mxu0 %v728
        %867 = vmatprep.subr.mxu0 0.0
        %868 = vmatpush1.msra.mxu0 %v729
        %869 = vmatprep.subr.mxu0 0.0
        %870 = vmatpush1.msra.mxu0 %v730
        %871 = vmatprep.subr.mxu0 0.0
        %872 = vmatpush1.msra.mxu0 %v731
        %873 = vmatprep.subr.mxu0 0.0
        %874 = vmatpush1.msra.mxu0 %v732
        %875 = vmatprep.subr.mxu0 0.0
        %876 = vmatpush1.msra.mxu0 %v733
        %877 = vmatprep.subr.mxu0 0.0
        %878 = vmatpush1.msra.mxu0 %v734
        %879 = vmatprep.subr.mxu0 0.0
        %880 = vmatpush1.msra.mxu0 0.0
        %881 = vmatprep.subr.mxu0 0.0
        %882 = vmatpush1.msra.mxu0 0.0
        %883 = vmatprep.subr.mxu0 0.0
        %884 = vmatpush1.msra.mxu0 0.0
        %885 = vmatprep.subr.mxu0 0.0
        %886 = vmatpush1.msra.mxu0 0.0
        %887 = vmatprep.subr.mxu0 0.0
        %888 = vmatpush1.msra.mxu0 0.0
        %889 = vmatprep.subr.mxu0 0.0
        %890 = vmatpush1.msra.mxu0 0.0
        %891 = vmatprep.subr.mxu0 0.0
        %892 = vmatpush1.msra.mxu0 0.0
        %893 = vmatprep.subr.mxu0 0.0
        %894 = vmatpush1.msra.mxu0 0.0
        %895 = vmatprep.subr.mxu0 0.0
        %896 = vmatpush1.msra.mxu0 0.0
        %897 = vmatprep.subr.mxu0 0.0
        %898 = vmatpush1.msra.mxu0 0.0
        %899 = vmatprep.subr.mxu0 0.0
        %900 = vmatpush1.msra.mxu0 0.0
        %901 = vmatprep.subr.mxu0 0.0
        %902 = vmatpush1.msra.mxu0 0.0
        %903 = vmatprep.subr.mxu0 0.0
        %904 = vmatpush1.msra.mxu0 0.0
        %905 = vmatprep.subr.mxu0 0.0
        %906 = vmatpush1.msra.mxu0 0.0
        %907 = vmatprep.subr.mxu0 0.0
        %908 = vmatpush1.msra.mxu0 0.0
        %909 = vmatprep.subr.mxu0 0.0
        %910 = vmatpush1.msra.mxu0 0.0
        %911 = vmatprep.mubr.f32.mxu0 0.0
        %912 = vmatmul.mubr.f32.gmra.mrb[0].mxu0 %v735
        %v913 = vpop.f32.mrb[0].mxu0
        %v914 = vadd.f32 %v770, %v913
        %v915 = vpop.f32.mrb[0].mxu0
        %916 = vmatprep.mubr.f32.mxu0 0.0
        %917 = vmatmul.mubr.f32.gmra.mrb[0].mxu0 %v736
        %v918 = vpop.f32.mrb[0].mxu0
        %v919 = vadd.f32 %v775, %v918
        %v920 = vpop.f32.mrb[0].mxu0
        %921 = vmatprep.mubr.f32.mxu0 0.0
        %922 = vmatmul.mubr.f32.gmra.mrb[0].mxu0 %v737
        %v923 = vpop.f32.mrb[0].mxu0
        %v924 = vadd.f32 %v780, %v923
        %v925 = vpop.f32.mrb[0].mxu0
        %926 = vmatprep.mubr.f32.mxu0 0.0
        %927 = vmatmul.mubr.f32.gmra.mrb[0].mxu0 %v738
        %v928 = vpop.f32.mrb[0].mxu0
        %v929 = vadd.f32 %v785, %v928
        %v930 = vpop.f32.mrb[0].mxu0
        %931 = vmatprep.mubr.f32.mxu0 0.0
        %932 = vmatmul.mubr.f32.gmra.mrb[0].mxu0 %v739
        %v933 = vpop.f32.mrb[0].mxu0
        %v934 = vadd.f32 %v790, %v933
        %v935 = vpop.f32.mrb[0].mxu0
        %936 = vmatprep.mubr.f32.mxu0 0.0
        %937 = vmatmul.mubr.f32.gmra.mrb[0].mxu0 %v740
        %v938 = vpop.f32.mrb[0].mxu0
        %v939 = vadd.f32 %v795, %v938
        %v940 = vpop.f32.mrb[0].mxu0
        %941 = vmatprep.mubr.f32.mxu0 0.0
        %942 = vmatmul.mubr.f32.gmra.mrb[0].mxu0 %v741
        %v943 = vpop.f32.mrb[0].mxu0
        %v944 = vadd.f32 %v800, %v943
        %v945 = vpop.f32.mrb[0].mxu0
        %946 = vmatprep.mubr.f32.mxu0 0.0
        %947 = vmatmul.mubr.f32.gmra.mrb[0].mxu0 %v742
        %v948 = vpop.f32.mrb[0].mxu0
        %v949 = vadd.f32 %v805, %v948
        %v950 = vpop.f32.mrb[0].mxu0
        %951 = vmatprep.mubr.f32.mxu0 0.0
        %952 = vmatmul.mubr.f32.gmra.mrb[0].mxu0 %v743
        %v953 = vpop.f32.mrb[0].mxu0
        %v954 = vadd.f32 %v810, %v953
        %v955 = vpop.f32.mrb[0].mxu0
        %956 = vmatprep.mubr.f32.mxu0 0.0
        %957 = vmatmul.mubr.f32.gmra.mrb[0].mxu0 %v744
        %v958 = vpop.f32.mrb[0].mxu0
        %v959 = vadd.f32 %v815, %v958
        %v960 = vpop.f32.mrb[0].mxu0
        %961 = vmatprep.mubr.f32.mxu0 0.0
        %962 = vmatmul.mubr.f32.gmra.mrb[0].mxu0 %v745
        %v963 = vpop.f32.mrb[0].mxu0
        %v964 = vadd.f32 %v820, %v963
        %v965 = vpop.f32.mrb[0].mxu0
        %966 = vmatprep.mubr.f32.mxu0 0.0
        %967 = vmatmul.mubr.f32.gmra.mrb[0].mxu0 %v746
        %v968 = vpop.f32.mrb[0].mxu0
        %v969 = vadd.f32 %v825, %v968
        %v970 = vpop.f32.mrb[0].mxu0
        %971 = vmatprep.mubr.f32.mxu0 0.0
        %972 = vmatmul.mubr.f32.gmra.mrb[0].mxu0 %v747
        %v973 = vpop.f32.mrb[0].mxu0
        %v974 = vadd.f32 %v830, %v973
        %v975 = vpop.f32.mrb[0].mxu0
        %976 = vmatprep.mubr.f32.mxu0 0.0
        %977 = vmatmul.mubr.f32.gmra.mrb[0].mxu0 %v748
        %v978 = vpop.f32.mrb[0].mxu0
        %v979 = vadd.f32 %v835, %v978
        %v980 = vpop.f32.mrb[0].mxu0
        %981 = vmatprep.mubr.f32.mxu0 0.0
        %982 = vmatmul.mubr.f32.gmra.mrb[0].mxu0 %v749
        %v983 = vpop.f32.mrb[0].mxu0
        %v984 = vadd.f32 %v840, %v983
        %v985 = vpop.f32.mrb[0].mxu0
        %986 = vmatprep.mubr.f32.mxu0 0.0
        %987 = vmatmul.mubr.f32.gmra.mrb[0].mxu0 %v750
        %v988 = vpop.f32.mrb[0].mxu0
        %v989 = vadd.f32 %v845, %v988
        %v990 = vpop.f32.mrb[0].mxu0
        %991 = vdwg.mxu0
        %v992 = vmax.f32 %v914, 0.0
        %v993 = vmax.f32 %v919, 0.0
        %v994 = vmax.f32 %v924, 0.0
        %v995 = vmax.f32 %v929, 0.0
        %v996 = vmax.f32 %v934, 0.0
        %v997 = vmax.f32 %v939, 0.0
        %v998 = vmax.f32 %v944, 0.0
        %v999 = vmax.f32 %v949, 0.0
        %v1000 = vmax.f32 %v954, 0.0
        %v1001 = vmax.f32 %v959, 0.0
        %v1002 = vmax.f32 %v964, 0.0
        %v1003 = vmax.f32 %v969, 0.0
        %v1004 = vmax.f32 %v974, 0.0
        %v1005 = vmax.f32 %v979, 0.0
        %v1006 = vmax.f32 %v984, 0.0
        %v1007 = vmax.f32 %v989, 0.0
        %1009 = vset.pattern.permute.xlu0 0
        %1010 = vperm.xlu0 %1009, %v427
        %v1011 = vpop.permute.xlu0 %1010
        %1013 = vmatprep.subr.mxu0 0.0
        %1014 = vmatpush1.msra.mxu0 %v992
        %1015 = vmatprep.subr.mxu0 0.0
        %1016 = vmatpush1.msra.mxu0 %v993
        %1017 = vmatprep.subr.mxu0 0.0
        %1018 = vmatpush1.msra.mxu0 %v994
        %1019 = vmatprep.subr.mxu0 0.0
        %1020 = vmatpush1.msra.mxu0 %v995
        %1021 = vmatprep.subr.mxu0 0.0
        %1022 = vmatpush1.msra.mxu0 %v996
        %1023 = vmatprep.subr.mxu0 0.0
        %1024 = vmatpush1.msra.mxu0 %v997
        %1025 = vmatprep.subr.mxu0 0.0
        %1026 = vmatpush1.msra.mxu0 %v998
        %1027 = vmatprep.subr.mxu0 0.0
        %1028 = vmatpush1.msra.mxu0 %v999
        %1029 = vmatprep.subr.mxu0 0.0
        %1030 = vmatpush1.msra.mxu0 %v1000
        %1031 = vmatprep.subr.mxu0 0.0
        %1032 = vmatpush1.msra.mxu0 %v1001
        %1033 = vmatprep.subr.mxu0 0.0
        %1034 = vmatpush1.msra.mxu0 %v1002
        %1035 = vmatprep.subr.mxu0 0.0
        %1036 = vmatpush1.msra.mxu0 %v1003
        %1037 = vmatprep.subr.mxu0 0.0
        %1038 = vmatpush1.msra.mxu0 %v1004
        %1039 = vmatprep.subr.mxu0 0.0
        %1040 = vmatpush1.msra.mxu0 %v1005
        %1041 = vmatprep.subr.mxu0 0.0
        %1042 = vmatpush1.msra.mxu0 %v1006
        %1043 = vmatprep.subr.mxu0 0.0
        %1044 = vmatpush1.msra.mxu0 %v1007
        %1045 = vmatprep.subr.mxu0 0.0
        %1046 = vmatpush1.msra.mxu0 0.0
        %1047 = vmatprep.subr.mxu0 0.0
        %1048 = vmatpush1.msra.mxu0 0.0
        %1049 = vmatprep.subr.mxu0 0.0
        %1050 = vmatpush1.msra.mxu0 0.0
        %1051 = vmatprep.subr.mxu0 0.0
        %1052 = vmatpush1.msra.mxu0 0.0
        %1053 = vmatprep.subr.mxu0 0.0
        %1054 = vmatpush1.msra.mxu0 0.0
        %1055 = vmatprep.subr.mxu0 0.0
        %1056 = vmatpush1.msra.mxu0 0.0
        %1057 = vmatprep.subr.mxu0 0.0
        %1058 = vmatpush1.msra.mxu0 0.0
        %1059 = vmatprep.subr.mxu0 0.0
        %1060 = vmatpush1.msra.mxu0 0.0
        %1061 = vmatprep.subr.mxu0 0.0
        %1062 = vmatpush1.msra.mxu0 0.0
        %1063 = vmatprep.subr.mxu0 0.0
        %1064 = vmatpush1.msra.mxu0 0.0
        %1065 = vmatprep.subr.mxu0 0.0
        %1066 = vmatpush1.msra.mxu0 0.0
        %1067 = vmatprep.subr.mxu0 0.0
        %1068 = vmatpush1.msra.mxu0 0.0
        %1069 = vmatprep.subr.mxu0 0.0
        %1070 = vmatpush1.msra.mxu0 0.0
        %1071 = vmatprep.subr.mxu0 0.0
        %1072 = vmatpush1.msra.mxu0 0.0
        %1073 = vmatprep.subr.mxu0 0.0
        %1074 = vmatpush1.msra.mxu0 0.0
        %1075 = vmatprep.subr.mxu0 0.0
        %1076 = vmatpush1.msra.mxu0 0.0
        %1077 = vmatprep.mubr.f32.mxu0 0.0
        %1078 = vmatmul.mubr.f32.gmra.mrb[0].mxu0 %v426
        %v1079 = vpop.f32.mrb[0].mxu0
        %v1080 = vadd.f32 %v1011, %v1079
        %v1081 = vpop.f32.mrb[0].mxu0
        %1082 = vdwg.mxu0
        %v1083 = vadd.f32 %v1080, 0.025
        %v1084 = vmul.f32 %v1083, 0.0625
        %v1085 = vadd.f32 %v1084, 1.0
        %v1086 = vadd.f32 %v1080, 0.2
        %v1088 = vrot.slane %v430, 7
        %v1090 = vmul.f32 %v1086, %v1088
        %v1092 = vrot.slane %v1090, 1
        %v1094 = vadd.f32 %v1085, %v1092
        %v1095 = vadd.f32 %v1080, 0.0
        %v1096 = vmul.f32 %v1095, 0.0625
        %v1097 = vadd.f32 %v1096, 0.04
        %v1098 = vadd.f32 %v1080, 0.3
        %v1099 = vrot.slane %v430, 6
        %v1101 = vmul.f32 %v1098, %v1099
        %v1103 = vrot.slane %v1101, 1
        %v1105 = vadd.f32 %v1097, %v1103
        %v1106 = vmax.f32 %v1105, 0.01
        %s1107 = scalar_lea.vmem %s371, 2 [#allocation2]
        %v1108 = vld [vmem:[%s1107] sm:$0x3]
        %v1109 = vmul.f32 %v1108, 0.25
        %v1110 = vlaneseq
        %v1111 = vshrl.u32 %v1110, 7
        %v1112 = vsub.s32 0, %v1111
        %v1113 = vrot.slane %v1094, %v1112
        %v1114 = vmul.f32 %v434, %v1113
        %v1115 = vmul.f32 %v439, %v1113
        %v1116 = vmul.f32 %v444, %v1113
        %v1117 = vmul.f32 %v449, %v1113
        %v1118 = vmul.f32 %v454, %v1113
        %v1119 = vmul.f32 %v459, %v1113
        %v1120 = vmul.f32 %v464, %v1113
        %v1121 = vmul.f32 %v469, %v1113
        %v1122 = vmul.f32 %v474, %v1113
        %v1123 = vmul.f32 %v479, %v1113
        %v1124 = vmul.f32 %v484, %v1113
        %v1125 = vmul.f32 %v489, %v1113
        %v1126 = vmul.f32 %v494, %v1113
        %v1127 = vmul.f32 %v499, %v1113
        %v1128 = vmul.f32 %v504, %v1113
        %v1129 = vmul.f32 %v509, %v1113
        %v1130 = vlaneseq
        %v1131 = vshrl.u32 %v1130, 7
        %v1132 = vsub.s32 2, %v1131
        %v1133 = vrot.slane %v1106, %v1132
        %v1134 = vmul.f32 %v513, %v1133
        %v1135 = vmul.f32 %v517, %v1133
        %v1136 = vmul.f32 %v521, %v1133
        %v1137 = vmul.f32 %v525, %v1133
        %v1138 = vmul.f32 %v529, %v1133
        %v1139 = vmul.f32 %v533, %v1133
        %v1140 = vmul.f32 %v537, %v1133
        %v1141 = vmul.f32 %v541, %v1133
        %v1142 = vmul.f32 %v545, %v1133
        %v1143 = vmul.f32 %v549, %v1133
        %v1144 = vmul.f32 %v553, %v1133
        %v1145 = vmul.f32 %v557, %v1133
        %v1146 = vmul.f32 %v561, %v1133
        %v1147 = vmul.f32 %v565, %v1133
        %v1148 = vmul.f32 %v569, %v1133
        %v1149 = vmul.f32 %v573, %v1133
        %v1150 = vadd.f32 %v1114, %v1134
        %v1151 = vadd.f32 %v1115, %v1135
        %v1152 = vadd.f32 %v1116, %v1136
        %v1153 = vadd.f32 %v1117, %v1137
        %v1154 = vadd.f32 %v1118, %v1138
        %v1155 = vadd.f32 %v1119, %v1139
        %v1156 = vadd.f32 %v1120, %v1140
        %v1157 = vadd.f32 %v1121, %v1141
        %v1158 = vadd.f32 %v1122, %v1142
        %v1159 = vadd.f32 %v1123, %v1143
        %v1160 = vadd.f32 %v1124, %v1144
        %v1161 = vadd.f32 %v1125, %v1145
        %v1162 = vadd.f32 %v1126, %v1146
        %v1163 = vadd.f32 %v1127, %v1147
        %v1164 = vadd.f32 %v1128, %v1148
        %v1165 = vadd.f32 %v1129, %v1149
        %s1166 = scalar_lea.vmem %s1, 128
        %v1167 = vld [vmem:[%s1166] sm:$0xff]
        %v1168 = vld [vmem:[%s1166 + $0x8] sm:$0xff]
        %v1169 = vld [vmem:[%s1166 + $0x10] sm:$0xff]
        %v1170 = vld [vmem:[%s1166 + $0x18] sm:$0xff]
        %v1171 = vld [vmem:[%s1166 + $0x20] sm:$0xff]
        %v1172 = vld [vmem:[%s1166 + $0x28] sm:$0xff]
        %v1173 = vld [vmem:[%s1166 + $0x30] sm:$0xff]
        %v1174 = vld [vmem:[%s1166 + $0x38] sm:$0xff]
        %v1175 = vld [vmem:[%s1166 + $0x40] sm:$0xff]
        %v1176 = vld [vmem:[%s1166 + $0x48] sm:$0xff]
        %v1177 = vld [vmem:[%s1166 + $0x50] sm:$0xff]
        %v1178 = vld [vmem:[%s1166 + $0x58] sm:$0xff]
        %v1179 = vld [vmem:[%s1166 + $0x60] sm:$0xff]
        %v1180 = vld [vmem:[%s1166 + $0x68] sm:$0xff]
        %v1181 = vld [vmem:[%s1166 + $0x70] sm:$0xff]
        %v1182 = vld [vmem:[%s1166 + $0x78] sm:$0xff]
        %1184 = vset.pattern.permute.xlu0 0
        %1185 = vperm.xlu0 %1184, %v1167
        %v1186 = vpop.permute.xlu0 %1185
        %1189 = vset.pattern.permute.xlu0 0
        %1190 = vperm.xlu0 %1189, %v1168
        %v1191 = vpop.permute.xlu0 %1190
        %1194 = vset.pattern.permute.xlu0 0
        %1195 = vperm.xlu0 %1194, %v1169
        %v1196 = vpop.permute.xlu0 %1195
        %1199 = vset.pattern.permute.xlu0 0
        %1200 = vperm.xlu0 %1199, %v1170
        %v1201 = vpop.permute.xlu0 %1200
        %1204 = vset.pattern.permute.xlu0 0
        %1205 = vperm.xlu0 %1204, %v1171
        %v1206 = vpop.permute.xlu0 %1205
        %1209 = vset.pattern.permute.xlu0 0
        %1210 = vperm.xlu0 %1209, %v1172
        %v1211 = vpop.permute.xlu0 %1210
        %1214 = vset.pattern.permute.xlu0 0
        %1215 = vperm.xlu0 %1214, %v1173
        %v1216 = vpop.permute.xlu0 %1215
        %1219 = vset.pattern.permute.xlu0 0
        %1220 = vperm.xlu0 %1219, %v1174
        %v1221 = vpop.permute.xlu0 %1220
        %1224 = vset.pattern.permute.xlu0 0
        %1225 = vperm.xlu0 %1224, %v1175
        %v1226 = vpop.permute.xlu0 %1225
        %1229 = vset.pattern.permute.xlu0 0
        %1230 = vperm.xlu0 %1229, %v1176
        %v1231 = vpop.permute.xlu0 %1230
        %1234 = vset.pattern.permute.xlu0 0
        %1235 = vperm.xlu0 %1234, %v1177
        %v1236 = vpop.permute.xlu0 %1235
        %1239 = vset.pattern.permute.xlu0 0
        %1240 = vperm.xlu0 %1239, %v1178
        %v1241 = vpop.permute.xlu0 %1240
        %1244 = vset.pattern.permute.xlu0 0
        %1245 = vperm.xlu0 %1244, %v1179
        %v1246 = vpop.permute.xlu0 %1245
        %1249 = vset.pattern.permute.xlu0 0
        %1250 = vperm.xlu0 %1249, %v1180
        %v1251 = vpop.permute.xlu0 %1250
        %1254 = vset.pattern.permute.xlu0 0
        %1255 = vperm.xlu0 %1254, %v1181
        %v1256 = vpop.permute.xlu0 %1255
        %1259 = vset.pattern.permute.xlu0 0
        %1260 = vperm.xlu0 %1259, %v1182
        %v1261 = vpop.permute.xlu0 %1260
        %v1263 = vadd.f32 %v1150, %v1186
        %v1264 = vadd.f32 %v1151, %v1191
        %v1265 = vadd.f32 %v1152, %v1196
        %v1266 = vadd.f32 %v1153, %v1201
        %v1267 = vadd.f32 %v1154, %v1206
        %v1268 = vadd.f32 %v1155, %v1211
        %v1269 = vadd.f32 %v1156, %v1216
        %v1270 = vadd.f32 %v1157, %v1221
        %v1271 = vadd.f32 %v1158, %v1226
        %v1272 = vadd.f32 %v1159, %v1231
        %v1273 = vadd.f32 %v1160, %v1236
        %v1274 = vadd.f32 %v1161, %v1241
        %v1275 = vadd.f32 %v1162, %v1246
        %v1276 = vadd.f32 %v1163, %v1251
        %v1277 = vadd.f32 %v1164, %v1256
        %v1278 = vadd.f32 %v1165, %v1261
        %v1279 = vmax.f32 %v1263, 0.0
        %v1280 = vmax.f32 %v1264, 0.0
        %v1281 = vmax.f32 %v1265, 0.0
        %v1282 = vmax.f32 %v1266, 0.0
        %v1283 = vmax.f32 %v1267, 0.0
        %v1284 = vmax.f32 %v1268, 0.0
        %v1285 = vmax.f32 %v1269, 0.0
        %v1286 = vmax.f32 %v1270, 0.0
        %v1287 = vmax.f32 %v1271, 0.0
        %v1288 = vmax.f32 %v1272, 0.0
        %v1289 = vmax.f32 %v1273, 0.0
        %v1290 = vmax.f32 %v1274, 0.0
        %v1291 = vmax.f32 %v1275, 0.0
        %v1292 = vmax.f32 %v1276, 0.0
        %v1293 = vmax.f32 %v1277, 0.0
        %v1294 = vmax.f32 %v1278, 0.0
        %1295 = vmatprep.subr.mxu0 0.0
        %1296 = vmatpush1.msra.mxu0 %v1279
        %1297 = vmatprep.subr.mxu0 0.0
        %1298 = vmatpush1.msra.mxu0 %v1280
        %1299 = vmatprep.subr.mxu0 0.0
        %1300 = vmatpush1.msra.mxu0 %v1281
        %1301 = vmatprep.subr.mxu0 0.0
        %1302 = vmatpush1.msra.mxu0 %v1282
        %1303 = vmatprep.subr.mxu0 0.0
        %1304 = vmatpush1.msra.mxu0 %v1283
        %1305 = vmatprep.subr.mxu0 0.0
        %1306 = vmatpush1.msra.mxu0 %v1284
        %1307 = vmatprep.subr.mxu0 0.0
        %1308 = vmatpush1.msra.mxu0 %v1285
        %1309 = vmatprep.subr.mxu0 0.0
        %1310 = vmatpush1.msra.mxu0 %v1286
        %1311 = vmatprep.subr.mxu0 0.0
        %1312 = vmatpush1.msra.mxu0 %v1287
        %1313 = vmatprep.subr.mxu0 0.0
        %1314 = vmatpush1.msra.mxu0 %v1288
        %1315 = vmatprep.subr.mxu0 0.0
        %1316 = vmatpush1.msra.mxu0 %v1289
        %1317 = vmatprep.subr.mxu0 0.0
        %1318 = vmatpush1.msra.mxu0 %v1290
        %1319 = vmatprep.subr.mxu0 0.0
        %1320 = vmatpush1.msra.mxu0 %v1291
        %1321 = vmatprep.subr.mxu0 0.0
        %1322 = vmatpush1.msra.mxu0 %v1292
        %1323 = vmatprep.subr.mxu0 0.0
        %1324 = vmatpush1.msra.mxu0 %v1293
        %1325 = vmatprep.subr.mxu0 0.0
        %1326 = vmatpush1.msra.mxu0 %v1294
        %1327 = vmatprep.subr.mxu0 0.0
        %1328 = vmatpush1.msra.mxu0 0.0
        %1329 = vmatprep.subr.mxu0 0.0
        %1330 = vmatpush1.msra.mxu0 0.0
        %1331 = vmatprep.subr.mxu0 0.0
        %1332 = vmatpush1.msra.mxu0 0.0
        %1333 = vmatprep.subr.mxu0 0.0
        %1334 = vmatpush1.msra.mxu0 0.0
        %1335 = vmatprep.subr.mxu0 0.0
        %1336 = vmatpush1.msra.mxu0 0.0
        %1337 = vmatprep.subr.mxu0 0.0
        %1338 = vmatpush1.msra.mxu0 0.0
        %1339 = vmatprep.subr.mxu0 0.0
        %1340 = vmatpush1.msra.mxu0 0.0
        %1341 = vmatprep.subr.mxu0 0.0
        %1342 = vmatpush1.msra.mxu0 0.0
        %1343 = vmatprep.subr.mxu0 0.0
        %1344 = vmatpush1.msra.mxu0 0.0
        %1345 = vmatprep.subr.mxu0 0.0
        %1346 = vmatpush1.msra.mxu0 0.0
        %1347 = vmatprep.subr.mxu0 0.0
        %1348 = vmatpush1.msra.mxu0 0.0
        %1349 = vmatprep.subr.mxu0 0.0
        %1350 = vmatpush1.msra.mxu0 0.0
        %1351 = vmatprep.subr.mxu0 0.0
        %1352 = vmatpush1.msra.mxu0 0.0
        %1353 = vmatprep.subr.mxu0 0.0
        %1354 = vmatpush1.msra.mxu0 0.0
        %1355 = vmatprep.subr.mxu0 0.0
        %1356 = vmatpush1.msra.mxu0 0.0
        %1357 = vmatprep.subr.mxu0 0.0
        %1358 = vmatpush1.msra.mxu0 0.0
        %1359 = vmatprep.mubr.f32.mxu0 0.0
        %1360 = vmatmul.mubr.f32.gmra.mrb[0].mxu0 %v735
        %v1361 = vpop.f32.mrb[0].mxu0
        %v1362 = vadd.f32 %v770, %v1361
        %v1363 = vpop.f32.mrb[0].mxu0
        %1364 = vmatprep.mubr.f32.mxu0 0.0
        %1365 = vmatmul.mubr.f32.gmra.mrb[0].mxu0 %v736
        %v1366 = vpop.f32.mrb[0].mxu0
        %v1367 = vadd.f32 %v775, %v1366
        %v1368 = vpop.f32.mrb[0].mxu0
        %1369 = vmatprep.mubr.f32.mxu0 0.0
        %1370 = vmatmul.mubr.f32.gmra.mrb[0].mxu0 %v737
        %v1371 = vpop.f32.mrb[0].mxu0
        %v1372 = vadd.f32 %v780, %v1371
        %v1373 = vpop.f32.mrb[0].mxu0
        %1374 = vmatprep.mubr.f32.mxu0 0.0
        %1375 = vmatmul.mubr.f32.gmra.mrb[0].mxu0 %v738
        %v1376 = vpop.f32.mrb[0].mxu0
        %v1377 = vadd.f32 %v785, %v1376
        %v1378 = vpop.f32.mrb[0].mxu0
        %1379 = vmatprep.mubr.f32.mxu0 0.0
        %1380 = vmatmul.mubr.f32.gmra.mrb[0].mxu0 %v739
        %v1381 = vpop.f32.mrb[0].mxu0
        %v1382 = vadd.f32 %v790, %v1381
        %v1383 = vpop.f32.mrb[0].mxu0
        %1384 = vmatprep.mubr.f32.mxu0 0.0
        %1385 = vmatmul.mubr.f32.gmra.mrb[0].mxu0 %v740
        %v1386 = vpop.f32.mrb[0].mxu0
        %v1387 = vadd.f32 %v795, %v1386
        %v1388 = vpop.f32.mrb[0].mxu0
        %1389 = vmatprep.mubr.f32.mxu0 0.0
        %1390 = vmatmul.mubr.f32.gmra.mrb[0].mxu0 %v741
        %v1391 = vpop.f32.mrb[0].mxu0
        %v1392 = vadd.f32 %v800, %v1391
        %v1393 = vpop.f32.mrb[0].mxu0
        %1394 = vmatprep.mubr.f32.mxu0 0.0
        %1395 = vmatmul.mubr.f32.gmra.mrb[0].mxu0 %v742
        %v1396 = vpop.f32.mrb[0].mxu0
        %v1397 = vadd.f32 %v805, %v1396
        %v1398 = vpop.f32.mrb[0].mxu0
        %1399 = vmatprep.mubr.f32.mxu0 0.0
        %1400 = vmatmul.mubr.f32.gmra.mrb[0].mxu0 %v743
        %v1401 = vpop.f32.mrb[0].mxu0
        %v1402 = vadd.f32 %v810, %v1401
        %v1403 = vpop.f32.mrb[0].mxu0
        %1404 = vmatprep.mubr.f32.mxu0 0.0
        %1405 = vmatmul.mubr.f32.gmra.mrb[0].mxu0 %v744
        %v1406 = vpop.f32.mrb[0].mxu0
        %v1407 = vadd.f32 %v815, %v1406
        %v1408 = vpop.f32.mrb[0].mxu0
        %1409 = vmatprep.mubr.f32.mxu0 0.0
        %1410 = vmatmul.mubr.f32.gmra.mrb[0].mxu0 %v745
        %v1411 = vpop.f32.mrb[0].mxu0
        %v1412 = vadd.f32 %v820, %v1411
        %v1413 = vpop.f32.mrb[0].mxu0
        %1414 = vmatprep.mubr.f32.mxu0 0.0
        %1415 = vmatmul.mubr.f32.gmra.mrb[0].mxu0 %v746
        %v1416 = vpop.f32.mrb[0].mxu0
        %v1417 = vadd.f32 %v825, %v1416
        %v1418 = vpop.f32.mrb[0].mxu0
        %1419 = vmatprep.mubr.f32.mxu0 0.0
        %1420 = vmatmul.mubr.f32.gmra.mrb[0].mxu0 %v747
        %v1421 = vpop.f32.mrb[0].mxu0
        %v1422 = vadd.f32 %v830, %v1421
        %v1423 = vpop.f32.mrb[0].mxu0
        %1424 = vmatprep.mubr.f32.mxu0 0.0
        %1425 = vmatmul.mubr.f32.gmra.mrb[0].mxu0 %v748
        %v1426 = vpop.f32.mrb[0].mxu0
        %v1427 = vadd.f32 %v835, %v1426
        %v1428 = vpop.f32.mrb[0].mxu0
        %1429 = vmatprep.mubr.f32.mxu0 0.0
        %1430 = vmatmul.mubr.f32.gmra.mrb[0].mxu0 %v749
        %v1431 = vpop.f32.mrb[0].mxu0
        %v1432 = vadd.f32 %v840, %v1431
        %v1433 = vpop.f32.mrb[0].mxu0
        %1434 = vmatprep.mubr.f32.mxu0 0.0
        %1435 = vmatmul.mubr.f32.gmra.mrb[0].mxu0 %v750
        %v1436 = vpop.f32.mrb[0].mxu0
        %v1437 = vadd.f32 %v845, %v1436
        %v1438 = vpop.f32.mrb[0].mxu0
        %1439 = vdwg.mxu0
        %v1440 = vmax.f32 %v1362, 0.0
        %v1441 = vmax.f32 %v1367, 0.0
        %v1442 = vmax.f32 %v1372, 0.0
        %v1443 = vmax.f32 %v1377, 0.0
        %v1444 = vmax.f32 %v1382, 0.0
        %v1445 = vmax.f32 %v1387, 0.0
        %v1446 = vmax.f32 %v1392, 0.0
        %v1447 = vmax.f32 %v1397, 0.0
        %v1448 = vmax.f32 %v1402, 0.0
        %v1449 = vmax.f32 %v1407, 0.0
        %v1450 = vmax.f32 %v1412, 0.0
        %v1451 = vmax.f32 %v1417, 0.0
        %v1452 = vmax.f32 %v1422, 0.0
        %v1453 = vmax.f32 %v1427, 0.0
        %v1454 = vmax.f32 %v1432, 0.0
        %v1455 = vmax.f32 %v1437, 0.0
        %1456 = vmatprep.subr.mxu0 0.0
        %1457 = vmatpush1.msra.mxu0 %v1440
        %1458 = vmatprep.subr.mxu0 0.0
        %1459 = vmatpush1.msra.mxu0 %v1441
        %1460 = vmatprep.subr.mxu0 0.0
        %1461 = vmatpush1.msra.mxu0 %v1442
        %1462 = vmatprep.subr.mxu0 0.0
        %1463 = vmatpush1.msra.mxu0 %v1443
        %1464 = vmatprep.subr.mxu0 0.0
        %1465 = vmatpush1.msra.mxu0 %v1444
        %1466 = vmatprep.subr.mxu0 0.0
        %1467 = vmatpush1.msra.mxu0 %v1445
        %1468 = vmatprep.subr.mxu0 0.0
        %1469 = vmatpush1.msra.mxu0 %v1446
        %1470 = vmatprep.subr.mxu0 0.0
        %1471 = vmatpush1.msra.mxu0 %v1447
        %1472 = vmatprep.subr.mxu0 0.0
        %1473 = vmatpush1.msra.mxu0 %v1448
        %1474 = vmatprep.subr.mxu0 0.0
        %1475 = vmatpush1.msra.mxu0 %v1449
        %1476 = vmatprep.subr.mxu0 0.0
        %1477 = vmatpush1.msra.mxu0 %v1450
        %1478 = vmatprep.subr.mxu0 0.0
        %1479 = vmatpush1.msra.mxu0 %v1451
        %1480 = vmatprep.subr.mxu0 0.0
        %1481 = vmatpush1.msra.mxu0 %v1452
        %1482 = vmatprep.subr.mxu0 0.0
        %1483 = vmatpush1.msra.mxu0 %v1453
        %1484 = vmatprep.subr.mxu0 0.0
        %1485 = vmatpush1.msra.mxu0 %v1454
        %1486 = vmatprep.subr.mxu0 0.0
        %1487 = vmatpush1.msra.mxu0 %v1455
        %1488 = vmatprep.subr.mxu0 0.0
        %1489 = vmatpush1.msra.mxu0 0.0
        %1490 = vmatprep.subr.mxu0 0.0
        %1491 = vmatpush1.msra.mxu0 0.0
        %1492 = vmatprep.subr.mxu0 0.0
        %1493 = vmatpush1.msra.mxu0 0.0
        %1494 = vmatprep.subr.mxu0 0.0
        %1495 = vmatpush1.msra.mxu0 0.0
        %1496 = vmatprep.subr.mxu0 0.0
        %1497 = vmatpush1.msra.mxu0 0.0
        %1498 = vmatprep.subr.mxu0 0.0
        %1499 = vmatpush1.msra.mxu0 0.0
        %1500 = vmatprep.subr.mxu0 0.0
        %1501 = vmatpush1.msra.mxu0 0.0
        %1502 = vmatprep.subr.mxu0 0.0
        %1503 = vmatpush1.msra.mxu0 0.0
        %1504 = vmatprep.subr.mxu0 0.0
        %1505 = vmatpush1.msra.mxu0 0.0
        %1506 = vmatprep.subr.mxu0 0.0
        %1507 = vmatpush1.msra.mxu0 0.0
        %1508 = vmatprep.subr.mxu0 0.0
        %1509 = vmatpush1.msra.mxu0 0.0
        %1510 = vmatprep.subr.mxu0 0.0
        %1511 = vmatpush1.msra.mxu0 0.0
        %1512 = vmatprep.subr.mxu0 0.0
        %1513 = vmatpush1.msra.mxu0 0.0
        %1514 = vmatprep.subr.mxu0 0.0
        %1515 = vmatpush1.msra.mxu0 0.0
        %1516 = vmatprep.subr.mxu0 0.0
        %1517 = vmatpush1.msra.mxu0 0.0
        %1518 = vmatprep.subr.mxu0 0.0
        %1519 = vmatpush1.msra.mxu0 0.0
        %1520 = vmatprep.mubr.f32.mxu0 0.0
        %1521 = vmatmul.mubr.f32.gmra.mrb[0].mxu0 %v426
        %v1522 = vpop.f32.mrb[0].mxu0
        %v1523 = vadd.f32 %v1011, %v1522
        %v1524 = vpop.f32.mrb[0].mxu0
        %1525 = vdwg.mxu0
        %v1526 = vmul.f32 %v1094, 0.025
        %v1527 = vadd.f32 %v1526, %v1523
        %v1528 = vmul.f32 %v1527, 0.0625
        %v1529 = vadd.f32 %v1094, %v1528
        %v1530 = vrsqrt.pop %v1106
        %v1531 = vmul.f32 %v1106, %v1530
        %vm1532 = vcmp.eq.f32.partialorder %v1106, inf
        %v1533 = vsel %vm1532, %v1106, %v1531
        %vm1534 = vcmp.eq.f32.partialorder %v1106, 0.0
        %v1535 = vand.u32 %v1106, 2147483648
        %v1536 = vsel %vm1534, %v1535, %v1533
        %v1538 = vrot.slane %v1536, 2
        %v1540 = vmul.f32 %v1094, %v1538
        %v1542 = vrot.slane %v1523, 1
        %v1544 = vadd.f32 %v1540, %v1542
        %v1545 = vmul.f32 %v1544, %v1109
        %v1546 = vadd.f32 %v1529, %v1545
        %v1547 = vsub.f32 0.04, %v1106
        %v1548 = vmul.f32 %v1547, 1.5
        %v1549 = vadd.f32 %v1548, %v1523
        %v1550 = vmul.f32 %v1549, 0.0625
        %v1551 = vadd.f32 %v1106, %v1550
        %v1552 = vadd.f32 %v1523, 0.3
        %v1554 = vrot.slane %v1109, 6
        %v1556 = vmul.f32 %v1552, %v1554
        %v1558 = vrot.slane %v1556, 1
        %v1560 = vadd.f32 %v1551, %v1558
        %v1561 = vmax.f32 %v1560, 0.01
        %s1562 = scalar_lea.vmem %s371, 4 [#allocation2]
        %v1563 = vld [vmem:[%s1562] sm:$0x3]
        %v1564 = vmul.f32 %v1563, 0.25
        %v1565 = vlaneseq
        %v1566 = vshrl.u32 %v1565, 7
        %v1567 = vsub.s32 0, %v1566
        %v1568 = vrot.slane %v1546, %v1567
        %v1569 = vmul.f32 %v434, %v1568
        %v1570 = vmul.f32 %v439, %v1568
        %v1571 = vmul.f32 %v444, %v1568
        %v1572 = vmul.f32 %v449, %v1568
        %v1573 = vmul.f32 %v454, %v1568
        %v1574 = vmul.f32 %v459, %v1568
        %v1575 = vmul.f32 %v464, %v1568
        %v1576 = vmul.f32 %v469, %v1568
        %v1577 = vmul.f32 %v474, %v1568
        %v1578 = vmul.f32 %v479, %v1568
        %v1579 = vmul.f32 %v484, %v1568
        %v1580 = vmul.f32 %v489, %v1568
        %v1581 = vmul.f32 %v494, %v1568
        %v1582 = vmul.f32 %v499, %v1568
        %v1583 = vmul.f32 %v504, %v1568
        %v1584 = vmul.f32 %v509, %v1568
        %v1585 = vlaneseq
        %v1586 = vshrl.u32 %v1585, 7
        %v1587 = vsub.s32 2, %v1586
        %v1588 = vrot.slane %v1561, %v1587
        %v1589 = vmul.f32 %v513, %v1588
        %v1590 = vmul.f32 %v517, %v1588
        %v1591 = vmul.f32 %v521, %v1588
        %v1592 = vmul.f32 %v525, %v1588
        %v1593 = vmul.f32 %v529, %v1588
        %v1594 = vmul.f32 %v533, %v1588
        %v1595 = vmul.f32 %v537, %v1588
        %v1596 = vmul.f32 %v541, %v1588
        %v1597 = vmul.f32 %v545, %v1588
        %v1598 = vmul.f32 %v549, %v1588
        %v1599 = vmul.f32 %v553, %v1588
        %v1600 = vmul.f32 %v557, %v1588
        %v1601 = vmul.f32 %v561, %v1588
        %v1602 = vmul.f32 %v565, %v1588
        %v1603 = vmul.f32 %v569, %v1588
        %v1604 = vmul.f32 %v573, %v1588
        %v1605 = vadd.f32 %v1569, %v1589
        %v1606 = vadd.f32 %v1570, %v1590
        %v1607 = vadd.f32 %v1571, %v1591
        %v1608 = vadd.f32 %v1572, %v1592
        %v1609 = vadd.f32 %v1573, %v1593
        %v1610 = vadd.f32 %v1574, %v1594
        %v1611 = vadd.f32 %v1575, %v1595
        %v1612 = vadd.f32 %v1576, %v1596
        %v1613 = vadd.f32 %v1577, %v1597
        %v1614 = vadd.f32 %v1578, %v1598
        %v1615 = vadd.f32 %v1579, %v1599
        %v1616 = vadd.f32 %v1580, %v1600
        %v1617 = vadd.f32 %v1581, %v1601
        %v1618 = vadd.f32 %v1582, %v1602
        %v1619 = vadd.f32 %v1583, %v1603
        %v1620 = vadd.f32 %v1584, %v1604
        %s1621 = scalar_lea.vmem %s1, 256
        %v1622 = vld [vmem:[%s1621] sm:$0xff]
        %v1623 = vld [vmem:[%s1621 + $0x8] sm:$0xff]
        %v1624 = vld [vmem:[%s1621 + $0x10] sm:$0xff]
        %v1625 = vld [vmem:[%s1621 + $0x18] sm:$0xff]
        %v1626 = vld [vmem:[%s1621 + $0x20] sm:$0xff]
        %v1627 = vld [vmem:[%s1621 + $0x28] sm:$0xff]
        %v1628 = vld [vmem:[%s1621 + $0x30] sm:$0xff]
        %v1629 = vld [vmem:[%s1621 + $0x38] sm:$0xff]
        %v1630 = vld [vmem:[%s1621 + $0x40] sm:$0xff]
        %v1631 = vld [vmem:[%s1621 + $0x48] sm:$0xff]
        %v1632 = vld [vmem:[%s1621 + $0x50] sm:$0xff]
        %v1633 = vld [vmem:[%s1621 + $0x58] sm:$0xff]
        %v1634 = vld [vmem:[%s1621 + $0x60] sm:$0xff]
        %v1635 = vld [vmem:[%s1621 + $0x68] sm:$0xff]
        %v1636 = vld [vmem:[%s1621 + $0x70] sm:$0xff]
        %v1637 = vld [vmem:[%s1621 + $0x78] sm:$0xff]
        %1639 = vset.pattern.permute.xlu0 0
        %1640 = vperm.xlu0 %1639, %v1622
        %v1641 = vpop.permute.xlu0 %1640
        %1644 = vset.pattern.permute.xlu0 0
        %1645 = vperm.xlu0 %1644, %v1623
        %v1646 = vpop.permute.xlu0 %1645
        %1649 = vset.pattern.permute.xlu0 0
        %1650 = vperm.xlu0 %1649, %v1624
        %v1651 = vpop.permute.xlu0 %1650
        %1654 = vset.pattern.permute.xlu0 0
        %1655 = vperm.xlu0 %1654, %v1625
        %v1656 = vpop.permute.xlu0 %1655
        %1659 = vset.pattern.permute.xlu0 0
        %1660 = vperm.xlu0 %1659, %v1626
        %v1661 = vpop.permute.xlu0 %1660
        %1664 = vset.pattern.permute.xlu0 0
        %1665 = vperm.xlu0 %1664, %v1627
        %v1666 = vpop.permute.xlu0 %1665
        %1669 = vset.pattern.permute.xlu0 0
        %1670 = vperm.xlu0 %1669, %v1628
        %v1671 = vpop.permute.xlu0 %1670
        %1674 = vset.pattern.permute.xlu0 0
        %1675 = vperm.xlu0 %1674, %v1629
        %v1676 = vpop.permute.xlu0 %1675
        %1679 = vset.pattern.permute.xlu0 0
        %1680 = vperm.xlu0 %1679, %v1630
        %v1681 = vpop.permute.xlu0 %1680
        %1684 = vset.pattern.permute.xlu0 0
        %1685 = vperm.xlu0 %1684, %v1631
        %v1686 = vpop.permute.xlu0 %1685
        %1689 = vset.pattern.permute.xlu0 0
        %1690 = vperm.xlu0 %1689, %v1632
        %v1691 = vpop.permute.xlu0 %1690
        %1694 = vset.pattern.permute.xlu0 0
        %1695 = vperm.xlu0 %1694, %v1633
        %v1696 = vpop.permute.xlu0 %1695
        %1699 = vset.pattern.permute.xlu0 0
        %1700 = vperm.xlu0 %1699, %v1634
        %v1701 = vpop.permute.xlu0 %1700
        %1704 = vset.pattern.permute.xlu0 0
        %1705 = vperm.xlu0 %1704, %v1635
        %v1706 = vpop.permute.xlu0 %1705
        %1709 = vset.pattern.permute.xlu0 0
        %1710 = vperm.xlu0 %1709, %v1636
        %v1711 = vpop.permute.xlu0 %1710
        %1714 = vset.pattern.permute.xlu0 0
        %1715 = vperm.xlu0 %1714, %v1637
        %v1716 = vpop.permute.xlu0 %1715
        %v1718 = vadd.f32 %v1605, %v1641
        %v1719 = vadd.f32 %v1606, %v1646
        %v1720 = vadd.f32 %v1607, %v1651
        %v1721 = vadd.f32 %v1608, %v1656
        %v1722 = vadd.f32 %v1609, %v1661
        %v1723 = vadd.f32 %v1610, %v1666
        %v1724 = vadd.f32 %v1611, %v1671
        %v1725 = vadd.f32 %v1612, %v1676
        %v1726 = vadd.f32 %v1613, %v1681
        %v1727 = vadd.f32 %v1614, %v1686
        %v1728 = vadd.f32 %v1615, %v1691
        %v1729 = vadd.f32 %v1616, %v1696
        %v1730 = vadd.f32 %v1617, %v1701
        %v1731 = vadd.f32 %v1618, %v1706
        %v1732 = vadd.f32 %v1619, %v1711
        %v1733 = vadd.f32 %v1620, %v1716
        %v1734 = vmax.f32 %v1718, 0.0
        %v1735 = vmax.f32 %v1719, 0.0
        %v1736 = vmax.f32 %v1720, 0.0
        %v1737 = vmax.f32 %v1721, 0.0
        %v1738 = vmax.f32 %v1722, 0.0
        %v1739 = vmax.f32 %v1723, 0.0
        %v1740 = vmax.f32 %v1724, 0.0
        %v1741 = vmax.f32 %v1725, 0.0
        %v1742 = vmax.f32 %v1726, 0.0
        %v1743 = vmax.f32 %v1727, 0.0
        %v1744 = vmax.f32 %v1728, 0.0
        %v1745 = vmax.f32 %v1729, 0.0
        %v1746 = vmax.f32 %v1730, 0.0
        %v1747 = vmax.f32 %v1731, 0.0
        %v1748 = vmax.f32 %v1732, 0.0
        %v1749 = vmax.f32 %v1733, 0.0
        %1750 = vmatprep.subr.mxu0 0.0
        %1751 = vmatpush1.msra.mxu0 %v1734
        %1752 = vmatprep.subr.mxu0 0.0
        %1753 = vmatpush1.msra.mxu0 %v1735
        %1754 = vmatprep.subr.mxu0 0.0
        %1755 = vmatpush1.msra.mxu0 %v1736
        %1756 = vmatprep.subr.mxu0 0.0
        %1757 = vmatpush1.msra.mxu0 %v1737
        %1758 = vmatprep.subr.mxu0 0.0
        %1759 = vmatpush1.msra.mxu0 %v1738
        %1760 = vmatprep.subr.mxu0 0.0
        %1761 = vmatpush1.msra.mxu0 %v1739
        %1762 = vmatprep.subr.mxu0 0.0
        %1763 = vmatpush1.msra.mxu0 %v1740
        %1764 = vmatprep.subr.mxu0 0.0
        %1765 = vmatpush1.msra.mxu0 %v1741
        %1766 = vmatprep.subr.mxu0 0.0
        %1767 = vmatpush1.msra.mxu0 %v1742
        %1768 = vmatprep.subr.mxu0 0.0
        %1769 = vmatpush1.msra.mxu0 %v1743
        %1770 = vmatprep.subr.mxu0 0.0
        %1771 = vmatpush1.msra.mxu0 %v1744
        %1772 = vmatprep.subr.mxu0 0.0
        %1773 = vmatpush1.msra.mxu0 %v1745
        %1774 = vmatprep.subr.mxu0 0.0
        %1775 = vmatpush1.msra.mxu0 %v1746
        %1776 = vmatprep.subr.mxu0 0.0
        %1777 = vmatpush1.msra.mxu0 %v1747
        %1778 = vmatprep.subr.mxu0 0.0
        %1779 = vmatpush1.msra.mxu0 %v1748
        %1780 = vmatprep.subr.mxu0 0.0
        %1781 = vmatpush1.msra.mxu0 %v1749
        %1782 = vmatprep.subr.mxu0 0.0
        %1783 = vmatpush1.msra.mxu0 0.0
        %1784 = vmatprep.subr.mxu0 0.0
        %1785 = vmatpush1.msra.mxu0 0.0
        %1786 = vmatprep.subr.mxu0 0.0
        %1787 = vmatpush1.msra.mxu0 0.0
        %1788 = vmatprep.subr.mxu0 0.0
        %1789 = vmatpush1.msra.mxu0 0.0
        %1790 = vmatprep.subr.mxu0 0.0
        %1791 = vmatpush1.msra.mxu0 0.0
        %1792 = vmatprep.subr.mxu0 0.0
        %1793 = vmatpush1.msra.mxu0 0.0
        %1794 = vmatprep.subr.mxu0 0.0
        %1795 = vmatpush1.msra.mxu0 0.0
        %1796 = vmatprep.subr.mxu0 0.0
        %1797 = vmatpush1.msra.mxu0 0.0
        %1798 = vmatprep.subr.mxu0 0.0
        %1799 = vmatpush1.msra.mxu0 0.0
        %1800 = vmatprep.subr.mxu0 0.0
        %1801 = vmatpush1.msra.mxu0 0.0
        %1802 = vmatprep.subr.mxu0 0.0
        %1803 = vmatpush1.msra.mxu0 0.0
        %1804 = vmatprep.subr.mxu0 0.0
        %1805 = vmatpush1.msra.mxu0 0.0
        %1806 = vmatprep.subr.mxu0 0.0
        %1807 = vmatpush1.msra.mxu0 0.0
        %1808 = vmatprep.subr.mxu0 0.0
        %1809 = vmatpush1.msra.mxu0 0.0
        %1810 = vmatprep.subr.mxu0 0.0
        %1811 = vmatpush1.msra.mxu0 0.0
        %1812 = vmatprep.subr.mxu0 0.0
        %1813 = vmatpush1.msra.mxu0 0.0
        %1814 = vmatprep.mubr.f32.mxu0 0.0
        %1815 = vmatmul.mubr.f32.gmra.mrb[0].mxu0 %v735
        %v1816 = vpop.f32.mrb[0].mxu0
        %v1817 = vadd.f32 %v770, %v1816
        %v1818 = vpop.f32.mrb[0].mxu0
        %1819 = vmatprep.mubr.f32.mxu0 0.0
        %1820 = vmatmul.mubr.f32.gmra.mrb[0].mxu0 %v736
        %v1821 = vpop.f32.mrb[0].mxu0
        %v1822 = vadd.f32 %v775, %v1821
        %v1823 = vpop.f32.mrb[0].mxu0
        %1824 = vmatprep.mubr.f32.mxu0 0.0
        %1825 = vmatmul.mubr.f32.gmra.mrb[0].mxu0 %v737
        %v1826 = vpop.f32.mrb[0].mxu0
        %v1827 = vadd.f32 %v780, %v1826
        %v1828 = vpop.f32.mrb[0].mxu0
        %1829 = vmatprep.mubr.f32.mxu0 0.0
        %1830 = vmatmul.mubr.f32.gmra.mrb[0].mxu0 %v738
        %v1831 = vpop.f32.mrb[0].mxu0
        %v1832 = vadd.f32 %v785, %v1831
        %v1833 = vpop.f32.mrb[0].mxu0
        %1834 = vmatprep.mubr.f32.mxu0 0.0
        %1835 = vmatmul.mubr.f32.gmra.mrb[0].mxu0 %v739
        %v1836 = vpop.f32.mrb[0].mxu0
        %v1837 = vadd.f32 %v790, %v1836
        %v1838 = vpop.f32.mrb[0].mxu0
        %1839 = vmatprep.mubr.f32.mxu0 0.0
        %1840 = vmatmul.mubr.f32.gmra.mrb[0].mxu0 %v740
        %v1841 = vpop.f32.mrb[0].mxu0
        %v1842 = vadd.f32 %v795, %v1841
        %v1843 = vpop.f32.mrb[0].mxu0
        %1844 = vmatprep.mubr.f32.mxu0 0.0
        %1845 = vmatmul.mubr.f32.gmra.mrb[0].mxu0 %v741
        %v1846 = vpop.f32.mrb[0].mxu0
        %v1847 = vadd.f32 %v800, %v1846
        %v1848 = vpop.f32.mrb[0].mxu0
        %1849 = vmatprep.mubr.f32.mxu0 0.0
        %1850 = vmatmul.mubr.f32.gmra.mrb[0].mxu0 %v742
        %v1851 = vpop.f32.mrb[0].mxu0
        %v1852 = vadd.f32 %v805, %v1851
        %v1853 = vpop.f32.mrb[0].mxu0
        %1854 = vmatprep.mubr.f32.mxu0 0.0
        %1855 = vmatmul.mubr.f32.gmra.mrb[0].mxu0 %v743
        %v1856 = vpop.f32.mrb[0].mxu0
        %v1857 = vadd.f32 %v810, %v1856
        %v1858 = vpop.f32.mrb[0].mxu0
        %1859 = vmatprep.mubr.f32.mxu0 0.0
        %1860 = vmatmul.mubr.f32.gmra.mrb[0].mxu0 %v744
        %v1861 = vpop.f32.mrb[0].mxu0
        %v1862 = vadd.f32 %v815, %v1861
        %v1863 = vpop.f32.mrb[0].mxu0
        %1864 = vmatprep.mubr.f32.mxu0 0.0
        %1865 = vmatmul.mubr.f32.gmra.mrb[0].mxu0 %v745
        %v1866 = vpop.f32.mrb[0].mxu0
        %v1867 = vadd.f32 %v820, %v1866
        %v1868 = vpop.f32.mrb[0].mxu0
        %1869 = vmatprep.mubr.f32.mxu0 0.0
        %1870 = vmatmul.mubr.f32.gmra.mrb[0].mxu0 %v746
        %v1871 = vpop.f32.mrb[0].mxu0
        %v1872 = vadd.f32 %v825, %v1871
        %v1873 = vpop.f32.mrb[0].mxu0
        %1874 = vmatprep.mubr.f32.mxu0 0.0
        %1875 = vmatmul.mubr.f32.gmra.mrb[0].mxu0 %v747
        %v1876 = vpop.f32.mrb[0].mxu0
        %v1877 = vadd.f32 %v830, %v1876
        %v1878 = vpop.f32.mrb[0].mxu0
        %1879 = vmatprep.mubr.f32.mxu0 0.0
        %1880 = vmatmul.mubr.f32.gmra.mrb[0].mxu0 %v748
        %v1881 = vpop.f32.mrb[0].mxu0
        %v1882 = vadd.f32 %v835, %v1881
        %v1883 = vpop.f32.mrb[0].mxu0
        %1884 = vmatprep.mubr.f32.mxu0 0.0
        %1885 = vmatmul.mubr.f32.gmra.mrb[0].mxu0 %v749
        %v1886 = vpop.f32.mrb[0].mxu0
        %v1887 = vadd.f32 %v840, %v1886
        %v1888 = vpop.f32.mrb[0].mxu0
        %1889 = vmatprep.mubr.f32.mxu0 0.0
        %1890 = vmatmul.mubr.f32.gmra.mrb[0].mxu0 %v750
        %v1891 = vpop.f32.mrb[0].mxu0
        %v1892 = vadd.f32 %v845, %v1891
        %v1893 = vpop.f32.mrb[0].mxu0
        %1894 = vdwg.mxu0
        %v1895 = vmax.f32 %v1817, 0.0
        %v1896 = vmax.f32 %v1822, 0.0
        %v1897 = vmax.f32 %v1827, 0.0
        %v1898 = vmax.f32 %v1832, 0.0
        %v1899 = vmax.f32 %v1837, 0.0
        %v1900 = vmax.f32 %v1842, 0.0
        %v1901 = vmax.f32 %v1847, 0.0
        %v1902 = vmax.f32 %v1852, 0.0
        %v1903 = vmax.f32 %v1857, 0.0
        %v1904 = vmax.f32 %v1862, 0.0
        %v1905 = vmax.f32 %v1867, 0.0
        %v1906 = vmax.f32 %v1872, 0.0
        %v1907 = vmax.f32 %v1877, 0.0
        %v1908 = vmax.f32 %v1882, 0.0
        %v1909 = vmax.f32 %v1887, 0.0
        %v1910 = vmax.f32 %v1892, 0.0
        %1911 = vmatprep.subr.mxu0 0.0
        %1912 = vmatpush1.msra.mxu0 %v1895
        %1913 = vmatprep.subr.mxu0 0.0
        %1914 = vmatpush1.msra.mxu0 %v1896
        %1915 = vmatprep.subr.mxu0 0.0
        %1916 = vmatpush1.msra.mxu0 %v1897
        %1917 = vmatprep.subr.mxu0 0.0
        %1918 = vmatpush1.msra.mxu0 %v1898
        %1919 = vmatprep.subr.mxu0 0.0
        %1920 = vmatpush1.msra.mxu0 %v1899
        %1921 = vmatprep.subr.mxu0 0.0
        %1922 = vmatpush1.msra.mxu0 %v1900
        %1923 = vmatprep.subr.mxu0 0.0
        %1924 = vmatpush1.msra.mxu0 %v1901
        %1925 = vmatprep.subr.mxu0 0.0
        %1926 = vmatpush1.msra.mxu0 %v1902
        %1927 = vmatprep.subr.mxu0 0.0
        %1928 = vmatpush1.msra.mxu0 %v1903
        %1929 = vmatprep.subr.mxu0 0.0
        %1930 = vmatpush1.msra.mxu0 %v1904
        %1931 = vmatprep.subr.mxu0 0.0
        %1932 = vmatpush1.msra.mxu0 %v1905
        %1933 = vmatprep.subr.mxu0 0.0
        %1934 = vmatpush1.msra.mxu0 %v1906
        %1935 = vmatprep.subr.mxu0 0.0
        %1936 = vmatpush1.msra.mxu0 %v1907
        %1937 = vmatprep.subr.mxu0 0.0
        %1938 = vmatpush1.msra.mxu0 %v1908
        %1939 = vmatprep.subr.mxu0 0.0
        %1940 = vmatpush1.msra.mxu0 %v1909
        %1941 = vmatprep.subr.mxu0 0.0
        %1942 = vmatpush1.msra.mxu0 %v1910
        %1943 = vmatprep.subr.mxu0 0.0
        %1944 = vmatpush1.msra.mxu0 0.0
        %1945 = vmatprep.subr.mxu0 0.0
        %1946 = vmatpush1.msra.mxu0 0.0
        %1947 = vmatprep.subr.mxu0 0.0
        %1948 = vmatpush1.msra.mxu0 0.0
        %1949 = vmatprep.subr.mxu0 0.0
        %1950 = vmatpush1.msra.mxu0 0.0
        %1951 = vmatprep.subr.mxu0 0.0
        %1952 = vmatpush1.msra.mxu0 0.0
        %1953 = vmatprep.subr.mxu0 0.0
        %1954 = vmatpush1.msra.mxu0 0.0
        %1955 = vmatprep.subr.mxu0 0.0
        %1956 = vmatpush1.msra.mxu0 0.0
        %1957 = vmatprep.subr.mxu0 0.0
        %1958 = vmatpush1.msra.mxu0 0.0
        %1959 = vmatprep.subr.mxu0 0.0
        %1960 = vmatpush1.msra.mxu0 0.0
        %1961 = vmatprep.subr.mxu0 0.0
        %1962 = vmatpush1.msra.mxu0 0.0
        %1963 = vmatprep.subr.mxu0 0.0
        %1964 = vmatpush1.msra.mxu0 0.0
        %1965 = vmatprep.subr.mxu0 0.0
        %1966 = vmatpush1.msra.mxu0 0.0
        %1967 = vmatprep.subr.mxu0 0.0
        %1968 = vmatpush1.msra.mxu0 0.0
        %1969 = vmatprep.subr.mxu0 0.0
        %1970 = vmatpush1.msra.mxu0 0.0
        %1971 = vmatprep.subr.mxu0 0.0
        %1972 = vmatpush1.msra.mxu0 0.0
        %1973 = vmatprep.subr.mxu0 0.0
        %1974 = vmatpush1.msra.mxu0 0.0
        %1975 = vmatprep.mubr.f32.mxu0 0.0
        %1976 = vmatmul.mubr.f32.gmra.mrb[0].mxu0 %v426
        %v1977 = vpop.f32.mrb[0].mxu0
        %v1978 = vadd.f32 %v1011, %v1977
        %v1979 = vpop.f32.mrb[0].mxu0
        %1980 = vdwg.mxu0
        %v1981 = vmul.f32 %v1546, 0.025
        %v1982 = vadd.f32 %v1981, %v1978
        %v1983 = vmul.f32 %v1982, 0.0625
        %v1984 = vadd.f32 %v1546, %v1983
        %v1985 = vrsqrt.pop %v1561
        %v1986 = vmul.f32 %v1561, %v1985
        %vm1987 = vcmp.eq.f32.partialorder %v1561, inf
        %v1988 = vsel %vm1987, %v1561, %v1986
        %vm1989 = vcmp.eq.f32.partialorder %v1561, 0.0
        %v1990 = vand.u32 %v1561, 2147483648
        %v1991 = vsel %vm1989, %v1990, %v1988
        %v1993 = vrot.slane %v1991, 2
        %v1995 = vmul.f32 %v1546, %v1993
        %v1997 = vrot.slane %v1978, 1
        %v1999 = vadd.f32 %v1995, %v1997
        %v2000 = vmul.f32 %v1999, %v1564
        %v2001 = vadd.f32 %v1984, %v2000
        %v2002 = vsub.f32 0.04, %v1561
        %v2003 = vmul.f32 %v2002, 1.5
        %v2004 = vadd.f32 %v2003, %v1978
        %v2005 = vmul.f32 %v2004, 0.0625
        %v2006 = vadd.f32 %v1561, %v2005
        %v2007 = vadd.f32 %v1978, 0.3
        %v2009 = vrot.slane %v1564, 6
        %v2011 = vmul.f32 %v2007, %v2009
        %v2013 = vrot.slane %v2011, 1
        %v2015 = vadd.f32 %v2006, %v2013
        %v2016 = vmax.f32 %v2015, 0.01
        %s2017 = scalar_lea.vmem %s371, 6 [#allocation2]
        %v2018 = vld [vmem:[%s2017] sm:$0x3]
        %v2019 = vmul.f32 %v2018, 0.25
        %v2020 = vlaneseq
        %v2021 = vshrl.u32 %v2020, 7
        %v2022 = vsub.s32 0, %v2021
        %v2023 = vrot.slane %v2001, %v2022
        %v2024 = vmul.f32 %v434, %v2023
        %v2025 = vmul.f32 %v439, %v2023
        %v2026 = vmul.f32 %v444, %v2023
        %v2027 = vmul.f32 %v449, %v2023
        %v2028 = vmul.f32 %v454, %v2023
        %v2029 = vmul.f32 %v459, %v2023
        %v2030 = vmul.f32 %v464, %v2023
        %v2031 = vmul.f32 %v469, %v2023
        %v2032 = vmul.f32 %v474, %v2023
        %v2033 = vmul.f32 %v479, %v2023
        %v2034 = vmul.f32 %v484, %v2023
        %v2035 = vmul.f32 %v489, %v2023
        %v2036 = vmul.f32 %v494, %v2023
        %v2037 = vmul.f32 %v499, %v2023
        %v2038 = vmul.f32 %v504, %v2023
        %v2039 = vmul.f32 %v509, %v2023
        %v2040 = vlaneseq
        %v2041 = vshrl.u32 %v2040, 7
        %v2042 = vsub.s32 2, %v2041
        %v2043 = vrot.slane %v2016, %v2042
        %v2044 = vmul.f32 %v513, %v2043
        %v2045 = vmul.f32 %v517, %v2043
        %v2046 = vmul.f32 %v521, %v2043
        %v2047 = vmul.f32 %v525, %v2043
        %v2048 = vmul.f32 %v529, %v2043
        %v2049 = vmul.f32 %v533, %v2043
        %v2050 = vmul.f32 %v537, %v2043
        %v2051 = vmul.f32 %v541, %v2043
        %v2052 = vmul.f32 %v545, %v2043
        %v2053 = vmul.f32 %v549, %v2043
        %v2054 = vmul.f32 %v553, %v2043
        %v2055 = vmul.f32 %v557, %v2043
        %v2056 = vmul.f32 %v561, %v2043
        %v2057 = vmul.f32 %v565, %v2043
        %v2058 = vmul.f32 %v569, %v2043
        %v2059 = vmul.f32 %v573, %v2043
        %v2060 = vadd.f32 %v2024, %v2044
        %v2061 = vadd.f32 %v2025, %v2045
        %v2062 = vadd.f32 %v2026, %v2046
        %v2063 = vadd.f32 %v2027, %v2047
        %v2064 = vadd.f32 %v2028, %v2048
        %v2065 = vadd.f32 %v2029, %v2049
        %v2066 = vadd.f32 %v2030, %v2050
        %v2067 = vadd.f32 %v2031, %v2051
        %v2068 = vadd.f32 %v2032, %v2052
        %v2069 = vadd.f32 %v2033, %v2053
        %v2070 = vadd.f32 %v2034, %v2054
        %v2071 = vadd.f32 %v2035, %v2055
        %v2072 = vadd.f32 %v2036, %v2056
        %v2073 = vadd.f32 %v2037, %v2057
        %v2074 = vadd.f32 %v2038, %v2058
        %v2075 = vadd.f32 %v2039, %v2059
        %s2076 = scalar_lea.vmem %s1, 384
        %v2077 = vld [vmem:[%s2076] sm:$0xff]
        %v2078 = vld [vmem:[%s2076 + $0x8] sm:$0xff]
        %v2079 = vld [vmem:[%s2076 + $0x10] sm:$0xff]
        %v2080 = vld [vmem:[%s2076 + $0x18] sm:$0xff]
        %v2081 = vld [vmem:[%s2076 + $0x20] sm:$0xff]
        %v2082 = vld [vmem:[%s2076 + $0x28] sm:$0xff]
        %v2083 = vld [vmem:[%s2076 + $0x30] sm:$0xff]
        %v2084 = vld [vmem:[%s2076 + $0x38] sm:$0xff]
        %v2085 = vld [vmem:[%s2076 + $0x40] sm:$0xff]
        %v2086 = vld [vmem:[%s2076 + $0x48] sm:$0xff]
        %v2087 = vld [vmem:[%s2076 + $0x50] sm:$0xff]
        %v2088 = vld [vmem:[%s2076 + $0x58] sm:$0xff]
        %v2089 = vld [vmem:[%s2076 + $0x60] sm:$0xff]
        %v2090 = vld [vmem:[%s2076 + $0x68] sm:$0xff]
        %v2091 = vld [vmem:[%s2076 + $0x70] sm:$0xff]
        %v2092 = vld [vmem:[%s2076 + $0x78] sm:$0xff]
        %2094 = vset.pattern.permute.xlu0 0
        %2095 = vperm.xlu0 %2094, %v2077
        %v2096 = vpop.permute.xlu0 %2095
        %2099 = vset.pattern.permute.xlu0 0
        %2100 = vperm.xlu0 %2099, %v2078
        %v2101 = vpop.permute.xlu0 %2100
        %2104 = vset.pattern.permute.xlu0 0
        %2105 = vperm.xlu0 %2104, %v2079
        %v2106 = vpop.permute.xlu0 %2105
        %2109 = vset.pattern.permute.xlu0 0
        %2110 = vperm.xlu0 %2109, %v2080
        %v2111 = vpop.permute.xlu0 %2110
        %2114 = vset.pattern.permute.xlu0 0
        %2115 = vperm.xlu0 %2114, %v2081
        %v2116 = vpop.permute.xlu0 %2115
        %2119 = vset.pattern.permute.xlu0 0
        %2120 = vperm.xlu0 %2119, %v2082
        %v2121 = vpop.permute.xlu0 %2120
        %2124 = vset.pattern.permute.xlu0 0
        %2125 = vperm.xlu0 %2124, %v2083
        %v2126 = vpop.permute.xlu0 %2125
        %2129 = vset.pattern.permute.xlu0 0
        %2130 = vperm.xlu0 %2129, %v2084
        %v2131 = vpop.permute.xlu0 %2130
        %2134 = vset.pattern.permute.xlu0 0
        %2135 = vperm.xlu0 %2134, %v2085
        %v2136 = vpop.permute.xlu0 %2135
        %2139 = vset.pattern.permute.xlu0 0
        %2140 = vperm.xlu0 %2139, %v2086
        %v2141 = vpop.permute.xlu0 %2140
        %2144 = vset.pattern.permute.xlu0 0
        %2145 = vperm.xlu0 %2144, %v2087
        %v2146 = vpop.permute.xlu0 %2145
        %2149 = vset.pattern.permute.xlu0 0
        %2150 = vperm.xlu0 %2149, %v2088
        %v2151 = vpop.permute.xlu0 %2150
        %2154 = vset.pattern.permute.xlu0 0
        %2155 = vperm.xlu0 %2154, %v2089
        %v2156 = vpop.permute.xlu0 %2155
        %2159 = vset.pattern.permute.xlu0 0
        %2160 = vperm.xlu0 %2159, %v2090
        %v2161 = vpop.permute.xlu0 %2160
        %2164 = vset.pattern.permute.xlu0 0
        %2165 = vperm.xlu0 %2164, %v2091
        %v2166 = vpop.permute.xlu0 %2165
        %2169 = vset.pattern.permute.xlu0 0
        %2170 = vperm.xlu0 %2169, %v2092
        %v2171 = vpop.permute.xlu0 %2170
        %v2173 = vadd.f32 %v2060, %v2096
        %v2174 = vadd.f32 %v2061, %v2101
        %v2175 = vadd.f32 %v2062, %v2106
        %v2176 = vadd.f32 %v2063, %v2111
        %v2177 = vadd.f32 %v2064, %v2116
        %v2178 = vadd.f32 %v2065, %v2121
        %v2179 = vadd.f32 %v2066, %v2126
        %v2180 = vadd.f32 %v2067, %v2131
        %v2181 = vadd.f32 %v2068, %v2136
        %v2182 = vadd.f32 %v2069, %v2141
        %v2183 = vadd.f32 %v2070, %v2146
        %v2184 = vadd.f32 %v2071, %v2151
        %v2185 = vadd.f32 %v2072, %v2156
        %v2186 = vadd.f32 %v2073, %v2161
        %v2187 = vadd.f32 %v2074, %v2166
        %v2188 = vadd.f32 %v2075, %v2171
        %v2189 = vmax.f32 %v2173, 0.0
        %v2190 = vmax.f32 %v2174, 0.0
        %v2191 = vmax.f32 %v2175, 0.0
        %v2192 = vmax.f32 %v2176, 0.0
        %v2193 = vmax.f32 %v2177, 0.0
        %v2194 = vmax.f32 %v2178, 0.0
        %v2195 = vmax.f32 %v2179, 0.0
        %v2196 = vmax.f32 %v2180, 0.0
        %v2197 = vmax.f32 %v2181, 0.0
        %v2198 = vmax.f32 %v2182, 0.0
        %v2199 = vmax.f32 %v2183, 0.0
        %v2200 = vmax.f32 %v2184, 0.0
        %v2201 = vmax.f32 %v2185, 0.0
        %v2202 = vmax.f32 %v2186, 0.0
        %v2203 = vmax.f32 %v2187, 0.0
        %v2204 = vmax.f32 %v2188, 0.0
        %2205 = vmatprep.subr.mxu0 0.0
        %2206 = vmatpush1.msra.mxu0 %v2189
        %2207 = vmatprep.subr.mxu0 0.0
        %2208 = vmatpush1.msra.mxu0 %v2190
        %2209 = vmatprep.subr.mxu0 0.0
        %2210 = vmatpush1.msra.mxu0 %v2191
        %2211 = vmatprep.subr.mxu0 0.0
        %2212 = vmatpush1.msra.mxu0 %v2192
        %2213 = vmatprep.subr.mxu0 0.0
        %2214 = vmatpush1.msra.mxu0 %v2193
        %2215 = vmatprep.subr.mxu0 0.0
        %2216 = vmatpush1.msra.mxu0 %v2194
        %2217 = vmatprep.subr.mxu0 0.0
        %2218 = vmatpush1.msra.mxu0 %v2195
        %2219 = vmatprep.subr.mxu0 0.0
        %2220 = vmatpush1.msra.mxu0 %v2196
        %2221 = vmatprep.subr.mxu0 0.0
        %2222 = vmatpush1.msra.mxu0 %v2197
        %2223 = vmatprep.subr.mxu0 0.0
        %2224 = vmatpush1.msra.mxu0 %v2198
        %2225 = vmatprep.subr.mxu0 0.0
        %2226 = vmatpush1.msra.mxu0 %v2199
        %2227 = vmatprep.subr.mxu0 0.0
        %2228 = vmatpush1.msra.mxu0 %v2200
        %2229 = vmatprep.subr.mxu0 0.0
        %2230 = vmatpush1.msra.mxu0 %v2201
        %2231 = vmatprep.subr.mxu0 0.0
        %2232 = vmatpush1.msra.mxu0 %v2202
        %2233 = vmatprep.subr.mxu0 0.0
        %2234 = vmatpush1.msra.mxu0 %v2203
        %2235 = vmatprep.subr.mxu0 0.0
        %2236 = vmatpush1.msra.mxu0 %v2204
        %2237 = vmatprep.subr.mxu0 0.0
        %2238 = vmatpush1.msra.mxu0 0.0
        %2239 = vmatprep.subr.mxu0 0.0
        %2240 = vmatpush1.msra.mxu0 0.0
        %2241 = vmatprep.subr.mxu0 0.0
        %2242 = vmatpush1.msra.mxu0 0.0
        %2243 = vmatprep.subr.mxu0 0.0
        %2244 = vmatpush1.msra.mxu0 0.0
        %2245 = vmatprep.subr.mxu0 0.0
        %2246 = vmatpush1.msra.mxu0 0.0
        %2247 = vmatprep.subr.mxu0 0.0
        %2248 = vmatpush1.msra.mxu0 0.0
        %2249 = vmatprep.subr.mxu0 0.0
        %2250 = vmatpush1.msra.mxu0 0.0
        %2251 = vmatprep.subr.mxu0 0.0
        %2252 = vmatpush1.msra.mxu0 0.0
        %2253 = vmatprep.subr.mxu0 0.0
        %2254 = vmatpush1.msra.mxu0 0.0
        %2255 = vmatprep.subr.mxu0 0.0
        %2256 = vmatpush1.msra.mxu0 0.0
        %2257 = vmatprep.subr.mxu0 0.0
        %2258 = vmatpush1.msra.mxu0 0.0
        %2259 = vmatprep.subr.mxu0 0.0
        %2260 = vmatpush1.msra.mxu0 0.0
        %2261 = vmatprep.subr.mxu0 0.0
        %2262 = vmatpush1.msra.mxu0 0.0
        %2263 = vmatprep.subr.mxu0 0.0
        %2264 = vmatpush1.msra.mxu0 0.0
        %2265 = vmatprep.subr.mxu0 0.0
        %2266 = vmatpush1.msra.mxu0 0.0
        %2267 = vmatprep.subr.mxu0 0.0
        %2268 = vmatpush1.msra.mxu0 0.0
        %2269 = vmatprep.mubr.f32.mxu0 0.0
        %2270 = vmatmul.mubr.f32.gmra.mrb[0].mxu0 %v735
        %v2271 = vpop.f32.mrb[0].mxu0
        %v2272 = vadd.f32 %v770, %v2271
        %v2273 = vpop.f32.mrb[0].mxu0
        %2274 = vmatprep.mubr.f32.mxu0 0.0
        %2275 = vmatmul.mubr.f32.gmra.mrb[0].mxu0 %v736
        %v2276 = vpop.f32.mrb[0].mxu0
        %v2277 = vadd.f32 %v775, %v2276
        %v2278 = vpop.f32.mrb[0].mxu0
        %2279 = vmatprep.mubr.f32.mxu0 0.0
        %2280 = vmatmul.mubr.f32.gmra.mrb[0].mxu0 %v737
        %v2281 = vpop.f32.mrb[0].mxu0
        %v2282 = vadd.f32 %v780, %v2281
        %v2283 = vpop.f32.mrb[0].mxu0
        %2284 = vmatprep.mubr.f32.mxu0 0.0
        %2285 = vmatmul.mubr.f32.gmra.mrb[0].mxu0 %v738
        %v2286 = vpop.f32.mrb[0].mxu0
        %v2287 = vadd.f32 %v785, %v2286
        %v2288 = vpop.f32.mrb[0].mxu0
        %2289 = vmatprep.mubr.f32.mxu0 0.0
        %2290 = vmatmul.mubr.f32.gmra.mrb[0].mxu0 %v739
        %v2291 = vpop.f32.mrb[0].mxu0
        %v2292 = vadd.f32 %v790, %v2291
        %v2293 = vpop.f32.mrb[0].mxu0
        %2294 = vmatprep.mubr.f32.mxu0 0.0
        %2295 = vmatmul.mubr.f32.gmra.mrb[0].mxu0 %v740
        %v2296 = vpop.f32.mrb[0].mxu0
        %v2297 = vadd.f32 %v795, %v2296
        %v2298 = vpop.f32.mrb[0].mxu0
        %2299 = vmatprep.mubr.f32.mxu0 0.0
        %2300 = vmatmul.mubr.f32.gmra.mrb[0].mxu0 %v741
        %v2301 = vpop.f32.mrb[0].mxu0
        %v2302 = vadd.f32 %v800, %v2301
        %v2303 = vpop.f32.mrb[0].mxu0
        %2304 = vmatprep.mubr.f32.mxu0 0.0
        %2305 = vmatmul.mubr.f32.gmra.mrb[0].mxu0 %v742
        %v2306 = vpop.f32.mrb[0].mxu0
        %v2307 = vadd.f32 %v805, %v2306
        %v2308 = vpop.f32.mrb[0].mxu0
        %2309 = vmatprep.mubr.f32.mxu0 0.0
        %2310 = vmatmul.mubr.f32.gmra.mrb[0].mxu0 %v743
        %v2311 = vpop.f32.mrb[0].mxu0
        %v2312 = vadd.f32 %v810, %v2311
        %v2313 = vpop.f32.mrb[0].mxu0
        %2314 = vmatprep.mubr.f32.mxu0 0.0
        %2315 = vmatmul.mubr.f32.gmra.mrb[0].mxu0 %v744
        %v2316 = vpop.f32.mrb[0].mxu0
        %v2317 = vadd.f32 %v815, %v2316
        %v2318 = vpop.f32.mrb[0].mxu0
        %2319 = vmatprep.mubr.f32.mxu0 0.0
        %2320 = vmatmul.mubr.f32.gmra.mrb[0].mxu0 %v745
        %v2321 = vpop.f32.mrb[0].mxu0
        %v2322 = vadd.f32 %v820, %v2321
        %v2323 = vpop.f32.mrb[0].mxu0
        %2324 = vmatprep.mubr.f32.mxu0 0.0
        %2325 = vmatmul.mubr.f32.gmra.mrb[0].mxu0 %v746
        %v2326 = vpop.f32.mrb[0].mxu0
        %v2327 = vadd.f32 %v825, %v2326
        %v2328 = vpop.f32.mrb[0].mxu0
        %2329 = vmatprep.mubr.f32.mxu0 0.0
        %2330 = vmatmul.mubr.f32.gmra.mrb[0].mxu0 %v747
        %v2331 = vpop.f32.mrb[0].mxu0
        %v2332 = vadd.f32 %v830, %v2331
        %v2333 = vpop.f32.mrb[0].mxu0
        %2334 = vmatprep.mubr.f32.mxu0 0.0
        %2335 = vmatmul.mubr.f32.gmra.mrb[0].mxu0 %v748
        %v2336 = vpop.f32.mrb[0].mxu0
        %v2337 = vadd.f32 %v835, %v2336
        %v2338 = vpop.f32.mrb[0].mxu0
        %2339 = vmatprep.mubr.f32.mxu0 0.0
        %2340 = vmatmul.mubr.f32.gmra.mrb[0].mxu0 %v749
        %v2341 = vpop.f32.mrb[0].mxu0
        %v2342 = vadd.f32 %v840, %v2341
        %v2343 = vpop.f32.mrb[0].mxu0
        %2344 = vmatprep.mubr.f32.mxu0 0.0
        %2345 = vmatmul.mubr.f32.gmra.mrb[0].mxu0 %v750
        %v2346 = vpop.f32.mrb[0].mxu0
        %v2347 = vadd.f32 %v845, %v2346
        %v2348 = vpop.f32.mrb[0].mxu0
        %2349 = vdwg.mxu0
        %v2350 = vmax.f32 %v2272, 0.0
        %v2351 = vmax.f32 %v2277, 0.0
        %v2352 = vmax.f32 %v2282, 0.0
        %v2353 = vmax.f32 %v2287, 0.0
        %v2354 = vmax.f32 %v2292, 0.0
        %v2355 = vmax.f32 %v2297, 0.0
        %v2356 = vmax.f32 %v2302, 0.0
        %v2357 = vmax.f32 %v2307, 0.0
        %v2358 = vmax.f32 %v2312, 0.0
        %v2359 = vmax.f32 %v2317, 0.0
        %v2360 = vmax.f32 %v2322, 0.0
        %v2361 = vmax.f32 %v2327, 0.0
        %v2362 = vmax.f32 %v2332, 0.0
        %v2363 = vmax.f32 %v2337, 0.0
        %v2364 = vmax.f32 %v2342, 0.0
        %v2365 = vmax.f32 %v2347, 0.0
        %2366 = vmatprep.subr.mxu0 0.0
        %2367 = vmatpush1.msra.mxu0 %v2350
        %2368 = vmatprep.subr.mxu0 0.0
        %2369 = vmatpush1.msra.mxu0 %v2351
        %2370 = vmatprep.subr.mxu0 0.0
        %2371 = vmatpush1.msra.mxu0 %v2352
        %2372 = vmatprep.subr.mxu0 0.0
        %2373 = vmatpush1.msra.mxu0 %v2353
        %2374 = vmatprep.subr.mxu0 0.0
        %2375 = vmatpush1.msra.mxu0 %v2354
        %2376 = vmatprep.subr.mxu0 0.0
        %2377 = vmatpush1.msra.mxu0 %v2355
        %2378 = vmatprep.subr.mxu0 0.0
        %2379 = vmatpush1.msra.mxu0 %v2356
        %2380 = vmatprep.subr.mxu0 0.0
        %2381 = vmatpush1.msra.mxu0 %v2357
        %2382 = vmatprep.subr.mxu0 0.0
        %2383 = vmatpush1.msra.mxu0 %v2358
        %2384 = vmatprep.subr.mxu0 0.0
        %2385 = vmatpush1.msra.mxu0 %v2359
        %2386 = vmatprep.subr.mxu0 0.0
        %2387 = vmatpush1.msra.mxu0 %v2360
        %2388 = vmatprep.subr.mxu0 0.0
        %2389 = vmatpush1.msra.mxu0 %v2361
        %2390 = vmatprep.subr.mxu0 0.0
        %2391 = vmatpush1.msra.mxu0 %v2362
        %2392 = vmatprep.subr.mxu0 0.0
        %2393 = vmatpush1.msra.mxu0 %v2363
        %2394 = vmatprep.subr.mxu0 0.0
        %2395 = vmatpush1.msra.mxu0 %v2364
        %2396 = vmatprep.subr.mxu0 0.0
        %2397 = vmatpush1.msra.mxu0 %v2365
        %2398 = vmatprep.subr.mxu0 0.0
        %2399 = vmatpush1.msra.mxu0 0.0
        %2400 = vmatprep.subr.mxu0 0.0
        %2401 = vmatpush1.msra.mxu0 0.0
        %2402 = vmatprep.subr.mxu0 0.0
        %2403 = vmatpush1.msra.mxu0 0.0
        %2404 = vmatprep.subr.mxu0 0.0
        %2405 = vmatpush1.msra.mxu0 0.0
        %2406 = vmatprep.subr.mxu0 0.0
        %2407 = vmatpush1.msra.mxu0 0.0
        %2408 = vmatprep.subr.mxu0 0.0
        %2409 = vmatpush1.msra.mxu0 0.0
        %2410 = vmatprep.subr.mxu0 0.0
        %2411 = vmatpush1.msra.mxu0 0.0
        %2412 = vmatprep.subr.mxu0 0.0
        %2413 = vmatpush1.msra.mxu0 0.0
        %2414 = vmatprep.subr.mxu0 0.0
        %2415 = vmatpush1.msra.mxu0 0.0
        %2416 = vmatprep.subr.mxu0 0.0
        %2417 = vmatpush1.msra.mxu0 0.0
        %2418 = vmatprep.subr.mxu0 0.0
        %2419 = vmatpush1.msra.mxu0 0.0
        %2420 = vmatprep.subr.mxu0 0.0
        %2421 = vmatpush1.msra.mxu0 0.0
        %2422 = vmatprep.subr.mxu0 0.0
        %2423 = vmatpush1.msra.mxu0 0.0
        %2424 = vmatprep.subr.mxu0 0.0
        %2425 = vmatpush1.msra.mxu0 0.0
        %2426 = vmatprep.subr.mxu0 0.0
        %2427 = vmatpush1.msra.mxu0 0.0
        %2428 = vmatprep.subr.mxu0 0.0
        %2429 = vmatpush1.msra.mxu0 0.0
        %2430 = vmatprep.mubr.f32.mxu0 0.0
        %2431 = vmatmul.mubr.f32.gmra.mrb[0].mxu0 %v426
        %v2432 = vpop.f32.mrb[0].mxu0
        %v2433 = vadd.f32 %v1011, %v2432
        %v2434 = vpop.f32.mrb[0].mxu0
        %2435 = vdwg.mxu0
        %v2436 = vmul.f32 %v2001, 0.025
        %v2437 = vadd.f32 %v2436, %v2433
        %v2438 = vmul.f32 %v2437, 0.0625
        %v2439 = vadd.f32 %v2001, %v2438
        %v2440 = vrsqrt.pop %v2016
        %v2441 = vmul.f32 %v2016, %v2440
        %vm2442 = vcmp.eq.f32.partialorder %v2016, inf
        %v2443 = vsel %vm2442, %v2016, %v2441
        %vm2444 = vcmp.eq.f32.partialorder %v2016, 0.0
        %v2445 = vand.u32 %v2016, 2147483648
        %v2446 = vsel %vm2444, %v2445, %v2443
        %v2448 = vrot.slane %v2446, 2
        %v2450 = vmul.f32 %v2001, %v2448
        %v2452 = vrot.slane %v2433, 1
        %v2454 = vadd.f32 %v2450, %v2452
        %v2455 = vmul.f32 %v2454, %v2019
        %v2456 = vadd.f32 %v2439, %v2455
        %v2457 = vsub.f32 0.04, %v2016
        %v2458 = vmul.f32 %v2457, 1.5
        %v2459 = vadd.f32 %v2458, %v2433
        %v2460 = vmul.f32 %v2459, 0.0625
        %v2461 = vadd.f32 %v2016, %v2460
        %v2462 = vadd.f32 %v2433, 0.3
        %v2464 = vrot.slane %v2019, 6
        %v2466 = vmul.f32 %v2462, %v2464
        %v2468 = vrot.slane %v2466, 1
        %v2470 = vadd.f32 %v2461, %v2468
        %v2471 = vmax.f32 %v2470, 0.01
        %s2472 = scalar_lea.vmem %s371, 8 [#allocation2]
        %v2473 = vld [vmem:[%s2472] sm:$0x3]
        %v2474 = vmul.f32 %v2473, 0.25
        %v2475 = vlaneseq
        %v2476 = vshrl.u32 %v2475, 7
        %v2477 = vsub.s32 0, %v2476
        %v2478 = vrot.slane %v2456, %v2477
        %v2479 = vmul.f32 %v434, %v2478
        %v2480 = vmul.f32 %v439, %v2478
        %v2481 = vmul.f32 %v444, %v2478
        %v2482 = vmul.f32 %v449, %v2478
        %v2483 = vmul.f32 %v454, %v2478
        %v2484 = vmul.f32 %v459, %v2478
        %v2485 = vmul.f32 %v464, %v2478
        %v2486 = vmul.f32 %v469, %v2478
        %v2487 = vmul.f32 %v474, %v2478
        %v2488 = vmul.f32 %v479, %v2478
        %v2489 = vmul.f32 %v484, %v2478
        %v2490 = vmul.f32 %v489, %v2478
        %v2491 = vmul.f32 %v494, %v2478
        %v2492 = vmul.f32 %v499, %v2478
        %v2493 = vmul.f32 %v504, %v2478
        %v2494 = vmul.f32 %v509, %v2478
        %v2495 = vlaneseq
        %v2496 = vshrl.u32 %v2495, 7
        %v2497 = vsub.s32 2, %v2496
        %v2498 = vrot.slane %v2471, %v2497
        %v2499 = vmul.f32 %v513, %v2498
        %v2500 = vmul.f32 %v517, %v2498
        %v2501 = vmul.f32 %v521, %v2498
        %v2502 = vmul.f32 %v525, %v2498
        %v2503 = vmul.f32 %v529, %v2498
        %v2504 = vmul.f32 %v533, %v2498
        %v2505 = vmul.f32 %v537, %v2498
        %v2506 = vmul.f32 %v541, %v2498
        %v2507 = vmul.f32 %v545, %v2498
        %v2508 = vmul.f32 %v549, %v2498
        %v2509 = vmul.f32 %v553, %v2498
        %v2510 = vmul.f32 %v557, %v2498
        %v2511 = vmul.f32 %v561, %v2498
        %v2512 = vmul.f32 %v565, %v2498
        %v2513 = vmul.f32 %v569, %v2498
        %v2514 = vmul.f32 %v573, %v2498
        %v2515 = vadd.f32 %v2479, %v2499
        %v2516 = vadd.f32 %v2480, %v2500
        %v2517 = vadd.f32 %v2481, %v2501
        %v2518 = vadd.f32 %v2482, %v2502
        %v2519 = vadd.f32 %v2483, %v2503
        %v2520 = vadd.f32 %v2484, %v2504
        %v2521 = vadd.f32 %v2485, %v2505
        %v2522 = vadd.f32 %v2486, %v2506
        %v2523 = vadd.f32 %v2487, %v2507
        %v2524 = vadd.f32 %v2488, %v2508
        %v2525 = vadd.f32 %v2489, %v2509
        %v2526 = vadd.f32 %v2490, %v2510
        %v2527 = vadd.f32 %v2491, %v2511
        %v2528 = vadd.f32 %v2492, %v2512
        %v2529 = vadd.f32 %v2493, %v2513
        %v2530 = vadd.f32 %v2494, %v2514
        %s2531 = scalar_lea.vmem %s1, 512
        %v2532 = vld [vmem:[%s2531] sm:$0xff]
        %v2533 = vld [vmem:[%s2531 + $0x8] sm:$0xff]
        %v2534 = vld [vmem:[%s2531 + $0x10] sm:$0xff]
        %v2535 = vld [vmem:[%s2531 + $0x18] sm:$0xff]
        %v2536 = vld [vmem:[%s2531 + $0x20] sm:$0xff]
        %v2537 = vld [vmem:[%s2531 + $0x28] sm:$0xff]
        %v2538 = vld [vmem:[%s2531 + $0x30] sm:$0xff]
        %v2539 = vld [vmem:[%s2531 + $0x38] sm:$0xff]
        %v2540 = vld [vmem:[%s2531 + $0x40] sm:$0xff]
        %v2541 = vld [vmem:[%s2531 + $0x48] sm:$0xff]
        %v2542 = vld [vmem:[%s2531 + $0x50] sm:$0xff]
        %v2543 = vld [vmem:[%s2531 + $0x58] sm:$0xff]
        %v2544 = vld [vmem:[%s2531 + $0x60] sm:$0xff]
        %v2545 = vld [vmem:[%s2531 + $0x68] sm:$0xff]
        %v2546 = vld [vmem:[%s2531 + $0x70] sm:$0xff]
        %v2547 = vld [vmem:[%s2531 + $0x78] sm:$0xff]
        %2549 = vset.pattern.permute.xlu0 0
        %2550 = vperm.xlu0 %2549, %v2532
        %v2551 = vpop.permute.xlu0 %2550
        %2554 = vset.pattern.permute.xlu0 0
        %2555 = vperm.xlu0 %2554, %v2533
        %v2556 = vpop.permute.xlu0 %2555
        %2559 = vset.pattern.permute.xlu0 0
        %2560 = vperm.xlu0 %2559, %v2534
        %v2561 = vpop.permute.xlu0 %2560
        %2564 = vset.pattern.permute.xlu0 0
        %2565 = vperm.xlu0 %2564, %v2535
        %v2566 = vpop.permute.xlu0 %2565
        %2569 = vset.pattern.permute.xlu0 0
        %2570 = vperm.xlu0 %2569, %v2536
        %v2571 = vpop.permute.xlu0 %2570
        %2574 = vset.pattern.permute.xlu0 0
        %2575 = vperm.xlu0 %2574, %v2537
        %v2576 = vpop.permute.xlu0 %2575
        %2579 = vset.pattern.permute.xlu0 0
        %2580 = vperm.xlu0 %2579, %v2538
        %v2581 = vpop.permute.xlu0 %2580
        %2584 = vset.pattern.permute.xlu0 0
        %2585 = vperm.xlu0 %2584, %v2539
        %v2586 = vpop.permute.xlu0 %2585
        %2589 = vset.pattern.permute.xlu0 0
        %2590 = vperm.xlu0 %2589, %v2540
        %v2591 = vpop.permute.xlu0 %2590
        %2594 = vset.pattern.permute.xlu0 0
        %2595 = vperm.xlu0 %2594, %v2541
        %v2596 = vpop.permute.xlu0 %2595
        %2599 = vset.pattern.permute.xlu0 0
        %2600 = vperm.xlu0 %2599, %v2542
        %v2601 = vpop.permute.xlu0 %2600
        %2604 = vset.pattern.permute.xlu0 0
        %2605 = vperm.xlu0 %2604, %v2543
        %v2606 = vpop.permute.xlu0 %2605
        %2609 = vset.pattern.permute.xlu0 0
        %2610 = vperm.xlu0 %2609, %v2544
        %v2611 = vpop.permute.xlu0 %2610
        %2614 = vset.pattern.permute.xlu0 0
        %2615 = vperm.xlu0 %2614, %v2545
        %v2616 = vpop.permute.xlu0 %2615
        %2619 = vset.pattern.permute.xlu0 0
        %2620 = vperm.xlu0 %2619, %v2546
        %v2621 = vpop.permute.xlu0 %2620
        %2624 = vset.pattern.permute.xlu0 0
        %2625 = vperm.xlu0 %2624, %v2547
        %v2626 = vpop.permute.xlu0 %2625
        %v2628 = vadd.f32 %v2515, %v2551
        %v2629 = vadd.f32 %v2516, %v2556
        %v2630 = vadd.f32 %v2517, %v2561
        %v2631 = vadd.f32 %v2518, %v2566
        %v2632 = vadd.f32 %v2519, %v2571
        %v2633 = vadd.f32 %v2520, %v2576
        %v2634 = vadd.f32 %v2521, %v2581
        %v2635 = vadd.f32 %v2522, %v2586
        %v2636 = vadd.f32 %v2523, %v2591
        %v2637 = vadd.f32 %v2524, %v2596
        %v2638 = vadd.f32 %v2525, %v2601
        %v2639 = vadd.f32 %v2526, %v2606
        %v2640 = vadd.f32 %v2527, %v2611
        %v2641 = vadd.f32 %v2528, %v2616
        %v2642 = vadd.f32 %v2529, %v2621
        %v2643 = vadd.f32 %v2530, %v2626
        %v2644 = vmax.f32 %v2628, 0.0
        %v2645 = vmax.f32 %v2629, 0.0
        %v2646 = vmax.f32 %v2630, 0.0
        %v2647 = vmax.f32 %v2631, 0.0
        %v2648 = vmax.f32 %v2632, 0.0
        %v2649 = vmax.f32 %v2633, 0.0
        %v2650 = vmax.f32 %v2634, 0.0
        %v2651 = vmax.f32 %v2635, 0.0
        %v2652 = vmax.f32 %v2636, 0.0
        %v2653 = vmax.f32 %v2637, 0.0
        %v2654 = vmax.f32 %v2638, 0.0
        %v2655 = vmax.f32 %v2639, 0.0
        %v2656 = vmax.f32 %v2640, 0.0
        %v2657 = vmax.f32 %v2641, 0.0
        %v2658 = vmax.f32 %v2642, 0.0
        %v2659 = vmax.f32 %v2643, 0.0
        %2660 = vmatprep.subr.mxu0 0.0
        %2661 = vmatpush1.msra.mxu0 %v2644
        %2662 = vmatprep.subr.mxu0 0.0
        %2663 = vmatpush1.msra.mxu0 %v2645
        %2664 = vmatprep.subr.mxu0 0.0
        %2665 = vmatpush1.msra.mxu0 %v2646
        %2666 = vmatprep.subr.mxu0 0.0
        %2667 = vmatpush1.msra.mxu0 %v2647
        %2668 = vmatprep.subr.mxu0 0.0
        %2669 = vmatpush1.msra.mxu0 %v2648
        %2670 = vmatprep.subr.mxu0 0.0
        %2671 = vmatpush1.msra.mxu0 %v2649
        %2672 = vmatprep.subr.mxu0 0.0
        %2673 = vmatpush1.msra.mxu0 %v2650
        %2674 = vmatprep.subr.mxu0 0.0
        %2675 = vmatpush1.msra.mxu0 %v2651
        %2676 = vmatprep.subr.mxu0 0.0
        %2677 = vmatpush1.msra.mxu0 %v2652
        %2678 = vmatprep.subr.mxu0 0.0
        %2679 = vmatpush1.msra.mxu0 %v2653
        %2680 = vmatprep.subr.mxu0 0.0
        %2681 = vmatpush1.msra.mxu0 %v2654
        %2682 = vmatprep.subr.mxu0 0.0
        %2683 = vmatpush1.msra.mxu0 %v2655
        %2684 = vmatprep.subr.mxu0 0.0
        %2685 = vmatpush1.msra.mxu0 %v2656
        %2686 = vmatprep.subr.mxu0 0.0
        %2687 = vmatpush1.msra.mxu0 %v2657
        %2688 = vmatprep.subr.mxu0 0.0
        %2689 = vmatpush1.msra.mxu0 %v2658
        %2690 = vmatprep.subr.mxu0 0.0
        %2691 = vmatpush1.msra.mxu0 %v2659
        %2692 = vmatprep.subr.mxu0 0.0
        %2693 = vmatpush1.msra.mxu0 0.0
        %2694 = vmatprep.subr.mxu0 0.0
        %2695 = vmatpush1.msra.mxu0 0.0
        %2696 = vmatprep.subr.mxu0 0.0
        %2697 = vmatpush1.msra.mxu0 0.0
        %2698 = vmatprep.subr.mxu0 0.0
        %2699 = vmatpush1.msra.mxu0 0.0
        %2700 = vmatprep.subr.mxu0 0.0
        %2701 = vmatpush1.msra.mxu0 0.0
        %2702 = vmatprep.subr.mxu0 0.0
        %2703 = vmatpush1.msra.mxu0 0.0
        %2704 = vmatprep.subr.mxu0 0.0
        %2705 = vmatpush1.msra.mxu0 0.0
        %2706 = vmatprep.subr.mxu0 0.0
        %2707 = vmatpush1.msra.mxu0 0.0
        %2708 = vmatprep.subr.mxu0 0.0
        %2709 = vmatpush1.msra.mxu0 0.0
        %2710 = vmatprep.subr.mxu0 0.0
        %2711 = vmatpush1.msra.mxu0 0.0
        %2712 = vmatprep.subr.mxu0 0.0
        %2713 = vmatpush1.msra.mxu0 0.0
        %2714 = vmatprep.subr.mxu0 0.0
        %2715 = vmatpush1.msra.mxu0 0.0
        %2716 = vmatprep.subr.mxu0 0.0
        %2717 = vmatpush1.msra.mxu0 0.0
        %2718 = vmatprep.subr.mxu0 0.0
        %2719 = vmatpush1.msra.mxu0 0.0
        %2720 = vmatprep.subr.mxu0 0.0
        %2721 = vmatpush1.msra.mxu0 0.0
        %2722 = vmatprep.subr.mxu0 0.0
        %2723 = vmatpush1.msra.mxu0 0.0
        %2724 = vmatprep.mubr.f32.mxu0 0.0
        %2725 = vmatmul.mubr.f32.gmra.mrb[0].mxu0 %v735
        %v2726 = vpop.f32.mrb[0].mxu0
        %v2727 = vadd.f32 %v770, %v2726
        %v2728 = vpop.f32.mrb[0].mxu0
        %2729 = vmatprep.mubr.f32.mxu0 0.0
        %2730 = vmatmul.mubr.f32.gmra.mrb[0].mxu0 %v736
        %v2731 = vpop.f32.mrb[0].mxu0
        %v2732 = vadd.f32 %v775, %v2731
        %v2733 = vpop.f32.mrb[0].mxu0
        %2734 = vmatprep.mubr.f32.mxu0 0.0
        %2735 = vmatmul.mubr.f32.gmra.mrb[0].mxu0 %v737
        %v2736 = vpop.f32.mrb[0].mxu0
        %v2737 = vadd.f32 %v780, %v2736
        %v2738 = vpop.f32.mrb[0].mxu0
        %2739 = vmatprep.mubr.f32.mxu0 0.0
        %2740 = vmatmul.mubr.f32.gmra.mrb[0].mxu0 %v738
        %v2741 = vpop.f32.mrb[0].mxu0
        %v2742 = vadd.f32 %v785, %v2741
        %v2743 = vpop.f32.mrb[0].mxu0
        %2744 = vmatprep.mubr.f32.mxu0 0.0
        %2745 = vmatmul.mubr.f32.gmra.mrb[0].mxu0 %v739
        %v2746 = vpop.f32.mrb[0].mxu0
        %v2747 = vadd.f32 %v790, %v2746
        %v2748 = vpop.f32.mrb[0].mxu0
        %2749 = vmatprep.mubr.f32.mxu0 0.0
        %2750 = vmatmul.mubr.f32.gmra.mrb[0].mxu0 %v740
        %v2751 = vpop.f32.mrb[0].mxu0
        %v2752 = vadd.f32 %v795, %v2751
        %v2753 = vpop.f32.mrb[0].mxu0
        %2754 = vmatprep.mubr.f32.mxu0 0.0
        %2755 = vmatmul.mubr.f32.gmra.mrb[0].mxu0 %v741
        %v2756 = vpop.f32.mrb[0].mxu0
        %v2757 = vadd.f32 %v800, %v2756
        %v2758 = vpop.f32.mrb[0].mxu0
        %2759 = vmatprep.mubr.f32.mxu0 0.0
        %2760 = vmatmul.mubr.f32.gmra.mrb[0].mxu0 %v742
        %v2761 = vpop.f32.mrb[0].mxu0
        %v2762 = vadd.f32 %v805, %v2761
        %v2763 = vpop.f32.mrb[0].mxu0
        %2764 = vmatprep.mubr.f32.mxu0 0.0
        %2765 = vmatmul.mubr.f32.gmra.mrb[0].mxu0 %v743
        %v2766 = vpop.f32.mrb[0].mxu0
        %v2767 = vadd.f32 %v810, %v2766
        %v2768 = vpop.f32.mrb[0].mxu0
        %2769 = vmatprep.mubr.f32.mxu0 0.0
        %2770 = vmatmul.mubr.f32.gmra.mrb[0].mxu0 %v744
        %v2771 = vpop.f32.mrb[0].mxu0
        %v2772 = vadd.f32 %v815, %v2771
        %v2773 = vpop.f32.mrb[0].mxu0
        %2774 = vmatprep.mubr.f32.mxu0 0.0
        %2775 = vmatmul.mubr.f32.gmra.mrb[0].mxu0 %v745
        %v2776 = vpop.f32.mrb[0].mxu0
        %v2777 = vadd.f32 %v820, %v2776
        %v2778 = vpop.f32.mrb[0].mxu0
        %2779 = vmatprep.mubr.f32.mxu0 0.0
        %2780 = vmatmul.mubr.f32.gmra.mrb[0].mxu0 %v746
        %v2781 = vpop.f32.mrb[0].mxu0
        %v2782 = vadd.f32 %v825, %v2781
        %v2783 = vpop.f32.mrb[0].mxu0
        %2784 = vmatprep.mubr.f32.mxu0 0.0
        %2785 = vmatmul.mubr.f32.gmra.mrb[0].mxu0 %v747
        %v2786 = vpop.f32.mrb[0].mxu0
        %v2787 = vadd.f32 %v830, %v2786
        %v2788 = vpop.f32.mrb[0].mxu0
        %2789 = vmatprep.mubr.f32.mxu0 0.0
        %2790 = vmatmul.mubr.f32.gmra.mrb[0].mxu0 %v748
        %v2791 = vpop.f32.mrb[0].mxu0
        %v2792 = vadd.f32 %v835, %v2791
        %v2793 = vpop.f32.mrb[0].mxu0
        %2794 = vmatprep.mubr.f32.mxu0 0.0
        %2795 = vmatmul.mubr.f32.gmra.mrb[0].mxu0 %v749
        %v2796 = vpop.f32.mrb[0].mxu0
        %v2797 = vadd.f32 %v840, %v2796
        %v2798 = vpop.f32.mrb[0].mxu0
        %2799 = vmatprep.mubr.f32.mxu0 0.0
        %2800 = vmatmul.mubr.f32.gmra.mrb[0].mxu0 %v750
        %v2801 = vpop.f32.mrb[0].mxu0
        %v2802 = vadd.f32 %v845, %v2801
        %v2803 = vpop.f32.mrb[0].mxu0
        %2804 = vdwg.mxu0
        %v2805 = vmax.f32 %v2727, 0.0
        %v2806 = vmax.f32 %v2732, 0.0
        %v2807 = vmax.f32 %v2737, 0.0
        %v2808 = vmax.f32 %v2742, 0.0
        %v2809 = vmax.f32 %v2747, 0.0
        %v2810 = vmax.f32 %v2752, 0.0
        %v2811 = vmax.f32 %v2757, 0.0
        %v2812 = vmax.f32 %v2762, 0.0
        %v2813 = vmax.f32 %v2767, 0.0
        %v2814 = vmax.f32 %v2772, 0.0
        %v2815 = vmax.f32 %v2777, 0.0
        %v2816 = vmax.f32 %v2782, 0.0
        %v2817 = vmax.f32 %v2787, 0.0
        %v2818 = vmax.f32 %v2792, 0.0
        %v2819 = vmax.f32 %v2797, 0.0
        %v2820 = vmax.f32 %v2802, 0.0
        %2821 = vmatprep.subr.mxu0 0.0
        %2822 = vmatpush1.msra.mxu0 %v2805
        %2823 = vmatprep.subr.mxu0 0.0
        %2824 = vmatpush1.msra.mxu0 %v2806
        %2825 = vmatprep.subr.mxu0 0.0
        %2826 = vmatpush1.msra.mxu0 %v2807
        %2827 = vmatprep.subr.mxu0 0.0
        %2828 = vmatpush1.msra.mxu0 %v2808
        %2829 = vmatprep.subr.mxu0 0.0
        %2830 = vmatpush1.msra.mxu0 %v2809
        %2831 = vmatprep.subr.mxu0 0.0
        %2832 = vmatpush1.msra.mxu0 %v2810
        %2833 = vmatprep.subr.mxu0 0.0
        %2834 = vmatpush1.msra.mxu0 %v2811
        %2835 = vmatprep.subr.mxu0 0.0
        %2836 = vmatpush1.msra.mxu0 %v2812
        %2837 = vmatprep.subr.mxu0 0.0
        %2838 = vmatpush1.msra.mxu0 %v2813
        %2839 = vmatprep.subr.mxu0 0.0
        %2840 = vmatpush1.msra.mxu0 %v2814
        %2841 = vmatprep.subr.mxu0 0.0
        %2842 = vmatpush1.msra.mxu0 %v2815
        %2843 = vmatprep.subr.mxu0 0.0
        %2844 = vmatpush1.msra.mxu0 %v2816
        %2845 = vmatprep.subr.mxu0 0.0
        %2846 = vmatpush1.msra.mxu0 %v2817
        %2847 = vmatprep.subr.mxu0 0.0
        %2848 = vmatpush1.msra.mxu0 %v2818
        %2849 = vmatprep.subr.mxu0 0.0
        %2850 = vmatpush1.msra.mxu0 %v2819
        %2851 = vmatprep.subr.mxu0 0.0
        %2852 = vmatpush1.msra.mxu0 %v2820
        %2853 = vmatprep.subr.mxu0 0.0
        %2854 = vmatpush1.msra.mxu0 0.0
        %2855 = vmatprep.subr.mxu0 0.0
        %2856 = vmatpush1.msra.mxu0 0.0
        %2857 = vmatprep.subr.mxu0 0.0
        %2858 = vmatpush1.msra.mxu0 0.0
        %2859 = vmatprep.subr.mxu0 0.0
        %2860 = vmatpush1.msra.mxu0 0.0
        %2861 = vmatprep.subr.mxu0 0.0
        %2862 = vmatpush1.msra.mxu0 0.0
        %2863 = vmatprep.subr.mxu0 0.0
        %2864 = vmatpush1.msra.mxu0 0.0
        %2865 = vmatprep.subr.mxu0 0.0
        %2866 = vmatpush1.msra.mxu0 0.0
        %2867 = vmatprep.subr.mxu0 0.0
        %2868 = vmatpush1.msra.mxu0 0.0
        %2869 = vmatprep.subr.mxu0 0.0
        %2870 = vmatpush1.msra.mxu0 0.0
        %2871 = vmatprep.subr.mxu0 0.0
        %2872 = vmatpush1.msra.mxu0 0.0
        %2873 = vmatprep.subr.mxu0 0.0
        %2874 = vmatpush1.msra.mxu0 0.0
        %2875 = vmatprep.subr.mxu0 0.0
        %2876 = vmatpush1.msra.mxu0 0.0
        %2877 = vmatprep.subr.mxu0 0.0
        %2878 = vmatpush1.msra.mxu0 0.0
        %2879 = vmatprep.subr.mxu0 0.0
        %2880 = vmatpush1.msra.mxu0 0.0
        %2881 = vmatprep.subr.mxu0 0.0
        %2882 = vmatpush1.msra.mxu0 0.0
        %2883 = vmatprep.subr.mxu0 0.0
        %2884 = vmatpush1.msra.mxu0 0.0
        %2885 = vmatprep.mubr.f32.mxu0 0.0
        %2886 = vmatmul.mubr.f32.gmra.mrb[0].mxu0 %v426
        %v2887 = vpop.f32.mrb[0].mxu0
        %v2888 = vadd.f32 %v1011, %v2887
        %v2889 = vpop.f32.mrb[0].mxu0
        %2890 = vdwg.mxu0
        %v2891 = vmul.f32 %v2456, 0.025
        %v2892 = vadd.f32 %v2891, %v2888
        %v2893 = vmul.f32 %v2892, 0.0625
        %v2894 = vadd.f32 %v2456, %v2893
        %v2895 = vrsqrt.pop %v2471
        %v2896 = vmul.f32 %v2471, %v2895
        %vm2897 = vcmp.eq.f32.partialorder %v2471, inf
        %v2898 = vsel %vm2897, %v2471, %v2896
        %vm2899 = vcmp.eq.f32.partialorder %v2471, 0.0
        %v2900 = vand.u32 %v2471, 2147483648
        %v2901 = vsel %vm2899, %v2900, %v2898
        %v2903 = vrot.slane %v2901, 2
        %v2905 = vmul.f32 %v2456, %v2903
        %v2907 = vrot.slane %v2888, 1
        %v2909 = vadd.f32 %v2905, %v2907
        %v2910 = vmul.f32 %v2909, %v2474
        %v2911 = vadd.f32 %v2894, %v2910
        %v2912 = vsub.f32 0.04, %v2471
        %v2913 = vmul.f32 %v2912, 1.5
        %v2914 = vadd.f32 %v2913, %v2888
        %v2915 = vmul.f32 %v2914, 0.0625
        %v2916 = vadd.f32 %v2471, %v2915
        %v2917 = vadd.f32 %v2888, 0.3
        %v2919 = vrot.slane %v2474, 6
        %v2921 = vmul.f32 %v2917, %v2919
        %v2923 = vrot.slane %v2921, 1
        %v2925 = vadd.f32 %v2916, %v2923
        %v2926 = vmax.f32 %v2925, 0.01
        %s2927 = scalar_lea.vmem %s371, 10 [#allocation2]
        %v2928 = vld [vmem:[%s2927] sm:$0x3]
        %v2929 = vmul.f32 %v2928, 0.25
        %v2930 = vlaneseq
        %v2931 = vshrl.u32 %v2930, 7
        %v2932 = vsub.s32 0, %v2931
        %v2933 = vrot.slane %v2911, %v2932
        %v2934 = vmul.f32 %v434, %v2933
        %v2935 = vmul.f32 %v439, %v2933
        %v2936 = vmul.f32 %v444, %v2933
        %v2937 = vmul.f32 %v449, %v2933
        %v2938 = vmul.f32 %v454, %v2933
        %v2939 = vmul.f32 %v459, %v2933
        %v2940 = vmul.f32 %v464, %v2933
        %v2941 = vmul.f32 %v469, %v2933
        %v2942 = vmul.f32 %v474, %v2933
        %v2943 = vmul.f32 %v479, %v2933
        %v2944 = vmul.f32 %v484, %v2933
        %v2945 = vmul.f32 %v489, %v2933
        %v2946 = vmul.f32 %v494, %v2933
        %v2947 = vmul.f32 %v499, %v2933
        %v2948 = vmul.f32 %v504, %v2933
        %v2949 = vmul.f32 %v509, %v2933
        %v2950 = vlaneseq
        %v2951 = vshrl.u32 %v2950, 7
        %v2952 = vsub.s32 2, %v2951
        %v2953 = vrot.slane %v2926, %v2952
        %v2954 = vmul.f32 %v513, %v2953
        %v2955 = vmul.f32 %v517, %v2953
        %v2956 = vmul.f32 %v521, %v2953
        %v2957 = vmul.f32 %v525, %v2953
        %v2958 = vmul.f32 %v529, %v2953
        %v2959 = vmul.f32 %v533, %v2953
        %v2960 = vmul.f32 %v537, %v2953
        %v2961 = vmul.f32 %v541, %v2953
        %v2962 = vmul.f32 %v545, %v2953
        %v2963 = vmul.f32 %v549, %v2953
        %v2964 = vmul.f32 %v553, %v2953
        %v2965 = vmul.f32 %v557, %v2953
        %v2966 = vmul.f32 %v561, %v2953
        %v2967 = vmul.f32 %v565, %v2953
        %v2968 = vmul.f32 %v569, %v2953
        %v2969 = vmul.f32 %v573, %v2953
        %v2970 = vadd.f32 %v2934, %v2954
        %v2971 = vadd.f32 %v2935, %v2955
        %v2972 = vadd.f32 %v2936, %v2956
        %v2973 = vadd.f32 %v2937, %v2957
        %v2974 = vadd.f32 %v2938, %v2958
        %v2975 = vadd.f32 %v2939, %v2959
        %v2976 = vadd.f32 %v2940, %v2960
        %v2977 = vadd.f32 %v2941, %v2961
        %v2978 = vadd.f32 %v2942, %v2962
        %v2979 = vadd.f32 %v2943, %v2963
        %v2980 = vadd.f32 %v2944, %v2964
        %v2981 = vadd.f32 %v2945, %v2965
        %v2982 = vadd.f32 %v2946, %v2966
        %v2983 = vadd.f32 %v2947, %v2967
        %v2984 = vadd.f32 %v2948, %v2968
        %v2985 = vadd.f32 %v2949, %v2969
        %s2986 = scalar_lea.vmem %s1, 640
        %v2987 = vld [vmem:[%s2986] sm:$0xff]
        %v2988 = vld [vmem:[%s2986 + $0x8] sm:$0xff]
        %v2989 = vld [vmem:[%s2986 + $0x10] sm:$0xff]
        %v2990 = vld [vmem:[%s2986 + $0x18] sm:$0xff]
        %v2991 = vld [vmem:[%s2986 + $0x20] sm:$0xff]
        %v2992 = vld [vmem:[%s2986 + $0x28] sm:$0xff]
        %v2993 = vld [vmem:[%s2986 + $0x30] sm:$0xff]
        %v2994 = vld [vmem:[%s2986 + $0x38] sm:$0xff]
        %v2995 = vld [vmem:[%s2986 + $0x40] sm:$0xff]
        %v2996 = vld [vmem:[%s2986 + $0x48] sm:$0xff]
        %v2997 = vld [vmem:[%s2986 + $0x50] sm:$0xff]
        %v2998 = vld [vmem:[%s2986 + $0x58] sm:$0xff]
        %v2999 = vld [vmem:[%s2986 + $0x60] sm:$0xff]
        %v3000 = vld [vmem:[%s2986 + $0x68] sm:$0xff]
        %v3001 = vld [vmem:[%s2986 + $0x70] sm:$0xff]
        %v3002 = vld [vmem:[%s2986 + $0x78] sm:$0xff]
        %3004 = vset.pattern.permute.xlu0 0
        %3005 = vperm.xlu0 %3004, %v2987
        %v3006 = vpop.permute.xlu0 %3005
        %3009 = vset.pattern.permute.xlu0 0
        %3010 = vperm.xlu0 %3009, %v2988
        %v3011 = vpop.permute.xlu0 %3010
        %3014 = vset.pattern.permute.xlu0 0
        %3015 = vperm.xlu0 %3014, %v2989
        %v3016 = vpop.permute.xlu0 %3015
        %3019 = vset.pattern.permute.xlu0 0
        %3020 = vperm.xlu0 %3019, %v2990
        %v3021 = vpop.permute.xlu0 %3020
        %3024 = vset.pattern.permute.xlu0 0
        %3025 = vperm.xlu0 %3024, %v2991
        %v3026 = vpop.permute.xlu0 %3025
        %3029 = vset.pattern.permute.xlu0 0
        %3030 = vperm.xlu0 %3029, %v2992
        %v3031 = vpop.permute.xlu0 %3030
        %3034 = vset.pattern.permute.xlu0 0
        %3035 = vperm.xlu0 %3034, %v2993
        %v3036 = vpop.permute.xlu0 %3035
        %3039 = vset.pattern.permute.xlu0 0
        %3040 = vperm.xlu0 %3039, %v2994
        %v3041 = vpop.permute.xlu0 %3040
        %3044 = vset.pattern.permute.xlu0 0
        %3045 = vperm.xlu0 %3044, %v2995
        %v3046 = vpop.permute.xlu0 %3045
        %3049 = vset.pattern.permute.xlu0 0
        %3050 = vperm.xlu0 %3049, %v2996
        %v3051 = vpop.permute.xlu0 %3050
        %3054 = vset.pattern.permute.xlu0 0
        %3055 = vperm.xlu0 %3054, %v2997
        %v3056 = vpop.permute.xlu0 %3055
        %3059 = vset.pattern.permute.xlu0 0
        %3060 = vperm.xlu0 %3059, %v2998
        %v3061 = vpop.permute.xlu0 %3060
        %3064 = vset.pattern.permute.xlu0 0
        %3065 = vperm.xlu0 %3064, %v2999
        %v3066 = vpop.permute.xlu0 %3065
        %3069 = vset.pattern.permute.xlu0 0
        %3070 = vperm.xlu0 %3069, %v3000
        %v3071 = vpop.permute.xlu0 %3070
        %3074 = vset.pattern.permute.xlu0 0
        %3075 = vperm.xlu0 %3074, %v3001
        %v3076 = vpop.permute.xlu0 %3075
        %3079 = vset.pattern.permute.xlu0 0
        %3080 = vperm.xlu0 %3079, %v3002
        %v3081 = vpop.permute.xlu0 %3080
        %v3083 = vadd.f32 %v2970, %v3006
        %v3084 = vadd.f32 %v2971, %v3011
        %v3085 = vadd.f32 %v2972, %v3016
        %v3086 = vadd.f32 %v2973, %v3021
        %v3087 = vadd.f32 %v2974, %v3026
        %v3088 = vadd.f32 %v2975, %v3031
        %v3089 = vadd.f32 %v2976, %v3036
        %v3090 = vadd.f32 %v2977, %v3041
        %v3091 = vadd.f32 %v2978, %v3046
        %v3092 = vadd.f32 %v2979, %v3051
        %v3093 = vadd.f32 %v2980, %v3056
        %v3094 = vadd.f32 %v2981, %v3061
        %v3095 = vadd.f32 %v2982, %v3066
        %v3096 = vadd.f32 %v2983, %v3071
        %v3097 = vadd.f32 %v2984, %v3076
        %v3098 = vadd.f32 %v2985, %v3081
        %v3099 = vmax.f32 %v3083, 0.0
        %v3100 = vmax.f32 %v3084, 0.0
        %v3101 = vmax.f32 %v3085, 0.0
        %v3102 = vmax.f32 %v3086, 0.0
        %v3103 = vmax.f32 %v3087, 0.0
        %v3104 = vmax.f32 %v3088, 0.0
        %v3105 = vmax.f32 %v3089, 0.0
        %v3106 = vmax.f32 %v3090, 0.0
        %v3107 = vmax.f32 %v3091, 0.0
        %v3108 = vmax.f32 %v3092, 0.0
        %v3109 = vmax.f32 %v3093, 0.0
        %v3110 = vmax.f32 %v3094, 0.0
        %v3111 = vmax.f32 %v3095, 0.0
        %v3112 = vmax.f32 %v3096, 0.0
        %v3113 = vmax.f32 %v3097, 0.0
        %v3114 = vmax.f32 %v3098, 0.0
        %3115 = vmatprep.subr.mxu0 0.0
        %3116 = vmatpush1.msra.mxu0 %v3099
        %3117 = vmatprep.subr.mxu0 0.0
        %3118 = vmatpush1.msra.mxu0 %v3100
        %3119 = vmatprep.subr.mxu0 0.0
        %3120 = vmatpush1.msra.mxu0 %v3101
        %3121 = vmatprep.subr.mxu0 0.0
        %3122 = vmatpush1.msra.mxu0 %v3102
        %3123 = vmatprep.subr.mxu0 0.0
        %3124 = vmatpush1.msra.mxu0 %v3103
        %3125 = vmatprep.subr.mxu0 0.0
        %3126 = vmatpush1.msra.mxu0 %v3104
        %3127 = vmatprep.subr.mxu0 0.0
        %3128 = vmatpush1.msra.mxu0 %v3105
        %3129 = vmatprep.subr.mxu0 0.0
        %3130 = vmatpush1.msra.mxu0 %v3106
        %3131 = vmatprep.subr.mxu0 0.0
        %3132 = vmatpush1.msra.mxu0 %v3107
        %3133 = vmatprep.subr.mxu0 0.0
        %3134 = vmatpush1.msra.mxu0 %v3108
        %3135 = vmatprep.subr.mxu0 0.0
        %3136 = vmatpush1.msra.mxu0 %v3109
        %3137 = vmatprep.subr.mxu0 0.0
        %3138 = vmatpush1.msra.mxu0 %v3110
        %3139 = vmatprep.subr.mxu0 0.0
        %3140 = vmatpush1.msra.mxu0 %v3111
        %3141 = vmatprep.subr.mxu0 0.0
        %3142 = vmatpush1.msra.mxu0 %v3112
        %3143 = vmatprep.subr.mxu0 0.0
        %3144 = vmatpush1.msra.mxu0 %v3113
        %3145 = vmatprep.subr.mxu0 0.0
        %3146 = vmatpush1.msra.mxu0 %v3114
        %3147 = vmatprep.subr.mxu0 0.0
        %3148 = vmatpush1.msra.mxu0 0.0
        %3149 = vmatprep.subr.mxu0 0.0
        %3150 = vmatpush1.msra.mxu0 0.0
        %3151 = vmatprep.subr.mxu0 0.0
        %3152 = vmatpush1.msra.mxu0 0.0
        %3153 = vmatprep.subr.mxu0 0.0
        %3154 = vmatpush1.msra.mxu0 0.0
        %3155 = vmatprep.subr.mxu0 0.0
        %3156 = vmatpush1.msra.mxu0 0.0
        %3157 = vmatprep.subr.mxu0 0.0
        %3158 = vmatpush1.msra.mxu0 0.0
        %3159 = vmatprep.subr.mxu0 0.0
        %3160 = vmatpush1.msra.mxu0 0.0
        %3161 = vmatprep.subr.mxu0 0.0
        %3162 = vmatpush1.msra.mxu0 0.0
        %3163 = vmatprep.subr.mxu0 0.0
        %3164 = vmatpush1.msra.mxu0 0.0
        %3165 = vmatprep.subr.mxu0 0.0
        %3166 = vmatpush1.msra.mxu0 0.0
        %3167 = vmatprep.subr.mxu0 0.0
        %3168 = vmatpush1.msra.mxu0 0.0
        %3169 = vmatprep.subr.mxu0 0.0
        %3170 = vmatpush1.msra.mxu0 0.0
        %3171 = vmatprep.subr.mxu0 0.0
        %3172 = vmatpush1.msra.mxu0 0.0
        %3173 = vmatprep.subr.mxu0 0.0
        %3174 = vmatpush1.msra.mxu0 0.0
        %3175 = vmatprep.subr.mxu0 0.0
        %3176 = vmatpush1.msra.mxu0 0.0
        %3177 = vmatprep.subr.mxu0 0.0
        %3178 = vmatpush1.msra.mxu0 0.0
        %3179 = vmatprep.mubr.f32.mxu0 0.0
        %3180 = vmatmul.mubr.f32.gmra.mrb[0].mxu0 %v735
        %v3181 = vpop.f32.mrb[0].mxu0
        %v3182 = vadd.f32 %v770, %v3181
        %v3183 = vpop.f32.mrb[0].mxu0
        %3184 = vmatprep.mubr.f32.mxu0 0.0
        %3185 = vmatmul.mubr.f32.gmra.mrb[0].mxu0 %v736
        %v3186 = vpop.f32.mrb[0].mxu0
        %v3187 = vadd.f32 %v775, %v3186
        %v3188 = vpop.f32.mrb[0].mxu0
        %3189 = vmatprep.mubr.f32.mxu0 0.0
        %3190 = vmatmul.mubr.f32.gmra.mrb[0].mxu0 %v737
        %v3191 = vpop.f32.mrb[0].mxu0
        %v3192 = vadd.f32 %v780, %v3191
        %v3193 = vpop.f32.mrb[0].mxu0
        %3194 = vmatprep.mubr.f32.mxu0 0.0
        %3195 = vmatmul.mubr.f32.gmra.mrb[0].mxu0 %v738
        %v3196 = vpop.f32.mrb[0].mxu0
        %v3197 = vadd.f32 %v785, %v3196
        %v3198 = vpop.f32.mrb[0].mxu0
        %3199 = vmatprep.mubr.f32.mxu0 0.0
        %3200 = vmatmul.mubr.f32.gmra.mrb[0].mxu0 %v739
        %v3201 = vpop.f32.mrb[0].mxu0
        %v3202 = vadd.f32 %v790, %v3201
        %v3203 = vpop.f32.mrb[0].mxu0
        %3204 = vmatprep.mubr.f32.mxu0 0.0
        %3205 = vmatmul.mubr.f32.gmra.mrb[0].mxu0 %v740
        %v3206 = vpop.f32.mrb[0].mxu0
        %v3207 = vadd.f32 %v795, %v3206
        %v3208 = vpop.f32.mrb[0].mxu0
        %3209 = vmatprep.mubr.f32.mxu0 0.0
        %3210 = vmatmul.mubr.f32.gmra.mrb[0].mxu0 %v741
        %v3211 = vpop.f32.mrb[0].mxu0
        %v3212 = vadd.f32 %v800, %v3211
        %v3213 = vpop.f32.mrb[0].mxu0
        %3214 = vmatprep.mubr.f32.mxu0 0.0
        %3215 = vmatmul.mubr.f32.gmra.mrb[0].mxu0 %v742
        %v3216 = vpop.f32.mrb[0].mxu0
        %v3217 = vadd.f32 %v805, %v3216
        %v3218 = vpop.f32.mrb[0].mxu0
        %3219 = vmatprep.mubr.f32.mxu0 0.0
        %3220 = vmatmul.mubr.f32.gmra.mrb[0].mxu0 %v743
        %v3221 = vpop.f32.mrb[0].mxu0
        %v3222 = vadd.f32 %v810, %v3221
        %v3223 = vpop.f32.mrb[0].mxu0
        %3224 = vmatprep.mubr.f32.mxu0 0.0
        %3225 = vmatmul.mubr.f32.gmra.mrb[0].mxu0 %v744
        %v3226 = vpop.f32.mrb[0].mxu0
        %v3227 = vadd.f32 %v815, %v3226
        %v3228 = vpop.f32.mrb[0].mxu0
        %3229 = vmatprep.mubr.f32.mxu0 0.0
        %3230 = vmatmul.mubr.f32.gmra.mrb[0].mxu0 %v745
        %v3231 = vpop.f32.mrb[0].mxu0
        %v3232 = vadd.f32 %v820, %v3231
        %v3233 = vpop.f32.mrb[0].mxu0
        %3234 = vmatprep.mubr.f32.mxu0 0.0
        %3235 = vmatmul.mubr.f32.gmra.mrb[0].mxu0 %v746
        %v3236 = vpop.f32.mrb[0].mxu0
        %v3237 = vadd.f32 %v825, %v3236
        %v3238 = vpop.f32.mrb[0].mxu0
        %3239 = vmatprep.mubr.f32.mxu0 0.0
        %3240 = vmatmul.mubr.f32.gmra.mrb[0].mxu0 %v747
        %v3241 = vpop.f32.mrb[0].mxu0
        %v3242 = vadd.f32 %v830, %v3241
        %v3243 = vpop.f32.mrb[0].mxu0
        %3244 = vmatprep.mubr.f32.mxu0 0.0
        %3245 = vmatmul.mubr.f32.gmra.mrb[0].mxu0 %v748
        %v3246 = vpop.f32.mrb[0].mxu0
        %v3247 = vadd.f32 %v835, %v3246
        %v3248 = vpop.f32.mrb[0].mxu0
        %3249 = vmatprep.mubr.f32.mxu0 0.0
        %3250 = vmatmul.mubr.f32.gmra.mrb[0].mxu0 %v749
        %v3251 = vpop.f32.mrb[0].mxu0
        %v3252 = vadd.f32 %v840, %v3251
        %v3253 = vpop.f32.mrb[0].mxu0
        %3254 = vmatprep.mubr.f32.mxu0 0.0
        %3255 = vmatmul.mubr.f32.gmra.mrb[0].mxu0 %v750
        %v3256 = vpop.f32.mrb[0].mxu0
        %v3257 = vadd.f32 %v845, %v3256
        %v3258 = vpop.f32.mrb[0].mxu0
        %3259 = vdwg.mxu0
        %v3260 = vmax.f32 %v3182, 0.0
        %v3261 = vmax.f32 %v3187, 0.0
        %v3262 = vmax.f32 %v3192, 0.0
        %v3263 = vmax.f32 %v3197, 0.0
        %v3264 = vmax.f32 %v3202, 0.0
        %v3265 = vmax.f32 %v3207, 0.0
        %v3266 = vmax.f32 %v3212, 0.0
        %v3267 = vmax.f32 %v3217, 0.0
        %v3268 = vmax.f32 %v3222, 0.0
        %v3269 = vmax.f32 %v3227, 0.0
        %v3270 = vmax.f32 %v3232, 0.0
        %v3271 = vmax.f32 %v3237, 0.0
        %v3272 = vmax.f32 %v3242, 0.0
        %v3273 = vmax.f32 %v3247, 0.0
        %v3274 = vmax.f32 %v3252, 0.0
        %v3275 = vmax.f32 %v3257, 0.0
        %3276 = vmatprep.subr.mxu0 0.0
        %3277 = vmatpush1.msra.mxu0 %v3260
        %3278 = vmatprep.subr.mxu0 0.0
        %3279 = vmatpush1.msra.mxu0 %v3261
        %3280 = vmatprep.subr.mxu0 0.0
        %3281 = vmatpush1.msra.mxu0 %v3262
        %3282 = vmatprep.subr.mxu0 0.0
        %3283 = vmatpush1.msra.mxu0 %v3263
        %3284 = vmatprep.subr.mxu0 0.0
        %3285 = vmatpush1.msra.mxu0 %v3264
        %3286 = vmatprep.subr.mxu0 0.0
        %3287 = vmatpush1.msra.mxu0 %v3265
        %3288 = vmatprep.subr.mxu0 0.0
        %3289 = vmatpush1.msra.mxu0 %v3266
        %3290 = vmatprep.subr.mxu0 0.0
        %3291 = vmatpush1.msra.mxu0 %v3267
        %3292 = vmatprep.subr.mxu0 0.0
        %3293 = vmatpush1.msra.mxu0 %v3268
        %3294 = vmatprep.subr.mxu0 0.0
        %3295 = vmatpush1.msra.mxu0 %v3269
        %3296 = vmatprep.subr.mxu0 0.0
        %3297 = vmatpush1.msra.mxu0 %v3270
        %3298 = vmatprep.subr.mxu0 0.0
        %3299 = vmatpush1.msra.mxu0 %v3271
        %3300 = vmatprep.subr.mxu0 0.0
        %3301 = vmatpush1.msra.mxu0 %v3272
        %3302 = vmatprep.subr.mxu0 0.0
        %3303 = vmatpush1.msra.mxu0 %v3273
        %3304 = vmatprep.subr.mxu0 0.0
        %3305 = vmatpush1.msra.mxu0 %v3274
        %3306 = vmatprep.subr.mxu0 0.0
        %3307 = vmatpush1.msra.mxu0 %v3275
        %3308 = vmatprep.subr.mxu0 0.0
        %3309 = vmatpush1.msra.mxu0 0.0
        %3310 = vmatprep.subr.mxu0 0.0
        %3311 = vmatpush1.msra.mxu0 0.0
        %3312 = vmatprep.subr.mxu0 0.0
        %3313 = vmatpush1.msra.mxu0 0.0
        %3314 = vmatprep.subr.mxu0 0.0
        %3315 = vmatpush1.msra.mxu0 0.0
        %3316 = vmatprep.subr.mxu0 0.0
        %3317 = vmatpush1.msra.mxu0 0.0
        %3318 = vmatprep.subr.mxu0 0.0
        %3319 = vmatpush1.msra.mxu0 0.0
        %3320 = vmatprep.subr.mxu0 0.0
        %3321 = vmatpush1.msra.mxu0 0.0
        %3322 = vmatprep.subr.mxu0 0.0
        %3323 = vmatpush1.msra.mxu0 0.0
        %3324 = vmatprep.subr.mxu0 0.0
        %3325 = vmatpush1.msra.mxu0 0.0
        %3326 = vmatprep.subr.mxu0 0.0
        %3327 = vmatpush1.msra.mxu0 0.0
        %3328 = vmatprep.subr.mxu0 0.0
        %3329 = vmatpush1.msra.mxu0 0.0
        %3330 = vmatprep.subr.mxu0 0.0
        %3331 = vmatpush1.msra.mxu0 0.0
        %3332 = vmatprep.subr.mxu0 0.0
        %3333 = vmatpush1.msra.mxu0 0.0
        %3334 = vmatprep.subr.mxu0 0.0
        %3335 = vmatpush1.msra.mxu0 0.0
        %3336 = vmatprep.subr.mxu0 0.0
        %3337 = vmatpush1.msra.mxu0 0.0
        %3338 = vmatprep.subr.mxu0 0.0
        %3339 = vmatpush1.msra.mxu0 0.0
        %3340 = vmatprep.mubr.f32.mxu0 0.0
        %3341 = vmatmul.mubr.f32.gmra.mrb[0].mxu0 %v426
        %v3342 = vpop.f32.mrb[0].mxu0
        %v3343 = vadd.f32 %v1011, %v3342
        %v3344 = vpop.f32.mrb[0].mxu0
        %3345 = vdwg.mxu0
        %v3346 = vmul.f32 %v2911, 0.025
        %v3347 = vadd.f32 %v3346, %v3343
        %v3348 = vmul.f32 %v3347, 0.0625
        %v3349 = vadd.f32 %v2911, %v3348
        %v3350 = vrsqrt.pop %v2926
        %v3351 = vmul.f32 %v2926, %v3350
        %vm3352 = vcmp.eq.f32.partialorder %v2926, inf
        %v3353 = vsel %vm3352, %v2926, %v3351
        %vm3354 = vcmp.eq.f32.partialorder %v2926, 0.0
        %v3355 = vand.u32 %v2926, 2147483648
        %v3356 = vsel %vm3354, %v3355, %v3353
        %v3358 = vrot.slane %v3356, 2
        %v3360 = vmul.f32 %v2911, %v3358
        %v3362 = vrot.slane %v3343, 1
        %v3364 = vadd.f32 %v3360, %v3362
        %v3365 = vmul.f32 %v3364, %v2929
        %v3366 = vadd.f32 %v3349, %v3365
        %v3367 = vsub.f32 0.04, %v2926
        %v3368 = vmul.f32 %v3367, 1.5
        %v3369 = vadd.f32 %v3368, %v3343
        %v3370 = vmul.f32 %v3369, 0.0625
        %v3371 = vadd.f32 %v2926, %v3370
        %v3372 = vadd.f32 %v3343, 0.3
        %v3374 = vrot.slane %v2929, 6
        %v3376 = vmul.f32 %v3372, %v3374
        %v3378 = vrot.slane %v3376, 1
        %v3380 = vadd.f32 %v3371, %v3378
        %v3381 = vmax.f32 %v3380, 0.01
        %s3382 = scalar_lea.vmem %s371, 12 [#allocation2]
        %v3383 = vld [vmem:[%s3382] sm:$0x3]
        %v3384 = vmul.f32 %v3383, 0.25
        %v3385 = vlaneseq
        %v3386 = vshrl.u32 %v3385, 7
        %v3387 = vsub.s32 0, %v3386
        %v3388 = vrot.slane %v3366, %v3387
        %v3389 = vmul.f32 %v434, %v3388
        %v3390 = vmul.f32 %v439, %v3388
        %v3391 = vmul.f32 %v444, %v3388
        %v3392 = vmul.f32 %v449, %v3388
        %v3393 = vmul.f32 %v454, %v3388
        %v3394 = vmul.f32 %v459, %v3388
        %v3395 = vmul.f32 %v464, %v3388
        %v3396 = vmul.f32 %v469, %v3388
        %v3397 = vmul.f32 %v474, %v3388
        %v3398 = vmul.f32 %v479, %v3388
        %v3399 = vmul.f32 %v484, %v3388
        %v3400 = vmul.f32 %v489, %v3388
        %v3401 = vmul.f32 %v494, %v3388
        %v3402 = vmul.f32 %v499, %v3388
        %v3403 = vmul.f32 %v504, %v3388
        %v3404 = vmul.f32 %v509, %v3388
        %v3405 = vlaneseq
        %v3406 = vshrl.u32 %v3405, 7
        %v3407 = vsub.s32 2, %v3406
        %v3408 = vrot.slane %v3381, %v3407
        %v3409 = vmul.f32 %v513, %v3408
        %v3410 = vmul.f32 %v517, %v3408
        %v3411 = vmul.f32 %v521, %v3408
        %v3412 = vmul.f32 %v525, %v3408
        %v3413 = vmul.f32 %v529, %v3408
        %v3414 = vmul.f32 %v533, %v3408
        %v3415 = vmul.f32 %v537, %v3408
        %v3416 = vmul.f32 %v541, %v3408
        %v3417 = vmul.f32 %v545, %v3408
        %v3418 = vmul.f32 %v549, %v3408
        %v3419 = vmul.f32 %v553, %v3408
        %v3420 = vmul.f32 %v557, %v3408
        %v3421 = vmul.f32 %v561, %v3408
        %v3422 = vmul.f32 %v565, %v3408
        %v3423 = vmul.f32 %v569, %v3408
        %v3424 = vmul.f32 %v573, %v3408
        %v3425 = vadd.f32 %v3389, %v3409
        %v3426 = vadd.f32 %v3390, %v3410
        %v3427 = vadd.f32 %v3391, %v3411
        %v3428 = vadd.f32 %v3392, %v3412
        %v3429 = vadd.f32 %v3393, %v3413
        %v3430 = vadd.f32 %v3394, %v3414
        %v3431 = vadd.f32 %v3395, %v3415
        %v3432 = vadd.f32 %v3396, %v3416
        %v3433 = vadd.f32 %v3397, %v3417
        %v3434 = vadd.f32 %v3398, %v3418
        %v3435 = vadd.f32 %v3399, %v3419
        %v3436 = vadd.f32 %v3400, %v3420
        %v3437 = vadd.f32 %v3401, %v3421
        %v3438 = vadd.f32 %v3402, %v3422
        %v3439 = vadd.f32 %v3403, %v3423
        %v3440 = vadd.f32 %v3404, %v3424
        %s3441 = scalar_lea.vmem %s1, 768
        %v3442 = vld [vmem:[%s3441] sm:$0xff]
        %v3443 = vld [vmem:[%s3441 + $0x8] sm:$0xff]
        %v3444 = vld [vmem:[%s3441 + $0x10] sm:$0xff]
        %v3445 = vld [vmem:[%s3441 + $0x18] sm:$0xff]
        %v3446 = vld [vmem:[%s3441 + $0x20] sm:$0xff]
        %v3447 = vld [vmem:[%s3441 + $0x28] sm:$0xff]
        %v3448 = vld [vmem:[%s3441 + $0x30] sm:$0xff]
        %v3449 = vld [vmem:[%s3441 + $0x38] sm:$0xff]
        %v3450 = vld [vmem:[%s3441 + $0x40] sm:$0xff]
        %v3451 = vld [vmem:[%s3441 + $0x48] sm:$0xff]
        %v3452 = vld [vmem:[%s3441 + $0x50] sm:$0xff]
        %v3453 = vld [vmem:[%s3441 + $0x58] sm:$0xff]
        %v3454 = vld [vmem:[%s3441 + $0x60] sm:$0xff]
        %v3455 = vld [vmem:[%s3441 + $0x68] sm:$0xff]
        %v3456 = vld [vmem:[%s3441 + $0x70] sm:$0xff]
        %v3457 = vld [vmem:[%s3441 + $0x78] sm:$0xff]
        %3459 = vset.pattern.permute.xlu0 0
        %3460 = vperm.xlu0 %3459, %v3442
        %v3461 = vpop.permute.xlu0 %3460
        %3464 = vset.pattern.permute.xlu0 0
        %3465 = vperm.xlu0 %3464, %v3443
        %v3466 = vpop.permute.xlu0 %3465
        %3469 = vset.pattern.permute.xlu0 0
        %3470 = vperm.xlu0 %3469, %v3444
        %v3471 = vpop.permute.xlu0 %3470
        %3474 = vset.pattern.permute.xlu0 0
        %3475 = vperm.xlu0 %3474, %v3445
        %v3476 = vpop.permute.xlu0 %3475
        %3479 = vset.pattern.permute.xlu0 0
        %3480 = vperm.xlu0 %3479, %v3446
        %v3481 = vpop.permute.xlu0 %3480
        %3484 = vset.pattern.permute.xlu0 0
        %3485 = vperm.xlu0 %3484, %v3447
        %v3486 = vpop.permute.xlu0 %3485
        %3489 = vset.pattern.permute.xlu0 0
        %3490 = vperm.xlu0 %3489, %v3448
        %v3491 = vpop.permute.xlu0 %3490
        %3494 = vset.pattern.permute.xlu0 0
        %3495 = vperm.xlu0 %3494, %v3449
        %v3496 = vpop.permute.xlu0 %3495
        %3499 = vset.pattern.permute.xlu0 0
        %3500 = vperm.xlu0 %3499, %v3450
        %v3501 = vpop.permute.xlu0 %3500
        %3504 = vset.pattern.permute.xlu0 0
        %3505 = vperm.xlu0 %3504, %v3451
        %v3506 = vpop.permute.xlu0 %3505
        %3509 = vset.pattern.permute.xlu0 0
        %3510 = vperm.xlu0 %3509, %v3452
        %v3511 = vpop.permute.xlu0 %3510
        %3514 = vset.pattern.permute.xlu0 0
        %3515 = vperm.xlu0 %3514, %v3453
        %v3516 = vpop.permute.xlu0 %3515
        %3519 = vset.pattern.permute.xlu0 0
        %3520 = vperm.xlu0 %3519, %v3454
        %v3521 = vpop.permute.xlu0 %3520
        %3524 = vset.pattern.permute.xlu0 0
        %3525 = vperm.xlu0 %3524, %v3455
        %v3526 = vpop.permute.xlu0 %3525
        %3529 = vset.pattern.permute.xlu0 0
        %3530 = vperm.xlu0 %3529, %v3456
        %v3531 = vpop.permute.xlu0 %3530
        %3534 = vset.pattern.permute.xlu0 0
        %3535 = vperm.xlu0 %3534, %v3457
        %v3536 = vpop.permute.xlu0 %3535
        %v3538 = vadd.f32 %v3425, %v3461
        %v3539 = vadd.f32 %v3426, %v3466
        %v3540 = vadd.f32 %v3427, %v3471
        %v3541 = vadd.f32 %v3428, %v3476
        %v3542 = vadd.f32 %v3429, %v3481
        %v3543 = vadd.f32 %v3430, %v3486
        %v3544 = vadd.f32 %v3431, %v3491
        %v3545 = vadd.f32 %v3432, %v3496
        %v3546 = vadd.f32 %v3433, %v3501
        %v3547 = vadd.f32 %v3434, %v3506
        %v3548 = vadd.f32 %v3435, %v3511
        %v3549 = vadd.f32 %v3436, %v3516
        %v3550 = vadd.f32 %v3437, %v3521
        %v3551 = vadd.f32 %v3438, %v3526
        %v3552 = vadd.f32 %v3439, %v3531
        %v3553 = vadd.f32 %v3440, %v3536
        %v3554 = vmax.f32 %v3538, 0.0
        %v3555 = vmax.f32 %v3539, 0.0
        %v3556 = vmax.f32 %v3540, 0.0
        %v3557 = vmax.f32 %v3541, 0.0
        %v3558 = vmax.f32 %v3542, 0.0
        %v3559 = vmax.f32 %v3543, 0.0
        %v3560 = vmax.f32 %v3544, 0.0
        %v3561 = vmax.f32 %v3545, 0.0
        %v3562 = vmax.f32 %v3546, 0.0
        %v3563 = vmax.f32 %v3547, 0.0
        %v3564 = vmax.f32 %v3548, 0.0
        %v3565 = vmax.f32 %v3549, 0.0
        %v3566 = vmax.f32 %v3550, 0.0
        %v3567 = vmax.f32 %v3551, 0.0
        %v3568 = vmax.f32 %v3552, 0.0
        %v3569 = vmax.f32 %v3553, 0.0
        %3570 = vmatprep.subr.mxu0 0.0
        %3571 = vmatpush1.msra.mxu0 %v3554
        %3572 = vmatprep.subr.mxu0 0.0
        %3573 = vmatpush1.msra.mxu0 %v3555
        %3574 = vmatprep.subr.mxu0 0.0
        %3575 = vmatpush1.msra.mxu0 %v3556
        %3576 = vmatprep.subr.mxu0 0.0
        %3577 = vmatpush1.msra.mxu0 %v3557
        %3578 = vmatprep.subr.mxu0 0.0
        %3579 = vmatpush1.msra.mxu0 %v3558
        %3580 = vmatprep.subr.mxu0 0.0
        %3581 = vmatpush1.msra.mxu0 %v3559
        %3582 = vmatprep.subr.mxu0 0.0
        %3583 = vmatpush1.msra.mxu0 %v3560
        %3584 = vmatprep.subr.mxu0 0.0
        %3585 = vmatpush1.msra.mxu0 %v3561
        %3586 = vmatprep.subr.mxu0 0.0
        %3587 = vmatpush1.msra.mxu0 %v3562
        %3588 = vmatprep.subr.mxu0 0.0
        %3589 = vmatpush1.msra.mxu0 %v3563
        %3590 = vmatprep.subr.mxu0 0.0
        %3591 = vmatpush1.msra.mxu0 %v3564
        %3592 = vmatprep.subr.mxu0 0.0
        %3593 = vmatpush1.msra.mxu0 %v3565
        %3594 = vmatprep.subr.mxu0 0.0
        %3595 = vmatpush1.msra.mxu0 %v3566
        %3596 = vmatprep.subr.mxu0 0.0
        %3597 = vmatpush1.msra.mxu0 %v3567
        %3598 = vmatprep.subr.mxu0 0.0
        %3599 = vmatpush1.msra.mxu0 %v3568
        %3600 = vmatprep.subr.mxu0 0.0
        %3601 = vmatpush1.msra.mxu0 %v3569
        %3602 = vmatprep.subr.mxu0 0.0
        %3603 = vmatpush1.msra.mxu0 0.0
        %3604 = vmatprep.subr.mxu0 0.0
        %3605 = vmatpush1.msra.mxu0 0.0
        %3606 = vmatprep.subr.mxu0 0.0
        %3607 = vmatpush1.msra.mxu0 0.0
        %3608 = vmatprep.subr.mxu0 0.0
        %3609 = vmatpush1.msra.mxu0 0.0
        %3610 = vmatprep.subr.mxu0 0.0
        %3611 = vmatpush1.msra.mxu0 0.0
        %3612 = vmatprep.subr.mxu0 0.0
        %3613 = vmatpush1.msra.mxu0 0.0
        %3614 = vmatprep.subr.mxu0 0.0
        %3615 = vmatpush1.msra.mxu0 0.0
        %3616 = vmatprep.subr.mxu0 0.0
        %3617 = vmatpush1.msra.mxu0 0.0
        %3618 = vmatprep.subr.mxu0 0.0
        %3619 = vmatpush1.msra.mxu0 0.0
        %3620 = vmatprep.subr.mxu0 0.0
        %3621 = vmatpush1.msra.mxu0 0.0
        %3622 = vmatprep.subr.mxu0 0.0
        %3623 = vmatpush1.msra.mxu0 0.0
        %3624 = vmatprep.subr.mxu0 0.0
        %3625 = vmatpush1.msra.mxu0 0.0
        %3626 = vmatprep.subr.mxu0 0.0
        %3627 = vmatpush1.msra.mxu0 0.0
        %3628 = vmatprep.subr.mxu0 0.0
        %3629 = vmatpush1.msra.mxu0 0.0
        %3630 = vmatprep.subr.mxu0 0.0
        %3631 = vmatpush1.msra.mxu0 0.0
        %3632 = vmatprep.subr.mxu0 0.0
        %3633 = vmatpush1.msra.mxu0 0.0
        %3634 = vmatprep.mubr.f32.mxu0 0.0
        %3635 = vmatmul.mubr.f32.gmra.mrb[0].mxu0 %v735
        %v3636 = vpop.f32.mrb[0].mxu0
        %v3637 = vadd.f32 %v770, %v3636
        %v3638 = vpop.f32.mrb[0].mxu0
        %3639 = vmatprep.mubr.f32.mxu0 0.0
        %3640 = vmatmul.mubr.f32.gmra.mrb[0].mxu0 %v736
        %v3641 = vpop.f32.mrb[0].mxu0
        %v3642 = vadd.f32 %v775, %v3641
        %v3643 = vpop.f32.mrb[0].mxu0
        %3644 = vmatprep.mubr.f32.mxu0 0.0
        %3645 = vmatmul.mubr.f32.gmra.mrb[0].mxu0 %v737
        %v3646 = vpop.f32.mrb[0].mxu0
        %v3647 = vadd.f32 %v780, %v3646
        %v3648 = vpop.f32.mrb[0].mxu0
        %3649 = vmatprep.mubr.f32.mxu0 0.0
        %3650 = vmatmul.mubr.f32.gmra.mrb[0].mxu0 %v738
        %v3651 = vpop.f32.mrb[0].mxu0
        %v3652 = vadd.f32 %v785, %v3651
        %v3653 = vpop.f32.mrb[0].mxu0
        %3654 = vmatprep.mubr.f32.mxu0 0.0
        %3655 = vmatmul.mubr.f32.gmra.mrb[0].mxu0 %v739
        %v3656 = vpop.f32.mrb[0].mxu0
        %v3657 = vadd.f32 %v790, %v3656
        %v3658 = vpop.f32.mrb[0].mxu0
        %3659 = vmatprep.mubr.f32.mxu0 0.0
        %3660 = vmatmul.mubr.f32.gmra.mrb[0].mxu0 %v740
        %v3661 = vpop.f32.mrb[0].mxu0
        %v3662 = vadd.f32 %v795, %v3661
        %v3663 = vpop.f32.mrb[0].mxu0
        %3664 = vmatprep.mubr.f32.mxu0 0.0
        %3665 = vmatmul.mubr.f32.gmra.mrb[0].mxu0 %v741
        %v3666 = vpop.f32.mrb[0].mxu0
        %v3667 = vadd.f32 %v800, %v3666
        %v3668 = vpop.f32.mrb[0].mxu0
        %3669 = vmatprep.mubr.f32.mxu0 0.0
        %3670 = vmatmul.mubr.f32.gmra.mrb[0].mxu0 %v742
        %v3671 = vpop.f32.mrb[0].mxu0
        %v3672 = vadd.f32 %v805, %v3671
        %v3673 = vpop.f32.mrb[0].mxu0
        %3674 = vmatprep.mubr.f32.mxu0 0.0
        %3675 = vmatmul.mubr.f32.gmra.mrb[0].mxu0 %v743
        %v3676 = vpop.f32.mrb[0].mxu0
        %v3677 = vadd.f32 %v810, %v3676
        %v3678 = vpop.f32.mrb[0].mxu0
        %3679 = vmatprep.mubr.f32.mxu0 0.0
        %3680 = vmatmul.mubr.f32.gmra.mrb[0].mxu0 %v744
        %v3681 = vpop.f32.mrb[0].mxu0
        %v3682 = vadd.f32 %v815, %v3681
        %v3683 = vpop.f32.mrb[0].mxu0
        %3684 = vmatprep.mubr.f32.mxu0 0.0
        %3685 = vmatmul.mubr.f32.gmra.mrb[0].mxu0 %v745
        %v3686 = vpop.f32.mrb[0].mxu0
        %v3687 = vadd.f32 %v820, %v3686
        %v3688 = vpop.f32.mrb[0].mxu0
        %3689 = vmatprep.mubr.f32.mxu0 0.0
        %3690 = vmatmul.mubr.f32.gmra.mrb[0].mxu0 %v746
        %v3691 = vpop.f32.mrb[0].mxu0
        %v3692 = vadd.f32 %v825, %v3691
        %v3693 = vpop.f32.mrb[0].mxu0
        %3694 = vmatprep.mubr.f32.mxu0 0.0
        %3695 = vmatmul.mubr.f32.gmra.mrb[0].mxu0 %v747
        %v3696 = vpop.f32.mrb[0].mxu0
        %v3697 = vadd.f32 %v830, %v3696
        %v3698 = vpop.f32.mrb[0].mxu0
        %3699 = vmatprep.mubr.f32.mxu0 0.0
        %3700 = vmatmul.mubr.f32.gmra.mrb[0].mxu0 %v748
        %v3701 = vpop.f32.mrb[0].mxu0
        %v3702 = vadd.f32 %v835, %v3701
        %v3703 = vpop.f32.mrb[0].mxu0
        %3704 = vmatprep.mubr.f32.mxu0 0.0
        %3705 = vmatmul.mubr.f32.gmra.mrb[0].mxu0 %v749
        %v3706 = vpop.f32.mrb[0].mxu0
        %v3707 = vadd.f32 %v840, %v3706
        %v3708 = vpop.f32.mrb[0].mxu0
        %3709 = vmatprep.mubr.f32.mxu0 0.0
        %3710 = vmatmul.mubr.f32.gmra.mrb[0].mxu0 %v750
        %v3711 = vpop.f32.mrb[0].mxu0
        %v3712 = vadd.f32 %v845, %v3711
        %v3713 = vpop.f32.mrb[0].mxu0
        %3714 = vdwg.mxu0
        %v3715 = vmax.f32 %v3637, 0.0
        %v3716 = vmax.f32 %v3642, 0.0
        %v3717 = vmax.f32 %v3647, 0.0
        %v3718 = vmax.f32 %v3652, 0.0
        %v3719 = vmax.f32 %v3657, 0.0
        %v3720 = vmax.f32 %v3662, 0.0
        %v3721 = vmax.f32 %v3667, 0.0
        %v3722 = vmax.f32 %v3672, 0.0
        %v3723 = vmax.f32 %v3677, 0.0
        %v3724 = vmax.f32 %v3682, 0.0
        %v3725 = vmax.f32 %v3687, 0.0
        %v3726 = vmax.f32 %v3692, 0.0
        %v3727 = vmax.f32 %v3697, 0.0
        %v3728 = vmax.f32 %v3702, 0.0
        %v3729 = vmax.f32 %v3707, 0.0
        %v3730 = vmax.f32 %v3712, 0.0
        %3731 = vmatprep.subr.mxu0 0.0
        %3732 = vmatpush1.msra.mxu0 %v3715
        %3733 = vmatprep.subr.mxu0 0.0
        %3734 = vmatpush1.msra.mxu0 %v3716
        %3735 = vmatprep.subr.mxu0 0.0
        %3736 = vmatpush1.msra.mxu0 %v3717
        %3737 = vmatprep.subr.mxu0 0.0
        %3738 = vmatpush1.msra.mxu0 %v3718
        %3739 = vmatprep.subr.mxu0 0.0
        %3740 = vmatpush1.msra.mxu0 %v3719
        %3741 = vmatprep.subr.mxu0 0.0
        %3742 = vmatpush1.msra.mxu0 %v3720
        %3743 = vmatprep.subr.mxu0 0.0
        %3744 = vmatpush1.msra.mxu0 %v3721
        %3745 = vmatprep.subr.mxu0 0.0
        %3746 = vmatpush1.msra.mxu0 %v3722
        %3747 = vmatprep.subr.mxu0 0.0
        %3748 = vmatpush1.msra.mxu0 %v3723
        %3749 = vmatprep.subr.mxu0 0.0
        %3750 = vmatpush1.msra.mxu0 %v3724
        %3751 = vmatprep.subr.mxu0 0.0
        %3752 = vmatpush1.msra.mxu0 %v3725
        %3753 = vmatprep.subr.mxu0 0.0
        %3754 = vmatpush1.msra.mxu0 %v3726
        %3755 = vmatprep.subr.mxu0 0.0
        %3756 = vmatpush1.msra.mxu0 %v3727
        %3757 = vmatprep.subr.mxu0 0.0
        %3758 = vmatpush1.msra.mxu0 %v3728
        %3759 = vmatprep.subr.mxu0 0.0
        %3760 = vmatpush1.msra.mxu0 %v3729
        %3761 = vmatprep.subr.mxu0 0.0
        %3762 = vmatpush1.msra.mxu0 %v3730
        %3763 = vmatprep.subr.mxu0 0.0
        %3764 = vmatpush1.msra.mxu0 0.0
        %3765 = vmatprep.subr.mxu0 0.0
        %3766 = vmatpush1.msra.mxu0 0.0
        %3767 = vmatprep.subr.mxu0 0.0
        %3768 = vmatpush1.msra.mxu0 0.0
        %3769 = vmatprep.subr.mxu0 0.0
        %3770 = vmatpush1.msra.mxu0 0.0
        %3771 = vmatprep.subr.mxu0 0.0
        %3772 = vmatpush1.msra.mxu0 0.0
        %3773 = vmatprep.subr.mxu0 0.0
        %3774 = vmatpush1.msra.mxu0 0.0
        %3775 = vmatprep.subr.mxu0 0.0
        %3776 = vmatpush1.msra.mxu0 0.0
        %3777 = vmatprep.subr.mxu0 0.0
        %3778 = vmatpush1.msra.mxu0 0.0
        %3779 = vmatprep.subr.mxu0 0.0
        %3780 = vmatpush1.msra.mxu0 0.0
        %3781 = vmatprep.subr.mxu0 0.0
        %3782 = vmatpush1.msra.mxu0 0.0
        %3783 = vmatprep.subr.mxu0 0.0
        %3784 = vmatpush1.msra.mxu0 0.0
        %3785 = vmatprep.subr.mxu0 0.0
        %3786 = vmatpush1.msra.mxu0 0.0
        %3787 = vmatprep.subr.mxu0 0.0
        %3788 = vmatpush1.msra.mxu0 0.0
        %3789 = vmatprep.subr.mxu0 0.0
        %3790 = vmatpush1.msra.mxu0 0.0
        %3791 = vmatprep.subr.mxu0 0.0
        %3792 = vmatpush1.msra.mxu0 0.0
        %3793 = vmatprep.subr.mxu0 0.0
        %3794 = vmatpush1.msra.mxu0 0.0
        %3795 = vmatprep.mubr.f32.mxu0 0.0
        %3796 = vmatmul.mubr.f32.gmra.mrb[0].mxu0 %v426
        %v3797 = vpop.f32.mrb[0].mxu0
        %v3798 = vadd.f32 %v1011, %v3797
        %v3799 = vpop.f32.mrb[0].mxu0
        %3800 = vdwg.mxu0
        %v3801 = vmul.f32 %v3366, 0.025
        %v3802 = vadd.f32 %v3801, %v3798
        %v3803 = vmul.f32 %v3802, 0.0625
        %v3804 = vadd.f32 %v3366, %v3803
        %v3805 = vrsqrt.pop %v3381
        %v3806 = vmul.f32 %v3381, %v3805
        %vm3807 = vcmp.eq.f32.partialorder %v3381, inf
        %v3808 = vsel %vm3807, %v3381, %v3806
        %vm3809 = vcmp.eq.f32.partialorder %v3381, 0.0
        %v3810 = vand.u32 %v3381, 2147483648
        %v3811 = vsel %vm3809, %v3810, %v3808
        %v3813 = vrot.slane %v3811, 2
        %v3815 = vmul.f32 %v3366, %v3813
        %v3817 = vrot.slane %v3798, 1
        %v3819 = vadd.f32 %v3815, %v3817
        %v3820 = vmul.f32 %v3819, %v3384
        %v3821 = vadd.f32 %v3804, %v3820
        %v3822 = vsub.f32 0.04, %v3381
        %v3823 = vmul.f32 %v3822, 1.5
        %v3824 = vadd.f32 %v3823, %v3798
        %v3825 = vmul.f32 %v3824, 0.0625
        %v3826 = vadd.f32 %v3381, %v3825
        %v3827 = vadd.f32 %v3798, 0.3
        %v3829 = vrot.slane %v3384, 6
        %v3831 = vmul.f32 %v3827, %v3829
        %v3833 = vrot.slane %v3831, 1
        %v3835 = vadd.f32 %v3826, %v3833
        %v3836 = vmax.f32 %v3835, 0.01
        %s3837 = scalar_lea.vmem %s371, 14 [#allocation2]
        %v3838 = vld [vmem:[%s3837] sm:$0x3]
        %v3839 = vmul.f32 %v3838, 0.25
        %v3840 = vlaneseq
        %v3841 = vshrl.u32 %v3840, 7
        %v3842 = vsub.s32 0, %v3841
        %v3843 = vrot.slane %v3821, %v3842
        %v3844 = vmul.f32 %v434, %v3843
        %v3845 = vmul.f32 %v439, %v3843
        %v3846 = vmul.f32 %v444, %v3843
        %v3847 = vmul.f32 %v449, %v3843
        %v3848 = vmul.f32 %v454, %v3843
        %v3849 = vmul.f32 %v459, %v3843
        %v3850 = vmul.f32 %v464, %v3843
        %v3851 = vmul.f32 %v469, %v3843
        %v3852 = vmul.f32 %v474, %v3843
        %v3853 = vmul.f32 %v479, %v3843
        %v3854 = vmul.f32 %v484, %v3843
        %v3855 = vmul.f32 %v489, %v3843
        %v3856 = vmul.f32 %v494, %v3843
        %v3857 = vmul.f32 %v499, %v3843
        %v3858 = vmul.f32 %v504, %v3843
        %v3859 = vmul.f32 %v509, %v3843
        %v3860 = vlaneseq
        %v3861 = vshrl.u32 %v3860, 7
        %v3862 = vsub.s32 2, %v3861
        %v3863 = vrot.slane %v3836, %v3862
        %v3864 = vmul.f32 %v513, %v3863
        %v3865 = vmul.f32 %v517, %v3863
        %v3866 = vmul.f32 %v521, %v3863
        %v3867 = vmul.f32 %v525, %v3863
        %v3868 = vmul.f32 %v529, %v3863
        %v3869 = vmul.f32 %v533, %v3863
        %v3870 = vmul.f32 %v537, %v3863
        %v3871 = vmul.f32 %v541, %v3863
        %v3872 = vmul.f32 %v545, %v3863
        %v3873 = vmul.f32 %v549, %v3863
        %v3874 = vmul.f32 %v553, %v3863
        %v3875 = vmul.f32 %v557, %v3863
        %v3876 = vmul.f32 %v561, %v3863
        %v3877 = vmul.f32 %v565, %v3863
        %v3878 = vmul.f32 %v569, %v3863
        %v3879 = vmul.f32 %v573, %v3863
        %v3880 = vadd.f32 %v3844, %v3864
        %v3881 = vadd.f32 %v3845, %v3865
        %v3882 = vadd.f32 %v3846, %v3866
        %v3883 = vadd.f32 %v3847, %v3867
        %v3884 = vadd.f32 %v3848, %v3868
        %v3885 = vadd.f32 %v3849, %v3869
        %v3886 = vadd.f32 %v3850, %v3870
        %v3887 = vadd.f32 %v3851, %v3871
        %v3888 = vadd.f32 %v3852, %v3872
        %v3889 = vadd.f32 %v3853, %v3873
        %v3890 = vadd.f32 %v3854, %v3874
        %v3891 = vadd.f32 %v3855, %v3875
        %v3892 = vadd.f32 %v3856, %v3876
        %v3893 = vadd.f32 %v3857, %v3877
        %v3894 = vadd.f32 %v3858, %v3878
        %v3895 = vadd.f32 %v3859, %v3879
        %s3896 = scalar_lea.vmem %s1, 896
        %v3897 = vld [vmem:[%s3896] sm:$0xff]
        %v3898 = vld [vmem:[%s3896 + $0x8] sm:$0xff]
        %v3899 = vld [vmem:[%s3896 + $0x10] sm:$0xff]
        %v3900 = vld [vmem:[%s3896 + $0x18] sm:$0xff]
        %v3901 = vld [vmem:[%s3896 + $0x20] sm:$0xff]
        %v3902 = vld [vmem:[%s3896 + $0x28] sm:$0xff]
        %v3903 = vld [vmem:[%s3896 + $0x30] sm:$0xff]
        %v3904 = vld [vmem:[%s3896 + $0x38] sm:$0xff]
        %v3905 = vld [vmem:[%s3896 + $0x40] sm:$0xff]
        %v3906 = vld [vmem:[%s3896 + $0x48] sm:$0xff]
        %v3907 = vld [vmem:[%s3896 + $0x50] sm:$0xff]
        %v3908 = vld [vmem:[%s3896 + $0x58] sm:$0xff]
        %v3909 = vld [vmem:[%s3896 + $0x60] sm:$0xff]
        %v3910 = vld [vmem:[%s3896 + $0x68] sm:$0xff]
        %v3911 = vld [vmem:[%s3896 + $0x70] sm:$0xff]
        %v3912 = vld [vmem:[%s3896 + $0x78] sm:$0xff]
        %3914 = vset.pattern.permute.xlu0 0
        %3915 = vperm.xlu0 %3914, %v3897
        %v3916 = vpop.permute.xlu0 %3915
        %3919 = vset.pattern.permute.xlu0 0
        %3920 = vperm.xlu0 %3919, %v3898
        %v3921 = vpop.permute.xlu0 %3920
        %3924 = vset.pattern.permute.xlu0 0
        %3925 = vperm.xlu0 %3924, %v3899
        %v3926 = vpop.permute.xlu0 %3925
        %3929 = vset.pattern.permute.xlu0 0
        %3930 = vperm.xlu0 %3929, %v3900
        %v3931 = vpop.permute.xlu0 %3930
        %3934 = vset.pattern.permute.xlu0 0
        %3935 = vperm.xlu0 %3934, %v3901
        %v3936 = vpop.permute.xlu0 %3935
        %3939 = vset.pattern.permute.xlu0 0
        %3940 = vperm.xlu0 %3939, %v3902
        %v3941 = vpop.permute.xlu0 %3940
        %3944 = vset.pattern.permute.xlu0 0
        %3945 = vperm.xlu0 %3944, %v3903
        %v3946 = vpop.permute.xlu0 %3945
        %3949 = vset.pattern.permute.xlu0 0
        %3950 = vperm.xlu0 %3949, %v3904
        %v3951 = vpop.permute.xlu0 %3950
        %3954 = vset.pattern.permute.xlu0 0
        %3955 = vperm.xlu0 %3954, %v3905
        %v3956 = vpop.permute.xlu0 %3955
        %3959 = vset.pattern.permute.xlu0 0
        %3960 = vperm.xlu0 %3959, %v3906
        %v3961 = vpop.permute.xlu0 %3960
        %3964 = vset.pattern.permute.xlu0 0
        %3965 = vperm.xlu0 %3964, %v3907
        %v3966 = vpop.permute.xlu0 %3965
        %3969 = vset.pattern.permute.xlu0 0
        %3970 = vperm.xlu0 %3969, %v3908
        %v3971 = vpop.permute.xlu0 %3970
        %3974 = vset.pattern.permute.xlu0 0
        %3975 = vperm.xlu0 %3974, %v3909
        %v3976 = vpop.permute.xlu0 %3975
        %3979 = vset.pattern.permute.xlu0 0
        %3980 = vperm.xlu0 %3979, %v3910
        %v3981 = vpop.permute.xlu0 %3980
        %3984 = vset.pattern.permute.xlu0 0
        %3985 = vperm.xlu0 %3984, %v3911
        %v3986 = vpop.permute.xlu0 %3985
        %3989 = vset.pattern.permute.xlu0 0
        %3990 = vperm.xlu0 %3989, %v3912
        %v3991 = vpop.permute.xlu0 %3990
        %v3993 = vadd.f32 %v3880, %v3916
        %v3994 = vadd.f32 %v3881, %v3921
        %v3995 = vadd.f32 %v3882, %v3926
        %v3996 = vadd.f32 %v3883, %v3931
        %v3997 = vadd.f32 %v3884, %v3936
        %v3998 = vadd.f32 %v3885, %v3941
        %v3999 = vadd.f32 %v3886, %v3946
        %v4000 = vadd.f32 %v3887, %v3951
        %v4001 = vadd.f32 %v3888, %v3956
        %v4002 = vadd.f32 %v3889, %v3961
        %v4003 = vadd.f32 %v3890, %v3966
        %v4004 = vadd.f32 %v3891, %v3971
        %v4005 = vadd.f32 %v3892, %v3976
        %v4006 = vadd.f32 %v3893, %v3981
        %v4007 = vadd.f32 %v3894, %v3986
        %v4008 = vadd.f32 %v3895, %v3991
        %v4009 = vmax.f32 %v3993, 0.0
        %v4010 = vmax.f32 %v3994, 0.0
        %v4011 = vmax.f32 %v3995, 0.0
        %v4012 = vmax.f32 %v3996, 0.0
        %v4013 = vmax.f32 %v3997, 0.0
        %v4014 = vmax.f32 %v3998, 0.0
        %v4015 = vmax.f32 %v3999, 0.0
        %v4016 = vmax.f32 %v4000, 0.0
        %v4017 = vmax.f32 %v4001, 0.0
        %v4018 = vmax.f32 %v4002, 0.0
        %v4019 = vmax.f32 %v4003, 0.0
        %v4020 = vmax.f32 %v4004, 0.0
        %v4021 = vmax.f32 %v4005, 0.0
        %v4022 = vmax.f32 %v4006, 0.0
        %v4023 = vmax.f32 %v4007, 0.0
        %v4024 = vmax.f32 %v4008, 0.0
        %4025 = vmatprep.subr.mxu0 0.0
        %4026 = vmatpush1.msra.mxu0 %v4009
        %4027 = vmatprep.subr.mxu0 0.0
        %4028 = vmatpush1.msra.mxu0 %v4010
        %4029 = vmatprep.subr.mxu0 0.0
        %4030 = vmatpush1.msra.mxu0 %v4011
        %4031 = vmatprep.subr.mxu0 0.0
        %4032 = vmatpush1.msra.mxu0 %v4012
        %4033 = vmatprep.subr.mxu0 0.0
        %4034 = vmatpush1.msra.mxu0 %v4013
        %4035 = vmatprep.subr.mxu0 0.0
        %4036 = vmatpush1.msra.mxu0 %v4014
        %4037 = vmatprep.subr.mxu0 0.0
        %4038 = vmatpush1.msra.mxu0 %v4015
        %4039 = vmatprep.subr.mxu0 0.0
        %4040 = vmatpush1.msra.mxu0 %v4016
        %4041 = vmatprep.subr.mxu0 0.0
        %4042 = vmatpush1.msra.mxu0 %v4017
        %4043 = vmatprep.subr.mxu0 0.0
        %4044 = vmatpush1.msra.mxu0 %v4018
        %4045 = vmatprep.subr.mxu0 0.0
        %4046 = vmatpush1.msra.mxu0 %v4019
        %4047 = vmatprep.subr.mxu0 0.0
        %4048 = vmatpush1.msra.mxu0 %v4020
        %4049 = vmatprep.subr.mxu0 0.0
        %4050 = vmatpush1.msra.mxu0 %v4021
        %4051 = vmatprep.subr.mxu0 0.0
        %4052 = vmatpush1.msra.mxu0 %v4022
        %4053 = vmatprep.subr.mxu0 0.0
        %4054 = vmatpush1.msra.mxu0 %v4023
        %4055 = vmatprep.subr.mxu0 0.0
        %4056 = vmatpush1.msra.mxu0 %v4024
        %4057 = vmatprep.subr.mxu0 0.0
        %4058 = vmatpush1.msra.mxu0 0.0
        %4059 = vmatprep.subr.mxu0 0.0
        %4060 = vmatpush1.msra.mxu0 0.0
        %4061 = vmatprep.subr.mxu0 0.0
        %4062 = vmatpush1.msra.mxu0 0.0
        %4063 = vmatprep.subr.mxu0 0.0
        %4064 = vmatpush1.msra.mxu0 0.0
        %4065 = vmatprep.subr.mxu0 0.0
        %4066 = vmatpush1.msra.mxu0 0.0
        %4067 = vmatprep.subr.mxu0 0.0
        %4068 = vmatpush1.msra.mxu0 0.0
        %4069 = vmatprep.subr.mxu0 0.0
        %4070 = vmatpush1.msra.mxu0 0.0
        %4071 = vmatprep.subr.mxu0 0.0
        %4072 = vmatpush1.msra.mxu0 0.0
        %4073 = vmatprep.subr.mxu0 0.0
        %4074 = vmatpush1.msra.mxu0 0.0
        %4075 = vmatprep.subr.mxu0 0.0
        %4076 = vmatpush1.msra.mxu0 0.0
        %4077 = vmatprep.subr.mxu0 0.0
        %4078 = vmatpush1.msra.mxu0 0.0
        %4079 = vmatprep.subr.mxu0 0.0
        %4080 = vmatpush1.msra.mxu0 0.0
        %4081 = vmatprep.subr.mxu0 0.0
        %4082 = vmatpush1.msra.mxu0 0.0
        %4083 = vmatprep.subr.mxu0 0.0
        %4084 = vmatpush1.msra.mxu0 0.0
        %4085 = vmatprep.subr.mxu0 0.0
        %4086 = vmatpush1.msra.mxu0 0.0
        %4087 = vmatprep.subr.mxu0 0.0
        %4088 = vmatpush1.msra.mxu0 0.0
        %4089 = vmatprep.mubr.f32.mxu0 0.0
        %4090 = vmatmul.mubr.f32.gmra.mrb[0].mxu0 %v735
        %v4091 = vpop.f32.mrb[0].mxu0
        %v4092 = vadd.f32 %v770, %v4091
        %v4093 = vpop.f32.mrb[0].mxu0
        %4094 = vmatprep.mubr.f32.mxu0 0.0
        %4095 = vmatmul.mubr.f32.gmra.mrb[0].mxu0 %v736
        %v4096 = vpop.f32.mrb[0].mxu0
        %v4097 = vadd.f32 %v775, %v4096
        %v4098 = vpop.f32.mrb[0].mxu0
        %4099 = vmatprep.mubr.f32.mxu0 0.0
        %4100 = vmatmul.mubr.f32.gmra.mrb[0].mxu0 %v737
        %v4101 = vpop.f32.mrb[0].mxu0
        %v4102 = vadd.f32 %v780, %v4101
        %v4103 = vpop.f32.mrb[0].mxu0
        %4104 = vmatprep.mubr.f32.mxu0 0.0
        %4105 = vmatmul.mubr.f32.gmra.mrb[0].mxu0 %v738
        %v4106 = vpop.f32.mrb[0].mxu0
        %v4107 = vadd.f32 %v785, %v4106
        %v4108 = vpop.f32.mrb[0].mxu0
        %4109 = vmatprep.mubr.f32.mxu0 0.0
        %4110 = vmatmul.mubr.f32.gmra.mrb[0].mxu0 %v739
        %v4111 = vpop.f32.mrb[0].mxu0
        %v4112 = vadd.f32 %v790, %v4111
        %v4113 = vpop.f32.mrb[0].mxu0
        %4114 = vmatprep.mubr.f32.mxu0 0.0
        %4115 = vmatmul.mubr.f32.gmra.mrb[0].mxu0 %v740
        %v4116 = vpop.f32.mrb[0].mxu0
        %v4117 = vadd.f32 %v795, %v4116
        %v4118 = vpop.f32.mrb[0].mxu0
        %4119 = vmatprep.mubr.f32.mxu0 0.0
        %4120 = vmatmul.mubr.f32.gmra.mrb[0].mxu0 %v741
        %v4121 = vpop.f32.mrb[0].mxu0
        %v4122 = vadd.f32 %v800, %v4121
        %v4123 = vpop.f32.mrb[0].mxu0
        %4124 = vmatprep.mubr.f32.mxu0 0.0
        %4125 = vmatmul.mubr.f32.gmra.mrb[0].mxu0 %v742
        %v4126 = vpop.f32.mrb[0].mxu0
        %v4127 = vadd.f32 %v805, %v4126
        %v4128 = vpop.f32.mrb[0].mxu0
        %4129 = vmatprep.mubr.f32.mxu0 0.0
        %4130 = vmatmul.mubr.f32.gmra.mrb[0].mxu0 %v743
        %v4131 = vpop.f32.mrb[0].mxu0
        %v4132 = vadd.f32 %v810, %v4131
        %v4133 = vpop.f32.mrb[0].mxu0
        %4134 = vmatprep.mubr.f32.mxu0 0.0
        %4135 = vmatmul.mubr.f32.gmra.mrb[0].mxu0 %v744
        %v4136 = vpop.f32.mrb[0].mxu0
        %v4137 = vadd.f32 %v815, %v4136
        %v4138 = vpop.f32.mrb[0].mxu0
        %4139 = vmatprep.mubr.f32.mxu0 0.0
        %4140 = vmatmul.mubr.f32.gmra.mrb[0].mxu0 %v745
        %v4141 = vpop.f32.mrb[0].mxu0
        %v4142 = vadd.f32 %v820, %v4141
        %v4143 = vpop.f32.mrb[0].mxu0
        %4144 = vmatprep.mubr.f32.mxu0 0.0
        %4145 = vmatmul.mubr.f32.gmra.mrb[0].mxu0 %v746
        %v4146 = vpop.f32.mrb[0].mxu0
        %v4147 = vadd.f32 %v825, %v4146
        %v4148 = vpop.f32.mrb[0].mxu0
        %4149 = vmatprep.mubr.f32.mxu0 0.0
        %4150 = vmatmul.mubr.f32.gmra.mrb[0].mxu0 %v747
        %v4151 = vpop.f32.mrb[0].mxu0
        %v4152 = vadd.f32 %v830, %v4151
        %v4153 = vpop.f32.mrb[0].mxu0
        %4154 = vmatprep.mubr.f32.mxu0 0.0
        %4155 = vmatmul.mubr.f32.gmra.mrb[0].mxu0 %v748
        %v4156 = vpop.f32.mrb[0].mxu0
        %v4157 = vadd.f32 %v835, %v4156
        %v4158 = vpop.f32.mrb[0].mxu0
        %4159 = vmatprep.mubr.f32.mxu0 0.0
        %4160 = vmatmul.mubr.f32.gmra.mrb[0].mxu0 %v749
        %v4161 = vpop.f32.mrb[0].mxu0
        %v4162 = vadd.f32 %v840, %v4161
        %v4163 = vpop.f32.mrb[0].mxu0
        %4164 = vmatprep.mubr.f32.mxu0 0.0
        %4165 = vmatmul.mubr.f32.gmra.mrb[0].mxu0 %v750
        %v4166 = vpop.f32.mrb[0].mxu0
        %v4167 = vadd.f32 %v845, %v4166
        %v4168 = vpop.f32.mrb[0].mxu0
        %4169 = vdwg.mxu0
        %v4170 = vmax.f32 %v4092, 0.0
        %v4171 = vmax.f32 %v4097, 0.0
        %v4172 = vmax.f32 %v4102, 0.0
        %v4173 = vmax.f32 %v4107, 0.0
        %v4174 = vmax.f32 %v4112, 0.0
        %v4175 = vmax.f32 %v4117, 0.0
        %v4176 = vmax.f32 %v4122, 0.0
        %v4177 = vmax.f32 %v4127, 0.0
        %v4178 = vmax.f32 %v4132, 0.0
        %v4179 = vmax.f32 %v4137, 0.0
        %v4180 = vmax.f32 %v4142, 0.0
        %v4181 = vmax.f32 %v4147, 0.0
        %v4182 = vmax.f32 %v4152, 0.0
        %v4183 = vmax.f32 %v4157, 0.0
        %v4184 = vmax.f32 %v4162, 0.0
        %v4185 = vmax.f32 %v4167, 0.0
        %4186 = vmatprep.subr.mxu0 0.0
        %4187 = vmatpush1.msra.mxu0 %v4170
        %4188 = vmatprep.subr.mxu0 0.0
        %4189 = vmatpush1.msra.mxu0 %v4171
        %4190 = vmatprep.subr.mxu0 0.0
        %4191 = vmatpush1.msra.mxu0 %v4172
        %4192 = vmatprep.subr.mxu0 0.0
        %4193 = vmatpush1.msra.mxu0 %v4173
        %4194 = vmatprep.subr.mxu0 0.0
        %4195 = vmatpush1.msra.mxu0 %v4174
        %4196 = vmatprep.subr.mxu0 0.0
        %4197 = vmatpush1.msra.mxu0 %v4175
        %4198 = vmatprep.subr.mxu0 0.0
        %4199 = vmatpush1.msra.mxu0 %v4176
        %4200 = vmatprep.subr.mxu0 0.0
        %4201 = vmatpush1.msra.mxu0 %v4177
        %4202 = vmatprep.subr.mxu0 0.0
        %4203 = vmatpush1.msra.mxu0 %v4178
        %4204 = vmatprep.subr.mxu0 0.0
        %4205 = vmatpush1.msra.mxu0 %v4179
        %4206 = vmatprep.subr.mxu0 0.0
        %4207 = vmatpush1.msra.mxu0 %v4180
        %4208 = vmatprep.subr.mxu0 0.0
        %4209 = vmatpush1.msra.mxu0 %v4181
        %4210 = vmatprep.subr.mxu0 0.0
        %4211 = vmatpush1.msra.mxu0 %v4182
        %4212 = vmatprep.subr.mxu0 0.0
        %4213 = vmatpush1.msra.mxu0 %v4183
        %4214 = vmatprep.subr.mxu0 0.0
        %4215 = vmatpush1.msra.mxu0 %v4184
        %4216 = vmatprep.subr.mxu0 0.0
        %4217 = vmatpush1.msra.mxu0 %v4185
        %4218 = vmatprep.subr.mxu0 0.0
        %4219 = vmatpush1.msra.mxu0 0.0
        %4220 = vmatprep.subr.mxu0 0.0
        %4221 = vmatpush1.msra.mxu0 0.0
        %4222 = vmatprep.subr.mxu0 0.0
        %4223 = vmatpush1.msra.mxu0 0.0
        %4224 = vmatprep.subr.mxu0 0.0
        %4225 = vmatpush1.msra.mxu0 0.0
        %4226 = vmatprep.subr.mxu0 0.0
        %4227 = vmatpush1.msra.mxu0 0.0
        %4228 = vmatprep.subr.mxu0 0.0
        %4229 = vmatpush1.msra.mxu0 0.0
        %4230 = vmatprep.subr.mxu0 0.0
        %4231 = vmatpush1.msra.mxu0 0.0
        %4232 = vmatprep.subr.mxu0 0.0
        %4233 = vmatpush1.msra.mxu0 0.0
        %4234 = vmatprep.subr.mxu0 0.0
        %4235 = vmatpush1.msra.mxu0 0.0
        %4236 = vmatprep.subr.mxu0 0.0
        %4237 = vmatpush1.msra.mxu0 0.0
        %4238 = vmatprep.subr.mxu0 0.0
        %4239 = vmatpush1.msra.mxu0 0.0
        %4240 = vmatprep.subr.mxu0 0.0
        %4241 = vmatpush1.msra.mxu0 0.0
        %4242 = vmatprep.subr.mxu0 0.0
        %4243 = vmatpush1.msra.mxu0 0.0
        %4244 = vmatprep.subr.mxu0 0.0
        %4245 = vmatpush1.msra.mxu0 0.0
        %4246 = vmatprep.subr.mxu0 0.0
        %4247 = vmatpush1.msra.mxu0 0.0
        %4248 = vmatprep.subr.mxu0 0.0
        %4249 = vmatpush1.msra.mxu0 0.0
        %4250 = vmatprep.mubr.f32.mxu0 0.0
        %4251 = vmatmul.mubr.f32.gmra.mrb[0].mxu0 %v426
        %v4252 = vpop.f32.mrb[0].mxu0
        %v4253 = vadd.f32 %v1011, %v4252
        %v4254 = vpop.f32.mrb[0].mxu0
        %4255 = vdwg.mxu0
        %v4256 = vmul.f32 %v3821, 0.025
        %v4257 = vadd.f32 %v4256, %v4253
        %v4258 = vmul.f32 %v4257, 0.0625
        %v4259 = vadd.f32 %v3821, %v4258
        %v4260 = vrsqrt.pop %v3836
        %v4261 = vmul.f32 %v3836, %v4260
        %vm4262 = vcmp.eq.f32.partialorder %v3836, inf
        %v4263 = vsel %vm4262, %v3836, %v4261
        %vm4264 = vcmp.eq.f32.partialorder %v3836, 0.0
        %v4265 = vand.u32 %v3836, 2147483648
        %v4266 = vsel %vm4264, %v4265, %v4263
        %v4268 = vrot.slane %v4266, 2
        %v4270 = vmul.f32 %v3821, %v4268
        %v4272 = vrot.slane %v4253, 1
        %v4274 = vadd.f32 %v4270, %v4272
        %v4275 = vmul.f32 %v4274, %v3839
        %v4276 = vadd.f32 %v4259, %v4275
        %v4277 = vsub.f32 0.04, %v3836
        %v4278 = vmul.f32 %v4277, 1.5
        %v4279 = vadd.f32 %v4278, %v4253
        %v4280 = vmul.f32 %v4279, 0.0625
        %v4281 = vadd.f32 %v3836, %v4280
        %v4282 = vadd.f32 %v4253, 0.3
        %v4284 = vrot.slane %v3839, 6
        %v4286 = vmul.f32 %v4282, %v4284
        %v4288 = vrot.slane %v4286, 1
        %v4290 = vadd.f32 %v4281, %v4288
        %v4291 = vmax.f32 %v4290, 0.01
        %vm4292 = vcmp.ne.f32.partialorder %v4276, %v4276
        %v4293 = vlaneseq
        %v4294 = vshrl.u32 %v4293, 7
        %v4295 = vsub.s32 0, %v4294
        %v4296 = vrot.slane %v4276, %v4295
        %4298 = vset.pattern.permute.xlu0 0
        %4299 = vperm.xlu0 %4298, %v428
        %v4300 = vpop.permute.xlu0 %4299
        %v4302 = vsub.f32 %v4296, %v4300
        %v4303 = vmax.f32 %v4302, 0.0
        %v4304 = vsel %vm4292, 1, 0
        %v4305 = vlaneseq
        %v4306 = vshrl.u32 %v4305, 7
        %v4307 = vsub.s32 0, %v4306
        %v4308 = vrot.slane %v4304, %v4307
        %vm4309 = vcmp.eq.s32.totalorder %v4308, 1
        %v4310 = vsel %vm4309, 0.0, %v4303
        %v4311 = vsel %vm4292, 0.0, 1.0
        %4312 = vadd.xlane.f32.xlu0 %v4310
        %v4313 = vpop.xlane.xlu0 %4312
        %vm4314 = vcmask 7168
        %4315 = vst.msk [vmem:[%s408] sm:$0xff] %vm4314, %v4313
        %vm4316 = vcmask 1040384
        %v4317 = vsel %vm4316, %v4311, 0.0
        %4318 = vadd.xlane.f32.xlu0 %v4317
        %v4319 = vpop.xlane.xlu0 %4318
        %vm4320 = vcmask 0
        %4321 = vst.msk [vmem:[%s408 + $0x8] sm:$0x1] %vm4320, %v4319
        %s4322 = scalar_lea.vmem %s371, 16 [#allocation2]
        %v4323 = vld [vmem:[%s4322] sm:$0x3]
        %v4324 = vmul.f32 %v4323, 0.25
        %v4325 = vmul.f32 %v434, %v4296
        %v4326 = vmul.f32 %v439, %v4296
        %v4327 = vmul.f32 %v444, %v4296
        %v4328 = vmul.f32 %v449, %v4296
        %v4329 = vmul.f32 %v454, %v4296
        %v4330 = vmul.f32 %v459, %v4296
        %v4331 = vmul.f32 %v464, %v4296
        %v4332 = vmul.f32 %v469, %v4296
        %v4333 = vmul.f32 %v474, %v4296
        %v4334 = vmul.f32 %v479, %v4296
        %v4335 = vmul.f32 %v484, %v4296
        %v4336 = vmul.f32 %v489, %v4296
        %v4337 = vmul.f32 %v494, %v4296
        %v4338 = vmul.f32 %v499, %v4296
        %v4339 = vmul.f32 %v504, %v4296
        %v4340 = vmul.f32 %v509, %v4296
        %v4341 = vlaneseq
        %v4342 = vshrl.u32 %v4341, 7
        %v4343 = vsub.s32 2, %v4342
        %v4344 = vrot.slane %v4291, %v4343
        %v4345 = vmul.f32 %v513, %v4344
        %v4346 = vmul.f32 %v517, %v4344
        %v4347 = vmul.f32 %v521, %v4344
        %v4348 = vmul.f32 %v525, %v4344
        %v4349 = vmul.f32 %v529, %v4344
        %v4350 = vmul.f32 %v533, %v4344
        %v4351 = vmul.f32 %v537, %v4344
        %v4352 = vmul.f32 %v541, %v4344
        %v4353 = vmul.f32 %v545, %v4344
        %v4354 = vmul.f32 %v549, %v4344
        %v4355 = vmul.f32 %v553, %v4344
        %v4356 = vmul.f32 %v557, %v4344
        %v4357 = vmul.f32 %v561, %v4344
        %v4358 = vmul.f32 %v565, %v4344
        %v4359 = vmul.f32 %v569, %v4344
        %v4360 = vmul.f32 %v573, %v4344
        %v4361 = vadd.f32 %v4325, %v4345
        %v4362 = vadd.f32 %v4326, %v4346
        %v4363 = vadd.f32 %v4327, %v4347
        %v4364 = vadd.f32 %v4328, %v4348
        %v4365 = vadd.f32 %v4329, %v4349
        %v4366 = vadd.f32 %v4330, %v4350
        %v4367 = vadd.f32 %v4331, %v4351
        %v4368 = vadd.f32 %v4332, %v4352
        %v4369 = vadd.f32 %v4333, %v4353
        %v4370 = vadd.f32 %v4334, %v4354
        %v4371 = vadd.f32 %v4335, %v4355
        %v4372 = vadd.f32 %v4336, %v4356
        %v4373 = vadd.f32 %v4337, %v4357
        %v4374 = vadd.f32 %v4338, %v4358
        %v4375 = vadd.f32 %v4339, %v4359
        %v4376 = vadd.f32 %v4340, %v4360
        %s4377 = scalar_lea.vmem %s1, 1024
        %v4378 = vld [vmem:[%s4377] sm:$0xff]
        %v4379 = vld [vmem:[%s4377 + $0x8] sm:$0xff]
        %v4380 = vld [vmem:[%s4377 + $0x10] sm:$0xff]
        %v4381 = vld [vmem:[%s4377 + $0x18] sm:$0xff]
        %v4382 = vld [vmem:[%s4377 + $0x20] sm:$0xff]
        %v4383 = vld [vmem:[%s4377 + $0x28] sm:$0xff]
        %v4384 = vld [vmem:[%s4377 + $0x30] sm:$0xff]
        %v4385 = vld [vmem:[%s4377 + $0x38] sm:$0xff]
        %v4386 = vld [vmem:[%s4377 + $0x40] sm:$0xff]
        %v4387 = vld [vmem:[%s4377 + $0x48] sm:$0xff]
        %v4388 = vld [vmem:[%s4377 + $0x50] sm:$0xff]
        %v4389 = vld [vmem:[%s4377 + $0x58] sm:$0xff]
        %v4390 = vld [vmem:[%s4377 + $0x60] sm:$0xff]
        %v4391 = vld [vmem:[%s4377 + $0x68] sm:$0xff]
        %v4392 = vld [vmem:[%s4377 + $0x70] sm:$0xff]
        %v4393 = vld [vmem:[%s4377 + $0x78] sm:$0xff]
        %4395 = vset.pattern.permute.xlu0 0
        %4396 = vperm.xlu0 %4395, %v4378
        %v4397 = vpop.permute.xlu0 %4396
        %4400 = vset.pattern.permute.xlu0 0
        %4401 = vperm.xlu0 %4400, %v4379
        %v4402 = vpop.permute.xlu0 %4401
        %4405 = vset.pattern.permute.xlu0 0
        %4406 = vperm.xlu0 %4405, %v4380
        %v4407 = vpop.permute.xlu0 %4406
        %4410 = vset.pattern.permute.xlu0 0
        %4411 = vperm.xlu0 %4410, %v4381
        %v4412 = vpop.permute.xlu0 %4411
        %4415 = vset.pattern.permute.xlu0 0
        %4416 = vperm.xlu0 %4415, %v4382
        %v4417 = vpop.permute.xlu0 %4416
        %4420 = vset.pattern.permute.xlu0 0
        %4421 = vperm.xlu0 %4420, %v4383
        %v4422 = vpop.permute.xlu0 %4421
        %4425 = vset.pattern.permute.xlu0 0
        %4426 = vperm.xlu0 %4425, %v4384
        %v4427 = vpop.permute.xlu0 %4426
        %4430 = vset.pattern.permute.xlu0 0
        %4431 = vperm.xlu0 %4430, %v4385
        %v4432 = vpop.permute.xlu0 %4431
        %4435 = vset.pattern.permute.xlu0 0
        %4436 = vperm.xlu0 %4435, %v4386
        %v4437 = vpop.permute.xlu0 %4436
        %4440 = vset.pattern.permute.xlu0 0
        %4441 = vperm.xlu0 %4440, %v4387
        %v4442 = vpop.permute.xlu0 %4441
        %4445 = vset.pattern.permute.xlu0 0
        %4446 = vperm.xlu0 %4445, %v4388
        %v4447 = vpop.permute.xlu0 %4446
        %4450 = vset.pattern.permute.xlu0 0
        %4451 = vperm.xlu0 %4450, %v4389
        %v4452 = vpop.permute.xlu0 %4451
        %4455 = vset.pattern.permute.xlu0 0
        %4456 = vperm.xlu0 %4455, %v4390
        %v4457 = vpop.permute.xlu0 %4456
        %4460 = vset.pattern.permute.xlu0 0
        %4461 = vperm.xlu0 %4460, %v4391
        %v4462 = vpop.permute.xlu0 %4461
        %4465 = vset.pattern.permute.xlu0 0
        %4466 = vperm.xlu0 %4465, %v4392
        %v4467 = vpop.permute.xlu0 %4466
        %4470 = vset.pattern.permute.xlu0 0
        %4471 = vperm.xlu0 %4470, %v4393
        %v4472 = vpop.permute.xlu0 %4471
        %v4474 = vadd.f32 %v4361, %v4397
        %v4475 = vadd.f32 %v4362, %v4402
        %v4476 = vadd.f32 %v4363, %v4407
        %v4477 = vadd.f32 %v4364, %v4412
        %v4478 = vadd.f32 %v4365, %v4417
        %v4479 = vadd.f32 %v4366, %v4422
        %v4480 = vadd.f32 %v4367, %v4427
        %v4481 = vadd.f32 %v4368, %v4432
        %v4482 = vadd.f32 %v4369, %v4437
        %v4483 = vadd.f32 %v4370, %v4442
        %v4484 = vadd.f32 %v4371, %v4447
        %v4485 = vadd.f32 %v4372, %v4452
        %v4486 = vadd.f32 %v4373, %v4457
        %v4487 = vadd.f32 %v4374, %v4462
        %v4488 = vadd.f32 %v4375, %v4467
        %v4489 = vadd.f32 %v4376, %v4472
        %v4490 = vmax.f32 %v4474, 0.0
        %v4491 = vmax.f32 %v4475, 0.0
        %v4492 = vmax.f32 %v4476, 0.0
        %v4493 = vmax.f32 %v4477, 0.0
        %v4494 = vmax.f32 %v4478, 0.0
        %v4495 = vmax.f32 %v4479, 0.0
        %v4496 = vmax.f32 %v4480, 0.0
        %v4497 = vmax.f32 %v4481, 0.0
        %v4498 = vmax.f32 %v4482, 0.0
        %v4499 = vmax.f32 %v4483, 0.0
        %v4500 = vmax.f32 %v4484, 0.0
        %v4501 = vmax.f32 %v4485, 0.0
        %v4502 = vmax.f32 %v4486, 0.0
        %v4503 = vmax.f32 %v4487, 0.0
        %v4504 = vmax.f32 %v4488, 0.0
        %v4505 = vmax.f32 %v4489, 0.0
        %v4506 = vld [vmem:[%s3] sm:$0xff]
        %v4507 = vld [vmem:[%s3 + $0x8] sm:$0xff]
        %v4508 = vld [vmem:[%s3 + $0x10] sm:$0xff]
        %v4509 = vld [vmem:[%s3 + $0x18] sm:$0xff]
        %v4510 = vld [vmem:[%s3 + $0x20] sm:$0xff]
        %v4511 = vld [vmem:[%s3 + $0x28] sm:$0xff]
        %v4512 = vld [vmem:[%s3 + $0x30] sm:$0xff]
        %v4513 = vld [vmem:[%s3 + $0x38] sm:$0xff]
        %v4514 = vld [vmem:[%s3 + $0x40] sm:$0xff]
        %v4515 = vld [vmem:[%s3 + $0x48] sm:$0xff]
        %v4516 = vld [vmem:[%s3 + $0x50] sm:$0xff]
        %v4517 = vld [vmem:[%s3 + $0x58] sm:$0xff]
        %v4518 = vld [vmem:[%s3 + $0x60] sm:$0xff]
        %v4519 = vld [vmem:[%s3 + $0x68] sm:$0xff]
        %v4520 = vld [vmem:[%s3 + $0x70] sm:$0xff]
        %v4521 = vld [vmem:[%s3 + $0x78] sm:$0xff]
        %v4522 = vld [vmem:[%s4] sm:$0xff]
        %v4523 = vld [vmem:[%s4 + $0x8] sm:$0xff]
        %v4524 = vld [vmem:[%s4 + $0x10] sm:$0xff]
        %v4525 = vld [vmem:[%s4 + $0x18] sm:$0xff]
        %v4526 = vld [vmem:[%s4 + $0x20] sm:$0xff]
        %v4527 = vld [vmem:[%s4 + $0x28] sm:$0xff]
        %v4528 = vld [vmem:[%s4 + $0x30] sm:$0xff]
        %v4529 = vld [vmem:[%s4 + $0x38] sm:$0xff]
        %v4530 = vld [vmem:[%s4 + $0x40] sm:$0xff]
        %v4531 = vld [vmem:[%s4 + $0x48] sm:$0xff]
        %v4532 = vld [vmem:[%s4 + $0x50] sm:$0xff]
        %v4533 = vld [vmem:[%s4 + $0x58] sm:$0xff]
        %v4534 = vld [vmem:[%s4 + $0x60] sm:$0xff]
        %v4535 = vld [vmem:[%s4 + $0x68] sm:$0xff]
        %v4536 = vld [vmem:[%s4 + $0x70] sm:$0xff]
        %v4537 = vld [vmem:[%s4 + $0x78] sm:$0xff]
        %4539 = vset.pattern.permute.xlu0 0
        %4540 = vperm.xlu0 %4539, %v4522
        %v4541 = vpop.permute.xlu0 %4540
        %4544 = vset.pattern.permute.xlu0 0
        %4545 = vperm.xlu0 %4544, %v4523
        %v4546 = vpop.permute.xlu0 %4545
        %4549 = vset.pattern.permute.xlu0 0
        %4550 = vperm.xlu0 %4549, %v4524
        %v4551 = vpop.permute.xlu0 %4550
        %4554 = vset.pattern.permute.xlu0 0
        %4555 = vperm.xlu0 %4554, %v4525
        %v4556 = vpop.permute.xlu0 %4555
        %4559 = vset.pattern.permute.xlu0 0
        %4560 = vperm.xlu0 %4559, %v4526
        %v4561 = vpop.permute.xlu0 %4560
        %4564 = vset.pattern.permute.xlu0 0
        %4565 = vperm.xlu0 %4564, %v4527
        %v4566 = vpop.permute.xlu0 %4565
        %4569 = vset.pattern.permute.xlu0 0
        %4570 = vperm.xlu0 %4569, %v4528
        %v4571 = vpop.permute.xlu0 %4570
        %4574 = vset.pattern.permute.xlu0 0
        %4575 = vperm.xlu0 %4574, %v4529
        %v4576 = vpop.permute.xlu0 %4575
        %4579 = vset.pattern.permute.xlu0 0
        %4580 = vperm.xlu0 %4579, %v4530
        %v4581 = vpop.permute.xlu0 %4580
        %4584 = vset.pattern.permute.xlu0 0
        %4585 = vperm.xlu0 %4584, %v4531
        %v4586 = vpop.permute.xlu0 %4585
        %4589 = vset.pattern.permute.xlu0 0
        %4590 = vperm.xlu0 %4589, %v4532
        %v4591 = vpop.permute.xlu0 %4590
        %4594 = vset.pattern.permute.xlu0 0
        %4595 = vperm.xlu0 %4594, %v4533
        %v4596 = vpop.permute.xlu0 %4595
        %4599 = vset.pattern.permute.xlu0 0
        %4600 = vperm.xlu0 %4599, %v4534
        %v4601 = vpop.permute.xlu0 %4600
        %4604 = vset.pattern.permute.xlu0 0
        %4605 = vperm.xlu0 %4604, %v4535
        %v4606 = vpop.permute.xlu0 %4605
        %4609 = vset.pattern.permute.xlu0 0
        %4610 = vperm.xlu0 %4609, %v4536
        %v4611 = vpop.permute.xlu0 %4610
        %4614 = vset.pattern.permute.xlu0 0
        %4615 = vperm.xlu0 %4614, %v4537
        %v4616 = vpop.permute.xlu0 %4615
        %4618 = vmatprep.subr.mxu0 0.0
        %4619 = vmatpush1.msra.mxu0 %v4490
        %4620 = vmatprep.subr.mxu0 0.0
        %4621 = vmatpush1.msra.mxu0 %v4491
        %4622 = vmatprep.subr.mxu0 0.0
        %4623 = vmatpush1.msra.mxu0 %v4492
        %4624 = vmatprep.subr.mxu0 0.0
        %4625 = vmatpush1.msra.mxu0 %v4493
        %4626 = vmatprep.subr.mxu0 0.0
        %4627 = vmatpush1.msra.mxu0 %v4494
        %4628 = vmatprep.subr.mxu0 0.0
        %4629 = vmatpush1.msra.mxu0 %v4495
        %4630 = vmatprep.subr.mxu0 0.0
        %4631 = vmatpush1.msra.mxu0 %v4496
        %4632 = vmatprep.subr.mxu0 0.0
        %4633 = vmatpush1.msra.mxu0 %v4497
        %4634 = vmatprep.subr.mxu0 0.0
        %4635 = vmatpush1.msra.mxu0 %v4498
        %4636 = vmatprep.subr.mxu0 0.0
        %4637 = vmatpush1.msra.mxu0 %v4499
        %4638 = vmatprep.subr.mxu0 0.0
        %4639 = vmatpush1.msra.mxu0 %v4500
        %4640 = vmatprep.subr.mxu0 0.0
        %4641 = vmatpush1.msra.mxu0 %v4501
        %4642 = vmatprep.subr.mxu0 0.0
        %4643 = vmatpush1.msra.mxu0 %v4502
        %4644 = vmatprep.subr.mxu0 0.0
        %4645 = vmatpush1.msra.mxu0 %v4503
        %4646 = vmatprep.subr.mxu0 0.0
        %4647 = vmatpush1.msra.mxu0 %v4504
        %4648 = vmatprep.subr.mxu0 0.0
        %4649 = vmatpush1.msra.mxu0 %v4505
        %4650 = vmatprep.subr.mxu0 0.0
        %4651 = vmatpush1.msra.mxu0 0.0
        %4652 = vmatprep.subr.mxu0 0.0
        %4653 = vmatpush1.msra.mxu0 0.0
        %4654 = vmatprep.subr.mxu0 0.0
        %4655 = vmatpush1.msra.mxu0 0.0
        %4656 = vmatprep.subr.mxu0 0.0
        %4657 = vmatpush1.msra.mxu0 0.0
        %4658 = vmatprep.subr.mxu0 0.0
        %4659 = vmatpush1.msra.mxu0 0.0
        %4660 = vmatprep.subr.mxu0 0.0
        %4661 = vmatpush1.msra.mxu0 0.0
        %4662 = vmatprep.subr.mxu0 0.0
        %4663 = vmatpush1.msra.mxu0 0.0
        %4664 = vmatprep.subr.mxu0 0.0
        %4665 = vmatpush1.msra.mxu0 0.0
        %4666 = vmatprep.subr.mxu0 0.0
        %4667 = vmatpush1.msra.mxu0 0.0
        %4668 = vmatprep.subr.mxu0 0.0
        %4669 = vmatpush1.msra.mxu0 0.0
        %4670 = vmatprep.subr.mxu0 0.0
        %4671 = vmatpush1.msra.mxu0 0.0
        %4672 = vmatprep.subr.mxu0 0.0
        %4673 = vmatpush1.msra.mxu0 0.0
        %4674 = vmatprep.subr.mxu0 0.0
        %4675 = vmatpush1.msra.mxu0 0.0
        %4676 = vmatprep.subr.mxu0 0.0
        %4677 = vmatpush1.msra.mxu0 0.0
        %4678 = vmatprep.subr.mxu0 0.0
        %4679 = vmatpush1.msra.mxu0 0.0
        %4680 = vmatprep.subr.mxu0 0.0
        %4681 = vmatpush1.msra.mxu0 0.0
        %4682 = vmatprep.mubr.f32.mxu0 0.0
        %4683 = vmatmul.mubr.f32.gmra.mrb[0].mxu0 %v4506
        %v4684 = vpop.f32.mrb[0].mxu0
        %v4685 = vadd.f32 %v4541, %v4684
        %v4686 = vpop.f32.mrb[0].mxu0
        %4687 = vmatprep.mubr.f32.mxu0 0.0
        %4688 = vmatmul.mubr.f32.gmra.mrb[0].mxu0 %v4507
        %v4689 = vpop.f32.mrb[0].mxu0
        %v4690 = vadd.f32 %v4546, %v4689
        %v4691 = vpop.f32.mrb[0].mxu0
        %4692 = vmatprep.mubr.f32.mxu0 0.0
        %4693 = vmatmul.mubr.f32.gmra.mrb[0].mxu0 %v4508
        %v4694 = vpop.f32.mrb[0].mxu0
        %v4695 = vadd.f32 %v4551, %v4694
        %v4696 = vpop.f32.mrb[0].mxu0
        %4697 = vmatprep.mubr.f32.mxu0 0.0
        %4698 = vmatmul.mubr.f32.gmra.mrb[0].mxu0 %v4509
        %v4699 = vpop.f32.mrb[0].mxu0
        %v4700 = vadd.f32 %v4556, %v4699
        %v4701 = vpop.f32.mrb[0].mxu0
        %4702 = vmatprep.mubr.f32.mxu0 0.0
        %4703 = vmatmul.mubr.f32.gmra.mrb[0].mxu0 %v4510
        %v4704 = vpop.f32.mrb[0].mxu0
        %v4705 = vadd.f32 %v4561, %v4704
        %v4706 = vpop.f32.mrb[0].mxu0
        %4707 = vmatprep.mubr.f32.mxu0 0.0
        %4708 = vmatmul.mubr.f32.gmra.mrb[0].mxu0 %v4511
        %v4709 = vpop.f32.mrb[0].mxu0
        %v4710 = vadd.f32 %v4566, %v4709
        %v4711 = vpop.f32.mrb[0].mxu0
        %4712 = vmatprep.mubr.f32.mxu0 0.0
        %4713 = vmatmul.mubr.f32.gmra.mrb[0].mxu0 %v4512
        %v4714 = vpop.f32.mrb[0].mxu0
        %v4715 = vadd.f32 %v4571, %v4714
        %v4716 = vpop.f32.mrb[0].mxu0
        %4717 = vmatprep.mubr.f32.mxu0 0.0
        %4718 = vmatmul.mubr.f32.gmra.mrb[0].mxu0 %v4513
        %v4719 = vpop.f32.mrb[0].mxu0
        %v4720 = vadd.f32 %v4576, %v4719
        %v4721 = vpop.f32.mrb[0].mxu0
        %4722 = vmatprep.mubr.f32.mxu0 0.0
        %4723 = vmatmul.mubr.f32.gmra.mrb[0].mxu0 %v4514
        %v4724 = vpop.f32.mrb[0].mxu0
        %v4725 = vadd.f32 %v4581, %v4724
        %v4726 = vpop.f32.mrb[0].mxu0
        %4727 = vmatprep.mubr.f32.mxu0 0.0
        %4728 = vmatmul.mubr.f32.gmra.mrb[0].mxu0 %v4515
        %v4729 = vpop.f32.mrb[0].mxu0
        %v4730 = vadd.f32 %v4586, %v4729
        %v4731 = vpop.f32.mrb[0].mxu0
        %4732 = vmatprep.mubr.f32.mxu0 0.0
        %4733 = vmatmul.mubr.f32.gmra.mrb[0].mxu0 %v4516
        %v4734 = vpop.f32.mrb[0].mxu0
        %v4735 = vadd.f32 %v4591, %v4734
        %v4736 = vpop.f32.mrb[0].mxu0
        %4737 = vmatprep.mubr.f32.mxu0 0.0
        %4738 = vmatmul.mubr.f32.gmra.mrb[0].mxu0 %v4517
        %v4739 = vpop.f32.mrb[0].mxu0
        %v4740 = vadd.f32 %v4596, %v4739
        %v4741 = vpop.f32.mrb[0].mxu0
        %4742 = vmatprep.mubr.f32.mxu0 0.0
        %4743 = vmatmul.mubr.f32.gmra.mrb[0].mxu0 %v4518
        %v4744 = vpop.f32.mrb[0].mxu0
        %v4745 = vadd.f32 %v4601, %v4744
        %v4746 = vpop.f32.mrb[0].mxu0
        %4747 = vmatprep.mubr.f32.mxu0 0.0
        %4748 = vmatmul.mubr.f32.gmra.mrb[0].mxu0 %v4519
        %v4749 = vpop.f32.mrb[0].mxu0
        %v4750 = vadd.f32 %v4606, %v4749
        %v4751 = vpop.f32.mrb[0].mxu0
        %4752 = vmatprep.mubr.f32.mxu0 0.0
        %4753 = vmatmul.mubr.f32.gmra.mrb[0].mxu0 %v4520
        %v4754 = vpop.f32.mrb[0].mxu0
        %v4755 = vadd.f32 %v4611, %v4754
        %v4756 = vpop.f32.mrb[0].mxu0
        %4757 = vmatprep.mubr.f32.mxu0 0.0
        %4758 = vmatmul.mubr.f32.gmra.mrb[0].mxu0 %v4521
        %v4759 = vpop.f32.mrb[0].mxu0
        %v4760 = vadd.f32 %v4616, %v4759
        %v4761 = vpop.f32.mrb[0].mxu0
        %4762 = vdwg.mxu0
        %v4763 = vmax.f32 %v4685, 0.0
        %v4764 = vmax.f32 %v4690, 0.0
        %v4765 = vmax.f32 %v4695, 0.0
        %v4766 = vmax.f32 %v4700, 0.0
        %v4767 = vmax.f32 %v4705, 0.0
        %v4768 = vmax.f32 %v4710, 0.0
        %v4769 = vmax.f32 %v4715, 0.0
        %v4770 = vmax.f32 %v4720, 0.0
        %v4771 = vmax.f32 %v4725, 0.0
        %v4772 = vmax.f32 %v4730, 0.0
        %v4773 = vmax.f32 %v4735, 0.0
        %v4774 = vmax.f32 %v4740, 0.0
        %v4775 = vmax.f32 %v4745, 0.0
        %v4776 = vmax.f32 %v4750, 0.0
        %v4777 = vmax.f32 %v4755, 0.0
        %v4778 = vmax.f32 %v4760, 0.0
        %4779 = vmatprep.subr.mxu0 0.0
        %4780 = vmatpush1.msra.mxu0 %v4763
        %4781 = vmatprep.subr.mxu0 0.0
        %4782 = vmatpush1.msra.mxu0 %v4764
        %4783 = vmatprep.subr.mxu0 0.0
        %4784 = vmatpush1.msra.mxu0 %v4765
        %4785 = vmatprep.subr.mxu0 0.0
        %4786 = vmatpush1.msra.mxu0 %v4766
        %4787 = vmatprep.subr.mxu0 0.0
        %4788 = vmatpush1.msra.mxu0 %v4767
        %4789 = vmatprep.subr.mxu0 0.0
        %4790 = vmatpush1.msra.mxu0 %v4768
        %4791 = vmatprep.subr.mxu0 0.0
        %4792 = vmatpush1.msra.mxu0 %v4769
        %4793 = vmatprep.subr.mxu0 0.0
        %4794 = vmatpush1.msra.mxu0 %v4770
        %4795 = vmatprep.subr.mxu0 0.0
        %4796 = vmatpush1.msra.mxu0 %v4771
        %4797 = vmatprep.subr.mxu0 0.0
        %4798 = vmatpush1.msra.mxu0 %v4772
        %4799 = vmatprep.subr.mxu0 0.0
        %4800 = vmatpush1.msra.mxu0 %v4773
        %4801 = vmatprep.subr.mxu0 0.0
        %4802 = vmatpush1.msra.mxu0 %v4774
        %4803 = vmatprep.subr.mxu0 0.0
        %4804 = vmatpush1.msra.mxu0 %v4775
        %4805 = vmatprep.subr.mxu0 0.0
        %4806 = vmatpush1.msra.mxu0 %v4776
        %4807 = vmatprep.subr.mxu0 0.0
        %4808 = vmatpush1.msra.mxu0 %v4777
        %4809 = vmatprep.subr.mxu0 0.0
        %4810 = vmatpush1.msra.mxu0 %v4778
        %4811 = vmatprep.subr.mxu0 0.0
        %4812 = vmatpush1.msra.mxu0 0.0
        %4813 = vmatprep.subr.mxu0 0.0
        %4814 = vmatpush1.msra.mxu0 0.0
        %4815 = vmatprep.subr.mxu0 0.0
        %4816 = vmatpush1.msra.mxu0 0.0
        %4817 = vmatprep.subr.mxu0 0.0
        %4818 = vmatpush1.msra.mxu0 0.0
        %4819 = vmatprep.subr.mxu0 0.0
        %4820 = vmatpush1.msra.mxu0 0.0
        %4821 = vmatprep.subr.mxu0 0.0
        %4822 = vmatpush1.msra.mxu0 0.0
        %4823 = vmatprep.subr.mxu0 0.0
        %4824 = vmatpush1.msra.mxu0 0.0
        %4825 = vmatprep.subr.mxu0 0.0
        %4826 = vmatpush1.msra.mxu0 0.0
        %4827 = vmatprep.subr.mxu0 0.0
        %4828 = vmatpush1.msra.mxu0 0.0
        %4829 = vmatprep.subr.mxu0 0.0
        %4830 = vmatpush1.msra.mxu0 0.0
        %4831 = vmatprep.subr.mxu0 0.0
        %4832 = vmatpush1.msra.mxu0 0.0
        %4833 = vmatprep.subr.mxu0 0.0
        %4834 = vmatpush1.msra.mxu0 0.0
        %4835 = vmatprep.subr.mxu0 0.0
        %4836 = vmatpush1.msra.mxu0 0.0
        %4837 = vmatprep.subr.mxu0 0.0
        %4838 = vmatpush1.msra.mxu0 0.0
        %4839 = vmatprep.subr.mxu0 0.0
        %4840 = vmatpush1.msra.mxu0 0.0
        %4841 = vmatprep.subr.mxu0 0.0
        %4842 = vmatpush1.msra.mxu0 0.0
        %4843 = vmatprep.mubr.f32.mxu0 0.0
        %4844 = vmatmul.mubr.f32.gmra.mrb[0].mxu0 %v426
        %v4845 = vpop.f32.mrb[0].mxu0
        %v4846 = vadd.f32 %v1011, %v4845
        %v4847 = vpop.f32.mrb[0].mxu0
        %4848 = vdwg.mxu0
        %v4849 = vmul.f32 %v4276, 0.025
        %v4850 = vadd.f32 %v4849, %v4846
        %v4851 = vmul.f32 %v4850, 0.0625
        %v4852 = vadd.f32 %v4276, %v4851
        %v4853 = vrsqrt.pop %v4291
        %v4854 = vmul.f32 %v4291, %v4853
        %vm4855 = vcmp.eq.f32.partialorder %v4291, inf
        %v4856 = vsel %vm4855, %v4291, %v4854
        %vm4857 = vcmp.eq.f32.partialorder %v4291, 0.0
        %v4858 = vand.u32 %v4291, 2147483648
        %v4859 = vsel %vm4857, %v4858, %v4856
        %v4861 = vrot.slane %v4859, 2
        %v4863 = vmul.f32 %v4276, %v4861
        %v4865 = vrot.slane %v4846, 1
        %v4867 = vadd.f32 %v4863, %v4865
        %v4868 = vmul.f32 %v4867, %v4324
        %v4869 = vadd.f32 %v4852, %v4868
        %v4870 = vsub.f32 0.04, %v4291
        %v4871 = vmul.f32 %v4870, 1.5
        %v4872 = vadd.f32 %v4871, %v4846
        %v4873 = vmul.f32 %v4872, 0.0625
        %v4874 = vadd.f32 %v4291, %v4873
        %v4875 = vadd.f32 %v4846, 0.3
        %v4877 = vrot.slane %v4324, 6
        %v4879 = vmul.f32 %v4875, %v4877
        %v4881 = vrot.slane %v4879, 1
        %v4883 = vadd.f32 %v4874, %v4881
        %v4884 = vmax.f32 %v4883, 0.01
        %s4885 = scalar_lea.vmem %s371, 18 [#allocation2]
        %v4886 = vld [vmem:[%s4885] sm:$0x3]
        %v4887 = vmul.f32 %v4886, 0.25
        %v4888 = vlaneseq
        %v4889 = vshrl.u32 %v4888, 7
        %v4890 = vsub.s32 0, %v4889
        %v4891 = vrot.slane %v4869, %v4890
        %v4892 = vmul.f32 %v434, %v4891
        %v4893 = vmul.f32 %v439, %v4891
        %v4894 = vmul.f32 %v444, %v4891
        %v4895 = vmul.f32 %v449, %v4891
        %v4896 = vmul.f32 %v454, %v4891
        %v4897 = vmul.f32 %v459, %v4891
        %v4898 = vmul.f32 %v464, %v4891
        %v4899 = vmul.f32 %v469, %v4891
        %v4900 = vmul.f32 %v474, %v4891
        %v4901 = vmul.f32 %v479, %v4891
        %v4902 = vmul.f32 %v484, %v4891
        %v4903 = vmul.f32 %v489, %v4891
        %v4904 = vmul.f32 %v494, %v4891
        %v4905 = vmul.f32 %v499, %v4891
        %v4906 = vmul.f32 %v504, %v4891
        %v4907 = vmul.f32 %v509, %v4891
        %v4908 = vlaneseq
        %v4909 = vshrl.u32 %v4908, 7
        %v4910 = vsub.s32 2, %v4909
        %v4911 = vrot.slane %v4884, %v4910
        %v4912 = vmul.f32 %v513, %v4911
        %v4913 = vmul.f32 %v517, %v4911
        %v4914 = vmul.f32 %v521, %v4911
        %v4915 = vmul.f32 %v525, %v4911
        %v4916 = vmul.f32 %v529, %v4911
        %v4917 = vmul.f32 %v533, %v4911
        %v4918 = vmul.f32 %v537, %v4911
        %v4919 = vmul.f32 %v541, %v4911
        %v4920 = vmul.f32 %v545, %v4911
        %v4921 = vmul.f32 %v549, %v4911
        %v4922 = vmul.f32 %v553, %v4911
        %v4923 = vmul.f32 %v557, %v4911
        %v4924 = vmul.f32 %v561, %v4911
        %v4925 = vmul.f32 %v565, %v4911
        %v4926 = vmul.f32 %v569, %v4911
        %v4927 = vmul.f32 %v573, %v4911
        %v4928 = vadd.f32 %v4892, %v4912
        %v4929 = vadd.f32 %v4893, %v4913
        %v4930 = vadd.f32 %v4894, %v4914
        %v4931 = vadd.f32 %v4895, %v4915
        %v4932 = vadd.f32 %v4896, %v4916
        %v4933 = vadd.f32 %v4897, %v4917
        %v4934 = vadd.f32 %v4898, %v4918
        %v4935 = vadd.f32 %v4899, %v4919
        %v4936 = vadd.f32 %v4900, %v4920
        %v4937 = vadd.f32 %v4901, %v4921
        %v4938 = vadd.f32 %v4902, %v4922
        %v4939 = vadd.f32 %v4903, %v4923
        %v4940 = vadd.f32 %v4904, %v4924
        %v4941 = vadd.f32 %v4905, %v4925
        %v4942 = vadd.f32 %v4906, %v4926
        %v4943 = vadd.f32 %v4907, %v4927
        %s4944 = scalar_lea.vmem %s1, 1152
        %v4945 = vld [vmem:[%s4944] sm:$0xff]
        %v4946 = vld [vmem:[%s4944 + $0x8] sm:$0xff]
        %v4947 = vld [vmem:[%s4944 + $0x10] sm:$0xff]
        %v4948 = vld [vmem:[%s4944 + $0x18] sm:$0xff]
        %v4949 = vld [vmem:[%s4944 + $0x20] sm:$0xff]
        %v4950 = vld [vmem:[%s4944 + $0x28] sm:$0xff]
        %v4951 = vld [vmem:[%s4944 + $0x30] sm:$0xff]
        %v4952 = vld [vmem:[%s4944 + $0x38] sm:$0xff]
        %v4953 = vld [vmem:[%s4944 + $0x40] sm:$0xff]
        %v4954 = vld [vmem:[%s4944 + $0x48] sm:$0xff]
        %v4955 = vld [vmem:[%s4944 + $0x50] sm:$0xff]
        %v4956 = vld [vmem:[%s4944 + $0x58] sm:$0xff]
        %v4957 = vld [vmem:[%s4944 + $0x60] sm:$0xff]
        %v4958 = vld [vmem:[%s4944 + $0x68] sm:$0xff]
        %v4959 = vld [vmem:[%s4944 + $0x70] sm:$0xff]
        %v4960 = vld [vmem:[%s4944 + $0x78] sm:$0xff]
        %4962 = vset.pattern.permute.xlu0 0
        %4963 = vperm.xlu0 %4962, %v4945
        %v4964 = vpop.permute.xlu0 %4963
        %4967 = vset.pattern.permute.xlu0 0
        %4968 = vperm.xlu0 %4967, %v4946
        %v4969 = vpop.permute.xlu0 %4968
        %4972 = vset.pattern.permute.xlu0 0
        %4973 = vperm.xlu0 %4972, %v4947
        %v4974 = vpop.permute.xlu0 %4973
        %4977 = vset.pattern.permute.xlu0 0
        %4978 = vperm.xlu0 %4977, %v4948
        %v4979 = vpop.permute.xlu0 %4978
        %4982 = vset.pattern.permute.xlu0 0
        %4983 = vperm.xlu0 %4982, %v4949
        %v4984 = vpop.permute.xlu0 %4983
        %4987 = vset.pattern.permute.xlu0 0
        %4988 = vperm.xlu0 %4987, %v4950
        %v4989 = vpop.permute.xlu0 %4988
        %4992 = vset.pattern.permute.xlu0 0
        %4993 = vperm.xlu0 %4992, %v4951
        %v4994 = vpop.permute.xlu0 %4993
        %4997 = vset.pattern.permute.xlu0 0
        %4998 = vperm.xlu0 %4997, %v4952
        %v4999 = vpop.permute.xlu0 %4998
        %5002 = vset.pattern.permute.xlu0 0
        %5003 = vperm.xlu0 %5002, %v4953
        %v5004 = vpop.permute.xlu0 %5003
        %5007 = vset.pattern.permute.xlu0 0
        %5008 = vperm.xlu0 %5007, %v4954
        %v5009 = vpop.permute.xlu0 %5008
        %5012 = vset.pattern.permute.xlu0 0
        %5013 = vperm.xlu0 %5012, %v4955
        %v5014 = vpop.permute.xlu0 %5013
        %5017 = vset.pattern.permute.xlu0 0
        %5018 = vperm.xlu0 %5017, %v4956
        %v5019 = vpop.permute.xlu0 %5018
        %5022 = vset.pattern.permute.xlu0 0
        %5023 = vperm.xlu0 %5022, %v4957
        %v5024 = vpop.permute.xlu0 %5023
        %5027 = vset.pattern.permute.xlu0 0
        %5028 = vperm.xlu0 %5027, %v4958
        %v5029 = vpop.permute.xlu0 %5028
        %5032 = vset.pattern.permute.xlu0 0
        %5033 = vperm.xlu0 %5032, %v4959
        %v5034 = vpop.permute.xlu0 %5033
        %5037 = vset.pattern.permute.xlu0 0
        %5038 = vperm.xlu0 %5037, %v4960
        %v5039 = vpop.permute.xlu0 %5038
        %v5041 = vadd.f32 %v4928, %v4964
        %v5042 = vadd.f32 %v4929, %v4969
        %v5043 = vadd.f32 %v4930, %v4974
        %v5044 = vadd.f32 %v4931, %v4979
        %v5045 = vadd.f32 %v4932, %v4984
        %v5046 = vadd.f32 %v4933, %v4989
        %v5047 = vadd.f32 %v4934, %v4994
        %v5048 = vadd.f32 %v4935, %v4999
        %v5049 = vadd.f32 %v4936, %v5004
        %v5050 = vadd.f32 %v4937, %v5009
        %v5051 = vadd.f32 %v4938, %v5014
        %v5052 = vadd.f32 %v4939, %v5019
        %v5053 = vadd.f32 %v4940, %v5024
        %v5054 = vadd.f32 %v4941, %v5029
        %v5055 = vadd.f32 %v4942, %v5034
        %v5056 = vadd.f32 %v4943, %v5039
        %v5057 = vmax.f32 %v5041, 0.0
        %v5058 = vmax.f32 %v5042, 0.0
        %v5059 = vmax.f32 %v5043, 0.0
        %v5060 = vmax.f32 %v5044, 0.0
        %v5061 = vmax.f32 %v5045, 0.0
        %v5062 = vmax.f32 %v5046, 0.0
        %v5063 = vmax.f32 %v5047, 0.0
        %v5064 = vmax.f32 %v5048, 0.0
        %v5065 = vmax.f32 %v5049, 0.0
        %v5066 = vmax.f32 %v5050, 0.0
        %v5067 = vmax.f32 %v5051, 0.0
        %v5068 = vmax.f32 %v5052, 0.0
        %v5069 = vmax.f32 %v5053, 0.0
        %v5070 = vmax.f32 %v5054, 0.0
        %v5071 = vmax.f32 %v5055, 0.0
        %v5072 = vmax.f32 %v5056, 0.0
        %5073 = vmatprep.subr.mxu0 0.0
        %5074 = vmatpush1.msra.mxu0 %v5057
        %5075 = vmatprep.subr.mxu0 0.0
        %5076 = vmatpush1.msra.mxu0 %v5058
        %5077 = vmatprep.subr.mxu0 0.0
        %5078 = vmatpush1.msra.mxu0 %v5059
        %5079 = vmatprep.subr.mxu0 0.0
        %5080 = vmatpush1.msra.mxu0 %v5060
        %5081 = vmatprep.subr.mxu0 0.0
        %5082 = vmatpush1.msra.mxu0 %v5061
        %5083 = vmatprep.subr.mxu0 0.0
        %5084 = vmatpush1.msra.mxu0 %v5062
        %5085 = vmatprep.subr.mxu0 0.0
        %5086 = vmatpush1.msra.mxu0 %v5063
        %5087 = vmatprep.subr.mxu0 0.0
        %5088 = vmatpush1.msra.mxu0 %v5064
        %5089 = vmatprep.subr.mxu0 0.0
        %5090 = vmatpush1.msra.mxu0 %v5065
        %5091 = vmatprep.subr.mxu0 0.0
        %5092 = vmatpush1.msra.mxu0 %v5066
        %5093 = vmatprep.subr.mxu0 0.0
        %5094 = vmatpush1.msra.mxu0 %v5067
        %5095 = vmatprep.subr.mxu0 0.0
        %5096 = vmatpush1.msra.mxu0 %v5068
        %5097 = vmatprep.subr.mxu0 0.0
        %5098 = vmatpush1.msra.mxu0 %v5069
        %5099 = vmatprep.subr.mxu0 0.0
        %5100 = vmatpush1.msra.mxu0 %v5070
        %5101 = vmatprep.subr.mxu0 0.0
        %5102 = vmatpush1.msra.mxu0 %v5071
        %5103 = vmatprep.subr.mxu0 0.0
        %5104 = vmatpush1.msra.mxu0 %v5072
        %5105 = vmatprep.subr.mxu0 0.0
        %5106 = vmatpush1.msra.mxu0 0.0
        %5107 = vmatprep.subr.mxu0 0.0
        %5108 = vmatpush1.msra.mxu0 0.0
        %5109 = vmatprep.subr.mxu0 0.0
        %5110 = vmatpush1.msra.mxu0 0.0
        %5111 = vmatprep.subr.mxu0 0.0
        %5112 = vmatpush1.msra.mxu0 0.0
        %5113 = vmatprep.subr.mxu0 0.0
        %5114 = vmatpush1.msra.mxu0 0.0
        %5115 = vmatprep.subr.mxu0 0.0
        %5116 = vmatpush1.msra.mxu0 0.0
        %5117 = vmatprep.subr.mxu0 0.0
        %5118 = vmatpush1.msra.mxu0 0.0
        %5119 = vmatprep.subr.mxu0 0.0
        %5120 = vmatpush1.msra.mxu0 0.0
        %5121 = vmatprep.subr.mxu0 0.0
        %5122 = vmatpush1.msra.mxu0 0.0
        %5123 = vmatprep.subr.mxu0 0.0
        %5124 = vmatpush1.msra.mxu0 0.0
        %5125 = vmatprep.subr.mxu0 0.0
        %5126 = vmatpush1.msra.mxu0 0.0
        %5127 = vmatprep.subr.mxu0 0.0
        %5128 = vmatpush1.msra.mxu0 0.0
        %5129 = vmatprep.subr.mxu0 0.0
        %5130 = vmatpush1.msra.mxu0 0.0
        %5131 = vmatprep.subr.mxu0 0.0
        %5132 = vmatpush1.msra.mxu0 0.0
        %5133 = vmatprep.subr.mxu0 0.0
        %5134 = vmatpush1.msra.mxu0 0.0
        %5135 = vmatprep.subr.mxu0 0.0
        %5136 = vmatpush1.msra.mxu0 0.0
        %5137 = vmatprep.mubr.f32.mxu0 0.0
        %5138 = vmatmul.mubr.f32.gmra.mrb[0].mxu0 %v4506
        %v5139 = vpop.f32.mrb[0].mxu0
        %v5140 = vadd.f32 %v4541, %v5139
        %v5141 = vpop.f32.mrb[0].mxu0
        %5142 = vmatprep.mubr.f32.mxu0 0.0
        %5143 = vmatmul.mubr.f32.gmra.mrb[0].mxu0 %v4507
        %v5144 = vpop.f32.mrb[0].mxu0
        %v5145 = vadd.f32 %v4546, %v5144
        %v5146 = vpop.f32.mrb[0].mxu0
        %5147 = vmatprep.mubr.f32.mxu0 0.0
        %5148 = vmatmul.mubr.f32.gmra.mrb[0].mxu0 %v4508
        %v5149 = vpop.f32.mrb[0].mxu0
        %v5150 = vadd.f32 %v4551, %v5149
        %v5151 = vpop.f32.mrb[0].mxu0
        %5152 = vmatprep.mubr.f32.mxu0 0.0
        %5153 = vmatmul.mubr.f32.gmra.mrb[0].mxu0 %v4509
        %v5154 = vpop.f32.mrb[0].mxu0
        %v5155 = vadd.f32 %v4556, %v5154
        %v5156 = vpop.f32.mrb[0].mxu0
        %5157 = vmatprep.mubr.f32.mxu0 0.0
        %5158 = vmatmul.mubr.f32.gmra.mrb[0].mxu0 %v4510
        %v5159 = vpop.f32.mrb[0].mxu0
        %v5160 = vadd.f32 %v4561, %v5159
        %v5161 = vpop.f32.mrb[0].mxu0
        %5162 = vmatprep.mubr.f32.mxu0 0.0
        %5163 = vmatmul.mubr.f32.gmra.mrb[0].mxu0 %v4511
        %v5164 = vpop.f32.mrb[0].mxu0
        %v5165 = vadd.f32 %v4566, %v5164
        %v5166 = vpop.f32.mrb[0].mxu0
        %5167 = vmatprep.mubr.f32.mxu0 0.0
        %5168 = vmatmul.mubr.f32.gmra.mrb[0].mxu0 %v4512
        %v5169 = vpop.f32.mrb[0].mxu0
        %v5170 = vadd.f32 %v4571, %v5169
        %v5171 = vpop.f32.mrb[0].mxu0
        %5172 = vmatprep.mubr.f32.mxu0 0.0
        %5173 = vmatmul.mubr.f32.gmra.mrb[0].mxu0 %v4513
        %v5174 = vpop.f32.mrb[0].mxu0
        %v5175 = vadd.f32 %v4576, %v5174
        %v5176 = vpop.f32.mrb[0].mxu0
        %5177 = vmatprep.mubr.f32.mxu0 0.0
        %5178 = vmatmul.mubr.f32.gmra.mrb[0].mxu0 %v4514
        %v5179 = vpop.f32.mrb[0].mxu0
        %v5180 = vadd.f32 %v4581, %v5179
        %v5181 = vpop.f32.mrb[0].mxu0
        %5182 = vmatprep.mubr.f32.mxu0 0.0
        %5183 = vmatmul.mubr.f32.gmra.mrb[0].mxu0 %v4515
        %v5184 = vpop.f32.mrb[0].mxu0
        %v5185 = vadd.f32 %v4586, %v5184
        %v5186 = vpop.f32.mrb[0].mxu0
        %5187 = vmatprep.mubr.f32.mxu0 0.0
        %5188 = vmatmul.mubr.f32.gmra.mrb[0].mxu0 %v4516
        %v5189 = vpop.f32.mrb[0].mxu0
        %v5190 = vadd.f32 %v4591, %v5189
        %v5191 = vpop.f32.mrb[0].mxu0
        %5192 = vmatprep.mubr.f32.mxu0 0.0
        %5193 = vmatmul.mubr.f32.gmra.mrb[0].mxu0 %v4517
        %v5194 = vpop.f32.mrb[0].mxu0
        %v5195 = vadd.f32 %v4596, %v5194
        %v5196 = vpop.f32.mrb[0].mxu0
        %5197 = vmatprep.mubr.f32.mxu0 0.0
        %5198 = vmatmul.mubr.f32.gmra.mrb[0].mxu0 %v4518
        %v5199 = vpop.f32.mrb[0].mxu0
        %v5200 = vadd.f32 %v4601, %v5199
        %v5201 = vpop.f32.mrb[0].mxu0
        %5202 = vmatprep.mubr.f32.mxu0 0.0
        %5203 = vmatmul.mubr.f32.gmra.mrb[0].mxu0 %v4519
        %v5204 = vpop.f32.mrb[0].mxu0
        %v5205 = vadd.f32 %v4606, %v5204
        %v5206 = vpop.f32.mrb[0].mxu0
        %5207 = vmatprep.mubr.f32.mxu0 0.0
        %5208 = vmatmul.mubr.f32.gmra.mrb[0].mxu0 %v4520
        %v5209 = vpop.f32.mrb[0].mxu0
        %v5210 = vadd.f32 %v4611, %v5209
        %v5211 = vpop.f32.mrb[0].mxu0
        %5212 = vmatprep.mubr.f32.mxu0 0.0
        %5213 = vmatmul.mubr.f32.gmra.mrb[0].mxu0 %v4521
        %v5214 = vpop.f32.mrb[0].mxu0
        %v5215 = vadd.f32 %v4616, %v5214
        %v5216 = vpop.f32.mrb[0].mxu0
        %5217 = vdwg.mxu0
        %v5218 = vmax.f32 %v5140, 0.0
        %v5219 = vmax.f32 %v5145, 0.0
        %v5220 = vmax.f32 %v5150, 0.0
        %v5221 = vmax.f32 %v5155, 0.0
        %v5222 = vmax.f32 %v5160, 0.0
        %v5223 = vmax.f32 %v5165, 0.0
        %v5224 = vmax.f32 %v5170, 0.0
        %v5225 = vmax.f32 %v5175, 0.0
        %v5226 = vmax.f32 %v5180, 0.0
        %v5227 = vmax.f32 %v5185, 0.0
        %v5228 = vmax.f32 %v5190, 0.0
        %v5229 = vmax.f32 %v5195, 0.0
        %v5230 = vmax.f32 %v5200, 0.0
        %v5231 = vmax.f32 %v5205, 0.0
        %v5232 = vmax.f32 %v5210, 0.0
        %v5233 = vmax.f32 %v5215, 0.0
        %5234 = vmatprep.subr.mxu0 0.0
        %5235 = vmatpush1.msra.mxu0 %v5218
        %5236 = vmatprep.subr.mxu0 0.0
        %5237 = vmatpush1.msra.mxu0 %v5219
        %5238 = vmatprep.subr.mxu0 0.0
        %5239 = vmatpush1.msra.mxu0 %v5220
        %5240 = vmatprep.subr.mxu0 0.0
        %5241 = vmatpush1.msra.mxu0 %v5221
        %5242 = vmatprep.subr.mxu0 0.0
        %5243 = vmatpush1.msra.mxu0 %v5222
        %5244 = vmatprep.subr.mxu0 0.0
        %5245 = vmatpush1.msra.mxu0 %v5223
        %5246 = vmatprep.subr.mxu0 0.0
        %5247 = vmatpush1.msra.mxu0 %v5224
        %5248 = vmatprep.subr.mxu0 0.0
        %5249 = vmatpush1.msra.mxu0 %v5225
        %5250 = vmatprep.subr.mxu0 0.0
        %5251 = vmatpush1.msra.mxu0 %v5226
        %5252 = vmatprep.subr.mxu0 0.0
        %5253 = vmatpush1.msra.mxu0 %v5227
        %5254 = vmatprep.subr.mxu0 0.0
        %5255 = vmatpush1.msra.mxu0 %v5228
        %5256 = vmatprep.subr.mxu0 0.0
        %5257 = vmatpush1.msra.mxu0 %v5229
        %5258 = vmatprep.subr.mxu0 0.0
        %5259 = vmatpush1.msra.mxu0 %v5230
        %5260 = vmatprep.subr.mxu0 0.0
        %5261 = vmatpush1.msra.mxu0 %v5231
        %5262 = vmatprep.subr.mxu0 0.0
        %5263 = vmatpush1.msra.mxu0 %v5232
        %5264 = vmatprep.subr.mxu0 0.0
        %5265 = vmatpush1.msra.mxu0 %v5233
        %5266 = vmatprep.subr.mxu0 0.0
        %5267 = vmatpush1.msra.mxu0 0.0
        %5268 = vmatprep.subr.mxu0 0.0
        %5269 = vmatpush1.msra.mxu0 0.0
        %5270 = vmatprep.subr.mxu0 0.0
        %5271 = vmatpush1.msra.mxu0 0.0
        %5272 = vmatprep.subr.mxu0 0.0
        %5273 = vmatpush1.msra.mxu0 0.0
        %5274 = vmatprep.subr.mxu0 0.0
        %5275 = vmatpush1.msra.mxu0 0.0
        %5276 = vmatprep.subr.mxu0 0.0
        %5277 = vmatpush1.msra.mxu0 0.0
        %5278 = vmatprep.subr.mxu0 0.0
        %5279 = vmatpush1.msra.mxu0 0.0
        %5280 = vmatprep.subr.mxu0 0.0
        %5281 = vmatpush1.msra.mxu0 0.0
        %5282 = vmatprep.subr.mxu0 0.0
        %5283 = vmatpush1.msra.mxu0 0.0
        %5284 = vmatprep.subr.mxu0 0.0
        %5285 = vmatpush1.msra.mxu0 0.0
        %5286 = vmatprep.subr.mxu0 0.0
        %5287 = vmatpush1.msra.mxu0 0.0
        %5288 = vmatprep.subr.mxu0 0.0
        %5289 = vmatpush1.msra.mxu0 0.0
        %5290 = vmatprep.subr.mxu0 0.0
        %5291 = vmatpush1.msra.mxu0 0.0
        %5292 = vmatprep.subr.mxu0 0.0
        %5293 = vmatpush1.msra.mxu0 0.0
        %5294 = vmatprep.subr.mxu0 0.0
        %5295 = vmatpush1.msra.mxu0 0.0
        %5296 = vmatprep.subr.mxu0 0.0
        %5297 = vmatpush1.msra.mxu0 0.0
        %5298 = vmatprep.mubr.f32.mxu0 0.0
        %5299 = vmatmul.mubr.f32.gmra.mrb[0].mxu0 %v426
        %v5300 = vpop.f32.mrb[0].mxu0
        %v5301 = vadd.f32 %v1011, %v5300
        %v5302 = vpop.f32.mrb[0].mxu0
        %5303 = vdwg.mxu0
        %v5304 = vmul.f32 %v4869, 0.025
        %v5305 = vadd.f32 %v5304, %v5301
        %v5306 = vmul.f32 %v5305, 0.0625
        %v5307 = vadd.f32 %v4869, %v5306
        %v5308 = vrsqrt.pop %v4884
        %v5309 = vmul.f32 %v4884, %v5308
        %vm5310 = vcmp.eq.f32.partialorder %v4884, inf
        %v5311 = vsel %vm5310, %v4884, %v5309
        %vm5312 = vcmp.eq.f32.partialorder %v4884, 0.0
        %v5313 = vand.u32 %v4884, 2147483648
        %v5314 = vsel %vm5312, %v5313, %v5311
        %v5316 = vrot.slane %v5314, 2
        %v5318 = vmul.f32 %v4869, %v5316
        %v5320 = vrot.slane %v5301, 1
        %v5322 = vadd.f32 %v5318, %v5320
        %v5323 = vmul.f32 %v5322, %v4887
        %v5324 = vadd.f32 %v5307, %v5323
        %v5325 = vsub.f32 0.04, %v4884
        %v5326 = vmul.f32 %v5325, 1.5
        %v5327 = vadd.f32 %v5326, %v5301
        %v5328 = vmul.f32 %v5327, 0.0625
        %v5329 = vadd.f32 %v4884, %v5328
        %v5330 = vadd.f32 %v5301, 0.3
        %v5332 = vrot.slane %v4887, 6
        %v5334 = vmul.f32 %v5330, %v5332
        %v5336 = vrot.slane %v5334, 1
        %v5338 = vadd.f32 %v5329, %v5336
        %v5339 = vmax.f32 %v5338, 0.01
        %s5340 = scalar_lea.vmem %s371, 20 [#allocation2]
        %v5341 = vld [vmem:[%s5340] sm:$0x3]
        %v5342 = vmul.f32 %v5341, 0.25
        %v5343 = vlaneseq
        %v5344 = vshrl.u32 %v5343, 7
        %v5345 = vsub.s32 0, %v5344
        %v5346 = vrot.slane %v5324, %v5345
        %v5347 = vmul.f32 %v434, %v5346
        %v5348 = vmul.f32 %v439, %v5346
        %v5349 = vmul.f32 %v444, %v5346
        %v5350 = vmul.f32 %v449, %v5346
        %v5351 = vmul.f32 %v454, %v5346
        %v5352 = vmul.f32 %v459, %v5346
        %v5353 = vmul.f32 %v464, %v5346
        %v5354 = vmul.f32 %v469, %v5346
        %v5355 = vmul.f32 %v474, %v5346
        %v5356 = vmul.f32 %v479, %v5346
        %v5357 = vmul.f32 %v484, %v5346
        %v5358 = vmul.f32 %v489, %v5346
        %v5359 = vmul.f32 %v494, %v5346
        %v5360 = vmul.f32 %v499, %v5346
        %v5361 = vmul.f32 %v504, %v5346
        %v5362 = vmul.f32 %v509, %v5346
        %v5363 = vlaneseq
        %v5364 = vshrl.u32 %v5363, 7
        %v5365 = vsub.s32 2, %v5364
        %v5366 = vrot.slane %v5339, %v5365
        %v5367 = vmul.f32 %v513, %v5366
        %v5368 = vmul.f32 %v517, %v5366
        %v5369 = vmul.f32 %v521, %v5366
        %v5370 = vmul.f32 %v525, %v5366
        %v5371 = vmul.f32 %v529, %v5366
        %v5372 = vmul.f32 %v533, %v5366
        %v5373 = vmul.f32 %v537, %v5366
        %v5374 = vmul.f32 %v541, %v5366
        %v5375 = vmul.f32 %v545, %v5366
        %v5376 = vmul.f32 %v549, %v5366
        %v5377 = vmul.f32 %v553, %v5366
        %v5378 = vmul.f32 %v557, %v5366
        %v5379 = vmul.f32 %v561, %v5366
        %v5380 = vmul.f32 %v565, %v5366
        %v5381 = vmul.f32 %v569, %v5366
        %v5382 = vmul.f32 %v573, %v5366
        %v5383 = vadd.f32 %v5347, %v5367
        %v5384 = vadd.f32 %v5348, %v5368
        %v5385 = vadd.f32 %v5349, %v5369
        %v5386 = vadd.f32 %v5350, %v5370
        %v5387 = vadd.f32 %v5351, %v5371
        %v5388 = vadd.f32 %v5352, %v5372
        %v5389 = vadd.f32 %v5353, %v5373
        %v5390 = vadd.f32 %v5354, %v5374
        %v5391 = vadd.f32 %v5355, %v5375
        %v5392 = vadd.f32 %v5356, %v5376
        %v5393 = vadd.f32 %v5357, %v5377
        %v5394 = vadd.f32 %v5358, %v5378
        %v5395 = vadd.f32 %v5359, %v5379
        %v5396 = vadd.f32 %v5360, %v5380
        %v5397 = vadd.f32 %v5361, %v5381
        %v5398 = vadd.f32 %v5362, %v5382
        %s5399 = scalar_lea.vmem %s1, 1280
        %v5400 = vld [vmem:[%s5399] sm:$0xff]
        %v5401 = vld [vmem:[%s5399 + $0x8] sm:$0xff]
        %v5402 = vld [vmem:[%s5399 + $0x10] sm:$0xff]
        %v5403 = vld [vmem:[%s5399 + $0x18] sm:$0xff]
        %v5404 = vld [vmem:[%s5399 + $0x20] sm:$0xff]
        %v5405 = vld [vmem:[%s5399 + $0x28] sm:$0xff]
        %v5406 = vld [vmem:[%s5399 + $0x30] sm:$0xff]
        %v5407 = vld [vmem:[%s5399 + $0x38] sm:$0xff]
        %v5408 = vld [vmem:[%s5399 + $0x40] sm:$0xff]
        %v5409 = vld [vmem:[%s5399 + $0x48] sm:$0xff]
        %v5410 = vld [vmem:[%s5399 + $0x50] sm:$0xff]
        %v5411 = vld [vmem:[%s5399 + $0x58] sm:$0xff]
        %v5412 = vld [vmem:[%s5399 + $0x60] sm:$0xff]
        %v5413 = vld [vmem:[%s5399 + $0x68] sm:$0xff]
        %v5414 = vld [vmem:[%s5399 + $0x70] sm:$0xff]
        %v5415 = vld [vmem:[%s5399 + $0x78] sm:$0xff]
        %5417 = vset.pattern.permute.xlu0 0
        %5418 = vperm.xlu0 %5417, %v5400
        %v5419 = vpop.permute.xlu0 %5418
        %5422 = vset.pattern.permute.xlu0 0
        %5423 = vperm.xlu0 %5422, %v5401
        %v5424 = vpop.permute.xlu0 %5423
        %5427 = vset.pattern.permute.xlu0 0
        %5428 = vperm.xlu0 %5427, %v5402
        %v5429 = vpop.permute.xlu0 %5428
        %5432 = vset.pattern.permute.xlu0 0
        %5433 = vperm.xlu0 %5432, %v5403
        %v5434 = vpop.permute.xlu0 %5433
        %5437 = vset.pattern.permute.xlu0 0
        %5438 = vperm.xlu0 %5437, %v5404
        %v5439 = vpop.permute.xlu0 %5438
        %5442 = vset.pattern.permute.xlu0 0
        %5443 = vperm.xlu0 %5442, %v5405
        %v5444 = vpop.permute.xlu0 %5443
        %5447 = vset.pattern.permute.xlu0 0
        %5448 = vperm.xlu0 %5447, %v5406
        %v5449 = vpop.permute.xlu0 %5448
        %5452 = vset.pattern.permute.xlu0 0
        %5453 = vperm.xlu0 %5452, %v5407
        %v5454 = vpop.permute.xlu0 %5453
        %5457 = vset.pattern.permute.xlu0 0
        %5458 = vperm.xlu0 %5457, %v5408
        %v5459 = vpop.permute.xlu0 %5458
        %5462 = vset.pattern.permute.xlu0 0
        %5463 = vperm.xlu0 %5462, %v5409
        %v5464 = vpop.permute.xlu0 %5463
        %5467 = vset.pattern.permute.xlu0 0
        %5468 = vperm.xlu0 %5467, %v5410
        %v5469 = vpop.permute.xlu0 %5468
        %5472 = vset.pattern.permute.xlu0 0
        %5473 = vperm.xlu0 %5472, %v5411
        %v5474 = vpop.permute.xlu0 %5473
        %5477 = vset.pattern.permute.xlu0 0
        %5478 = vperm.xlu0 %5477, %v5412
        %v5479 = vpop.permute.xlu0 %5478
        %5482 = vset.pattern.permute.xlu0 0
        %5483 = vperm.xlu0 %5482, %v5413
        %v5484 = vpop.permute.xlu0 %5483
        %5487 = vset.pattern.permute.xlu0 0
        %5488 = vperm.xlu0 %5487, %v5414
        %v5489 = vpop.permute.xlu0 %5488
        %5492 = vset.pattern.permute.xlu0 0
        %5493 = vperm.xlu0 %5492, %v5415
        %v5494 = vpop.permute.xlu0 %5493
        %v5496 = vadd.f32 %v5383, %v5419
        %v5497 = vadd.f32 %v5384, %v5424
        %v5498 = vadd.f32 %v5385, %v5429
        %v5499 = vadd.f32 %v5386, %v5434
        %v5500 = vadd.f32 %v5387, %v5439
        %v5501 = vadd.f32 %v5388, %v5444
        %v5502 = vadd.f32 %v5389, %v5449
        %v5503 = vadd.f32 %v5390, %v5454
        %v5504 = vadd.f32 %v5391, %v5459
        %v5505 = vadd.f32 %v5392, %v5464
        %v5506 = vadd.f32 %v5393, %v5469
        %v5507 = vadd.f32 %v5394, %v5474
        %v5508 = vadd.f32 %v5395, %v5479
        %v5509 = vadd.f32 %v5396, %v5484
        %v5510 = vadd.f32 %v5397, %v5489
        %v5511 = vadd.f32 %v5398, %v5494
        %v5512 = vmax.f32 %v5496, 0.0
        %v5513 = vmax.f32 %v5497, 0.0
        %v5514 = vmax.f32 %v5498, 0.0
        %v5515 = vmax.f32 %v5499, 0.0
        %v5516 = vmax.f32 %v5500, 0.0
        %v5517 = vmax.f32 %v5501, 0.0
        %v5518 = vmax.f32 %v5502, 0.0
        %v5519 = vmax.f32 %v5503, 0.0
        %v5520 = vmax.f32 %v5504, 0.0
        %v5521 = vmax.f32 %v5505, 0.0
        %v5522 = vmax.f32 %v5506, 0.0
        %v5523 = vmax.f32 %v5507, 0.0
        %v5524 = vmax.f32 %v5508, 0.0
        %v5525 = vmax.f32 %v5509, 0.0
        %v5526 = vmax.f32 %v5510, 0.0
        %v5527 = vmax.f32 %v5511, 0.0
        %5528 = vmatprep.subr.mxu0 0.0
        %5529 = vmatpush1.msra.mxu0 %v5512
        %5530 = vmatprep.subr.mxu0 0.0
        %5531 = vmatpush1.msra.mxu0 %v5513
        %5532 = vmatprep.subr.mxu0 0.0
        %5533 = vmatpush1.msra.mxu0 %v5514
        %5534 = vmatprep.subr.mxu0 0.0
        %5535 = vmatpush1.msra.mxu0 %v5515
        %5536 = vmatprep.subr.mxu0 0.0
        %5537 = vmatpush1.msra.mxu0 %v5516
        %5538 = vmatprep.subr.mxu0 0.0
        %5539 = vmatpush1.msra.mxu0 %v5517
        %5540 = vmatprep.subr.mxu0 0.0
        %5541 = vmatpush1.msra.mxu0 %v5518
        %5542 = vmatprep.subr.mxu0 0.0
        %5543 = vmatpush1.msra.mxu0 %v5519
        %5544 = vmatprep.subr.mxu0 0.0
        %5545 = vmatpush1.msra.mxu0 %v5520
        %5546 = vmatprep.subr.mxu0 0.0
        %5547 = vmatpush1.msra.mxu0 %v5521
        %5548 = vmatprep.subr.mxu0 0.0
        %5549 = vmatpush1.msra.mxu0 %v5522
        %5550 = vmatprep.subr.mxu0 0.0
        %5551 = vmatpush1.msra.mxu0 %v5523
        %5552 = vmatprep.subr.mxu0 0.0
        %5553 = vmatpush1.msra.mxu0 %v5524
        %5554 = vmatprep.subr.mxu0 0.0
        %5555 = vmatpush1.msra.mxu0 %v5525
        %5556 = vmatprep.subr.mxu0 0.0
        %5557 = vmatpush1.msra.mxu0 %v5526
        %5558 = vmatprep.subr.mxu0 0.0
        %5559 = vmatpush1.msra.mxu0 %v5527
        %5560 = vmatprep.subr.mxu0 0.0
        %5561 = vmatpush1.msra.mxu0 0.0
        %5562 = vmatprep.subr.mxu0 0.0
        %5563 = vmatpush1.msra.mxu0 0.0
        %5564 = vmatprep.subr.mxu0 0.0
        %5565 = vmatpush1.msra.mxu0 0.0
        %5566 = vmatprep.subr.mxu0 0.0
        %5567 = vmatpush1.msra.mxu0 0.0
        %5568 = vmatprep.subr.mxu0 0.0
        %5569 = vmatpush1.msra.mxu0 0.0
        %5570 = vmatprep.subr.mxu0 0.0
        %5571 = vmatpush1.msra.mxu0 0.0
        %5572 = vmatprep.subr.mxu0 0.0
        %5573 = vmatpush1.msra.mxu0 0.0
        %5574 = vmatprep.subr.mxu0 0.0
        %5575 = vmatpush1.msra.mxu0 0.0
        %5576 = vmatprep.subr.mxu0 0.0
        %5577 = vmatpush1.msra.mxu0 0.0
        %5578 = vmatprep.subr.mxu0 0.0
        %5579 = vmatpush1.msra.mxu0 0.0
        %5580 = vmatprep.subr.mxu0 0.0
        %5581 = vmatpush1.msra.mxu0 0.0
        %5582 = vmatprep.subr.mxu0 0.0
        %5583 = vmatpush1.msra.mxu0 0.0
        %5584 = vmatprep.subr.mxu0 0.0
        %5585 = vmatpush1.msra.mxu0 0.0
        %5586 = vmatprep.subr.mxu0 0.0
        %5587 = vmatpush1.msra.mxu0 0.0
        %5588 = vmatprep.subr.mxu0 0.0
        %5589 = vmatpush1.msra.mxu0 0.0
        %5590 = vmatprep.subr.mxu0 0.0
        %5591 = vmatpush1.msra.mxu0 0.0
        %5592 = vmatprep.mubr.f32.mxu0 0.0
        %5593 = vmatmul.mubr.f32.gmra.mrb[0].mxu0 %v4506
        %v5594 = vpop.f32.mrb[0].mxu0
        %v5595 = vadd.f32 %v4541, %v5594
        %v5596 = vpop.f32.mrb[0].mxu0
        %5597 = vmatprep.mubr.f32.mxu0 0.0
        %5598 = vmatmul.mubr.f32.gmra.mrb[0].mxu0 %v4507
        %v5599 = vpop.f32.mrb[0].mxu0
        %v5600 = vadd.f32 %v4546, %v5599
        %v5601 = vpop.f32.mrb[0].mxu0
        %5602 = vmatprep.mubr.f32.mxu0 0.0
        %5603 = vmatmul.mubr.f32.gmra.mrb[0].mxu0 %v4508
        %v5604 = vpop.f32.mrb[0].mxu0
        %v5605 = vadd.f32 %v4551, %v5604
        %v5606 = vpop.f32.mrb[0].mxu0
        %5607 = vmatprep.mubr.f32.mxu0 0.0
        %5608 = vmatmul.mubr.f32.gmra.mrb[0].mxu0 %v4509
        %v5609 = vpop.f32.mrb[0].mxu0
        %v5610 = vadd.f32 %v4556, %v5609
        %v5611 = vpop.f32.mrb[0].mxu0
        %5612 = vmatprep.mubr.f32.mxu0 0.0
        %5613 = vmatmul.mubr.f32.gmra.mrb[0].mxu0 %v4510
        %v5614 = vpop.f32.mrb[0].mxu0
        %v5615 = vadd.f32 %v4561, %v5614
        %v5616 = vpop.f32.mrb[0].mxu0
        %5617 = vmatprep.mubr.f32.mxu0 0.0
        %5618 = vmatmul.mubr.f32.gmra.mrb[0].mxu0 %v4511
        %v5619 = vpop.f32.mrb[0].mxu0
        %v5620 = vadd.f32 %v4566, %v5619
        %v5621 = vpop.f32.mrb[0].mxu0
        %5622 = vmatprep.mubr.f32.mxu0 0.0
        %5623 = vmatmul.mubr.f32.gmra.mrb[0].mxu0 %v4512
        %v5624 = vpop.f32.mrb[0].mxu0
        %v5625 = vadd.f32 %v4571, %v5624
        %v5626 = vpop.f32.mrb[0].mxu0
        %5627 = vmatprep.mubr.f32.mxu0 0.0
        %5628 = vmatmul.mubr.f32.gmra.mrb[0].mxu0 %v4513
        %v5629 = vpop.f32.mrb[0].mxu0
        %v5630 = vadd.f32 %v4576, %v5629
        %v5631 = vpop.f32.mrb[0].mxu0
        %5632 = vmatprep.mubr.f32.mxu0 0.0
        %5633 = vmatmul.mubr.f32.gmra.mrb[0].mxu0 %v4514
        %v5634 = vpop.f32.mrb[0].mxu0
        %v5635 = vadd.f32 %v4581, %v5634
        %v5636 = vpop.f32.mrb[0].mxu0
        %5637 = vmatprep.mubr.f32.mxu0 0.0
        %5638 = vmatmul.mubr.f32.gmra.mrb[0].mxu0 %v4515
        %v5639 = vpop.f32.mrb[0].mxu0
        %v5640 = vadd.f32 %v4586, %v5639
        %v5641 = vpop.f32.mrb[0].mxu0
        %5642 = vmatprep.mubr.f32.mxu0 0.0
        %5643 = vmatmul.mubr.f32.gmra.mrb[0].mxu0 %v4516
        %v5644 = vpop.f32.mrb[0].mxu0
        %v5645 = vadd.f32 %v4591, %v5644
        %v5646 = vpop.f32.mrb[0].mxu0
        %5647 = vmatprep.mubr.f32.mxu0 0.0
        %5648 = vmatmul.mubr.f32.gmra.mrb[0].mxu0 %v4517
        %v5649 = vpop.f32.mrb[0].mxu0
        %v5650 = vadd.f32 %v4596, %v5649
        %v5651 = vpop.f32.mrb[0].mxu0
        %5652 = vmatprep.mubr.f32.mxu0 0.0
        %5653 = vmatmul.mubr.f32.gmra.mrb[0].mxu0 %v4518
        %v5654 = vpop.f32.mrb[0].mxu0
        %v5655 = vadd.f32 %v4601, %v5654
        %v5656 = vpop.f32.mrb[0].mxu0
        %5657 = vmatprep.mubr.f32.mxu0 0.0
        %5658 = vmatmul.mubr.f32.gmra.mrb[0].mxu0 %v4519
        %v5659 = vpop.f32.mrb[0].mxu0
        %v5660 = vadd.f32 %v4606, %v5659
        %v5661 = vpop.f32.mrb[0].mxu0
        %5662 = vmatprep.mubr.f32.mxu0 0.0
        %5663 = vmatmul.mubr.f32.gmra.mrb[0].mxu0 %v4520
        %v5664 = vpop.f32.mrb[0].mxu0
        %v5665 = vadd.f32 %v4611, %v5664
        %v5666 = vpop.f32.mrb[0].mxu0
        %5667 = vmatprep.mubr.f32.mxu0 0.0
        %5668 = vmatmul.mubr.f32.gmra.mrb[0].mxu0 %v4521
        %v5669 = vpop.f32.mrb[0].mxu0
        %v5670 = vadd.f32 %v4616, %v5669
        %v5671 = vpop.f32.mrb[0].mxu0
        %5672 = vdwg.mxu0
        %v5673 = vmax.f32 %v5595, 0.0
        %v5674 = vmax.f32 %v5600, 0.0
        %v5675 = vmax.f32 %v5605, 0.0
        %v5676 = vmax.f32 %v5610, 0.0
        %v5677 = vmax.f32 %v5615, 0.0
        %v5678 = vmax.f32 %v5620, 0.0
        %v5679 = vmax.f32 %v5625, 0.0
        %v5680 = vmax.f32 %v5630, 0.0
        %v5681 = vmax.f32 %v5635, 0.0
        %v5682 = vmax.f32 %v5640, 0.0
        %v5683 = vmax.f32 %v5645, 0.0
        %v5684 = vmax.f32 %v5650, 0.0
        %v5685 = vmax.f32 %v5655, 0.0
        %v5686 = vmax.f32 %v5660, 0.0
        %v5687 = vmax.f32 %v5665, 0.0
        %v5688 = vmax.f32 %v5670, 0.0
        %5689 = vmatprep.subr.mxu0 0.0
        %5690 = vmatpush1.msra.mxu0 %v5673
        %5691 = vmatprep.subr.mxu0 0.0
        %5692 = vmatpush1.msra.mxu0 %v5674
        %5693 = vmatprep.subr.mxu0 0.0
        %5694 = vmatpush1.msra.mxu0 %v5675
        %5695 = vmatprep.subr.mxu0 0.0
        %5696 = vmatpush1.msra.mxu0 %v5676
        %5697 = vmatprep.subr.mxu0 0.0
        %5698 = vmatpush1.msra.mxu0 %v5677
        %5699 = vmatprep.subr.mxu0 0.0
        %5700 = vmatpush1.msra.mxu0 %v5678
        %5701 = vmatprep.subr.mxu0 0.0
        %5702 = vmatpush1.msra.mxu0 %v5679
        %5703 = vmatprep.subr.mxu0 0.0
        %5704 = vmatpush1.msra.mxu0 %v5680
        %5705 = vmatprep.subr.mxu0 0.0
        %5706 = vmatpush1.msra.mxu0 %v5681
        %5707 = vmatprep.subr.mxu0 0.0
        %5708 = vmatpush1.msra.mxu0 %v5682
        %5709 = vmatprep.subr.mxu0 0.0
        %5710 = vmatpush1.msra.mxu0 %v5683
        %5711 = vmatprep.subr.mxu0 0.0
        %5712 = vmatpush1.msra.mxu0 %v5684
        %5713 = vmatprep.subr.mxu0 0.0
        %5714 = vmatpush1.msra.mxu0 %v5685
        %5715 = vmatprep.subr.mxu0 0.0
        %5716 = vmatpush1.msra.mxu0 %v5686
        %5717 = vmatprep.subr.mxu0 0.0
        %5718 = vmatpush1.msra.mxu0 %v5687
        %5719 = vmatprep.subr.mxu0 0.0
        %5720 = vmatpush1.msra.mxu0 %v5688
        %5721 = vmatprep.subr.mxu0 0.0
        %5722 = vmatpush1.msra.mxu0 0.0
        %5723 = vmatprep.subr.mxu0 0.0
        %5724 = vmatpush1.msra.mxu0 0.0
        %5725 = vmatprep.subr.mxu0 0.0
        %5726 = vmatpush1.msra.mxu0 0.0
        %5727 = vmatprep.subr.mxu0 0.0
        %5728 = vmatpush1.msra.mxu0 0.0
        %5729 = vmatprep.subr.mxu0 0.0
        %5730 = vmatpush1.msra.mxu0 0.0
        %5731 = vmatprep.subr.mxu0 0.0
        %5732 = vmatpush1.msra.mxu0 0.0
        %5733 = vmatprep.subr.mxu0 0.0
        %5734 = vmatpush1.msra.mxu0 0.0
        %5735 = vmatprep.subr.mxu0 0.0
        %5736 = vmatpush1.msra.mxu0 0.0
        %5737 = vmatprep.subr.mxu0 0.0
        %5738 = vmatpush1.msra.mxu0 0.0
        %5739 = vmatprep.subr.mxu0 0.0
        %5740 = vmatpush1.msra.mxu0 0.0
        %5741 = vmatprep.subr.mxu0 0.0
        %5742 = vmatpush1.msra.mxu0 0.0
        %5743 = vmatprep.subr.mxu0 0.0
        %5744 = vmatpush1.msra.mxu0 0.0
        %5745 = vmatprep.subr.mxu0 0.0
        %5746 = vmatpush1.msra.mxu0 0.0
        %5747 = vmatprep.subr.mxu0 0.0
        %5748 = vmatpush1.msra.mxu0 0.0
        %5749 = vmatprep.subr.mxu0 0.0
        %5750 = vmatpush1.msra.mxu0 0.0
        %5751 = vmatprep.subr.mxu0 0.0
        %5752 = vmatpush1.msra.mxu0 0.0
        %5753 = vmatprep.mubr.f32.mxu0 0.0
        %5754 = vmatmul.mubr.f32.gmra.mrb[0].mxu0 %v426
        %v5755 = vpop.f32.mrb[0].mxu0
        %v5756 = vadd.f32 %v1011, %v5755
        %v5757 = vpop.f32.mrb[0].mxu0
        %5758 = vdwg.mxu0
        %v5759 = vmul.f32 %v5324, 0.025
        %v5760 = vadd.f32 %v5759, %v5756
        %v5761 = vmul.f32 %v5760, 0.0625
        %v5762 = vadd.f32 %v5324, %v5761
        %v5763 = vrsqrt.pop %v5339
        %v5764 = vmul.f32 %v5339, %v5763
        %vm5765 = vcmp.eq.f32.partialorder %v5339, inf
        %v5766 = vsel %vm5765, %v5339, %v5764
        %vm5767 = vcmp.eq.f32.partialorder %v5339, 0.0
        %v5768 = vand.u32 %v5339, 2147483648
        %v5769 = vsel %vm5767, %v5768, %v5766
        %v5771 = vrot.slane %v5769, 2
        %v5773 = vmul.f32 %v5324, %v5771
        %v5775 = vrot.slane %v5756, 1
        %v5777 = vadd.f32 %v5773, %v5775
        %v5778 = vmul.f32 %v5777, %v5342
        %v5779 = vadd.f32 %v5762, %v5778
        %v5780 = vsub.f32 0.04, %v5339
        %v5781 = vmul.f32 %v5780, 1.5
        %v5782 = vadd.f32 %v5781, %v5756
        %v5783 = vmul.f32 %v5782, 0.0625
        %v5784 = vadd.f32 %v5339, %v5783
        %v5785 = vadd.f32 %v5756, 0.3
        %v5787 = vrot.slane %v5342, 6
        %v5789 = vmul.f32 %v5785, %v5787
        %v5791 = vrot.slane %v5789, 1
        %v5793 = vadd.f32 %v5784, %v5791
        %v5794 = vmax.f32 %v5793, 0.01
        %s5795 = scalar_lea.vmem %s371, 22 [#allocation2]
        %v5796 = vld [vmem:[%s5795] sm:$0x3]
        %v5797 = vmul.f32 %v5796, 0.25
        %v5798 = vlaneseq
        %v5799 = vshrl.u32 %v5798, 7
        %v5800 = vsub.s32 0, %v5799
        %v5801 = vrot.slane %v5779, %v5800
        %v5802 = vmul.f32 %v434, %v5801
        %v5803 = vmul.f32 %v439, %v5801
        %v5804 = vmul.f32 %v444, %v5801
        %v5805 = vmul.f32 %v449, %v5801
        %v5806 = vmul.f32 %v454, %v5801
        %v5807 = vmul.f32 %v459, %v5801
        %v5808 = vmul.f32 %v464, %v5801
        %v5809 = vmul.f32 %v469, %v5801
        %v5810 = vmul.f32 %v474, %v5801
        %v5811 = vmul.f32 %v479, %v5801
        %v5812 = vmul.f32 %v484, %v5801
        %v5813 = vmul.f32 %v489, %v5801
        %v5814 = vmul.f32 %v494, %v5801
        %v5815 = vmul.f32 %v499, %v5801
        %v5816 = vmul.f32 %v504, %v5801
        %v5817 = vmul.f32 %v509, %v5801
        %v5818 = vlaneseq
        %v5819 = vshrl.u32 %v5818, 7
        %v5820 = vsub.s32 2, %v5819
        %v5821 = vrot.slane %v5794, %v5820
        %v5822 = vmul.f32 %v513, %v5821
        %v5823 = vmul.f32 %v517, %v5821
        %v5824 = vmul.f32 %v521, %v5821
        %v5825 = vmul.f32 %v525, %v5821
        %v5826 = vmul.f32 %v529, %v5821
        %v5827 = vmul.f32 %v533, %v5821
        %v5828 = vmul.f32 %v537, %v5821
        %v5829 = vmul.f32 %v541, %v5821
        %v5830 = vmul.f32 %v545, %v5821
        %v5831 = vmul.f32 %v549, %v5821
        %v5832 = vmul.f32 %v553, %v5821
        %v5833 = vmul.f32 %v557, %v5821
        %v5834 = vmul.f32 %v561, %v5821
        %v5835 = vmul.f32 %v565, %v5821
        %v5836 = vmul.f32 %v569, %v5821
        %v5837 = vmul.f32 %v573, %v5821
        %v5838 = vadd.f32 %v5802, %v5822
        %v5839 = vadd.f32 %v5803, %v5823
        %v5840 = vadd.f32 %v5804, %v5824
        %v5841 = vadd.f32 %v5805, %v5825
        %v5842 = vadd.f32 %v5806, %v5826
        %v5843 = vadd.f32 %v5807, %v5827
        %v5844 = vadd.f32 %v5808, %v5828
        %v5845 = vadd.f32 %v5809, %v5829
        %v5846 = vadd.f32 %v5810, %v5830
        %v5847 = vadd.f32 %v5811, %v5831
        %v5848 = vadd.f32 %v5812, %v5832
        %v5849 = vadd.f32 %v5813, %v5833
        %v5850 = vadd.f32 %v5814, %v5834
        %v5851 = vadd.f32 %v5815, %v5835
        %v5852 = vadd.f32 %v5816, %v5836
        %v5853 = vadd.f32 %v5817, %v5837
        %s5854 = scalar_lea.vmem %s1, 1408
        %v5855 = vld [vmem:[%s5854] sm:$0xff]
        %v5856 = vld [vmem:[%s5854 + $0x8] sm:$0xff]
        %v5857 = vld [vmem:[%s5854 + $0x10] sm:$0xff]
        %v5858 = vld [vmem:[%s5854 + $0x18] sm:$0xff]
        %v5859 = vld [vmem:[%s5854 + $0x20] sm:$0xff]
        %v5860 = vld [vmem:[%s5854 + $0x28] sm:$0xff]
        %v5861 = vld [vmem:[%s5854 + $0x30] sm:$0xff]
        %v5862 = vld [vmem:[%s5854 + $0x38] sm:$0xff]
        %v5863 = vld [vmem:[%s5854 + $0x40] sm:$0xff]
        %v5864 = vld [vmem:[%s5854 + $0x48] sm:$0xff]
        %v5865 = vld [vmem:[%s5854 + $0x50] sm:$0xff]
        %v5866 = vld [vmem:[%s5854 + $0x58] sm:$0xff]
        %v5867 = vld [vmem:[%s5854 + $0x60] sm:$0xff]
        %v5868 = vld [vmem:[%s5854 + $0x68] sm:$0xff]
        %v5869 = vld [vmem:[%s5854 + $0x70] sm:$0xff]
        %v5870 = vld [vmem:[%s5854 + $0x78] sm:$0xff]
        %5872 = vset.pattern.permute.xlu0 0
        %5873 = vperm.xlu0 %5872, %v5855
        %v5874 = vpop.permute.xlu0 %5873
        %5877 = vset.pattern.permute.xlu0 0
        %5878 = vperm.xlu0 %5877, %v5856
        %v5879 = vpop.permute.xlu0 %5878
        %5882 = vset.pattern.permute.xlu0 0
        %5883 = vperm.xlu0 %5882, %v5857
        %v5884 = vpop.permute.xlu0 %5883
        %5887 = vset.pattern.permute.xlu0 0
        %5888 = vperm.xlu0 %5887, %v5858
        %v5889 = vpop.permute.xlu0 %5888
        %5892 = vset.pattern.permute.xlu0 0
        %5893 = vperm.xlu0 %5892, %v5859
        %v5894 = vpop.permute.xlu0 %5893
        %5897 = vset.pattern.permute.xlu0 0
        %5898 = vperm.xlu0 %5897, %v5860
        %v5899 = vpop.permute.xlu0 %5898
        %5902 = vset.pattern.permute.xlu0 0
        %5903 = vperm.xlu0 %5902, %v5861
        %v5904 = vpop.permute.xlu0 %5903
        %5907 = vset.pattern.permute.xlu0 0
        %5908 = vperm.xlu0 %5907, %v5862
        %v5909 = vpop.permute.xlu0 %5908
        %5912 = vset.pattern.permute.xlu0 0
        %5913 = vperm.xlu0 %5912, %v5863
        %v5914 = vpop.permute.xlu0 %5913
        %5917 = vset.pattern.permute.xlu0 0
        %5918 = vperm.xlu0 %5917, %v5864
        %v5919 = vpop.permute.xlu0 %5918
        %5922 = vset.pattern.permute.xlu0 0
        %5923 = vperm.xlu0 %5922, %v5865
        %v5924 = vpop.permute.xlu0 %5923
        %5927 = vset.pattern.permute.xlu0 0
        %5928 = vperm.xlu0 %5927, %v5866
        %v5929 = vpop.permute.xlu0 %5928
        %5932 = vset.pattern.permute.xlu0 0
        %5933 = vperm.xlu0 %5932, %v5867
        %v5934 = vpop.permute.xlu0 %5933
        %5937 = vset.pattern.permute.xlu0 0
        %5938 = vperm.xlu0 %5937, %v5868
        %v5939 = vpop.permute.xlu0 %5938
        %5942 = vset.pattern.permute.xlu0 0
        %5943 = vperm.xlu0 %5942, %v5869
        %v5944 = vpop.permute.xlu0 %5943
        %5947 = vset.pattern.permute.xlu0 0
        %5948 = vperm.xlu0 %5947, %v5870
        %v5949 = vpop.permute.xlu0 %5948
        %v5951 = vadd.f32 %v5838, %v5874
        %v5952 = vadd.f32 %v5839, %v5879
        %v5953 = vadd.f32 %v5840, %v5884
        %v5954 = vadd.f32 %v5841, %v5889
        %v5955 = vadd.f32 %v5842, %v5894
        %v5956 = vadd.f32 %v5843, %v5899
        %v5957 = vadd.f32 %v5844, %v5904
        %v5958 = vadd.f32 %v5845, %v5909
        %v5959 = vadd.f32 %v5846, %v5914
        %v5960 = vadd.f32 %v5847, %v5919
        %v5961 = vadd.f32 %v5848, %v5924
        %v5962 = vadd.f32 %v5849, %v5929
        %v5963 = vadd.f32 %v5850, %v5934
        %v5964 = vadd.f32 %v5851, %v5939
        %v5965 = vadd.f32 %v5852, %v5944
        %v5966 = vadd.f32 %v5853, %v5949
        %v5967 = vmax.f32 %v5951, 0.0
        %v5968 = vmax.f32 %v5952, 0.0
        %v5969 = vmax.f32 %v5953, 0.0
        %v5970 = vmax.f32 %v5954, 0.0
        %v5971 = vmax.f32 %v5955, 0.0
        %v5972 = vmax.f32 %v5956, 0.0
        %v5973 = vmax.f32 %v5957, 0.0
        %v5974 = vmax.f32 %v5958, 0.0
        %v5975 = vmax.f32 %v5959, 0.0
        %v5976 = vmax.f32 %v5960, 0.0
        %v5977 = vmax.f32 %v5961, 0.0
        %v5978 = vmax.f32 %v5962, 0.0
        %v5979 = vmax.f32 %v5963, 0.0
        %v5980 = vmax.f32 %v5964, 0.0
        %v5981 = vmax.f32 %v5965, 0.0
        %v5982 = vmax.f32 %v5966, 0.0
        %5983 = vmatprep.subr.mxu0 0.0
        %5984 = vmatpush1.msra.mxu0 %v5967
        %5985 = vmatprep.subr.mxu0 0.0
        %5986 = vmatpush1.msra.mxu0 %v5968
        %5987 = vmatprep.subr.mxu0 0.0
        %5988 = vmatpush1.msra.mxu0 %v5969
        %5989 = vmatprep.subr.mxu0 0.0
        %5990 = vmatpush1.msra.mxu0 %v5970
        %5991 = vmatprep.subr.mxu0 0.0
        %5992 = vmatpush1.msra.mxu0 %v5971
        %5993 = vmatprep.subr.mxu0 0.0
        %5994 = vmatpush1.msra.mxu0 %v5972
        %5995 = vmatprep.subr.mxu0 0.0
        %5996 = vmatpush1.msra.mxu0 %v5973
        %5997 = vmatprep.subr.mxu0 0.0
        %5998 = vmatpush1.msra.mxu0 %v5974
        %5999 = vmatprep.subr.mxu0 0.0
        %6000 = vmatpush1.msra.mxu0 %v5975
        %6001 = vmatprep.subr.mxu0 0.0
        %6002 = vmatpush1.msra.mxu0 %v5976
        %6003 = vmatprep.subr.mxu0 0.0
        %6004 = vmatpush1.msra.mxu0 %v5977
        %6005 = vmatprep.subr.mxu0 0.0
        %6006 = vmatpush1.msra.mxu0 %v5978
        %6007 = vmatprep.subr.mxu0 0.0
        %6008 = vmatpush1.msra.mxu0 %v5979
        %6009 = vmatprep.subr.mxu0 0.0
        %6010 = vmatpush1.msra.mxu0 %v5980
        %6011 = vmatprep.subr.mxu0 0.0
        %6012 = vmatpush1.msra.mxu0 %v5981
        %6013 = vmatprep.subr.mxu0 0.0
        %6014 = vmatpush1.msra.mxu0 %v5982
        %6015 = vmatprep.subr.mxu0 0.0
        %6016 = vmatpush1.msra.mxu0 0.0
        %6017 = vmatprep.subr.mxu0 0.0
        %6018 = vmatpush1.msra.mxu0 0.0
        %6019 = vmatprep.subr.mxu0 0.0
        %6020 = vmatpush1.msra.mxu0 0.0
        %6021 = vmatprep.subr.mxu0 0.0
        %6022 = vmatpush1.msra.mxu0 0.0
        %6023 = vmatprep.subr.mxu0 0.0
        %6024 = vmatpush1.msra.mxu0 0.0
        %6025 = vmatprep.subr.mxu0 0.0
        %6026 = vmatpush1.msra.mxu0 0.0
        %6027 = vmatprep.subr.mxu0 0.0
        %6028 = vmatpush1.msra.mxu0 0.0
        %6029 = vmatprep.subr.mxu0 0.0
        %6030 = vmatpush1.msra.mxu0 0.0
        %6031 = vmatprep.subr.mxu0 0.0
        %6032 = vmatpush1.msra.mxu0 0.0
        %6033 = vmatprep.subr.mxu0 0.0
        %6034 = vmatpush1.msra.mxu0 0.0
        %6035 = vmatprep.subr.mxu0 0.0
        %6036 = vmatpush1.msra.mxu0 0.0
        %6037 = vmatprep.subr.mxu0 0.0
        %6038 = vmatpush1.msra.mxu0 0.0
        %6039 = vmatprep.subr.mxu0 0.0
        %6040 = vmatpush1.msra.mxu0 0.0
        %6041 = vmatprep.subr.mxu0 0.0
        %6042 = vmatpush1.msra.mxu0 0.0
        %6043 = vmatprep.subr.mxu0 0.0
        %6044 = vmatpush1.msra.mxu0 0.0
        %6045 = vmatprep.subr.mxu0 0.0
        %6046 = vmatpush1.msra.mxu0 0.0
        %6047 = vmatprep.mubr.f32.mxu0 0.0
        %6048 = vmatmul.mubr.f32.gmra.mrb[0].mxu0 %v4506
        %v6049 = vpop.f32.mrb[0].mxu0
        %v6050 = vadd.f32 %v4541, %v6049
        %v6051 = vpop.f32.mrb[0].mxu0
        %6052 = vmatprep.mubr.f32.mxu0 0.0
        %6053 = vmatmul.mubr.f32.gmra.mrb[0].mxu0 %v4507
        %v6054 = vpop.f32.mrb[0].mxu0
        %v6055 = vadd.f32 %v4546, %v6054
        %v6056 = vpop.f32.mrb[0].mxu0
        %6057 = vmatprep.mubr.f32.mxu0 0.0
        %6058 = vmatmul.mubr.f32.gmra.mrb[0].mxu0 %v4508
        %v6059 = vpop.f32.mrb[0].mxu0
        %v6060 = vadd.f32 %v4551, %v6059
        %v6061 = vpop.f32.mrb[0].mxu0
        %6062 = vmatprep.mubr.f32.mxu0 0.0
        %6063 = vmatmul.mubr.f32.gmra.mrb[0].mxu0 %v4509
        %v6064 = vpop.f32.mrb[0].mxu0
        %v6065 = vadd.f32 %v4556, %v6064
        %v6066 = vpop.f32.mrb[0].mxu0
        %6067 = vmatprep.mubr.f32.mxu0 0.0
        %6068 = vmatmul.mubr.f32.gmra.mrb[0].mxu0 %v4510
        %v6069 = vpop.f32.mrb[0].mxu0
        %v6070 = vadd.f32 %v4561, %v6069
        %v6071 = vpop.f32.mrb[0].mxu0
        %6072 = vmatprep.mubr.f32.mxu0 0.0
        %6073 = vmatmul.mubr.f32.gmra.mrb[0].mxu0 %v4511
        %v6074 = vpop.f32.mrb[0].mxu0
        %v6075 = vadd.f32 %v4566, %v6074
        %v6076 = vpop.f32.mrb[0].mxu0
        %6077 = vmatprep.mubr.f32.mxu0 0.0
        %6078 = vmatmul.mubr.f32.gmra.mrb[0].mxu0 %v4512
        %v6079 = vpop.f32.mrb[0].mxu0
        %v6080 = vadd.f32 %v4571, %v6079
        %v6081 = vpop.f32.mrb[0].mxu0
        %6082 = vmatprep.mubr.f32.mxu0 0.0
        %6083 = vmatmul.mubr.f32.gmra.mrb[0].mxu0 %v4513
        %v6084 = vpop.f32.mrb[0].mxu0
        %v6085 = vadd.f32 %v4576, %v6084
        %v6086 = vpop.f32.mrb[0].mxu0
        %6087 = vmatprep.mubr.f32.mxu0 0.0
        %6088 = vmatmul.mubr.f32.gmra.mrb[0].mxu0 %v4514
        %v6089 = vpop.f32.mrb[0].mxu0
        %v6090 = vadd.f32 %v4581, %v6089
        %v6091 = vpop.f32.mrb[0].mxu0
        %6092 = vmatprep.mubr.f32.mxu0 0.0
        %6093 = vmatmul.mubr.f32.gmra.mrb[0].mxu0 %v4515
        %v6094 = vpop.f32.mrb[0].mxu0
        %v6095 = vadd.f32 %v4586, %v6094
        %v6096 = vpop.f32.mrb[0].mxu0
        %6097 = vmatprep.mubr.f32.mxu0 0.0
        %6098 = vmatmul.mubr.f32.gmra.mrb[0].mxu0 %v4516
        %v6099 = vpop.f32.mrb[0].mxu0
        %v6100 = vadd.f32 %v4591, %v6099
        %v6101 = vpop.f32.mrb[0].mxu0
        %6102 = vmatprep.mubr.f32.mxu0 0.0
        %6103 = vmatmul.mubr.f32.gmra.mrb[0].mxu0 %v4517
        %v6104 = vpop.f32.mrb[0].mxu0
        %v6105 = vadd.f32 %v4596, %v6104
        %v6106 = vpop.f32.mrb[0].mxu0
        %6107 = vmatprep.mubr.f32.mxu0 0.0
        %6108 = vmatmul.mubr.f32.gmra.mrb[0].mxu0 %v4518
        %v6109 = vpop.f32.mrb[0].mxu0
        %v6110 = vadd.f32 %v4601, %v6109
        %v6111 = vpop.f32.mrb[0].mxu0
        %6112 = vmatprep.mubr.f32.mxu0 0.0
        %6113 = vmatmul.mubr.f32.gmra.mrb[0].mxu0 %v4519
        %v6114 = vpop.f32.mrb[0].mxu0
        %v6115 = vadd.f32 %v4606, %v6114
        %v6116 = vpop.f32.mrb[0].mxu0
        %6117 = vmatprep.mubr.f32.mxu0 0.0
        %6118 = vmatmul.mubr.f32.gmra.mrb[0].mxu0 %v4520
        %v6119 = vpop.f32.mrb[0].mxu0
        %v6120 = vadd.f32 %v4611, %v6119
        %v6121 = vpop.f32.mrb[0].mxu0
        %6122 = vmatprep.mubr.f32.mxu0 0.0
        %6123 = vmatmul.mubr.f32.gmra.mrb[0].mxu0 %v4521
        %v6124 = vpop.f32.mrb[0].mxu0
        %v6125 = vadd.f32 %v4616, %v6124
        %v6126 = vpop.f32.mrb[0].mxu0
        %6127 = vdwg.mxu0
        %v6128 = vmax.f32 %v6050, 0.0
        %v6129 = vmax.f32 %v6055, 0.0
        %v6130 = vmax.f32 %v6060, 0.0
        %v6131 = vmax.f32 %v6065, 0.0
        %v6132 = vmax.f32 %v6070, 0.0
        %v6133 = vmax.f32 %v6075, 0.0
        %v6134 = vmax.f32 %v6080, 0.0
        %v6135 = vmax.f32 %v6085, 0.0
        %v6136 = vmax.f32 %v6090, 0.0
        %v6137 = vmax.f32 %v6095, 0.0
        %v6138 = vmax.f32 %v6100, 0.0
        %v6139 = vmax.f32 %v6105, 0.0
        %v6140 = vmax.f32 %v6110, 0.0
        %v6141 = vmax.f32 %v6115, 0.0
        %v6142 = vmax.f32 %v6120, 0.0
        %v6143 = vmax.f32 %v6125, 0.0
        %6144 = vmatprep.subr.mxu0 0.0
        %6145 = vmatpush1.msra.mxu0 %v6128
        %6146 = vmatprep.subr.mxu0 0.0
        %6147 = vmatpush1.msra.mxu0 %v6129
        %6148 = vmatprep.subr.mxu0 0.0
        %6149 = vmatpush1.msra.mxu0 %v6130
        %6150 = vmatprep.subr.mxu0 0.0
        %6151 = vmatpush1.msra.mxu0 %v6131
        %6152 = vmatprep.subr.mxu0 0.0
        %6153 = vmatpush1.msra.mxu0 %v6132
        %6154 = vmatprep.subr.mxu0 0.0
        %6155 = vmatpush1.msra.mxu0 %v6133
        %6156 = vmatprep.subr.mxu0 0.0
        %6157 = vmatpush1.msra.mxu0 %v6134
        %6158 = vmatprep.subr.mxu0 0.0
        %6159 = vmatpush1.msra.mxu0 %v6135
        %6160 = vmatprep.subr.mxu0 0.0
        %6161 = vmatpush1.msra.mxu0 %v6136
        %6162 = vmatprep.subr.mxu0 0.0
        %6163 = vmatpush1.msra.mxu0 %v6137
        %6164 = vmatprep.subr.mxu0 0.0
        %6165 = vmatpush1.msra.mxu0 %v6138
        %6166 = vmatprep.subr.mxu0 0.0
        %6167 = vmatpush1.msra.mxu0 %v6139
        %6168 = vmatprep.subr.mxu0 0.0
        %6169 = vmatpush1.msra.mxu0 %v6140
        %6170 = vmatprep.subr.mxu0 0.0
        %6171 = vmatpush1.msra.mxu0 %v6141
        %6172 = vmatprep.subr.mxu0 0.0
        %6173 = vmatpush1.msra.mxu0 %v6142
        %6174 = vmatprep.subr.mxu0 0.0
        %6175 = vmatpush1.msra.mxu0 %v6143
        %6176 = vmatprep.subr.mxu0 0.0
        %6177 = vmatpush1.msra.mxu0 0.0
        %6178 = vmatprep.subr.mxu0 0.0
        %6179 = vmatpush1.msra.mxu0 0.0
        %6180 = vmatprep.subr.mxu0 0.0
        %6181 = vmatpush1.msra.mxu0 0.0
        %6182 = vmatprep.subr.mxu0 0.0
        %6183 = vmatpush1.msra.mxu0 0.0
        %6184 = vmatprep.subr.mxu0 0.0
        %6185 = vmatpush1.msra.mxu0 0.0
        %6186 = vmatprep.subr.mxu0 0.0
        %6187 = vmatpush1.msra.mxu0 0.0
        %6188 = vmatprep.subr.mxu0 0.0
        %6189 = vmatpush1.msra.mxu0 0.0
        %6190 = vmatprep.subr.mxu0 0.0
        %6191 = vmatpush1.msra.mxu0 0.0
        %6192 = vmatprep.subr.mxu0 0.0
        %6193 = vmatpush1.msra.mxu0 0.0
        %6194 = vmatprep.subr.mxu0 0.0
        %6195 = vmatpush1.msra.mxu0 0.0
        %6196 = vmatprep.subr.mxu0 0.0
        %6197 = vmatpush1.msra.mxu0 0.0
        %6198 = vmatprep.subr.mxu0 0.0
        %6199 = vmatpush1.msra.mxu0 0.0
        %6200 = vmatprep.subr.mxu0 0.0
        %6201 = vmatpush1.msra.mxu0 0.0
        %6202 = vmatprep.subr.mxu0 0.0
        %6203 = vmatpush1.msra.mxu0 0.0
        %6204 = vmatprep.subr.mxu0 0.0
        %6205 = vmatpush1.msra.mxu0 0.0
        %6206 = vmatprep.subr.mxu0 0.0
        %6207 = vmatpush1.msra.mxu0 0.0
        %6208 = vmatprep.mubr.f32.mxu0 0.0
        %6209 = vmatmul.mubr.f32.gmra.mrb[0].mxu0 %v426
        %v6210 = vpop.f32.mrb[0].mxu0
        %v6211 = vadd.f32 %v1011, %v6210
        %v6212 = vpop.f32.mrb[0].mxu0
        %6213 = vdwg.mxu0
        %v6214 = vmul.f32 %v5779, 0.025
        %v6215 = vadd.f32 %v6214, %v6211
        %v6216 = vmul.f32 %v6215, 0.0625
        %v6217 = vadd.f32 %v5779, %v6216
        %v6218 = vrsqrt.pop %v5794
        %v6219 = vmul.f32 %v5794, %v6218
        %vm6220 = vcmp.eq.f32.partialorder %v5794, inf
        %v6221 = vsel %vm6220, %v5794, %v6219
        %vm6222 = vcmp.eq.f32.partialorder %v5794, 0.0
        %v6223 = vand.u32 %v5794, 2147483648
        %v6224 = vsel %vm6222, %v6223, %v6221
        %v6226 = vrot.slane %v6224, 2
        %v6228 = vmul.f32 %v5779, %v6226
        %v6230 = vrot.slane %v6211, 1
        %v6232 = vadd.f32 %v6228, %v6230
        %v6233 = vmul.f32 %v6232, %v5797
        %v6234 = vadd.f32 %v6217, %v6233
        %v6235 = vsub.f32 0.04, %v5794
        %v6236 = vmul.f32 %v6235, 1.5
        %v6237 = vadd.f32 %v6236, %v6211
        %v6238 = vmul.f32 %v6237, 0.0625
        %v6239 = vadd.f32 %v5794, %v6238
        %v6240 = vadd.f32 %v6211, 0.3
        %v6242 = vrot.slane %v5797, 6
        %v6244 = vmul.f32 %v6240, %v6242
        %v6246 = vrot.slane %v6244, 1
        %v6248 = vadd.f32 %v6239, %v6246
        %v6249 = vmax.f32 %v6248, 0.01
        %s6250 = scalar_lea.vmem %s371, 24 [#allocation2]
        %v6251 = vld [vmem:[%s6250] sm:$0x3]
        %v6252 = vmul.f32 %v6251, 0.25
        %v6253 = vlaneseq
        %v6254 = vshrl.u32 %v6253, 7
        %v6255 = vsub.s32 0, %v6254
        %v6256 = vrot.slane %v6234, %v6255
        %v6257 = vmul.f32 %v434, %v6256
        %v6258 = vmul.f32 %v439, %v6256
        %v6259 = vmul.f32 %v444, %v6256
        %v6260 = vmul.f32 %v449, %v6256
        %v6261 = vmul.f32 %v454, %v6256
        %v6262 = vmul.f32 %v459, %v6256
        %v6263 = vmul.f32 %v464, %v6256
        %v6264 = vmul.f32 %v469, %v6256
        %v6265 = vmul.f32 %v474, %v6256
        %v6266 = vmul.f32 %v479, %v6256
        %v6267 = vmul.f32 %v484, %v6256
        %v6268 = vmul.f32 %v489, %v6256
        %v6269 = vmul.f32 %v494, %v6256
        %v6270 = vmul.f32 %v499, %v6256
        %v6271 = vmul.f32 %v504, %v6256
        %v6272 = vmul.f32 %v509, %v6256
        %v6273 = vlaneseq
        %v6274 = vshrl.u32 %v6273, 7
        %v6275 = vsub.s32 2, %v6274
        %v6276 = vrot.slane %v6249, %v6275
        %v6277 = vmul.f32 %v513, %v6276
        %v6278 = vmul.f32 %v517, %v6276
        %v6279 = vmul.f32 %v521, %v6276
        %v6280 = vmul.f32 %v525, %v6276
        %v6281 = vmul.f32 %v529, %v6276
        %v6282 = vmul.f32 %v533, %v6276
        %v6283 = vmul.f32 %v537, %v6276
        %v6284 = vmul.f32 %v541, %v6276
        %v6285 = vmul.f32 %v545, %v6276
        %v6286 = vmul.f32 %v549, %v6276
        %v6287 = vmul.f32 %v553, %v6276
        %v6288 = vmul.f32 %v557, %v6276
        %v6289 = vmul.f32 %v561, %v6276
        %v6290 = vmul.f32 %v565, %v6276
        %v6291 = vmul.f32 %v569, %v6276
        %v6292 = vmul.f32 %v573, %v6276
        %v6293 = vadd.f32 %v6257, %v6277
        %v6294 = vadd.f32 %v6258, %v6278
        %v6295 = vadd.f32 %v6259, %v6279
        %v6296 = vadd.f32 %v6260, %v6280
        %v6297 = vadd.f32 %v6261, %v6281
        %v6298 = vadd.f32 %v6262, %v6282
        %v6299 = vadd.f32 %v6263, %v6283
        %v6300 = vadd.f32 %v6264, %v6284
        %v6301 = vadd.f32 %v6265, %v6285
        %v6302 = vadd.f32 %v6266, %v6286
        %v6303 = vadd.f32 %v6267, %v6287
        %v6304 = vadd.f32 %v6268, %v6288
        %v6305 = vadd.f32 %v6269, %v6289
        %v6306 = vadd.f32 %v6270, %v6290
        %v6307 = vadd.f32 %v6271, %v6291
        %v6308 = vadd.f32 %v6272, %v6292
        %s6309 = scalar_lea.vmem %s1, 1536
        %v6310 = vld [vmem:[%s6309] sm:$0xff]
        %v6311 = vld [vmem:[%s6309 + $0x8] sm:$0xff]
        %v6312 = vld [vmem:[%s6309 + $0x10] sm:$0xff]
        %v6313 = vld [vmem:[%s6309 + $0x18] sm:$0xff]
        %v6314 = vld [vmem:[%s6309 + $0x20] sm:$0xff]
        %v6315 = vld [vmem:[%s6309 + $0x28] sm:$0xff]
        %v6316 = vld [vmem:[%s6309 + $0x30] sm:$0xff]
        %v6317 = vld [vmem:[%s6309 + $0x38] sm:$0xff]
        %v6318 = vld [vmem:[%s6309 + $0x40] sm:$0xff]
        %v6319 = vld [vmem:[%s6309 + $0x48] sm:$0xff]
        %v6320 = vld [vmem:[%s6309 + $0x50] sm:$0xff]
        %v6321 = vld [vmem:[%s6309 + $0x58] sm:$0xff]
        %v6322 = vld [vmem:[%s6309 + $0x60] sm:$0xff]
        %v6323 = vld [vmem:[%s6309 + $0x68] sm:$0xff]
        %v6324 = vld [vmem:[%s6309 + $0x70] sm:$0xff]
        %v6325 = vld [vmem:[%s6309 + $0x78] sm:$0xff]
        %6327 = vset.pattern.permute.xlu0 0
        %6328 = vperm.xlu0 %6327, %v6310
        %v6329 = vpop.permute.xlu0 %6328
        %6332 = vset.pattern.permute.xlu0 0
        %6333 = vperm.xlu0 %6332, %v6311
        %v6334 = vpop.permute.xlu0 %6333
        %6337 = vset.pattern.permute.xlu0 0
        %6338 = vperm.xlu0 %6337, %v6312
        %v6339 = vpop.permute.xlu0 %6338
        %6342 = vset.pattern.permute.xlu0 0
        %6343 = vperm.xlu0 %6342, %v6313
        %v6344 = vpop.permute.xlu0 %6343
        %6347 = vset.pattern.permute.xlu0 0
        %6348 = vperm.xlu0 %6347, %v6314
        %v6349 = vpop.permute.xlu0 %6348
        %6352 = vset.pattern.permute.xlu0 0
        %6353 = vperm.xlu0 %6352, %v6315
        %v6354 = vpop.permute.xlu0 %6353
        %6357 = vset.pattern.permute.xlu0 0
        %6358 = vperm.xlu0 %6357, %v6316
        %v6359 = vpop.permute.xlu0 %6358
        %6362 = vset.pattern.permute.xlu0 0
        %6363 = vperm.xlu0 %6362, %v6317
        %v6364 = vpop.permute.xlu0 %6363
        %6367 = vset.pattern.permute.xlu0 0
        %6368 = vperm.xlu0 %6367, %v6318
        %v6369 = vpop.permute.xlu0 %6368
        %6372 = vset.pattern.permute.xlu0 0
        %6373 = vperm.xlu0 %6372, %v6319
        %v6374 = vpop.permute.xlu0 %6373
        %6377 = vset.pattern.permute.xlu0 0
        %6378 = vperm.xlu0 %6377, %v6320
        %v6379 = vpop.permute.xlu0 %6378
        %6382 = vset.pattern.permute.xlu0 0
        %6383 = vperm.xlu0 %6382, %v6321
        %v6384 = vpop.permute.xlu0 %6383
        %6387 = vset.pattern.permute.xlu0 0
        %6388 = vperm.xlu0 %6387, %v6322
        %v6389 = vpop.permute.xlu0 %6388
        %6392 = vset.pattern.permute.xlu0 0
        %6393 = vperm.xlu0 %6392, %v6323
        %v6394 = vpop.permute.xlu0 %6393
        %6397 = vset.pattern.permute.xlu0 0
        %6398 = vperm.xlu0 %6397, %v6324
        %v6399 = vpop.permute.xlu0 %6398
        %6402 = vset.pattern.permute.xlu0 0
        %6403 = vperm.xlu0 %6402, %v6325
        %v6404 = vpop.permute.xlu0 %6403
        %v6406 = vadd.f32 %v6293, %v6329
        %v6407 = vadd.f32 %v6294, %v6334
        %v6408 = vadd.f32 %v6295, %v6339
        %v6409 = vadd.f32 %v6296, %v6344
        %v6410 = vadd.f32 %v6297, %v6349
        %v6411 = vadd.f32 %v6298, %v6354
        %v6412 = vadd.f32 %v6299, %v6359
        %v6413 = vadd.f32 %v6300, %v6364
        %v6414 = vadd.f32 %v6301, %v6369
        %v6415 = vadd.f32 %v6302, %v6374
        %v6416 = vadd.f32 %v6303, %v6379
        %v6417 = vadd.f32 %v6304, %v6384
        %v6418 = vadd.f32 %v6305, %v6389
        %v6419 = vadd.f32 %v6306, %v6394
        %v6420 = vadd.f32 %v6307, %v6399
        %v6421 = vadd.f32 %v6308, %v6404
        %v6422 = vmax.f32 %v6406, 0.0
        %v6423 = vmax.f32 %v6407, 0.0
        %v6424 = vmax.f32 %v6408, 0.0
        %v6425 = vmax.f32 %v6409, 0.0
        %v6426 = vmax.f32 %v6410, 0.0
        %v6427 = vmax.f32 %v6411, 0.0
        %v6428 = vmax.f32 %v6412, 0.0
        %v6429 = vmax.f32 %v6413, 0.0
        %v6430 = vmax.f32 %v6414, 0.0
        %v6431 = vmax.f32 %v6415, 0.0
        %v6432 = vmax.f32 %v6416, 0.0
        %v6433 = vmax.f32 %v6417, 0.0
        %v6434 = vmax.f32 %v6418, 0.0
        %v6435 = vmax.f32 %v6419, 0.0
        %v6436 = vmax.f32 %v6420, 0.0
        %v6437 = vmax.f32 %v6421, 0.0
        %6438 = vmatprep.subr.mxu0 0.0
        %6439 = vmatpush1.msra.mxu0 %v6422
        %6440 = vmatprep.subr.mxu0 0.0
        %6441 = vmatpush1.msra.mxu0 %v6423
        %6442 = vmatprep.subr.mxu0 0.0
        %6443 = vmatpush1.msra.mxu0 %v6424
        %6444 = vmatprep.subr.mxu0 0.0
        %6445 = vmatpush1.msra.mxu0 %v6425
        %6446 = vmatprep.subr.mxu0 0.0
        %6447 = vmatpush1.msra.mxu0 %v6426
        %6448 = vmatprep.subr.mxu0 0.0
        %6449 = vmatpush1.msra.mxu0 %v6427
        %6450 = vmatprep.subr.mxu0 0.0
        %6451 = vmatpush1.msra.mxu0 %v6428
        %6452 = vmatprep.subr.mxu0 0.0
        %6453 = vmatpush1.msra.mxu0 %v6429
        %6454 = vmatprep.subr.mxu0 0.0
        %6455 = vmatpush1.msra.mxu0 %v6430
        %6456 = vmatprep.subr.mxu0 0.0
        %6457 = vmatpush1.msra.mxu0 %v6431
        %6458 = vmatprep.subr.mxu0 0.0
        %6459 = vmatpush1.msra.mxu0 %v6432
        %6460 = vmatprep.subr.mxu0 0.0
        %6461 = vmatpush1.msra.mxu0 %v6433
        %6462 = vmatprep.subr.mxu0 0.0
        %6463 = vmatpush1.msra.mxu0 %v6434
        %6464 = vmatprep.subr.mxu0 0.0
        %6465 = vmatpush1.msra.mxu0 %v6435
        %6466 = vmatprep.subr.mxu0 0.0
        %6467 = vmatpush1.msra.mxu0 %v6436
        %6468 = vmatprep.subr.mxu0 0.0
        %6469 = vmatpush1.msra.mxu0 %v6437
        %6470 = vmatprep.subr.mxu0 0.0
        %6471 = vmatpush1.msra.mxu0 0.0
        %6472 = vmatprep.subr.mxu0 0.0
        %6473 = vmatpush1.msra.mxu0 0.0
        %6474 = vmatprep.subr.mxu0 0.0
        %6475 = vmatpush1.msra.mxu0 0.0
        %6476 = vmatprep.subr.mxu0 0.0
        %6477 = vmatpush1.msra.mxu0 0.0
        %6478 = vmatprep.subr.mxu0 0.0
        %6479 = vmatpush1.msra.mxu0 0.0
        %6480 = vmatprep.subr.mxu0 0.0
        %6481 = vmatpush1.msra.mxu0 0.0
        %6482 = vmatprep.subr.mxu0 0.0
        %6483 = vmatpush1.msra.mxu0 0.0
        %6484 = vmatprep.subr.mxu0 0.0
        %6485 = vmatpush1.msra.mxu0 0.0
        %6486 = vmatprep.subr.mxu0 0.0
        %6487 = vmatpush1.msra.mxu0 0.0
        %6488 = vmatprep.subr.mxu0 0.0
        %6489 = vmatpush1.msra.mxu0 0.0
        %6490 = vmatprep.subr.mxu0 0.0
        %6491 = vmatpush1.msra.mxu0 0.0
        %6492 = vmatprep.subr.mxu0 0.0
        %6493 = vmatpush1.msra.mxu0 0.0
        %6494 = vmatprep.subr.mxu0 0.0
        %6495 = vmatpush1.msra.mxu0 0.0
        %6496 = vmatprep.subr.mxu0 0.0
        %6497 = vmatpush1.msra.mxu0 0.0
        %6498 = vmatprep.subr.mxu0 0.0
        %6499 = vmatpush1.msra.mxu0 0.0
        %6500 = vmatprep.subr.mxu0 0.0
        %6501 = vmatpush1.msra.mxu0 0.0
        %6502 = vmatprep.mubr.f32.mxu0 0.0
        %6503 = vmatmul.mubr.f32.gmra.mrb[0].mxu0 %v4506
        %v6504 = vpop.f32.mrb[0].mxu0
        %v6505 = vadd.f32 %v4541, %v6504
        %v6506 = vpop.f32.mrb[0].mxu0
        %6507 = vmatprep.mubr.f32.mxu0 0.0
        %6508 = vmatmul.mubr.f32.gmra.mrb[0].mxu0 %v4507
        %v6509 = vpop.f32.mrb[0].mxu0
        %v6510 = vadd.f32 %v4546, %v6509
        %v6511 = vpop.f32.mrb[0].mxu0
        %6512 = vmatprep.mubr.f32.mxu0 0.0
        %6513 = vmatmul.mubr.f32.gmra.mrb[0].mxu0 %v4508
        %v6514 = vpop.f32.mrb[0].mxu0
        %v6515 = vadd.f32 %v4551, %v6514
        %v6516 = vpop.f32.mrb[0].mxu0
        %6517 = vmatprep.mubr.f32.mxu0 0.0
        %6518 = vmatmul.mubr.f32.gmra.mrb[0].mxu0 %v4509
        %v6519 = vpop.f32.mrb[0].mxu0
        %v6520 = vadd.f32 %v4556, %v6519
        %v6521 = vpop.f32.mrb[0].mxu0
        %6522 = vmatprep.mubr.f32.mxu0 0.0
        %6523 = vmatmul.mubr.f32.gmra.mrb[0].mxu0 %v4510
        %v6524 = vpop.f32.mrb[0].mxu0
        %v6525 = vadd.f32 %v4561, %v6524
        %v6526 = vpop.f32.mrb[0].mxu0
        %6527 = vmatprep.mubr.f32.mxu0 0.0
        %6528 = vmatmul.mubr.f32.gmra.mrb[0].mxu0 %v4511
        %v6529 = vpop.f32.mrb[0].mxu0
        %v6530 = vadd.f32 %v4566, %v6529
        %v6531 = vpop.f32.mrb[0].mxu0
        %6532 = vmatprep.mubr.f32.mxu0 0.0
        %6533 = vmatmul.mubr.f32.gmra.mrb[0].mxu0 %v4512
        %v6534 = vpop.f32.mrb[0].mxu0
        %v6535 = vadd.f32 %v4571, %v6534
        %v6536 = vpop.f32.mrb[0].mxu0
        %6537 = vmatprep.mubr.f32.mxu0 0.0
        %6538 = vmatmul.mubr.f32.gmra.mrb[0].mxu0 %v4513
        %v6539 = vpop.f32.mrb[0].mxu0
        %v6540 = vadd.f32 %v4576, %v6539
        %v6541 = vpop.f32.mrb[0].mxu0
        %6542 = vmatprep.mubr.f32.mxu0 0.0
        %6543 = vmatmul.mubr.f32.gmra.mrb[0].mxu0 %v4514
        %v6544 = vpop.f32.mrb[0].mxu0
        %v6545 = vadd.f32 %v4581, %v6544
        %v6546 = vpop.f32.mrb[0].mxu0
        %6547 = vmatprep.mubr.f32.mxu0 0.0
        %6548 = vmatmul.mubr.f32.gmra.mrb[0].mxu0 %v4515
        %v6549 = vpop.f32.mrb[0].mxu0
        %v6550 = vadd.f32 %v4586, %v6549
        %v6551 = vpop.f32.mrb[0].mxu0
        %6552 = vmatprep.mubr.f32.mxu0 0.0
        %6553 = vmatmul.mubr.f32.gmra.mrb[0].mxu0 %v4516
        %v6554 = vpop.f32.mrb[0].mxu0
        %v6555 = vadd.f32 %v4591, %v6554
        %v6556 = vpop.f32.mrb[0].mxu0
        %6557 = vmatprep.mubr.f32.mxu0 0.0
        %6558 = vmatmul.mubr.f32.gmra.mrb[0].mxu0 %v4517
        %v6559 = vpop.f32.mrb[0].mxu0
        %v6560 = vadd.f32 %v4596, %v6559
        %v6561 = vpop.f32.mrb[0].mxu0
        %6562 = vmatprep.mubr.f32.mxu0 0.0
        %6563 = vmatmul.mubr.f32.gmra.mrb[0].mxu0 %v4518
        %v6564 = vpop.f32.mrb[0].mxu0
        %v6565 = vadd.f32 %v4601, %v6564
        %v6566 = vpop.f32.mrb[0].mxu0
        %6567 = vmatprep.mubr.f32.mxu0 0.0
        %6568 = vmatmul.mubr.f32.gmra.mrb[0].mxu0 %v4519
        %v6569 = vpop.f32.mrb[0].mxu0
        %v6570 = vadd.f32 %v4606, %v6569
        %v6571 = vpop.f32.mrb[0].mxu0
        %6572 = vmatprep.mubr.f32.mxu0 0.0
        %6573 = vmatmul.mubr.f32.gmra.mrb[0].mxu0 %v4520
        %v6574 = vpop.f32.mrb[0].mxu0
        %v6575 = vadd.f32 %v4611, %v6574
        %v6576 = vpop.f32.mrb[0].mxu0
        %6577 = vmatprep.mubr.f32.mxu0 0.0
        %6578 = vmatmul.mubr.f32.gmra.mrb[0].mxu0 %v4521
        %v6579 = vpop.f32.mrb[0].mxu0
        %v6580 = vadd.f32 %v4616, %v6579
        %v6581 = vpop.f32.mrb[0].mxu0
        %6582 = vdwg.mxu0
        %v6583 = vmax.f32 %v6505, 0.0
        %v6584 = vmax.f32 %v6510, 0.0
        %v6585 = vmax.f32 %v6515, 0.0
        %v6586 = vmax.f32 %v6520, 0.0
        %v6587 = vmax.f32 %v6525, 0.0
        %v6588 = vmax.f32 %v6530, 0.0
        %v6589 = vmax.f32 %v6535, 0.0
        %v6590 = vmax.f32 %v6540, 0.0
        %v6591 = vmax.f32 %v6545, 0.0
        %v6592 = vmax.f32 %v6550, 0.0
        %v6593 = vmax.f32 %v6555, 0.0
        %v6594 = vmax.f32 %v6560, 0.0
        %v6595 = vmax.f32 %v6565, 0.0
        %v6596 = vmax.f32 %v6570, 0.0
        %v6597 = vmax.f32 %v6575, 0.0
        %v6598 = vmax.f32 %v6580, 0.0
        %6599 = vmatprep.subr.mxu0 0.0
        %6600 = vmatpush1.msra.mxu0 %v6583
        %6601 = vmatprep.subr.mxu0 0.0
        %6602 = vmatpush1.msra.mxu0 %v6584
        %6603 = vmatprep.subr.mxu0 0.0
        %6604 = vmatpush1.msra.mxu0 %v6585
        %6605 = vmatprep.subr.mxu0 0.0
        %6606 = vmatpush1.msra.mxu0 %v6586
        %6607 = vmatprep.subr.mxu0 0.0
        %6608 = vmatpush1.msra.mxu0 %v6587
        %6609 = vmatprep.subr.mxu0 0.0
        %6610 = vmatpush1.msra.mxu0 %v6588
        %6611 = vmatprep.subr.mxu0 0.0
        %6612 = vmatpush1.msra.mxu0 %v6589
        %6613 = vmatprep.subr.mxu0 0.0
        %6614 = vmatpush1.msra.mxu0 %v6590
        %6615 = vmatprep.subr.mxu0 0.0
        %6616 = vmatpush1.msra.mxu0 %v6591
        %6617 = vmatprep.subr.mxu0 0.0
        %6618 = vmatpush1.msra.mxu0 %v6592
        %6619 = vmatprep.subr.mxu0 0.0
        %6620 = vmatpush1.msra.mxu0 %v6593
        %6621 = vmatprep.subr.mxu0 0.0
        %6622 = vmatpush1.msra.mxu0 %v6594
        %6623 = vmatprep.subr.mxu0 0.0
        %6624 = vmatpush1.msra.mxu0 %v6595
        %6625 = vmatprep.subr.mxu0 0.0
        %6626 = vmatpush1.msra.mxu0 %v6596
        %6627 = vmatprep.subr.mxu0 0.0
        %6628 = vmatpush1.msra.mxu0 %v6597
        %6629 = vmatprep.subr.mxu0 0.0
        %6630 = vmatpush1.msra.mxu0 %v6598
        %6631 = vmatprep.subr.mxu0 0.0
        %6632 = vmatpush1.msra.mxu0 0.0
        %6633 = vmatprep.subr.mxu0 0.0
        %6634 = vmatpush1.msra.mxu0 0.0
        %6635 = vmatprep.subr.mxu0 0.0
        %6636 = vmatpush1.msra.mxu0 0.0
        %6637 = vmatprep.subr.mxu0 0.0
        %6638 = vmatpush1.msra.mxu0 0.0
        %6639 = vmatprep.subr.mxu0 0.0
        %6640 = vmatpush1.msra.mxu0 0.0
        %6641 = vmatprep.subr.mxu0 0.0
        %6642 = vmatpush1.msra.mxu0 0.0
        %6643 = vmatprep.subr.mxu0 0.0
        %6644 = vmatpush1.msra.mxu0 0.0
        %6645 = vmatprep.subr.mxu0 0.0
        %6646 = vmatpush1.msra.mxu0 0.0
        %6647 = vmatprep.subr.mxu0 0.0
        %6648 = vmatpush1.msra.mxu0 0.0
        %6649 = vmatprep.subr.mxu0 0.0
        %6650 = vmatpush1.msra.mxu0 0.0
        %6651 = vmatprep.subr.mxu0 0.0
        %6652 = vmatpush1.msra.mxu0 0.0
        %6653 = vmatprep.subr.mxu0 0.0
        %6654 = vmatpush1.msra.mxu0 0.0
        %6655 = vmatprep.subr.mxu0 0.0
        %6656 = vmatpush1.msra.mxu0 0.0
        %6657 = vmatprep.subr.mxu0 0.0
        %6658 = vmatpush1.msra.mxu0 0.0
        %6659 = vmatprep.subr.mxu0 0.0
        %6660 = vmatpush1.msra.mxu0 0.0
        %6661 = vmatprep.subr.mxu0 0.0
        %6662 = vmatpush1.msra.mxu0 0.0
        %6663 = vmatprep.mubr.f32.mxu0 0.0
        %6664 = vmatmul.mubr.f32.gmra.mrb[0].mxu0 %v426
        %v6665 = vpop.f32.mrb[0].mxu0
        %v6666 = vadd.f32 %v1011, %v6665
        %v6667 = vpop.f32.mrb[0].mxu0
        %6668 = vdwg.mxu0
        %v6669 = vmul.f32 %v6234, 0.025
        %v6670 = vadd.f32 %v6669, %v6666
        %v6671 = vmul.f32 %v6670, 0.0625
        %v6672 = vadd.f32 %v6234, %v6671
        %v6673 = vrsqrt.pop %v6249
        %v6674 = vmul.f32 %v6249, %v6673
        %vm6675 = vcmp.eq.f32.partialorder %v6249, inf
        %v6676 = vsel %vm6675, %v6249, %v6674
        %vm6677 = vcmp.eq.f32.partialorder %v6249, 0.0
        %v6678 = vand.u32 %v6249, 2147483648
        %v6679 = vsel %vm6677, %v6678, %v6676
        %v6681 = vrot.slane %v6679, 2
        %v6683 = vmul.f32 %v6234, %v6681
        %v6685 = vrot.slane %v6666, 1
        %v6687 = vadd.f32 %v6683, %v6685
        %v6688 = vmul.f32 %v6687, %v6252
        %v6689 = vadd.f32 %v6672, %v6688
        %v6690 = vsub.f32 0.04, %v6249
        %v6691 = vmul.f32 %v6690, 1.5
        %v6692 = vadd.f32 %v6691, %v6666
        %v6693 = vmul.f32 %v6692, 0.0625
        %v6694 = vadd.f32 %v6249, %v6693
        %v6695 = vadd.f32 %v6666, 0.3
        %v6697 = vrot.slane %v6252, 6
        %v6699 = vmul.f32 %v6695, %v6697
        %v6701 = vrot.slane %v6699, 1
        %v6703 = vadd.f32 %v6694, %v6701
        %v6704 = vmax.f32 %v6703, 0.01
        %s6705 = scalar_lea.vmem %s371, 26 [#allocation2]
        %v6706 = vld [vmem:[%s6705] sm:$0x3]
        %v6707 = vmul.f32 %v6706, 0.25
        %v6708 = vlaneseq
        %v6709 = vshrl.u32 %v6708, 7
        %v6710 = vsub.s32 0, %v6709
        %v6711 = vrot.slane %v6689, %v6710
        %v6712 = vmul.f32 %v434, %v6711
        %v6713 = vmul.f32 %v439, %v6711
        %v6714 = vmul.f32 %v444, %v6711
        %v6715 = vmul.f32 %v449, %v6711
        %v6716 = vmul.f32 %v454, %v6711
        %v6717 = vmul.f32 %v459, %v6711
        %v6718 = vmul.f32 %v464, %v6711
        %v6719 = vmul.f32 %v469, %v6711
        %v6720 = vmul.f32 %v474, %v6711
        %v6721 = vmul.f32 %v479, %v6711
        %v6722 = vmul.f32 %v484, %v6711
        %v6723 = vmul.f32 %v489, %v6711
        %v6724 = vmul.f32 %v494, %v6711
        %v6725 = vmul.f32 %v499, %v6711
        %v6726 = vmul.f32 %v504, %v6711
        %v6727 = vmul.f32 %v509, %v6711
        %v6728 = vlaneseq
        %v6729 = vshrl.u32 %v6728, 7
        %v6730 = vsub.s32 2, %v6729
        %v6731 = vrot.slane %v6704, %v6730
        %v6732 = vmul.f32 %v513, %v6731
        %v6733 = vmul.f32 %v517, %v6731
        %v6734 = vmul.f32 %v521, %v6731
        %v6735 = vmul.f32 %v525, %v6731
        %v6736 = vmul.f32 %v529, %v6731
        %v6737 = vmul.f32 %v533, %v6731
        %v6738 = vmul.f32 %v537, %v6731
        %v6739 = vmul.f32 %v541, %v6731
        %v6740 = vmul.f32 %v545, %v6731
        %v6741 = vmul.f32 %v549, %v6731
        %v6742 = vmul.f32 %v553, %v6731
        %v6743 = vmul.f32 %v557, %v6731
        %v6744 = vmul.f32 %v561, %v6731
        %v6745 = vmul.f32 %v565, %v6731
        %v6746 = vmul.f32 %v569, %v6731
        %v6747 = vmul.f32 %v573, %v6731
        %v6748 = vadd.f32 %v6712, %v6732
        %v6749 = vadd.f32 %v6713, %v6733
        %v6750 = vadd.f32 %v6714, %v6734
        %v6751 = vadd.f32 %v6715, %v6735
        %v6752 = vadd.f32 %v6716, %v6736
        %v6753 = vadd.f32 %v6717, %v6737
        %v6754 = vadd.f32 %v6718, %v6738
        %v6755 = vadd.f32 %v6719, %v6739
        %v6756 = vadd.f32 %v6720, %v6740
        %v6757 = vadd.f32 %v6721, %v6741
        %v6758 = vadd.f32 %v6722, %v6742
        %v6759 = vadd.f32 %v6723, %v6743
        %v6760 = vadd.f32 %v6724, %v6744
        %v6761 = vadd.f32 %v6725, %v6745
        %v6762 = vadd.f32 %v6726, %v6746
        %v6763 = vadd.f32 %v6727, %v6747
        %s6764 = scalar_lea.vmem %s1, 1664
        %v6765 = vld [vmem:[%s6764] sm:$0xff]
        %v6766 = vld [vmem:[%s6764 + $0x8] sm:$0xff]
        %v6767 = vld [vmem:[%s6764 + $0x10] sm:$0xff]
        %v6768 = vld [vmem:[%s6764 + $0x18] sm:$0xff]
        %v6769 = vld [vmem:[%s6764 + $0x20] sm:$0xff]
        %v6770 = vld [vmem:[%s6764 + $0x28] sm:$0xff]
        %v6771 = vld [vmem:[%s6764 + $0x30] sm:$0xff]
        %v6772 = vld [vmem:[%s6764 + $0x38] sm:$0xff]
        %v6773 = vld [vmem:[%s6764 + $0x40] sm:$0xff]
        %v6774 = vld [vmem:[%s6764 + $0x48] sm:$0xff]
        %v6775 = vld [vmem:[%s6764 + $0x50] sm:$0xff]
        %v6776 = vld [vmem:[%s6764 + $0x58] sm:$0xff]
        %v6777 = vld [vmem:[%s6764 + $0x60] sm:$0xff]
        %v6778 = vld [vmem:[%s6764 + $0x68] sm:$0xff]
        %v6779 = vld [vmem:[%s6764 + $0x70] sm:$0xff]
        %v6780 = vld [vmem:[%s6764 + $0x78] sm:$0xff]
        %6782 = vset.pattern.permute.xlu0 0
        %6783 = vperm.xlu0 %6782, %v6765
        %v6784 = vpop.permute.xlu0 %6783
        %6787 = vset.pattern.permute.xlu0 0
        %6788 = vperm.xlu0 %6787, %v6766
        %v6789 = vpop.permute.xlu0 %6788
        %6792 = vset.pattern.permute.xlu0 0
        %6793 = vperm.xlu0 %6792, %v6767
        %v6794 = vpop.permute.xlu0 %6793
        %6797 = vset.pattern.permute.xlu0 0
        %6798 = vperm.xlu0 %6797, %v6768
        %v6799 = vpop.permute.xlu0 %6798
        %6802 = vset.pattern.permute.xlu0 0
        %6803 = vperm.xlu0 %6802, %v6769
        %v6804 = vpop.permute.xlu0 %6803
        %6807 = vset.pattern.permute.xlu0 0
        %6808 = vperm.xlu0 %6807, %v6770
        %v6809 = vpop.permute.xlu0 %6808
        %6812 = vset.pattern.permute.xlu0 0
        %6813 = vperm.xlu0 %6812, %v6771
        %v6814 = vpop.permute.xlu0 %6813
        %6817 = vset.pattern.permute.xlu0 0
        %6818 = vperm.xlu0 %6817, %v6772
        %v6819 = vpop.permute.xlu0 %6818
        %6822 = vset.pattern.permute.xlu0 0
        %6823 = vperm.xlu0 %6822, %v6773
        %v6824 = vpop.permute.xlu0 %6823
        %6827 = vset.pattern.permute.xlu0 0
        %6828 = vperm.xlu0 %6827, %v6774
        %v6829 = vpop.permute.xlu0 %6828
        %6832 = vset.pattern.permute.xlu0 0
        %6833 = vperm.xlu0 %6832, %v6775
        %v6834 = vpop.permute.xlu0 %6833
        %6837 = vset.pattern.permute.xlu0 0
        %6838 = vperm.xlu0 %6837, %v6776
        %v6839 = vpop.permute.xlu0 %6838
        %6842 = vset.pattern.permute.xlu0 0
        %6843 = vperm.xlu0 %6842, %v6777
        %v6844 = vpop.permute.xlu0 %6843
        %6847 = vset.pattern.permute.xlu0 0
        %6848 = vperm.xlu0 %6847, %v6778
        %v6849 = vpop.permute.xlu0 %6848
        %6852 = vset.pattern.permute.xlu0 0
        %6853 = vperm.xlu0 %6852, %v6779
        %v6854 = vpop.permute.xlu0 %6853
        %6857 = vset.pattern.permute.xlu0 0
        %6858 = vperm.xlu0 %6857, %v6780
        %v6859 = vpop.permute.xlu0 %6858
        %v6861 = vadd.f32 %v6748, %v6784
        %v6862 = vadd.f32 %v6749, %v6789
        %v6863 = vadd.f32 %v6750, %v6794
        %v6864 = vadd.f32 %v6751, %v6799
        %v6865 = vadd.f32 %v6752, %v6804
        %v6866 = vadd.f32 %v6753, %v6809
        %v6867 = vadd.f32 %v6754, %v6814
        %v6868 = vadd.f32 %v6755, %v6819
        %v6869 = vadd.f32 %v6756, %v6824
        %v6870 = vadd.f32 %v6757, %v6829
        %v6871 = vadd.f32 %v6758, %v6834
        %v6872 = vadd.f32 %v6759, %v6839
        %v6873 = vadd.f32 %v6760, %v6844
        %v6874 = vadd.f32 %v6761, %v6849
        %v6875 = vadd.f32 %v6762, %v6854
        %v6876 = vadd.f32 %v6763, %v6859
        %v6877 = vmax.f32 %v6861, 0.0
        %v6878 = vmax.f32 %v6862, 0.0
        %v6879 = vmax.f32 %v6863, 0.0
        %v6880 = vmax.f32 %v6864, 0.0
        %v6881 = vmax.f32 %v6865, 0.0
        %v6882 = vmax.f32 %v6866, 0.0
        %v6883 = vmax.f32 %v6867, 0.0
        %v6884 = vmax.f32 %v6868, 0.0
        %v6885 = vmax.f32 %v6869, 0.0
        %v6886 = vmax.f32 %v6870, 0.0
        %v6887 = vmax.f32 %v6871, 0.0
        %v6888 = vmax.f32 %v6872, 0.0
        %v6889 = vmax.f32 %v6873, 0.0
        %v6890 = vmax.f32 %v6874, 0.0
        %v6891 = vmax.f32 %v6875, 0.0
        %v6892 = vmax.f32 %v6876, 0.0
        %6893 = vmatprep.subr.mxu0 0.0
        %6894 = vmatpush1.msra.mxu0 %v6877
        %6895 = vmatprep.subr.mxu0 0.0
        %6896 = vmatpush1.msra.mxu0 %v6878
        %6897 = vmatprep.subr.mxu0 0.0
        %6898 = vmatpush1.msra.mxu0 %v6879
        %6899 = vmatprep.subr.mxu0 0.0
        %6900 = vmatpush1.msra.mxu0 %v6880
        %6901 = vmatprep.subr.mxu0 0.0
        %6902 = vmatpush1.msra.mxu0 %v6881
        %6903 = vmatprep.subr.mxu0 0.0
        %6904 = vmatpush1.msra.mxu0 %v6882
        %6905 = vmatprep.subr.mxu0 0.0
        %6906 = vmatpush1.msra.mxu0 %v6883
        %6907 = vmatprep.subr.mxu0 0.0
        %6908 = vmatpush1.msra.mxu0 %v6884
        %6909 = vmatprep.subr.mxu0 0.0
        %6910 = vmatpush1.msra.mxu0 %v6885
        %6911 = vmatprep.subr.mxu0 0.0
        %6912 = vmatpush1.msra.mxu0 %v6886
        %6913 = vmatprep.subr.mxu0 0.0
        %6914 = vmatpush1.msra.mxu0 %v6887
        %6915 = vmatprep.subr.mxu0 0.0
        %6916 = vmatpush1.msra.mxu0 %v6888
        %6917 = vmatprep.subr.mxu0 0.0
        %6918 = vmatpush1.msra.mxu0 %v6889
        %6919 = vmatprep.subr.mxu0 0.0
        %6920 = vmatpush1.msra.mxu0 %v6890
        %6921 = vmatprep.subr.mxu0 0.0
        %6922 = vmatpush1.msra.mxu0 %v6891
        %6923 = vmatprep.subr.mxu0 0.0
        %6924 = vmatpush1.msra.mxu0 %v6892
        %6925 = vmatprep.subr.mxu0 0.0
        %6926 = vmatpush1.msra.mxu0 0.0
        %6927 = vmatprep.subr.mxu0 0.0
        %6928 = vmatpush1.msra.mxu0 0.0
        %6929 = vmatprep.subr.mxu0 0.0
        %6930 = vmatpush1.msra.mxu0 0.0
        %6931 = vmatprep.subr.mxu0 0.0
        %6932 = vmatpush1.msra.mxu0 0.0
        %6933 = vmatprep.subr.mxu0 0.0
        %6934 = vmatpush1.msra.mxu0 0.0
        %6935 = vmatprep.subr.mxu0 0.0
        %6936 = vmatpush1.msra.mxu0 0.0
        %6937 = vmatprep.subr.mxu0 0.0
        %6938 = vmatpush1.msra.mxu0 0.0
        %6939 = vmatprep.subr.mxu0 0.0
        %6940 = vmatpush1.msra.mxu0 0.0
        %6941 = vmatprep.subr.mxu0 0.0
        %6942 = vmatpush1.msra.mxu0 0.0
        %6943 = vmatprep.subr.mxu0 0.0
        %6944 = vmatpush1.msra.mxu0 0.0
        %6945 = vmatprep.subr.mxu0 0.0
        %6946 = vmatpush1.msra.mxu0 0.0
        %6947 = vmatprep.subr.mxu0 0.0
        %6948 = vmatpush1.msra.mxu0 0.0
        %6949 = vmatprep.subr.mxu0 0.0
        %6950 = vmatpush1.msra.mxu0 0.0
        %6951 = vmatprep.subr.mxu0 0.0
        %6952 = vmatpush1.msra.mxu0 0.0
        %6953 = vmatprep.subr.mxu0 0.0
        %6954 = vmatpush1.msra.mxu0 0.0
        %6955 = vmatprep.subr.mxu0 0.0
        %6956 = vmatpush1.msra.mxu0 0.0
        %6957 = vmatprep.mubr.f32.mxu0 0.0
        %6958 = vmatmul.mubr.f32.gmra.mrb[0].mxu0 %v4506
        %v6959 = vpop.f32.mrb[0].mxu0
        %v6960 = vadd.f32 %v4541, %v6959
        %v6961 = vpop.f32.mrb[0].mxu0
        %6962 = vmatprep.mubr.f32.mxu0 0.0
        %6963 = vmatmul.mubr.f32.gmra.mrb[0].mxu0 %v4507
        %v6964 = vpop.f32.mrb[0].mxu0
        %v6965 = vadd.f32 %v4546, %v6964
        %v6966 = vpop.f32.mrb[0].mxu0
        %6967 = vmatprep.mubr.f32.mxu0 0.0
        %6968 = vmatmul.mubr.f32.gmra.mrb[0].mxu0 %v4508
        %v6969 = vpop.f32.mrb[0].mxu0
        %v6970 = vadd.f32 %v4551, %v6969
        %v6971 = vpop.f32.mrb[0].mxu0
        %6972 = vmatprep.mubr.f32.mxu0 0.0
        %6973 = vmatmul.mubr.f32.gmra.mrb[0].mxu0 %v4509
        %v6974 = vpop.f32.mrb[0].mxu0
        %v6975 = vadd.f32 %v4556, %v6974
        %v6976 = vpop.f32.mrb[0].mxu0
        %6977 = vmatprep.mubr.f32.mxu0 0.0
        %6978 = vmatmul.mubr.f32.gmra.mrb[0].mxu0 %v4510
        %v6979 = vpop.f32.mrb[0].mxu0
        %v6980 = vadd.f32 %v4561, %v6979
        %v6981 = vpop.f32.mrb[0].mxu0
        %6982 = vmatprep.mubr.f32.mxu0 0.0
        %6983 = vmatmul.mubr.f32.gmra.mrb[0].mxu0 %v4511
        %v6984 = vpop.f32.mrb[0].mxu0
        %v6985 = vadd.f32 %v4566, %v6984
        %v6986 = vpop.f32.mrb[0].mxu0
        %6987 = vmatprep.mubr.f32.mxu0 0.0
        %6988 = vmatmul.mubr.f32.gmra.mrb[0].mxu0 %v4512
        %v6989 = vpop.f32.mrb[0].mxu0
        %v6990 = vadd.f32 %v4571, %v6989
        %v6991 = vpop.f32.mrb[0].mxu0
        %6992 = vmatprep.mubr.f32.mxu0 0.0
        %6993 = vmatmul.mubr.f32.gmra.mrb[0].mxu0 %v4513
        %v6994 = vpop.f32.mrb[0].mxu0
        %v6995 = vadd.f32 %v4576, %v6994
        %v6996 = vpop.f32.mrb[0].mxu0
        %6997 = vmatprep.mubr.f32.mxu0 0.0
        %6998 = vmatmul.mubr.f32.gmra.mrb[0].mxu0 %v4514
        %v6999 = vpop.f32.mrb[0].mxu0
        %v7000 = vadd.f32 %v4581, %v6999
        %v7001 = vpop.f32.mrb[0].mxu0
        %7002 = vmatprep.mubr.f32.mxu0 0.0
        %7003 = vmatmul.mubr.f32.gmra.mrb[0].mxu0 %v4515
        %v7004 = vpop.f32.mrb[0].mxu0
        %v7005 = vadd.f32 %v4586, %v7004
        %v7006 = vpop.f32.mrb[0].mxu0
        %7007 = vmatprep.mubr.f32.mxu0 0.0
        %7008 = vmatmul.mubr.f32.gmra.mrb[0].mxu0 %v4516
        %v7009 = vpop.f32.mrb[0].mxu0
        %v7010 = vadd.f32 %v4591, %v7009
        %v7011 = vpop.f32.mrb[0].mxu0
        %7012 = vmatprep.mubr.f32.mxu0 0.0
        %7013 = vmatmul.mubr.f32.gmra.mrb[0].mxu0 %v4517
        %v7014 = vpop.f32.mrb[0].mxu0
        %v7015 = vadd.f32 %v4596, %v7014
        %v7016 = vpop.f32.mrb[0].mxu0
        %7017 = vmatprep.mubr.f32.mxu0 0.0
        %7018 = vmatmul.mubr.f32.gmra.mrb[0].mxu0 %v4518
        %v7019 = vpop.f32.mrb[0].mxu0
        %v7020 = vadd.f32 %v4601, %v7019
        %v7021 = vpop.f32.mrb[0].mxu0
        %7022 = vmatprep.mubr.f32.mxu0 0.0
        %7023 = vmatmul.mubr.f32.gmra.mrb[0].mxu0 %v4519
        %v7024 = vpop.f32.mrb[0].mxu0
        %v7025 = vadd.f32 %v4606, %v7024
        %v7026 = vpop.f32.mrb[0].mxu0
        %7027 = vmatprep.mubr.f32.mxu0 0.0
        %7028 = vmatmul.mubr.f32.gmra.mrb[0].mxu0 %v4520
        %v7029 = vpop.f32.mrb[0].mxu0
        %v7030 = vadd.f32 %v4611, %v7029
        %v7031 = vpop.f32.mrb[0].mxu0
        %7032 = vmatprep.mubr.f32.mxu0 0.0
        %7033 = vmatmul.mubr.f32.gmra.mrb[0].mxu0 %v4521
        %v7034 = vpop.f32.mrb[0].mxu0
        %v7035 = vadd.f32 %v4616, %v7034
        %v7036 = vpop.f32.mrb[0].mxu0
        %7037 = vdwg.mxu0
        %v7038 = vmax.f32 %v6960, 0.0
        %v7039 = vmax.f32 %v6965, 0.0
        %v7040 = vmax.f32 %v6970, 0.0
        %v7041 = vmax.f32 %v6975, 0.0
        %v7042 = vmax.f32 %v6980, 0.0
        %v7043 = vmax.f32 %v6985, 0.0
        %v7044 = vmax.f32 %v6990, 0.0
        %v7045 = vmax.f32 %v6995, 0.0
        %v7046 = vmax.f32 %v7000, 0.0
        %v7047 = vmax.f32 %v7005, 0.0
        %v7048 = vmax.f32 %v7010, 0.0
        %v7049 = vmax.f32 %v7015, 0.0
        %v7050 = vmax.f32 %v7020, 0.0
        %v7051 = vmax.f32 %v7025, 0.0
        %v7052 = vmax.f32 %v7030, 0.0
        %v7053 = vmax.f32 %v7035, 0.0
        %7054 = vmatprep.subr.mxu0 0.0
        %7055 = vmatpush1.msra.mxu0 %v7038
        %7056 = vmatprep.subr.mxu0 0.0
        %7057 = vmatpush1.msra.mxu0 %v7039
        %7058 = vmatprep.subr.mxu0 0.0
        %7059 = vmatpush1.msra.mxu0 %v7040
        %7060 = vmatprep.subr.mxu0 0.0
        %7061 = vmatpush1.msra.mxu0 %v7041
        %7062 = vmatprep.subr.mxu0 0.0
        %7063 = vmatpush1.msra.mxu0 %v7042
        %7064 = vmatprep.subr.mxu0 0.0
        %7065 = vmatpush1.msra.mxu0 %v7043
        %7066 = vmatprep.subr.mxu0 0.0
        %7067 = vmatpush1.msra.mxu0 %v7044
        %7068 = vmatprep.subr.mxu0 0.0
        %7069 = vmatpush1.msra.mxu0 %v7045
        %7070 = vmatprep.subr.mxu0 0.0
        %7071 = vmatpush1.msra.mxu0 %v7046
        %7072 = vmatprep.subr.mxu0 0.0
        %7073 = vmatpush1.msra.mxu0 %v7047
        %7074 = vmatprep.subr.mxu0 0.0
        %7075 = vmatpush1.msra.mxu0 %v7048
        %7076 = vmatprep.subr.mxu0 0.0
        %7077 = vmatpush1.msra.mxu0 %v7049
        %7078 = vmatprep.subr.mxu0 0.0
        %7079 = vmatpush1.msra.mxu0 %v7050
        %7080 = vmatprep.subr.mxu0 0.0
        %7081 = vmatpush1.msra.mxu0 %v7051
        %7082 = vmatprep.subr.mxu0 0.0
        %7083 = vmatpush1.msra.mxu0 %v7052
        %7084 = vmatprep.subr.mxu0 0.0
        %7085 = vmatpush1.msra.mxu0 %v7053
        %7086 = vmatprep.subr.mxu0 0.0
        %7087 = vmatpush1.msra.mxu0 0.0
        %7088 = vmatprep.subr.mxu0 0.0
        %7089 = vmatpush1.msra.mxu0 0.0
        %7090 = vmatprep.subr.mxu0 0.0
        %7091 = vmatpush1.msra.mxu0 0.0
        %7092 = vmatprep.subr.mxu0 0.0
        %7093 = vmatpush1.msra.mxu0 0.0
        %7094 = vmatprep.subr.mxu0 0.0
        %7095 = vmatpush1.msra.mxu0 0.0
        %7096 = vmatprep.subr.mxu0 0.0
        %7097 = vmatpush1.msra.mxu0 0.0
        %7098 = vmatprep.subr.mxu0 0.0
        %7099 = vmatpush1.msra.mxu0 0.0
        %7100 = vmatprep.subr.mxu0 0.0
        %7101 = vmatpush1.msra.mxu0 0.0
        %7102 = vmatprep.subr.mxu0 0.0
        %7103 = vmatpush1.msra.mxu0 0.0
        %7104 = vmatprep.subr.mxu0 0.0
        %7105 = vmatpush1.msra.mxu0 0.0
        %7106 = vmatprep.subr.mxu0 0.0
        %7107 = vmatpush1.msra.mxu0 0.0
        %7108 = vmatprep.subr.mxu0 0.0
        %7109 = vmatpush1.msra.mxu0 0.0
        %7110 = vmatprep.subr.mxu0 0.0
        %7111 = vmatpush1.msra.mxu0 0.0
        %7112 = vmatprep.subr.mxu0 0.0
        %7113 = vmatpush1.msra.mxu0 0.0
        %7114 = vmatprep.subr.mxu0 0.0
        %7115 = vmatpush1.msra.mxu0 0.0
        %7116 = vmatprep.subr.mxu0 0.0
        %7117 = vmatpush1.msra.mxu0 0.0
        %7118 = vmatprep.mubr.f32.mxu0 0.0
        %7119 = vmatmul.mubr.f32.gmra.mrb[0].mxu0 %v426
        %v7120 = vpop.f32.mrb[0].mxu0
        %v7121 = vadd.f32 %v1011, %v7120
        %v7122 = vpop.f32.mrb[0].mxu0
        %7123 = vdwg.mxu0
        %v7124 = vmul.f32 %v6689, 0.025
        %v7125 = vadd.f32 %v7124, %v7121
        %v7126 = vmul.f32 %v7125, 0.0625
        %v7127 = vadd.f32 %v6689, %v7126
        %v7128 = vrsqrt.pop %v6704
        %v7129 = vmul.f32 %v6704, %v7128
        %vm7130 = vcmp.eq.f32.partialorder %v6704, inf
        %v7131 = vsel %vm7130, %v6704, %v7129
        %vm7132 = vcmp.eq.f32.partialorder %v6704, 0.0
        %v7133 = vand.u32 %v6704, 2147483648
        %v7134 = vsel %vm7132, %v7133, %v7131
        %v7136 = vrot.slane %v7134, 2
        %v7138 = vmul.f32 %v6689, %v7136
        %v7140 = vrot.slane %v7121, 1
        %v7142 = vadd.f32 %v7138, %v7140
        %v7143 = vmul.f32 %v7142, %v6707
        %v7144 = vadd.f32 %v7127, %v7143
        %v7145 = vsub.f32 0.04, %v6704
        %v7146 = vmul.f32 %v7145, 1.5
        %v7147 = vadd.f32 %v7146, %v7121
        %v7148 = vmul.f32 %v7147, 0.0625
        %v7149 = vadd.f32 %v6704, %v7148
        %v7150 = vadd.f32 %v7121, 0.3
        %v7152 = vrot.slane %v6707, 6
        %v7154 = vmul.f32 %v7150, %v7152
        %v7156 = vrot.slane %v7154, 1
        %v7158 = vadd.f32 %v7149, %v7156
        %v7159 = vmax.f32 %v7158, 0.01
        %s7160 = scalar_lea.vmem %s371, 28 [#allocation2]
        %v7161 = vld [vmem:[%s7160] sm:$0x3]
        %v7162 = vmul.f32 %v7161, 0.25
        %v7163 = vlaneseq
        %v7164 = vshrl.u32 %v7163, 7
        %v7165 = vsub.s32 0, %v7164
        %v7166 = vrot.slane %v7144, %v7165
        %v7167 = vmul.f32 %v434, %v7166
        %v7168 = vmul.f32 %v439, %v7166
        %v7169 = vmul.f32 %v444, %v7166
        %v7170 = vmul.f32 %v449, %v7166
        %v7171 = vmul.f32 %v454, %v7166
        %v7172 = vmul.f32 %v459, %v7166
        %v7173 = vmul.f32 %v464, %v7166
        %v7174 = vmul.f32 %v469, %v7166
        %v7175 = vmul.f32 %v474, %v7166
        %v7176 = vmul.f32 %v479, %v7166
        %v7177 = vmul.f32 %v484, %v7166
        %v7178 = vmul.f32 %v489, %v7166
        %v7179 = vmul.f32 %v494, %v7166
        %v7180 = vmul.f32 %v499, %v7166
        %v7181 = vmul.f32 %v504, %v7166
        %v7182 = vmul.f32 %v509, %v7166
        %v7183 = vlaneseq
        %v7184 = vshrl.u32 %v7183, 7
        %v7185 = vsub.s32 2, %v7184
        %v7186 = vrot.slane %v7159, %v7185
        %v7187 = vmul.f32 %v513, %v7186
        %v7188 = vmul.f32 %v517, %v7186
        %v7189 = vmul.f32 %v521, %v7186
        %v7190 = vmul.f32 %v525, %v7186
        %v7191 = vmul.f32 %v529, %v7186
        %v7192 = vmul.f32 %v533, %v7186
        %v7193 = vmul.f32 %v537, %v7186
        %v7194 = vmul.f32 %v541, %v7186
        %v7195 = vmul.f32 %v545, %v7186
        %v7196 = vmul.f32 %v549, %v7186
        %v7197 = vmul.f32 %v553, %v7186
        %v7198 = vmul.f32 %v557, %v7186
        %v7199 = vmul.f32 %v561, %v7186
        %v7200 = vmul.f32 %v565, %v7186
        %v7201 = vmul.f32 %v569, %v7186
        %v7202 = vmul.f32 %v573, %v7186
        %v7203 = vadd.f32 %v7167, %v7187
        %v7204 = vadd.f32 %v7168, %v7188
        %v7205 = vadd.f32 %v7169, %v7189
        %v7206 = vadd.f32 %v7170, %v7190
        %v7207 = vadd.f32 %v7171, %v7191
        %v7208 = vadd.f32 %v7172, %v7192
        %v7209 = vadd.f32 %v7173, %v7193
        %v7210 = vadd.f32 %v7174, %v7194
        %v7211 = vadd.f32 %v7175, %v7195
        %v7212 = vadd.f32 %v7176, %v7196
        %v7213 = vadd.f32 %v7177, %v7197
        %v7214 = vadd.f32 %v7178, %v7198
        %v7215 = vadd.f32 %v7179, %v7199
        %v7216 = vadd.f32 %v7180, %v7200
        %v7217 = vadd.f32 %v7181, %v7201
        %v7218 = vadd.f32 %v7182, %v7202
        %s7219 = scalar_lea.vmem %s1, 1792
        %v7220 = vld [vmem:[%s7219] sm:$0xff]
        %v7221 = vld [vmem:[%s7219 + $0x8] sm:$0xff]
        %v7222 = vld [vmem:[%s7219 + $0x10] sm:$0xff]
        %v7223 = vld [vmem:[%s7219 + $0x18] sm:$0xff]
        %v7224 = vld [vmem:[%s7219 + $0x20] sm:$0xff]
        %v7225 = vld [vmem:[%s7219 + $0x28] sm:$0xff]
        %v7226 = vld [vmem:[%s7219 + $0x30] sm:$0xff]
        %v7227 = vld [vmem:[%s7219 + $0x38] sm:$0xff]
        %v7228 = vld [vmem:[%s7219 + $0x40] sm:$0xff]
        %v7229 = vld [vmem:[%s7219 + $0x48] sm:$0xff]
        %v7230 = vld [vmem:[%s7219 + $0x50] sm:$0xff]
        %v7231 = vld [vmem:[%s7219 + $0x58] sm:$0xff]
        %v7232 = vld [vmem:[%s7219 + $0x60] sm:$0xff]
        %v7233 = vld [vmem:[%s7219 + $0x68] sm:$0xff]
        %v7234 = vld [vmem:[%s7219 + $0x70] sm:$0xff]
        %v7235 = vld [vmem:[%s7219 + $0x78] sm:$0xff]
        %7237 = vset.pattern.permute.xlu0 0
        %7238 = vperm.xlu0 %7237, %v7220
        %v7239 = vpop.permute.xlu0 %7238
        %7242 = vset.pattern.permute.xlu0 0
        %7243 = vperm.xlu0 %7242, %v7221
        %v7244 = vpop.permute.xlu0 %7243
        %7247 = vset.pattern.permute.xlu0 0
        %7248 = vperm.xlu0 %7247, %v7222
        %v7249 = vpop.permute.xlu0 %7248
        %7252 = vset.pattern.permute.xlu0 0
        %7253 = vperm.xlu0 %7252, %v7223
        %v7254 = vpop.permute.xlu0 %7253
        %7257 = vset.pattern.permute.xlu0 0
        %7258 = vperm.xlu0 %7257, %v7224
        %v7259 = vpop.permute.xlu0 %7258
        %7262 = vset.pattern.permute.xlu0 0
        %7263 = vperm.xlu0 %7262, %v7225
        %v7264 = vpop.permute.xlu0 %7263
        %7267 = vset.pattern.permute.xlu0 0
        %7268 = vperm.xlu0 %7267, %v7226
        %v7269 = vpop.permute.xlu0 %7268
        %7272 = vset.pattern.permute.xlu0 0
        %7273 = vperm.xlu0 %7272, %v7227
        %v7274 = vpop.permute.xlu0 %7273
        %7277 = vset.pattern.permute.xlu0 0
        %7278 = vperm.xlu0 %7277, %v7228
        %v7279 = vpop.permute.xlu0 %7278
        %7282 = vset.pattern.permute.xlu0 0
        %7283 = vperm.xlu0 %7282, %v7229
        %v7284 = vpop.permute.xlu0 %7283
        %7287 = vset.pattern.permute.xlu0 0
        %7288 = vperm.xlu0 %7287, %v7230
        %v7289 = vpop.permute.xlu0 %7288
        %7292 = vset.pattern.permute.xlu0 0
        %7293 = vperm.xlu0 %7292, %v7231
        %v7294 = vpop.permute.xlu0 %7293
        %7297 = vset.pattern.permute.xlu0 0
        %7298 = vperm.xlu0 %7297, %v7232
        %v7299 = vpop.permute.xlu0 %7298
        %7302 = vset.pattern.permute.xlu0 0
        %7303 = vperm.xlu0 %7302, %v7233
        %v7304 = vpop.permute.xlu0 %7303
        %7307 = vset.pattern.permute.xlu0 0
        %7308 = vperm.xlu0 %7307, %v7234
        %v7309 = vpop.permute.xlu0 %7308
        %7312 = vset.pattern.permute.xlu0 0
        %7313 = vperm.xlu0 %7312, %v7235
        %v7314 = vpop.permute.xlu0 %7313
        %v7316 = vadd.f32 %v7203, %v7239
        %v7317 = vadd.f32 %v7204, %v7244
        %v7318 = vadd.f32 %v7205, %v7249
        %v7319 = vadd.f32 %v7206, %v7254
        %v7320 = vadd.f32 %v7207, %v7259
        %v7321 = vadd.f32 %v7208, %v7264
        %v7322 = vadd.f32 %v7209, %v7269
        %v7323 = vadd.f32 %v7210, %v7274
        %v7324 = vadd.f32 %v7211, %v7279
        %v7325 = vadd.f32 %v7212, %v7284
        %v7326 = vadd.f32 %v7213, %v7289
        %v7327 = vadd.f32 %v7214, %v7294
        %v7328 = vadd.f32 %v7215, %v7299
        %v7329 = vadd.f32 %v7216, %v7304
        %v7330 = vadd.f32 %v7217, %v7309
        %v7331 = vadd.f32 %v7218, %v7314
        %v7332 = vmax.f32 %v7316, 0.0
        %v7333 = vmax.f32 %v7317, 0.0
        %v7334 = vmax.f32 %v7318, 0.0
        %v7335 = vmax.f32 %v7319, 0.0
        %v7336 = vmax.f32 %v7320, 0.0
        %v7337 = vmax.f32 %v7321, 0.0
        %v7338 = vmax.f32 %v7322, 0.0
        %v7339 = vmax.f32 %v7323, 0.0
        %v7340 = vmax.f32 %v7324, 0.0
        %v7341 = vmax.f32 %v7325, 0.0
        %v7342 = vmax.f32 %v7326, 0.0
        %v7343 = vmax.f32 %v7327, 0.0
        %v7344 = vmax.f32 %v7328, 0.0
        %v7345 = vmax.f32 %v7329, 0.0
        %v7346 = vmax.f32 %v7330, 0.0
        %v7347 = vmax.f32 %v7331, 0.0
        %7348 = vmatprep.subr.mxu0 0.0
        %7349 = vmatpush1.msra.mxu0 %v7332
        %7350 = vmatprep.subr.mxu0 0.0
        %7351 = vmatpush1.msra.mxu0 %v7333
        %7352 = vmatprep.subr.mxu0 0.0
        %7353 = vmatpush1.msra.mxu0 %v7334
        %7354 = vmatprep.subr.mxu0 0.0
        %7355 = vmatpush1.msra.mxu0 %v7335
        %7356 = vmatprep.subr.mxu0 0.0
        %7357 = vmatpush1.msra.mxu0 %v7336
        %7358 = vmatprep.subr.mxu0 0.0
        %7359 = vmatpush1.msra.mxu0 %v7337
        %7360 = vmatprep.subr.mxu0 0.0
        %7361 = vmatpush1.msra.mxu0 %v7338
        %7362 = vmatprep.subr.mxu0 0.0
        %7363 = vmatpush1.msra.mxu0 %v7339
        %7364 = vmatprep.subr.mxu0 0.0
        %7365 = vmatpush1.msra.mxu0 %v7340
        %7366 = vmatprep.subr.mxu0 0.0
        %7367 = vmatpush1.msra.mxu0 %v7341
        %7368 = vmatprep.subr.mxu0 0.0
        %7369 = vmatpush1.msra.mxu0 %v7342
        %7370 = vmatprep.subr.mxu0 0.0
        %7371 = vmatpush1.msra.mxu0 %v7343
        %7372 = vmatprep.subr.mxu0 0.0
        %7373 = vmatpush1.msra.mxu0 %v7344
        %7374 = vmatprep.subr.mxu0 0.0
        %7375 = vmatpush1.msra.mxu0 %v7345
        %7376 = vmatprep.subr.mxu0 0.0
        %7377 = vmatpush1.msra.mxu0 %v7346
        %7378 = vmatprep.subr.mxu0 0.0
        %7379 = vmatpush1.msra.mxu0 %v7347
        %7380 = vmatprep.subr.mxu0 0.0
        %7381 = vmatpush1.msra.mxu0 0.0
        %7382 = vmatprep.subr.mxu0 0.0
        %7383 = vmatpush1.msra.mxu0 0.0
        %7384 = vmatprep.subr.mxu0 0.0
        %7385 = vmatpush1.msra.mxu0 0.0
        %7386 = vmatprep.subr.mxu0 0.0
        %7387 = vmatpush1.msra.mxu0 0.0
        %7388 = vmatprep.subr.mxu0 0.0
        %7389 = vmatpush1.msra.mxu0 0.0
        %7390 = vmatprep.subr.mxu0 0.0
        %7391 = vmatpush1.msra.mxu0 0.0
        %7392 = vmatprep.subr.mxu0 0.0
        %7393 = vmatpush1.msra.mxu0 0.0
        %7394 = vmatprep.subr.mxu0 0.0
        %7395 = vmatpush1.msra.mxu0 0.0
        %7396 = vmatprep.subr.mxu0 0.0
        %7397 = vmatpush1.msra.mxu0 0.0
        %7398 = vmatprep.subr.mxu0 0.0
        %7399 = vmatpush1.msra.mxu0 0.0
        %7400 = vmatprep.subr.mxu0 0.0
        %7401 = vmatpush1.msra.mxu0 0.0
        %7402 = vmatprep.subr.mxu0 0.0
        %7403 = vmatpush1.msra.mxu0 0.0
        %7404 = vmatprep.subr.mxu0 0.0
        %7405 = vmatpush1.msra.mxu0 0.0
        %7406 = vmatprep.subr.mxu0 0.0
        %7407 = vmatpush1.msra.mxu0 0.0
        %7408 = vmatprep.subr.mxu0 0.0
        %7409 = vmatpush1.msra.mxu0 0.0
        %7410 = vmatprep.subr.mxu0 0.0
        %7411 = vmatpush1.msra.mxu0 0.0
        %7412 = vmatprep.mubr.f32.mxu0 0.0
        %7413 = vmatmul.mubr.f32.gmra.mrb[0].mxu0 %v4506
        %v7414 = vpop.f32.mrb[0].mxu0
        %v7415 = vadd.f32 %v4541, %v7414
        %v7416 = vpop.f32.mrb[0].mxu0
        %7417 = vmatprep.mubr.f32.mxu0 0.0
        %7418 = vmatmul.mubr.f32.gmra.mrb[0].mxu0 %v4507
        %v7419 = vpop.f32.mrb[0].mxu0
        %v7420 = vadd.f32 %v4546, %v7419
        %v7421 = vpop.f32.mrb[0].mxu0
        %7422 = vmatprep.mubr.f32.mxu0 0.0
        %7423 = vmatmul.mubr.f32.gmra.mrb[0].mxu0 %v4508
        %v7424 = vpop.f32.mrb[0].mxu0
        %v7425 = vadd.f32 %v4551, %v7424
        %v7426 = vpop.f32.mrb[0].mxu0
        %7427 = vmatprep.mubr.f32.mxu0 0.0
        %7428 = vmatmul.mubr.f32.gmra.mrb[0].mxu0 %v4509
        %v7429 = vpop.f32.mrb[0].mxu0
        %v7430 = vadd.f32 %v4556, %v7429
        %v7431 = vpop.f32.mrb[0].mxu0
        %7432 = vmatprep.mubr.f32.mxu0 0.0
        %7433 = vmatmul.mubr.f32.gmra.mrb[0].mxu0 %v4510
        %v7434 = vpop.f32.mrb[0].mxu0
        %v7435 = vadd.f32 %v4561, %v7434
        %v7436 = vpop.f32.mrb[0].mxu0
        %7437 = vmatprep.mubr.f32.mxu0 0.0
        %7438 = vmatmul.mubr.f32.gmra.mrb[0].mxu0 %v4511
        %v7439 = vpop.f32.mrb[0].mxu0
        %v7440 = vadd.f32 %v4566, %v7439
        %v7441 = vpop.f32.mrb[0].mxu0
        %7442 = vmatprep.mubr.f32.mxu0 0.0
        %7443 = vmatmul.mubr.f32.gmra.mrb[0].mxu0 %v4512
        %v7444 = vpop.f32.mrb[0].mxu0
        %v7445 = vadd.f32 %v4571, %v7444
        %v7446 = vpop.f32.mrb[0].mxu0
        %7447 = vmatprep.mubr.f32.mxu0 0.0
        %7448 = vmatmul.mubr.f32.gmra.mrb[0].mxu0 %v4513
        %v7449 = vpop.f32.mrb[0].mxu0
        %v7450 = vadd.f32 %v4576, %v7449
        %v7451 = vpop.f32.mrb[0].mxu0
        %7452 = vmatprep.mubr.f32.mxu0 0.0
        %7453 = vmatmul.mubr.f32.gmra.mrb[0].mxu0 %v4514
        %v7454 = vpop.f32.mrb[0].mxu0
        %v7455 = vadd.f32 %v4581, %v7454
        %v7456 = vpop.f32.mrb[0].mxu0
        %7457 = vmatprep.mubr.f32.mxu0 0.0
        %7458 = vmatmul.mubr.f32.gmra.mrb[0].mxu0 %v4515
        %v7459 = vpop.f32.mrb[0].mxu0
        %v7460 = vadd.f32 %v4586, %v7459
        %v7461 = vpop.f32.mrb[0].mxu0
        %7462 = vmatprep.mubr.f32.mxu0 0.0
        %7463 = vmatmul.mubr.f32.gmra.mrb[0].mxu0 %v4516
        %v7464 = vpop.f32.mrb[0].mxu0
        %v7465 = vadd.f32 %v4591, %v7464
        %v7466 = vpop.f32.mrb[0].mxu0
        %7467 = vmatprep.mubr.f32.mxu0 0.0
        %7468 = vmatmul.mubr.f32.gmra.mrb[0].mxu0 %v4517
        %v7469 = vpop.f32.mrb[0].mxu0
        %v7470 = vadd.f32 %v4596, %v7469
        %v7471 = vpop.f32.mrb[0].mxu0
        %7472 = vmatprep.mubr.f32.mxu0 0.0
        %7473 = vmatmul.mubr.f32.gmra.mrb[0].mxu0 %v4518
        %v7474 = vpop.f32.mrb[0].mxu0
        %v7475 = vadd.f32 %v4601, %v7474
        %v7476 = vpop.f32.mrb[0].mxu0
        %7477 = vmatprep.mubr.f32.mxu0 0.0
        %7478 = vmatmul.mubr.f32.gmra.mrb[0].mxu0 %v4519
        %v7479 = vpop.f32.mrb[0].mxu0
        %v7480 = vadd.f32 %v4606, %v7479
        %v7481 = vpop.f32.mrb[0].mxu0
        %7482 = vmatprep.mubr.f32.mxu0 0.0
        %7483 = vmatmul.mubr.f32.gmra.mrb[0].mxu0 %v4520
        %v7484 = vpop.f32.mrb[0].mxu0
        %v7485 = vadd.f32 %v4611, %v7484
        %v7486 = vpop.f32.mrb[0].mxu0
        %7487 = vmatprep.mubr.f32.mxu0 0.0
        %7488 = vmatmul.mubr.f32.gmra.mrb[0].mxu0 %v4521
        %v7489 = vpop.f32.mrb[0].mxu0
        %v7490 = vadd.f32 %v4616, %v7489
        %v7491 = vpop.f32.mrb[0].mxu0
        %7492 = vdwg.mxu0
        %v7493 = vmax.f32 %v7415, 0.0
        %v7494 = vmax.f32 %v7420, 0.0
        %v7495 = vmax.f32 %v7425, 0.0
        %v7496 = vmax.f32 %v7430, 0.0
        %v7497 = vmax.f32 %v7435, 0.0
        %v7498 = vmax.f32 %v7440, 0.0
        %v7499 = vmax.f32 %v7445, 0.0
        %v7500 = vmax.f32 %v7450, 0.0
        %v7501 = vmax.f32 %v7455, 0.0
        %v7502 = vmax.f32 %v7460, 0.0
        %v7503 = vmax.f32 %v7465, 0.0
        %v7504 = vmax.f32 %v7470, 0.0
        %v7505 = vmax.f32 %v7475, 0.0
        %v7506 = vmax.f32 %v7480, 0.0
        %v7507 = vmax.f32 %v7485, 0.0
        %v7508 = vmax.f32 %v7490, 0.0
        %7509 = vmatprep.subr.mxu0 0.0
        %7510 = vmatpush1.msra.mxu0 %v7493
        %7511 = vmatprep.subr.mxu0 0.0
        %7512 = vmatpush1.msra.mxu0 %v7494
        %7513 = vmatprep.subr.mxu0 0.0
        %7514 = vmatpush1.msra.mxu0 %v7495
        %7515 = vmatprep.subr.mxu0 0.0
        %7516 = vmatpush1.msra.mxu0 %v7496
        %7517 = vmatprep.subr.mxu0 0.0
        %7518 = vmatpush1.msra.mxu0 %v7497
        %7519 = vmatprep.subr.mxu0 0.0
        %7520 = vmatpush1.msra.mxu0 %v7498
        %7521 = vmatprep.subr.mxu0 0.0
        %7522 = vmatpush1.msra.mxu0 %v7499
        %7523 = vmatprep.subr.mxu0 0.0
        %7524 = vmatpush1.msra.mxu0 %v7500
        %7525 = vmatprep.subr.mxu0 0.0
        %7526 = vmatpush1.msra.mxu0 %v7501
        %7527 = vmatprep.subr.mxu0 0.0
        %7528 = vmatpush1.msra.mxu0 %v7502
        %7529 = vmatprep.subr.mxu0 0.0
        %7530 = vmatpush1.msra.mxu0 %v7503
        %7531 = vmatprep.subr.mxu0 0.0
        %7532 = vmatpush1.msra.mxu0 %v7504
        %7533 = vmatprep.subr.mxu0 0.0
        %7534 = vmatpush1.msra.mxu0 %v7505
        %7535 = vmatprep.subr.mxu0 0.0
        %7536 = vmatpush1.msra.mxu0 %v7506
        %7537 = vmatprep.subr.mxu0 0.0
        %7538 = vmatpush1.msra.mxu0 %v7507
        %7539 = vmatprep.subr.mxu0 0.0
        %7540 = vmatpush1.msra.mxu0 %v7508
        %7541 = vmatprep.subr.mxu0 0.0
        %7542 = vmatpush1.msra.mxu0 0.0
        %7543 = vmatprep.subr.mxu0 0.0
        %7544 = vmatpush1.msra.mxu0 0.0
        %7545 = vmatprep.subr.mxu0 0.0
        %7546 = vmatpush1.msra.mxu0 0.0
        %7547 = vmatprep.subr.mxu0 0.0
        %7548 = vmatpush1.msra.mxu0 0.0
        %7549 = vmatprep.subr.mxu0 0.0
        %7550 = vmatpush1.msra.mxu0 0.0
        %7551 = vmatprep.subr.mxu0 0.0
        %7552 = vmatpush1.msra.mxu0 0.0
        %7553 = vmatprep.subr.mxu0 0.0
        %7554 = vmatpush1.msra.mxu0 0.0
        %7555 = vmatprep.subr.mxu0 0.0
        %7556 = vmatpush1.msra.mxu0 0.0
        %7557 = vmatprep.subr.mxu0 0.0
        %7558 = vmatpush1.msra.mxu0 0.0
        %7559 = vmatprep.subr.mxu0 0.0
        %7560 = vmatpush1.msra.mxu0 0.0
        %7561 = vmatprep.subr.mxu0 0.0
        %7562 = vmatpush1.msra.mxu0 0.0
        %7563 = vmatprep.subr.mxu0 0.0
        %7564 = vmatpush1.msra.mxu0 0.0
        %7565 = vmatprep.subr.mxu0 0.0
        %7566 = vmatpush1.msra.mxu0 0.0
        %7567 = vmatprep.subr.mxu0 0.0
        %7568 = vmatpush1.msra.mxu0 0.0
        %7569 = vmatprep.subr.mxu0 0.0
        %7570 = vmatpush1.msra.mxu0 0.0
        %7571 = vmatprep.subr.mxu0 0.0
        %7572 = vmatpush1.msra.mxu0 0.0
        %7573 = vmatprep.mubr.f32.mxu0 0.0
        %7574 = vmatmul.mubr.f32.gmra.mrb[0].mxu0 %v426
        %v7575 = vpop.f32.mrb[0].mxu0
        %v7576 = vadd.f32 %v1011, %v7575
        %v7577 = vpop.f32.mrb[0].mxu0
        %7578 = vdwg.mxu0
        %v7579 = vmul.f32 %v7144, 0.025
        %v7580 = vadd.f32 %v7579, %v7576
        %v7581 = vmul.f32 %v7580, 0.0625
        %v7582 = vadd.f32 %v7144, %v7581
        %v7583 = vrsqrt.pop %v7159
        %v7584 = vmul.f32 %v7159, %v7583
        %vm7585 = vcmp.eq.f32.partialorder %v7159, inf
        %v7586 = vsel %vm7585, %v7159, %v7584
        %vm7587 = vcmp.eq.f32.partialorder %v7159, 0.0
        %v7588 = vand.u32 %v7159, 2147483648
        %v7589 = vsel %vm7587, %v7588, %v7586
        %v7591 = vrot.slane %v7589, 2
        %v7593 = vmul.f32 %v7144, %v7591
        %v7595 = vrot.slane %v7576, 1
        %v7597 = vadd.f32 %v7593, %v7595
        %v7598 = vmul.f32 %v7597, %v7162
        %v7599 = vadd.f32 %v7582, %v7598
        %v7600 = vsub.f32 0.04, %v7159
        %v7601 = vmul.f32 %v7600, 1.5
        %v7602 = vadd.f32 %v7601, %v7576
        %v7603 = vmul.f32 %v7602, 0.0625
        %v7604 = vadd.f32 %v7159, %v7603
        %v7605 = vadd.f32 %v7576, 0.3
        %v7607 = vrot.slane %v7162, 6
        %v7609 = vmul.f32 %v7605, %v7607
        %v7611 = vrot.slane %v7609, 1
        %v7613 = vadd.f32 %v7604, %v7611
        %v7614 = vmax.f32 %v7613, 0.01
        %s7615 = scalar_lea.vmem %s371, 30 [#allocation2]
        %v7616 = vld [vmem:[%s7615] sm:$0x3]
        %v7617 = vmul.f32 %v7616, 0.25
        %v7618 = vlaneseq
        %v7619 = vshrl.u32 %v7618, 7
        %v7620 = vsub.s32 0, %v7619
        %v7621 = vrot.slane %v7599, %v7620
        %v7622 = vmul.f32 %v434, %v7621
        %v7623 = vmul.f32 %v439, %v7621
        %v7624 = vmul.f32 %v444, %v7621
        %v7625 = vmul.f32 %v449, %v7621
        %v7626 = vmul.f32 %v454, %v7621
        %v7627 = vmul.f32 %v459, %v7621
        %v7628 = vmul.f32 %v464, %v7621
        %v7629 = vmul.f32 %v469, %v7621
        %v7630 = vmul.f32 %v474, %v7621
        %v7631 = vmul.f32 %v479, %v7621
        %v7632 = vmul.f32 %v484, %v7621
        %v7633 = vmul.f32 %v489, %v7621
        %v7634 = vmul.f32 %v494, %v7621
        %v7635 = vmul.f32 %v499, %v7621
        %v7636 = vmul.f32 %v504, %v7621
        %v7637 = vmul.f32 %v509, %v7621
        %v7638 = vlaneseq
        %v7639 = vshrl.u32 %v7638, 7
        %v7640 = vsub.s32 2, %v7639
        %v7641 = vrot.slane %v7614, %v7640
        %v7642 = vmul.f32 %v513, %v7641
        %v7643 = vmul.f32 %v517, %v7641
        %v7644 = vmul.f32 %v521, %v7641
        %v7645 = vmul.f32 %v525, %v7641
        %v7646 = vmul.f32 %v529, %v7641
        %v7647 = vmul.f32 %v533, %v7641
        %v7648 = vmul.f32 %v537, %v7641
        %v7649 = vmul.f32 %v541, %v7641
        %v7650 = vmul.f32 %v545, %v7641
        %v7651 = vmul.f32 %v549, %v7641
        %v7652 = vmul.f32 %v553, %v7641
        %v7653 = vmul.f32 %v557, %v7641
        %v7654 = vmul.f32 %v561, %v7641
        %v7655 = vmul.f32 %v565, %v7641
        %v7656 = vmul.f32 %v569, %v7641
        %v7657 = vmul.f32 %v573, %v7641
        %v7658 = vadd.f32 %v7622, %v7642
        %v7659 = vadd.f32 %v7623, %v7643
        %v7660 = vadd.f32 %v7624, %v7644
        %v7661 = vadd.f32 %v7625, %v7645
        %v7662 = vadd.f32 %v7626, %v7646
        %v7663 = vadd.f32 %v7627, %v7647
        %v7664 = vadd.f32 %v7628, %v7648
        %v7665 = vadd.f32 %v7629, %v7649
        %v7666 = vadd.f32 %v7630, %v7650
        %v7667 = vadd.f32 %v7631, %v7651
        %v7668 = vadd.f32 %v7632, %v7652
        %v7669 = vadd.f32 %v7633, %v7653
        %v7670 = vadd.f32 %v7634, %v7654
        %v7671 = vadd.f32 %v7635, %v7655
        %v7672 = vadd.f32 %v7636, %v7656
        %v7673 = vadd.f32 %v7637, %v7657
        %s7674 = scalar_lea.vmem %s1, 1920
        %v7675 = vld [vmem:[%s7674] sm:$0xff]
        %v7676 = vld [vmem:[%s7674 + $0x8] sm:$0xff]
        %v7677 = vld [vmem:[%s7674 + $0x10] sm:$0xff]
        %v7678 = vld [vmem:[%s7674 + $0x18] sm:$0xff]
        %v7679 = vld [vmem:[%s7674 + $0x20] sm:$0xff]
        %v7680 = vld [vmem:[%s7674 + $0x28] sm:$0xff]
        %v7681 = vld [vmem:[%s7674 + $0x30] sm:$0xff]
        %v7682 = vld [vmem:[%s7674 + $0x38] sm:$0xff]
        %v7683 = vld [vmem:[%s7674 + $0x40] sm:$0xff]
        %v7684 = vld [vmem:[%s7674 + $0x48] sm:$0xff]
        %v7685 = vld [vmem:[%s7674 + $0x50] sm:$0xff]
        %v7686 = vld [vmem:[%s7674 + $0x58] sm:$0xff]
        %v7687 = vld [vmem:[%s7674 + $0x60] sm:$0xff]
        %v7688 = vld [vmem:[%s7674 + $0x68] sm:$0xff]
        %v7689 = vld [vmem:[%s7674 + $0x70] sm:$0xff]
        %v7690 = vld [vmem:[%s7674 + $0x78] sm:$0xff]
        %7692 = vset.pattern.permute.xlu0 0
        %7693 = vperm.xlu0 %7692, %v7675
        %v7694 = vpop.permute.xlu0 %7693
        %7697 = vset.pattern.permute.xlu0 0
        %7698 = vperm.xlu0 %7697, %v7676
        %v7699 = vpop.permute.xlu0 %7698
        %7702 = vset.pattern.permute.xlu0 0
        %7703 = vperm.xlu0 %7702, %v7677
        %v7704 = vpop.permute.xlu0 %7703
        %7707 = vset.pattern.permute.xlu0 0
        %7708 = vperm.xlu0 %7707, %v7678
        %v7709 = vpop.permute.xlu0 %7708
        %7712 = vset.pattern.permute.xlu0 0
        %7713 = vperm.xlu0 %7712, %v7679
        %v7714 = vpop.permute.xlu0 %7713
        %7717 = vset.pattern.permute.xlu0 0
        %7718 = vperm.xlu0 %7717, %v7680
        %v7719 = vpop.permute.xlu0 %7718
        %7722 = vset.pattern.permute.xlu0 0
        %7723 = vperm.xlu0 %7722, %v7681
        %v7724 = vpop.permute.xlu0 %7723
        %7727 = vset.pattern.permute.xlu0 0
        %7728 = vperm.xlu0 %7727, %v7682
        %v7729 = vpop.permute.xlu0 %7728
        %7732 = vset.pattern.permute.xlu0 0
        %7733 = vperm.xlu0 %7732, %v7683
        %v7734 = vpop.permute.xlu0 %7733
        %7737 = vset.pattern.permute.xlu0 0
        %7738 = vperm.xlu0 %7737, %v7684
        %v7739 = vpop.permute.xlu0 %7738
        %7742 = vset.pattern.permute.xlu0 0
        %7743 = vperm.xlu0 %7742, %v7685
        %v7744 = vpop.permute.xlu0 %7743
        %7747 = vset.pattern.permute.xlu0 0
        %7748 = vperm.xlu0 %7747, %v7686
        %v7749 = vpop.permute.xlu0 %7748
        %7752 = vset.pattern.permute.xlu0 0
        %7753 = vperm.xlu0 %7752, %v7687
        %v7754 = vpop.permute.xlu0 %7753
        %7757 = vset.pattern.permute.xlu0 0
        %7758 = vperm.xlu0 %7757, %v7688
        %v7759 = vpop.permute.xlu0 %7758
        %7762 = vset.pattern.permute.xlu0 0
        %7763 = vperm.xlu0 %7762, %v7689
        %v7764 = vpop.permute.xlu0 %7763
        %7767 = vset.pattern.permute.xlu0 0
        %7768 = vperm.xlu0 %7767, %v7690
        %v7769 = vpop.permute.xlu0 %7768
        %v7771 = vadd.f32 %v7658, %v7694
        %v7772 = vadd.f32 %v7659, %v7699
        %v7773 = vadd.f32 %v7660, %v7704
        %v7774 = vadd.f32 %v7661, %v7709
        %v7775 = vadd.f32 %v7662, %v7714
        %v7776 = vadd.f32 %v7663, %v7719
        %v7777 = vadd.f32 %v7664, %v7724
        %v7778 = vadd.f32 %v7665, %v7729
        %v7779 = vadd.f32 %v7666, %v7734
        %v7780 = vadd.f32 %v7667, %v7739
        %v7781 = vadd.f32 %v7668, %v7744
        %v7782 = vadd.f32 %v7669, %v7749
        %v7783 = vadd.f32 %v7670, %v7754
        %v7784 = vadd.f32 %v7671, %v7759
        %v7785 = vadd.f32 %v7672, %v7764
        %v7786 = vadd.f32 %v7673, %v7769
        %v7787 = vmax.f32 %v7771, 0.0
        %v7788 = vmax.f32 %v7772, 0.0
        %v7789 = vmax.f32 %v7773, 0.0
        %v7790 = vmax.f32 %v7774, 0.0
        %v7791 = vmax.f32 %v7775, 0.0
        %v7792 = vmax.f32 %v7776, 0.0
        %v7793 = vmax.f32 %v7777, 0.0
        %v7794 = vmax.f32 %v7778, 0.0
        %v7795 = vmax.f32 %v7779, 0.0
        %v7796 = vmax.f32 %v7780, 0.0
        %v7797 = vmax.f32 %v7781, 0.0
        %v7798 = vmax.f32 %v7782, 0.0
        %v7799 = vmax.f32 %v7783, 0.0
        %v7800 = vmax.f32 %v7784, 0.0
        %v7801 = vmax.f32 %v7785, 0.0
        %v7802 = vmax.f32 %v7786, 0.0
        %7803 = vmatprep.subr.mxu0 0.0
        %7804 = vmatpush1.msra.mxu0 %v7787
        %7805 = vmatprep.subr.mxu0 0.0
        %7806 = vmatpush1.msra.mxu0 %v7788
        %7807 = vmatprep.subr.mxu0 0.0
        %7808 = vmatpush1.msra.mxu0 %v7789
        %7809 = vmatprep.subr.mxu0 0.0
        %7810 = vmatpush1.msra.mxu0 %v7790
        %7811 = vmatprep.subr.mxu0 0.0
        %7812 = vmatpush1.msra.mxu0 %v7791
        %7813 = vmatprep.subr.mxu0 0.0
        %7814 = vmatpush1.msra.mxu0 %v7792
        %7815 = vmatprep.subr.mxu0 0.0
        %7816 = vmatpush1.msra.mxu0 %v7793
        %7817 = vmatprep.subr.mxu0 0.0
        %7818 = vmatpush1.msra.mxu0 %v7794
        %7819 = vmatprep.subr.mxu0 0.0
        %7820 = vmatpush1.msra.mxu0 %v7795
        %7821 = vmatprep.subr.mxu0 0.0
        %7822 = vmatpush1.msra.mxu0 %v7796
        %7823 = vmatprep.subr.mxu0 0.0
        %7824 = vmatpush1.msra.mxu0 %v7797
        %7825 = vmatprep.subr.mxu0 0.0
        %7826 = vmatpush1.msra.mxu0 %v7798
        %7827 = vmatprep.subr.mxu0 0.0
        %7828 = vmatpush1.msra.mxu0 %v7799
        %7829 = vmatprep.subr.mxu0 0.0
        %7830 = vmatpush1.msra.mxu0 %v7800
        %7831 = vmatprep.subr.mxu0 0.0
        %7832 = vmatpush1.msra.mxu0 %v7801
        %7833 = vmatprep.subr.mxu0 0.0
        %7834 = vmatpush1.msra.mxu0 %v7802
        %7835 = vmatprep.subr.mxu0 0.0
        %7836 = vmatpush1.msra.mxu0 0.0
        %7837 = vmatprep.subr.mxu0 0.0
        %7838 = vmatpush1.msra.mxu0 0.0
        %7839 = vmatprep.subr.mxu0 0.0
        %7840 = vmatpush1.msra.mxu0 0.0
        %7841 = vmatprep.subr.mxu0 0.0
        %7842 = vmatpush1.msra.mxu0 0.0
        %7843 = vmatprep.subr.mxu0 0.0
        %7844 = vmatpush1.msra.mxu0 0.0
        %7845 = vmatprep.subr.mxu0 0.0
        %7846 = vmatpush1.msra.mxu0 0.0
        %7847 = vmatprep.subr.mxu0 0.0
        %7848 = vmatpush1.msra.mxu0 0.0
        %7849 = vmatprep.subr.mxu0 0.0
        %7850 = vmatpush1.msra.mxu0 0.0
        %7851 = vmatprep.subr.mxu0 0.0
        %7852 = vmatpush1.msra.mxu0 0.0
        %7853 = vmatprep.subr.mxu0 0.0
        %7854 = vmatpush1.msra.mxu0 0.0
        %7855 = vmatprep.subr.mxu0 0.0
        %7856 = vmatpush1.msra.mxu0 0.0
        %7857 = vmatprep.subr.mxu0 0.0
        %7858 = vmatpush1.msra.mxu0 0.0
        %7859 = vmatprep.subr.mxu0 0.0
        %7860 = vmatpush1.msra.mxu0 0.0
        %7861 = vmatprep.subr.mxu0 0.0
        %7862 = vmatpush1.msra.mxu0 0.0
        %7863 = vmatprep.subr.mxu0 0.0
        %7864 = vmatpush1.msra.mxu0 0.0
        %7865 = vmatprep.subr.mxu0 0.0
        %7866 = vmatpush1.msra.mxu0 0.0
        %7867 = vmatprep.mubr.f32.mxu0 0.0
        %7868 = vmatmul.mubr.f32.gmra.mrb[0].mxu0 %v4506
        %v7869 = vpop.f32.mrb[0].mxu0
        %v7870 = vadd.f32 %v4541, %v7869
        %v7871 = vpop.f32.mrb[0].mxu0
        %7872 = vmatprep.mubr.f32.mxu0 0.0
        %7873 = vmatmul.mubr.f32.gmra.mrb[0].mxu0 %v4507
        %v7874 = vpop.f32.mrb[0].mxu0
        %v7875 = vadd.f32 %v4546, %v7874
        %v7876 = vpop.f32.mrb[0].mxu0
        %7877 = vmatprep.mubr.f32.mxu0 0.0
        %7878 = vmatmul.mubr.f32.gmra.mrb[0].mxu0 %v4508
        %v7879 = vpop.f32.mrb[0].mxu0
        %v7880 = vadd.f32 %v4551, %v7879
        %v7881 = vpop.f32.mrb[0].mxu0
        %7882 = vmatprep.mubr.f32.mxu0 0.0
        %7883 = vmatmul.mubr.f32.gmra.mrb[0].mxu0 %v4509
        %v7884 = vpop.f32.mrb[0].mxu0
        %v7885 = vadd.f32 %v4556, %v7884
        %v7886 = vpop.f32.mrb[0].mxu0
        %7887 = vmatprep.mubr.f32.mxu0 0.0
        %7888 = vmatmul.mubr.f32.gmra.mrb[0].mxu0 %v4510
        %v7889 = vpop.f32.mrb[0].mxu0
        %v7890 = vadd.f32 %v4561, %v7889
        %v7891 = vpop.f32.mrb[0].mxu0
        %7892 = vmatprep.mubr.f32.mxu0 0.0
        %7893 = vmatmul.mubr.f32.gmra.mrb[0].mxu0 %v4511
        %v7894 = vpop.f32.mrb[0].mxu0
        %v7895 = vadd.f32 %v4566, %v7894
        %v7896 = vpop.f32.mrb[0].mxu0
        %7897 = vmatprep.mubr.f32.mxu0 0.0
        %7898 = vmatmul.mubr.f32.gmra.mrb[0].mxu0 %v4512
        %v7899 = vpop.f32.mrb[0].mxu0
        %v7900 = vadd.f32 %v4571, %v7899
        %v7901 = vpop.f32.mrb[0].mxu0
        %7902 = vmatprep.mubr.f32.mxu0 0.0
        %7903 = vmatmul.mubr.f32.gmra.mrb[0].mxu0 %v4513
        %v7904 = vpop.f32.mrb[0].mxu0
        %v7905 = vadd.f32 %v4576, %v7904
        %v7906 = vpop.f32.mrb[0].mxu0
        %7907 = vmatprep.mubr.f32.mxu0 0.0
        %7908 = vmatmul.mubr.f32.gmra.mrb[0].mxu0 %v4514
        %v7909 = vpop.f32.mrb[0].mxu0
        %v7910 = vadd.f32 %v4581, %v7909
        %v7911 = vpop.f32.mrb[0].mxu0
        %7912 = vmatprep.mubr.f32.mxu0 0.0
        %7913 = vmatmul.mubr.f32.gmra.mrb[0].mxu0 %v4515
        %v7914 = vpop.f32.mrb[0].mxu0
        %v7915 = vadd.f32 %v4586, %v7914
        %v7916 = vpop.f32.mrb[0].mxu0
        %7917 = vmatprep.mubr.f32.mxu0 0.0
        %7918 = vmatmul.mubr.f32.gmra.mrb[0].mxu0 %v4516
        %v7919 = vpop.f32.mrb[0].mxu0
        %v7920 = vadd.f32 %v4591, %v7919
        %v7921 = vpop.f32.mrb[0].mxu0
        %7922 = vmatprep.mubr.f32.mxu0 0.0
        %7923 = vmatmul.mubr.f32.gmra.mrb[0].mxu0 %v4517
        %v7924 = vpop.f32.mrb[0].mxu0
        %v7925 = vadd.f32 %v4596, %v7924
        %v7926 = vpop.f32.mrb[0].mxu0
        %7927 = vmatprep.mubr.f32.mxu0 0.0
        %7928 = vmatmul.mubr.f32.gmra.mrb[0].mxu0 %v4518
        %v7929 = vpop.f32.mrb[0].mxu0
        %v7930 = vadd.f32 %v4601, %v7929
        %v7931 = vpop.f32.mrb[0].mxu0
        %7932 = vmatprep.mubr.f32.mxu0 0.0
        %7933 = vmatmul.mubr.f32.gmra.mrb[0].mxu0 %v4519
        %v7934 = vpop.f32.mrb[0].mxu0
        %v7935 = vadd.f32 %v4606, %v7934
        %v7936 = vpop.f32.mrb[0].mxu0
        %7937 = vmatprep.mubr.f32.mxu0 0.0
        %7938 = vmatmul.mubr.f32.gmra.mrb[0].mxu0 %v4520
        %v7939 = vpop.f32.mrb[0].mxu0
        %v7940 = vadd.f32 %v4611, %v7939
        %v7941 = vpop.f32.mrb[0].mxu0
        %7942 = vmatprep.mubr.f32.mxu0 0.0
        %7943 = vmatmul.mubr.f32.gmra.mrb[0].mxu0 %v4521
        %v7944 = vpop.f32.mrb[0].mxu0
        %v7945 = vadd.f32 %v4616, %v7944
        %v7946 = vpop.f32.mrb[0].mxu0
        %7947 = vdwg.mxu0
        %v7948 = vmax.f32 %v7870, 0.0
        %v7949 = vmax.f32 %v7875, 0.0
        %v7950 = vmax.f32 %v7880, 0.0
        %v7951 = vmax.f32 %v7885, 0.0
        %v7952 = vmax.f32 %v7890, 0.0
        %v7953 = vmax.f32 %v7895, 0.0
        %v7954 = vmax.f32 %v7900, 0.0
        %v7955 = vmax.f32 %v7905, 0.0
        %v7956 = vmax.f32 %v7910, 0.0
        %v7957 = vmax.f32 %v7915, 0.0
        %v7958 = vmax.f32 %v7920, 0.0
        %v7959 = vmax.f32 %v7925, 0.0
        %v7960 = vmax.f32 %v7930, 0.0
        %v7961 = vmax.f32 %v7935, 0.0
        %v7962 = vmax.f32 %v7940, 0.0
        %v7963 = vmax.f32 %v7945, 0.0
        %7964 = vmatprep.subr.mxu0 0.0
        %7965 = vmatpush1.msra.mxu0 %v7948
        %7966 = vmatprep.subr.mxu0 0.0
        %7967 = vmatpush1.msra.mxu0 %v7949
        %7968 = vmatprep.subr.mxu0 0.0
        %7969 = vmatpush1.msra.mxu0 %v7950
        %7970 = vmatprep.subr.mxu0 0.0
        %7971 = vmatpush1.msra.mxu0 %v7951
        %7972 = vmatprep.subr.mxu0 0.0
        %7973 = vmatpush1.msra.mxu0 %v7952
        %7974 = vmatprep.subr.mxu0 0.0
        %7975 = vmatpush1.msra.mxu0 %v7953
        %7976 = vmatprep.subr.mxu0 0.0
        %7977 = vmatpush1.msra.mxu0 %v7954
        %7978 = vmatprep.subr.mxu0 0.0
        %7979 = vmatpush1.msra.mxu0 %v7955
        %7980 = vmatprep.subr.mxu0 0.0
        %7981 = vmatpush1.msra.mxu0 %v7956
        %7982 = vmatprep.subr.mxu0 0.0
        %7983 = vmatpush1.msra.mxu0 %v7957
        %7984 = vmatprep.subr.mxu0 0.0
        %7985 = vmatpush1.msra.mxu0 %v7958
        %7986 = vmatprep.subr.mxu0 0.0
        %7987 = vmatpush1.msra.mxu0 %v7959
        %7988 = vmatprep.subr.mxu0 0.0
        %7989 = vmatpush1.msra.mxu0 %v7960
        %7990 = vmatprep.subr.mxu0 0.0
        %7991 = vmatpush1.msra.mxu0 %v7961
        %7992 = vmatprep.subr.mxu0 0.0
        %7993 = vmatpush1.msra.mxu0 %v7962
        %7994 = vmatprep.subr.mxu0 0.0
        %7995 = vmatpush1.msra.mxu0 %v7963
        %7996 = vmatprep.subr.mxu0 0.0
        %7997 = vmatpush1.msra.mxu0 0.0
        %7998 = vmatprep.subr.mxu0 0.0
        %7999 = vmatpush1.msra.mxu0 0.0
        %8000 = vmatprep.subr.mxu0 0.0
        %8001 = vmatpush1.msra.mxu0 0.0
        %8002 = vmatprep.subr.mxu0 0.0
        %8003 = vmatpush1.msra.mxu0 0.0
        %8004 = vmatprep.subr.mxu0 0.0
        %8005 = vmatpush1.msra.mxu0 0.0
        %8006 = vmatprep.subr.mxu0 0.0
        %8007 = vmatpush1.msra.mxu0 0.0
        %8008 = vmatprep.subr.mxu0 0.0
        %8009 = vmatpush1.msra.mxu0 0.0
        %8010 = vmatprep.subr.mxu0 0.0
        %8011 = vmatpush1.msra.mxu0 0.0
        %8012 = vmatprep.subr.mxu0 0.0
        %8013 = vmatpush1.msra.mxu0 0.0
        %8014 = vmatprep.subr.mxu0 0.0
        %8015 = vmatpush1.msra.mxu0 0.0
        %8016 = vmatprep.subr.mxu0 0.0
        %8017 = vmatpush1.msra.mxu0 0.0
        %8018 = vmatprep.subr.mxu0 0.0
        %8019 = vmatpush1.msra.mxu0 0.0
        %8020 = vmatprep.subr.mxu0 0.0
        %8021 = vmatpush1.msra.mxu0 0.0
        %8022 = vmatprep.subr.mxu0 0.0
        %8023 = vmatpush1.msra.mxu0 0.0
        %8024 = vmatprep.subr.mxu0 0.0
        %8025 = vmatpush1.msra.mxu0 0.0
        %8026 = vmatprep.subr.mxu0 0.0
        %8027 = vmatpush1.msra.mxu0 0.0
        %8028 = vmatprep.mubr.f32.mxu0 0.0
        %8029 = vmatmul.mubr.f32.gmra.mrb[0].mxu0 %v426
        %v8030 = vpop.f32.mrb[0].mxu0
        %v8031 = vadd.f32 %v1011, %v8030
        %v8032 = vpop.f32.mrb[0].mxu0
        %8033 = vdwg.mxu0
        %v8034 = vmul.f32 %v7599, 0.025
        %v8035 = vadd.f32 %v8034, %v8031
        %v8036 = vmul.f32 %v8035, 0.0625
        %v8037 = vadd.f32 %v7599, %v8036
        %v8038 = vrsqrt.pop %v7614
        %v8039 = vmul.f32 %v7614, %v8038
        %vm8040 = vcmp.eq.f32.partialorder %v7614, inf
        %v8041 = vsel %vm8040, %v7614, %v8039
        %vm8042 = vcmp.eq.f32.partialorder %v7614, 0.0
        %v8043 = vand.u32 %v7614, 2147483648
        %v8044 = vsel %vm8042, %v8043, %v8041
        %v8046 = vrot.slane %v8044, 2
        %v8048 = vmul.f32 %v7599, %v8046
        %v8050 = vrot.slane %v8031, 1
        %v8052 = vadd.f32 %v8048, %v8050
        %v8053 = vmul.f32 %v8052, %v7617
        %v8054 = vadd.f32 %v8037, %v8053
        %vm8055 = vcmp.ne.f32.partialorder %v8054, %v8054
        %v8056 = vlaneseq
        %v8057 = vshrl.u32 %v8056, 7
        %v8058 = vsub.s32 0, %v8057
        %v8059 = vrot.slane %v8054, %v8058
        %v8060 = vsub.f32 %v8059, %v4300
        %v8061 = vmax.f32 %v8060, 0.0
        %v8062 = vsel %vm8055, 1, 0
        %v8063 = vlaneseq
        %v8064 = vshrl.u32 %v8063, 7
        %v8065 = vsub.s32 0, %v8064
        %v8066 = vrot.slane %v8062, %v8065
        %vm8067 = vcmp.eq.s32.totalorder %v8066, 1
        %v8068 = vsel %vm8067, 0.0, %v8061
        %v8069 = vsel %vm8055, 0.0, 1.0
        %8070 = vadd.xlane.f32.xlu0 %v8068
        %v8071 = vpop.xlane.xlu0 %8070
        %s8072 = scalar_lea.vmem %s408, 16
        %8073 = vst.msk [vmem:[%s8072] sm:$0xff] %vm4314, %v8071
        %v8074 = vsel %vm4316, %v8069, 0.0
        %8075 = vadd.xlane.f32.xlu0 %v8074
        %v8076 = vpop.xlane.xlu0 %8075
        %8077 = vst.msk [vmem:[%s8072 + $0x8] sm:$0x1] %vm4320, %v8076
        %s8078 = smul.u32 2, %s19
        %p8079 = scmp.lt.s32.totalorder %s8078, 3
        %s8080 = scalar_select %p8079, %s8078, 3
        %s8081 = smul.addr %s8080, 2
        %s8082 = smul.addr %s8081, 8
        %s8083 = scalar_lea.vmem %s8, %s8082
        // Predicated region
        $region94: #{tpu_custom_call.1} parent=88 // pred_check
          %p8084 = pneg %p210
        $region95: #{tpu_custom_call.1} parent=88 // pred_check_branch
          %8086 = sbr.rel (%p8084) target = $region97
        $region96: #{tpu_custom_call.1} parent=88 // pred_region
          %s8087 = smul.u32 2, %s19
        $region97: #{tpu_custom_call.1} parent=88 // pred_fallthru
          _
      $region89: #{tpu_custom_call.1} parent=5 // pred_fallthru
        _
      %p8088 = scmp.le.s32.totalorder 2, %s14
      // Predicated region
      $region98: #{tpu_custom_call.1} parent=5 // pred_check
        %p8089 = pneg %p8088
      $region99: #{tpu_custom_call.1} parent=5 // pred_check_branch
        %8091 = sbr.rel (%p8089) target = $region101
      $region100: #{tpu_custom_call.1} parent=5 // pred_region
        %s8092 = ssub.s32 %s14, 2
        // Predicated region
        $region102: #{tpu_custom_call.1} parent=100 // pred_check
          %p8093 = pneg %p216
        $region103: #{tpu_custom_call.1} parent=100 // pred_check_branch
          %8095 = sbr.rel (%p8093) target = $region105
        $region104: #{tpu_custom_call.1} parent=100 // pred_region
          %s8096 = smul.u32 2, %s20
          %p8097 = scmp.lt.s32.totalorder %s8096, 3
          %s8098 = scalar_select %p8097, %s8096, 3
          %s8099 = smul.addr %s8098, 2
          %s8100 = smul.addr %s8099, 8
          %s8101 = scalar_lea.vmem %s8, %s8100
        $region105: #{tpu_custom_call.1} parent=100 // pred_fallthru
          _
      $region101: #{tpu_custom_call.1} parent=5 // pred_fallthru
        _
    $region6: #{tpu_custom_call.1} parent=1 // loop_footer
      %s18 = sadd.s32 1, %s14
    $region7: #{tpu_custom_call.1} parent=1 // loop_footer_branch
      %13 = sbr.rel target = $region3
    $region8: #{tpu_custom_call.1} parent=1 // loop_exit
      _

</llo_original>
